<compile_context>
chip_gen: v7x
topology: tpu7x:2x2x1
jax: 0.10.0
libtpu: 0.0.40
codegen_flags: <defaults>
</compile_context>

<pallas_src>
import functools

import jax
import jax.numpy as jnp
import numpy as np
from jax import lax
from jax.experimental import pallas as pl
from jax.experimental.pallas import tpu as pltpu


# ---------------------------------------------------------------------------
# Pallas kernel: mask + z_encoder + two 3x3 convs + fused target gather.
# ---------------------------------------------------------------------------
def _encoder_kernel(y_ref, mc_ref, grow_ref, ww_ref,
                    rep_ref, wey_ref, wem_ref, be_ref,
                    wc1_ref, b1_ref, wc2_ref, b2_ref, fold_ref,
                    out_ref):
    # y_ref   : (MB, H, W*DY)   f32   (y flattened, lane-dense)
    # mc_ref  : (MB, H, W)      f32   (context mask, NOT repeated over DY)
    # grow_ref: (MB*DT, 1)      int32 (global row index b_local*H + h_t per target)
    # ww_ref  : (MB*DT, 1)      int32 (target column w_t per target)
    # rep_ref : (W, W*DY)       bf16  kron(eye(W), ones(1,DY))   -- in-kernel DY repeat
    # wey_ref : (W*DY, W*C)     bf16  block-diag encoder weight (y path)
    # wem_ref : (W, W*C)        bf16  kron(eye(W), sum(We[DY:],0)) -- mc path
    # be/b1/b2: (1, W*C)        f32   biases tiled across W
    # wc1/wc2 : (3, W*C, W*C)   bf16  block-banded conv weights, taps kh=0,1,2
    # fold_ref: (W*C, C)        f32   kron(ones(W,1), eye(C))
    # out_ref : (MB, DT, C)     f32
    f32, bf16 = jnp.float32, jnp.bfloat16
    MB, H, WDY = y_ref.shape
    W = mc_ref.shape[2]
    WC = be_ref.shape[1]
    DT, C = out_ref.shape[1], out_ref.shape[2]

    # ---- z_encoder: pointwise Linear(2*DY -> C) as lane-dense matmuls --------
    mc2 = mc_ref[...].reshape(MB * H, W).astype(bf16)          # 0/1 -> exact in bf16
    # repeat(mc, DY) done on the MXU (tiny K=W dot) instead of an HBM stream.
    mcr = jnp.dot(mc2, rep_ref[...], preferred_element_type=f32)   # (MB*H, WDY) f32
    yc = (y_ref[...].reshape(MB * H, WDY) * mcr).astype(bf16)
    z = (jnp.dot(yc, wey_ref[...], preferred_element_type=f32)
         + jnp.dot(mc2, wem_ref[...], preferred_element_type=f32)
         + be_ref[...])                                        # (MB*H, W*C) f32

    # ---- 3x3 'SAME' conv == three accumulating matmuls (no 3*WC lane-concat) --
    h_pos = lax.broadcasted_iota(jnp.int32, (MB, H, 1), 1)
    not_first = (h_pos > 0).astype(f32)                        # zero wrapped top row
    not_last = (h_pos < H - 1).astype(f32)                     # zero wrapped bottom row

    def conv3x3(x2d, w_ref, b_ref, relu):
        # Rolls/masks kept in f32 (proven lowering); bf16 only at the MXU dots.
        x3 = x2d.reshape(MB, H, WC)
        up = pltpu.roll(x3, 1, 1) * not_first                  # x[h-1]
        dn = pltpu.roll(x3, H - 1, 1) * not_last                # x[h+1]
        acc = jnp.dot(up.reshape(MB * H, WC).astype(bf16), w_ref[0],
                      preferred_element_type=f32)
        acc = acc + jnp.dot(x3.reshape(MB * H, WC).astype(bf16), w_ref[1],
                            preferred_element_type=f32)
        acc = acc + jnp.dot(dn.reshape(MB * H, WC).astype(bf16), w_ref[2],
                            preferred_element_type=f32)
        acc = acc + b_ref[...]
        return jnp.maximum(acc, 0.0) if relu else acc          # (MB*H, W*C) f32

    h1 = conv3x3(z, wc1_ref, b1_ref, relu=True)
    h2 = conv3x3(h1, wc2_ref, b2_ref, relu=False)

    # ---- fused target gather: ONE block-diagonal one-hot matmul over MB*H -----
    grow = grow_ref[...]                                        # (MB*DT, 1) int32
    ww = ww_ref[...]                                            # (MB*DT, 1) int32
    c_iota = lax.broadcasted_iota(jnp.int32, (MB * DT, MB * H), 1)
    sel = (c_iota == grow).astype(f32)                          # block-diag one-hot
    rows = jnp.dot(sel, h2, preferred_element_type=f32)         # (MB*DT, W*C)
    j_iota = lax.broadcasted_iota(jnp.int32, (MB * DT, WC), 1)
    lo = ww * C
    pick = jnp.where((j_iota >= lo) & (j_iota < lo + C), rows, 0.0)
    zt = jnp.dot(pick, fold_ref[...], preferred_element_type=f32)   # (MB*DT, C)
    # NOTE: output block is (MB, DT, C) (C=32 lanes -> masked stores); it is a
    # few KiB per step so this is not worth the relayout needed to lane-pack it.
    out_ref[...] = zt.reshape(MB, DT, C).astype(out_ref.dtype)


# ---------------------------------------------------------------------------
# Wrapper: weight preprocessing (block-diag / block-banded forms), BlockSpecs.
# ---------------------------------------------------------------------------
def _prep_weights(params, H, W, DY):
    f32, bf16 = jnp.float32, jnp.bfloat16
    we = params["we"].astype(f32)                      # (2*DY, C)
    C = we.shape[1]
    we_y = we[:DY]                                     # (DY, C)
    we_m = we[DY:].sum(axis=0, keepdims=True)          # (1, C)  rank-1 mc path
    eye_w = jnp.eye(W, dtype=f32)
    wey = jnp.kron(eye_w, we_y)                        # (W*DY, W*C) block diagonal
    wem = jnp.kron(eye_w, we_m)                        # (W, W*C)
    rep = jnp.kron(eye_w, jnp.ones((1, DY), f32))      # (W, W*DY) in-kernel DY repeat
    be_t = jnp.tile(params["be"].reshape(1, C).astype(f32), (1, W))

    def banded(wk):                                    # wk: (3, 3, Ci, Co) HWIO
        taps = []
        for kh in range(3):
            t = jnp.zeros((W * C, W * C), f32)
            for kw in range(3):
                dw = kw - 1
                # T[wi*C+ci, wo*C+co] = wk[kh, kw, ci, co]  when wi - wo == dw
                t = t + jnp.kron(jnp.eye(W, W, k=-dw, dtype=f32), wk[kh, kw])
            taps.append(t)
        return jnp.stack(taps, axis=0)                 # (3, W*C, W*C), taps kh=0,1,2

    w1 = banded(params["w1"].astype(f32))
    w2 = banded(params["w2"].astype(f32))
    b1_t = jnp.tile(params["b1"].reshape(1, C).astype(f32), (1, W))
    b2_t = jnp.tile(params["b2"].reshape(1, C).astype(f32), (1, W))
    fold = jnp.kron(jnp.ones((W, 1), f32), jnp.eye(C, dtype=f32))  # (W*C, C)
    return dict(rep=rep.astype(bf16), wey=wey.astype(bf16), wem=wem.astype(bf16),
                be=be_t, wc1=w1.astype(bf16), b1=b1_t, wc2=w2.astype(bf16),
                b2=b2_t, fold=fold)


@functools.partial(jax.jit, static_argnames=("num_targets", "block_m"))
def gridded_convcnp_encoder(mc, y, mt, params, *, num_targets, block_m=None):
    m, H, W, DY = y.shape
    C = params["we"].shape[1]
    WC, WDY, DT = W * C, W * DY, num_targets

    if block_m is None:
        # Largest divisor of m up to 16: MB*H reaches 256 (fills the v6e/v7x MXU
        # M dimension for the K=512 conv matmuls) and, for m >= 32, keeps the
        # "parallel" grid axis >= 2 steps so v7x can shard across both TCs.
        block_m = max(d for d in range(1, min(m, 16) + 1) if m % d == 0)
    assert m % block_m == 0
    mb, nb = block_m, m // block_m

    w = _prep_weights(params, H, W, DY)

    # Layout plumbing on the XLA side (cheap): channels-last flattened into lanes.
    y_flat = y.astype(jnp.float32).reshape(m, H, WDY)
    mc_f = mc.astype(jnp.float32)                       # (m, H, W) -- no DY repeat

    # TODO(synk): torch's `z_grid[i][mt[i]]` is a ragged boolean gather; stacking
    # requires the same number of targets per batch, so we take that count
    # statically and extract row-major-ordered target indices with top_k.
    mt_flat = mt.reshape(m, H * W)
    score = mt_flat.astype(jnp.int32) * (H * W) - jnp.arange(H * W, dtype=jnp.int32)
    _, idx = lax.top_k(score, DT)                       # ascending True positions
    h_idx = (idx // W).astype(jnp.int32)                # (m, DT)
    w_idx = (idx % W).astype(jnp.int32)                 # (m, DT)
    # Global row index within the per-block (MB*H, W*C) grid: b_local*H + h_t.
    pos_in_block = (jnp.arange(m, dtype=jnp.int32) % mb)[:, None]
    grow = pos_in_block * H + h_idx                     # (m, DT)

    def rsh(a):                                         # (m, ...) -> (nb, mb, ...)
        return a.reshape((nb, mb) + a.shape[1:])

    y_in = rsh(y_flat)                                  # (nb, mb, H, WDY)
    mc_in = rsh(mc_f)                                   # (nb, mb, H, W)
    grow_in = grow.reshape(nb, mb * DT, 1)              # (nb, mb*DT, 1)
    ww_in = w_idx.reshape(nb, mb * DT, 1)               # (nb, mb*DT, 1)

    grid_spec = pltpu.PrefetchScalarGridSpec(
        num_scalar_prefetch=0,
        grid=(nb,),
        in_specs=[
            pl.BlockSpec((None, mb, H, WDY), lambda i: (i, 0, 0, 0)),   # y
            pl.BlockSpec((None, mb, H, W), lambda i: (i, 0, 0, 0)),     # mc
            pl.BlockSpec((None, mb * DT, 1), lambda i: (i, 0, 0)),      # global row idx
            pl.BlockSpec((None, mb * DT, 1), lambda i: (i, 0, 0)),      # target w idx
            pl.BlockSpec((W, WDY), lambda i: (0, 0)),                   # DY-repeat matrix
            pl.BlockSpec((WDY, WC), lambda i: (0, 0)),                  # encoder (y path)
            pl.BlockSpec((W, WC), lambda i: (0, 0)),                    # encoder (mc path)
            pl.BlockSpec((1, WC), lambda i: (0, 0)),                    # be
            pl.BlockSpec((3, WC, WC), lambda i: (0, 0, 0)),             # conv1 (banded)
            pl.BlockSpec((1, WC), lambda i: (0, 0)),                    # b1
            pl.BlockSpec((3, WC, WC), lambda i: (0, 0, 0)),             # conv2 (banded)
            pl.BlockSpec((1, WC), lambda i: (0, 0)),                    # b2
            pl.BlockSpec((WC, C), lambda i: (0, 0)),                    # channel fold
        ],
        out_specs=pl.BlockSpec((None, mb, DT, C), lambda i: (i, 0, 0, 0)),
    )

    zt = pl.pallas_call(
        _encoder_kernel,
        out_shape=jax.ShapeDtypeStruct((nb, mb, DT, C), jnp.float32),
        grid_spec=grid_spec,
        compiler_params=pltpu.CompilerParams(
            dimension_semantics=("parallel",)),   # batch axis independent (v7x 2 TCs)
    )(y_in, mc_in, grow_in, ww_in,
      w["rep"], w["wey"], w["wem"], w["be"],
      w["wc1"], w["b1"], w["wc2"], w["b2"], w["fold"])

    return zt.reshape(m, DT, C)                                  # [m, dt, C]


# ---------------------------------------------------------------------------
# Pure-JAX reference (mirrors the PyTorch forward).
# ---------------------------------------------------------------------------
def reference(mc, y, mt, params, *, num_targets):
    m, H, W, DY = y.shape
    C = params["we"].shape[1]
    mc_b = jnp.broadcast_to(mc[..., None], y.shape)
    yc = y * mc_b
    z = jnp.concatenate([yc, mc_b], axis=-1)
    z = jnp.einsum('mhwi,io->mhwo', z, params["we"],
                   precision=lax.Precision.HIGHEST) + params["be"]
    dn = ('NHWC', 'HWIO', 'NHWC')
    h = lax.conv_general_dilated(z, params["w1"], (1, 1), 'SAME',
                                 dimension_numbers=dn,
                                 precision=lax.Precision.HIGHEST) + params["b1"]
    h = jnp.maximum(h, 0.0)
    h = lax.conv_general_dilated(h, params["w2"], (1, 1), 'SAME',
                                 dimension_numbers=dn,
                                 precision=lax.Precision.HIGHEST) + params["b2"]
    mt_flat = mt.reshape(m, H * W)
    score = mt_flat.astype(jnp.int32) * (H * W) - jnp.arange(H * W, dtype=jnp.int32)
    _, idx = lax.top_k(score, num_targets)
    h_flat = h.reshape(m, H * W, C)
    return jnp.take_along_axis(h_flat, idx[..., None], axis=1)


if __name__ == "__main__":
    M, H, W, DY, C = 2, 16, 16, 4, 32
    DT = 16  # targets per batch element

    key = jax.random.PRNGKey(0)
    k_y, k_mc, k_mt, k_we, k_be, k_w1, k_b1, k_w2, k_b2 = jax.random.split(key, 9)

    # Inputs.
    y = jax.random.normal(k_y, (M, H, W, DY), dtype=jnp.float32)
    mc = (jax.random.uniform(k_mc, (M, H, W)) < 0.5).astype(jnp.float32)
    # Target mask with exactly DT True entries per batch element.
    perms = jax.vmap(lambda k: jax.random.permutation(k, H * W))(
        jax.random.split(k_mt, M))
    tgt_idx = jnp.sort(perms[:, :DT], axis=1)
    mt = (jnp.zeros((M, H * W), dtype=bool)
          .at[jnp.arange(M)[:, None], tgt_idx].set(True)
          .reshape(M, H, W))

    # Parameters: z_encoder Linear(2*DY -> C); conv_net = two 3x3 convs (HWIO).
    params = {
        "we": 0.3 * jax.random.normal(k_we, (2 * DY, C), dtype=jnp.float32),
        "be": 0.1 * jax.random.normal(k_be, (1, C), dtype=jnp.float32),
        "w1": 0.1 * jax.random.normal(k_w1, (3, 3, C, C), dtype=jnp.float32),
        "b1": 0.1 * jax.random.normal(k_b1, (1, C), dtype=jnp.float32),
        "w2": 0.1 * jax.random.normal(k_w2, (3, 3, C, C), dtype=jnp.float32),
        "b2": 0.1 * jax.random.normal(k_b2, (1, C), dtype=jnp.float32),
    }

    zt = gridded_convcnp_encoder(mc, y, mt, params, num_targets=DT)
    zt = jax.block_until_ready(zt)
    assert zt.shape == (M, DT, C), zt.shape

    zt_ref = reference(mc, y, mt, params, num_targets=DT)
    # NOTE: matmul operands are intentionally bf16 (f32 accumulation), so the
    # comparison against the f32 HIGHEST-precision reference uses a loose tol.
    np.testing.assert_allclose(np.asarray(zt), np.asarray(zt_ref),
                               rtol=3e-2, atol=3e-2)
    print("KERNEL_OK")
</pallas_src>

<mosaic_0001>
module attributes {stable_mosaic.version = 11 : i64} {
  func.func @_encoder_kernel(%arg0: i32, %arg1: memref<1x2x16x64xf32, #tpu.memory_space<vmem>>, %arg2: memref<1x2x16x16xf32, #tpu.memory_space<vmem>>, %arg3: memref<1x32x1xi32, #tpu.memory_space<vmem>>, %arg4: memref<1x32x1xi32, #tpu.memory_space<vmem>>, %arg5: memref<16x64xbf16, #tpu.memory_space<vmem>>, %arg6: memref<64x512xbf16, #tpu.memory_space<vmem>>, %arg7: memref<16x512xbf16, #tpu.memory_space<vmem>>, %arg8: memref<1x512xf32, #tpu.memory_space<vmem>>, %arg9: memref<3x512x512xbf16, #tpu.memory_space<vmem>>, %arg10: memref<1x512xf32, #tpu.memory_space<vmem>>, %arg11: memref<3x512x512xbf16, #tpu.memory_space<vmem>>, %arg12: memref<1x512xf32, #tpu.memory_space<vmem>>, %arg13: memref<512x32xf32, #tpu.memory_space<vmem>>, %arg14: memref<1x2x16x32xf32, #tpu.memory_space<vmem>>) attributes {dimension_semantics = [#tpu.dimension_semantics<parallel>], iteration_bounds = array<i64: 1>, scalar_prefetch = 0 : i64, scratch_operands = 0 : i64, tpu.core_type = #tpu.core_type<tc>, window_params = [{transform_indices = @transform_0, window_bounds = array<i64: 1, 2, 16, 64>}, {transform_indices = @transform_1, window_bounds = array<i64: 1, 2, 16, 16>}, {transform_indices = @transform_2, window_bounds = array<i64: 1, 32, 1>}, {transform_indices = @transform_3, window_bounds = array<i64: 1, 32, 1>}, {pipeline_mode = #tpu.pipeline_mode<synchronous>, transform_indices = @transform_4, window_bounds = array<i64: 16, 64>}, {pipeline_mode = #tpu.pipeline_mode<synchronous>, transform_indices = @transform_5, window_bounds = array<i64: 64, 512>}, {pipeline_mode = #tpu.pipeline_mode<synchronous>, transform_indices = @transform_6, window_bounds = array<i64: 16, 512>}, {pipeline_mode = #tpu.pipeline_mode<synchronous>, transform_indices = @transform_7, window_bounds = array<i64: 1, 512>}, {pipeline_mode = #tpu.pipeline_mode<synchronous>, transform_indices = @transform_8, window_bounds = array<i64: 3, 512, 512>}, {pipeline_mode = #tpu.pipeline_mode<synchronous>, transform_indices = @transform_9, window_bounds = array<i64: 1, 512>}, {pipeline_mode = #tpu.pipeline_mode<synchronous>, transform_indices = @transform_10, window_bounds = array<i64: 3, 512, 512>}, {pipeline_mode = #tpu.pipeline_mode<synchronous>, transform_indices = @transform_11, window_bounds = array<i64: 1, 512>}, {pipeline_mode = #tpu.pipeline_mode<synchronous>, transform_indices = @transform_12, window_bounds = array<i64: 512, 32>}, {transform_indices = @transform_13, window_bounds = array<i64: 1, 2, 16, 32>}]} {
    %c0 = arith.constant 0 : index
    %c0_0 = arith.constant 0 : index
    %c0_1 = arith.constant 0 : index
    %c0_2 = arith.constant 0 : index
    %0 = vector.load %arg2[%c0, %c0_0, %c0_1, %c0_2] : memref<1x2x16x16xf32, #tpu.memory_space<vmem>>, vector<1x2x16x16xf32>
    %1 = vector.shape_cast %0 : vector<1x2x16x16xf32> to vector<2x16x16xf32>
    %2 = vector.shape_cast %1 : vector<2x16x16xf32> to vector<32x16xf32>
    %3 = arith.truncf %2 : vector<32x16xf32> to vector<32x16xbf16>
    %c0_3 = arith.constant 0 : index
    %c0_4 = arith.constant 0 : index
    %4 = vector.load %arg5[%c0_3, %c0_4] : memref<16x64xbf16, #tpu.memory_space<vmem>>, vector<16x64xbf16>
    %cst = arith.constant dense<0.000000e+00> : vector<32x64xf32>
    %5 = tpu.matmul %3, %4, %cst {dimension_numbers = #tpu.dot_dimension_numbers<[1], [0], [0], [1], [0, 0, 1, 1], [], []>} : vector<32x16xbf16>, vector<16x64xbf16>, vector<32x64xf32> -> vector<32x64xf32>
    %c0_5 = arith.constant 0 : index
    %c0_6 = arith.constant 0 : index
    %c0_7 = arith.constant 0 : index
    %c0_8 = arith.constant 0 : index
    %6 = vector.load %arg1[%c0_5, %c0_6, %c0_7, %c0_8] : memref<1x2x16x64xf32, #tpu.memory_space<vmem>>, vector<1x2x16x64xf32>
    %7 = vector.shape_cast %6 : vector<1x2x16x64xf32> to vector<2x16x64xf32>
    %8 = vector.shape_cast %7 : vector<2x16x64xf32> to vector<32x64xf32>
    %9 = arith.mulf %8, %5 : vector<32x64xf32>
    %10 = arith.truncf %9 : vector<32x64xf32> to vector<32x64xbf16>
    %c0_9 = arith.constant 0 : index
    %c0_10 = arith.constant 0 : index
    %11 = vector.load %arg6[%c0_9, %c0_10] : memref<64x512xbf16, #tpu.memory_space<vmem>>, vector<64x512xbf16>
    %cst_11 = arith.constant dense<0.000000e+00> : vector<32x512xf32>
    %12 = tpu.matmul %10, %11, %cst_11 {dimension_numbers = #tpu.dot_dimension_numbers<[1], [0], [0], [1], [0, 0, 1, 1], [], []>} : vector<32x64xbf16>, vector<64x512xbf16>, vector<32x512xf32> -> vector<32x512xf32>
    %c0_12 = arith.constant 0 : index
    %c0_13 = arith.constant 0 : index
    %13 = vector.load %arg7[%c0_12, %c0_13] : memref<16x512xbf16, #tpu.memory_space<vmem>>, vector<16x512xbf16>
    %cst_14 = arith.constant dense<0.000000e+00> : vector<32x512xf32>
    %14 = tpu.matmul %3, %13, %cst_14 {dimension_numbers = #tpu.dot_dimension_numbers<[1], [0], [0], [1], [0, 0, 1, 1], [], []>} : vector<32x16xbf16>, vector<16x512xbf16>, vector<32x512xf32> -> vector<32x512xf32>
    %15 = arith.addf %12, %14 : vector<32x512xf32>
    %c0_15 = arith.constant 0 : index
    %c0_16 = arith.constant 0 : index
    %16 = vector.load %arg8[%c0_15, %c0_16] : memref<1x512xf32, #tpu.memory_space<vmem>>, vector<1x512xf32>
    %17 = vector.broadcast %16 : vector<1x512xf32> to vector<32x512xf32>
    %18 = arith.addf %15, %17 : vector<32x512xf32>
    %19 = tpu.iota {dimensions = array<i32: 1>} : vector<2x16x1xi32>
    %c0_i32 = arith.constant 0 : i32
    %20 = vector.broadcast %c0_i32 : i32 to vector<2x16x1xi32>
    %21 = arith.cmpi sgt, %19, %20 : vector<2x16x1xi32>
    %22 = arith.extui %21 : vector<2x16x1xi1> to vector<2x16x1xi32>
    %23 = arith.sitofp %22 : vector<2x16x1xi32> to vector<2x16x1xf32>
    %c15_i32 = arith.constant 15 : i32
    %24 = vector.broadcast %c15_i32 : i32 to vector<2x16x1xi32>
    %25 = arith.cmpi slt, %19, %24 : vector<2x16x1xi32>
    %26 = arith.extui %25 : vector<2x16x1xi1> to vector<2x16x1xi32>
    %27 = arith.sitofp %26 : vector<2x16x1xi32> to vector<2x16x1xf32>
    %28 = vector.shape_cast %18 : vector<32x512xf32> to vector<2x16x512xf32>
    %c1_i32 = arith.constant 1 : i32
    %29 = tpu.dynamic_rotate %28 by %c1_i32 dim 1 : vector<2x16x512xf32>, i32 -> vector<2x16x512xf32>
    %30 = vector.broadcast %23 : vector<2x16x1xf32> to vector<2x16x512xf32>
    %31 = arith.mulf %29, %30 : vector<2x16x512xf32>
    %c15_i32_17 = arith.constant 15 : i32
    %32 = tpu.dynamic_rotate %28 by %c15_i32_17 dim 1 : vector<2x16x512xf32>, i32 -> vector<2x16x512xf32>
    %33 = vector.broadcast %27 : vector<2x16x1xf32> to vector<2x16x512xf32>
    %34 = arith.mulf %32, %33 : vector<2x16x512xf32>
    %35 = vector.shape_cast %31 : vector<2x16x512xf32> to vector<32x512xf32>
    %36 = arith.truncf %35 : vector<32x512xf32> to vector<32x512xbf16>
    %c0_18 = arith.constant 0 : index
    %c0_19 = arith.constant 0 : index
    %c0_20 = arith.constant 0 : index
    %37 = vector.load %arg9[%c0_18, %c0_19, %c0_20] : memref<3x512x512xbf16, #tpu.memory_space<vmem>>, vector<1x512x512xbf16>
    %38 = vector.shape_cast %37 : vector<1x512x512xbf16> to vector<512x512xbf16>
    %cst_21 = arith.constant dense<0.000000e+00> : vector<32x512xf32>
    %39 = tpu.matmul %36, %38, %cst_21 {dimension_numbers = #tpu.dot_dimension_numbers<[1], [0], [0], [1], [0, 0, 1, 1], [], []>} : vector<32x512xbf16>, vector<512x512xbf16>, vector<32x512xf32> -> vector<32x512xf32>
    %40 = vector.shape_cast %28 : vector<2x16x512xf32> to vector<32x512xf32>
    %41 = arith.truncf %40 : vector<32x512xf32> to vector<32x512xbf16>
    %c1 = arith.constant 1 : index
    %c0_22 = arith.constant 0 : index
    %c0_23 = arith.constant 0 : index
    %42 = vector.load %arg9[%c1, %c0_22, %c0_23] : memref<3x512x512xbf16, #tpu.memory_space<vmem>>, vector<1x512x512xbf16>
    %43 = vector.shape_cast %42 : vector<1x512x512xbf16> to vector<512x512xbf16>
    %cst_24 = arith.constant dense<0.000000e+00> : vector<32x512xf32>
    %44 = tpu.matmul %41, %43, %cst_24 {dimension_numbers = #tpu.dot_dimension_numbers<[1], [0], [0], [1], [0, 0, 1, 1], [], []>} : vector<32x512xbf16>, vector<512x512xbf16>, vector<32x512xf32> -> vector<32x512xf32>
    %45 = arith.addf %39, %44 : vector<32x512xf32>
    %46 = vector.shape_cast %34 : vector<2x16x512xf32> to vector<32x512xf32>
    %47 = arith.truncf %46 : vector<32x512xf32> to vector<32x512xbf16>
    %c2 = arith.constant 2 : index
    %c0_25 = arith.constant 0 : index
    %c0_26 = arith.constant 0 : index
    %48 = vector.load %arg9[%c2, %c0_25, %c0_26] : memref<3x512x512xbf16, #tpu.memory_space<vmem>>, vector<1x512x512xbf16>
    %49 = vector.shape_cast %48 : vector<1x512x512xbf16> to vector<512x512xbf16>
    %cst_27 = arith.constant dense<0.000000e+00> : vector<32x512xf32>
    %50 = tpu.matmul %47, %49, %cst_27 {dimension_numbers = #tpu.dot_dimension_numbers<[1], [0], [0], [1], [0, 0, 1, 1], [], []>} : vector<32x512xbf16>, vector<512x512xbf16>, vector<32x512xf32> -> vector<32x512xf32>
    %51 = arith.addf %45, %50 : vector<32x512xf32>
    %c0_28 = arith.constant 0 : index
    %c0_29 = arith.constant 0 : index
    %52 = vector.load %arg10[%c0_28, %c0_29] : memref<1x512xf32, #tpu.memory_space<vmem>>, vector<1x512xf32>
    %53 = vector.broadcast %52 : vector<1x512xf32> to vector<32x512xf32>
    %54 = arith.addf %51, %53 : vector<32x512xf32>
    %cst_30 = arith.constant 0.000000e+00 : f32
    %55 = vector.broadcast %cst_30 : f32 to vector<32x512xf32>
    %56 = arith.maximumf %54, %55 : vector<32x512xf32>
    %57 = vector.shape_cast %56 : vector<32x512xf32> to vector<2x16x512xf32>
    %c1_i32_31 = arith.constant 1 : i32
    %58 = tpu.dynamic_rotate %57 by %c1_i32_31 dim 1 : vector<2x16x512xf32>, i32 -> vector<2x16x512xf32>
    %59 = vector.broadcast %23 : vector<2x16x1xf32> to vector<2x16x512xf32>
    %60 = arith.mulf %58, %59 : vector<2x16x512xf32>
    %c15_i32_32 = arith.constant 15 : i32
    %61 = tpu.dynamic_rotate %57 by %c15_i32_32 dim 1 : vector<2x16x512xf32>, i32 -> vector<2x16x512xf32>
    %62 = vector.broadcast %27 : vector<2x16x1xf32> to vector<2x16x512xf32>
    %63 = arith.mulf %61, %62 : vector<2x16x512xf32>
    %64 = vector.shape_cast %60 : vector<2x16x512xf32> to vector<32x512xf32>
    %65 = arith.truncf %64 : vector<32x512xf32> to vector<32x512xbf16>
    %c0_33 = arith.constant 0 : index
    %c0_34 = arith.constant 0 : index
    %c0_35 = arith.constant 0 : index
    %66 = vector.load %arg11[%c0_33, %c0_34, %c0_35] : memref<3x512x512xbf16, #tpu.memory_space<vmem>>, vector<1x512x512xbf16>
    %67 = vector.shape_cast %66 : vector<1x512x512xbf16> to vector<512x512xbf16>
    %cst_36 = arith.constant dense<0.000000e+00> : vector<32x512xf32>
    %68 = tpu.matmul %65, %67, %cst_36 {dimension_numbers = #tpu.dot_dimension_numbers<[1], [0], [0], [1], [0, 0, 1, 1], [], []>} : vector<32x512xbf16>, vector<512x512xbf16>, vector<32x512xf32> -> vector<32x512xf32>
    %69 = vector.shape_cast %57 : vector<2x16x512xf32> to vector<32x512xf32>
    %70 = arith.truncf %69 : vector<32x512xf32> to vector<32x512xbf16>
    %c1_37 = arith.constant 1 : index
    %c0_38 = arith.constant 0 : index
    %c0_39 = arith.constant 0 : index
    %71 = vector.load %arg11[%c1_37, %c0_38, %c0_39] : memref<3x512x512xbf16, #tpu.memory_space<vmem>>, vector<1x512x512xbf16>
    %72 = vector.shape_cast %71 : vector<1x512x512xbf16> to vector<512x512xbf16>
    %cst_40 = arith.constant dense<0.000000e+00> : vector<32x512xf32>
    %73 = tpu.matmul %70, %72, %cst_40 {dimension_numbers = #tpu.dot_dimension_numbers<[1], [0], [0], [1], [0, 0, 1, 1], [], []>} : vector<32x512xbf16>, vector<512x512xbf16>, vector<32x512xf32> -> vector<32x512xf32>
    %74 = arith.addf %68, %73 : vector<32x512xf32>
    %75 = vector.shape_cast %63 : vector<2x16x512xf32> to vector<32x512xf32>
    %76 = arith.truncf %75 : vector<32x512xf32> to vector<32x512xbf16>
    %c2_41 = arith.constant 2 : index
    %c0_42 = arith.constant 0 : index
    %c0_43 = arith.constant 0 : index
    %77 = vector.load %arg11[%c2_41, %c0_42, %c0_43] : memref<3x512x512xbf16, #tpu.memory_space<vmem>>, vector<1x512x512xbf16>
    %78 = vector.shape_cast %77 : vector<1x512x512xbf16> to vector<512x512xbf16>
    %cst_44 = arith.constant dense<0.000000e+00> : vector<32x512xf32>
    %79 = tpu.matmul %76, %78, %cst_44 {dimension_numbers = #tpu.dot_dimension_numbers<[1], [0], [0], [1], [0, 0, 1, 1], [], []>} : vector<32x512xbf16>, vector<512x512xbf16>, vector<32x512xf32> -> vector<32x512xf32>
    %80 = arith.addf %74, %79 : vector<32x512xf32>
    %c0_45 = arith.constant 0 : index
    %c0_46 = arith.constant 0 : index
    %81 = vector.load %arg12[%c0_45, %c0_46] : memref<1x512xf32, #tpu.memory_space<vmem>>, vector<1x512xf32>
    %82 = vector.broadcast %81 : vector<1x512xf32> to vector<32x512xf32>
    %83 = arith.addf %80, %82 : vector<32x512xf32>
    %c0_47 = arith.constant 0 : index
    %c0_48 = arith.constant 0 : index
    %c0_49 = arith.constant 0 : index
    %84 = vector.load %arg3[%c0_47, %c0_48, %c0_49] : memref<1x32x1xi32, #tpu.memory_space<vmem>>, vector<1x32x1xi32>
    %85 = vector.shape_cast %84 : vector<1x32x1xi32> to vector<32x1xi32>
    %c0_50 = arith.constant 0 : index
    %c0_51 = arith.constant 0 : index
    %c0_52 = arith.constant 0 : index
    %86 = vector.load %arg4[%c0_50, %c0_51, %c0_52] : memref<1x32x1xi32, #tpu.memory_space<vmem>>, vector<1x32x1xi32>
    %87 = vector.shape_cast %86 : vector<1x32x1xi32> to vector<32x1xi32>
    %88 = tpu.iota {dimensions = array<i32: 1>} : vector<32x32xi32>
    %89 = vector.broadcast %85 : vector<32x1xi32> to vector<32x32xi32>
    %90 = arith.cmpi eq, %88, %89 : vector<32x32xi32>
    %91 = arith.extui %90 : vector<32x32xi1> to vector<32x32xi32>
    %92 = arith.sitofp %91 : vector<32x32xi32> to vector<32x32xf32>
    %cst_53 = arith.constant dense<0.000000e+00> : vector<32x512xf32>
    %93 = tpu.matmul %92, %83, %cst_53 {dimension_numbers = #tpu.dot_dimension_numbers<[1], [0], [0], [1], [0, 0, 1, 1], [], []>} : vector<32x32xf32>, vector<32x512xf32>, vector<32x512xf32> -> vector<32x512xf32>
    %94 = tpu.iota {dimensions = array<i32: 1>} : vector<32x512xi32>
    %c32_i32 = arith.constant 32 : i32
    %95 = vector.broadcast %c32_i32 : i32 to vector<32x1xi32>
    %96 = arith.muli %87, %95 : vector<32x1xi32>
    %97 = vector.broadcast %96 : vector<32x1xi32> to vector<32x512xi32>
    %98 = arith.cmpi sge, %94, %97 : vector<32x512xi32>
    %c32_i32_54 = arith.constant 32 : i32
    %99 = vector.broadcast %c32_i32_54 : i32 to vector<32x1xi32>
    %100 = arith.addi %96, %99 : vector<32x1xi32>
    %101 = vector.broadcast %100 : vector<32x1xi32> to vector<32x512xi32>
    %102 = arith.cmpi slt, %94, %101 : vector<32x512xi32>
    %103 = arith.andi %98, %102 : vector<32x512xi1>
    %cst_55 = arith.constant 0.000000e+00 : f32
    %104 = vector.broadcast %cst_55 : f32 to vector<32x512xf32>
    %105 = arith.select %103, %93, %104 : vector<32x512xi1>, vector<32x512xf32>
    %c0_56 = arith.constant 0 : index
    %c0_57 = arith.constant 0 : index
    %106 = vector.load %arg13[%c0_56, %c0_57] : memref<512x32xf32, #tpu.memory_space<vmem>>, vector<512x32xf32>
    %cst_58 = arith.constant dense<0.000000e+00> : vector<32x32xf32>
    %107 = tpu.matmul %105, %106, %cst_58 {dimension_numbers = #tpu.dot_dimension_numbers<[1], [0], [0], [1], [0, 0, 1, 1], [], []>} : vector<32x512xf32>, vector<512x32xf32>, vector<32x32xf32> -> vector<32x32xf32>
    %108 = vector.shape_cast %107 : vector<32x32xf32> to vector<2x16x32xf32>
    %c0_59 = arith.constant 0 : index
    %c0_60 = arith.constant 0 : index
    %c0_61 = arith.constant 0 : index
    %c0_62 = arith.constant 0 : index
    %109 = vector.load %arg14[%c0_59, %c0_60, %c0_61, %c0_62] : memref<1x2x16x32xf32, #tpu.memory_space<vmem>>, vector<1x2x16x32xf32>
    %110 = vector.shape_cast %109 : vector<1x2x16x32xf32> to vector<2x16x32xf32>
    %111 = vector.shape_cast %108 : vector<2x16x32xf32> to vector<1x2x16x32xf32>
    tpu.vector_store %arg14[%c0_59, %c0_60, %c0_61, %c0_62], %111 {strides = array<i32>} : memref<1x2x16x32xf32, #tpu.memory_space<vmem>>, vector<1x2x16x32xf32>,
    return
  }
  func.func @transform_0(%arg0: i32) -> (i32, i32, i32, i32) {
    %c0_i32 = arith.constant 0 : i32
    %c0_i32_0 = arith.constant 0 : i32
    %c0_i32_1 = arith.constant 0 : i32
    %c0_i32_2 = arith.constant 0 : i32
    return %arg0, %c0_i32, %c0_i32_0, %c0_i32_1 : i32, i32, i32, i32
  }
  func.func @transform_1(%arg0: i32) -> (i32, i32, i32, i32) {
    %c0_i32 = arith.constant 0 : i32
    %c0_i32_0 = arith.constant 0 : i32
    %c0_i32_1 = arith.constant 0 : i32
    %c0_i32_2 = arith.constant 0 : i32
    return %arg0, %c0_i32, %c0_i32_0, %c0_i32_1 : i32, i32, i32, i32
  }
  func.func @transform_2(%arg0: i32) -> (i32, i32, i32) {
    %c0_i32 = arith.constant 0 : i32
    %c0_i32_0 = arith.constant 0 : i32
    %c0_i32_1 = arith.constant 0 : i32
    return %arg0, %c0_i32, %c0_i32_0 : i32, i32, i32
  }
  func.func @transform_3(%arg0: i32) -> (i32, i32, i32) {
    %c0_i32 = arith.constant 0 : i32
    %c0_i32_0 = arith.constant 0 : i32
    %c0_i32_1 = arith.constant 0 : i32
    return %arg0, %c0_i32, %c0_i32_0 : i32, i32, i32
  }
  func.func @transform_4(%arg0: i32) -> (i32, i32) {
    %c0_i32 = arith.constant 0 : i32
    %c0_i32_0 = arith.constant 0 : i32
    %c0_i32_1 = arith.constant 0 : i32
    return %c0_i32, %c0_i32_0 : i32, i32
  }
  func.func @transform_5(%arg0: i32) -> (i32, i32) {
    %c0_i32 = arith.constant 0 : i32
    %c0_i32_0 = arith.constant 0 : i32
    %c0_i32_1 = arith.constant 0 : i32
    return %c0_i32, %c0_i32_0 : i32, i32
  }
  func.func @transform_6(%arg0: i32) -> (i32, i32) {
    %c0_i32 = arith.constant 0 : i32
    %c0_i32_0 = arith.constant 0 : i32
    %c0_i32_1 = arith.constant 0 : i32
    return %c0_i32, %c0_i32_0 : i32, i32
  }
  func.func @transform_7(%arg0: i32) -> (i32, i32) {
    %c0_i32 = arith.constant 0 : i32
    %c0_i32_0 = arith.constant 0 : i32
    %c0_i32_1 = arith.constant 0 : i32
    return %c0_i32, %c0_i32_0 : i32, i32
  }
  func.func @transform_8(%arg0: i32) -> (i32, i32, i32) {
    %c0_i32 = arith.constant 0 : i32
    %c0_i32_0 = arith.constant 0 : i32
    %c0_i32_1 = arith.constant 0 : i32
    %c0_i32_2 = arith.constant 0 : i32
    return %c0_i32, %c0_i32_0, %c0_i32_1 : i32, i32, i32
  }
  func.func @transform_9(%arg0: i32) -> (i32, i32) {
    %c0_i32 = arith.constant 0 : i32
    %c0_i32_0 = arith.constant 0 : i32
    %c0_i32_1 = arith.constant 0 : i32
    return %c0_i32, %c0_i32_0 : i32, i32
  }
  func.func @transform_10(%arg0: i32) -> (i32, i32, i32) {
    %c0_i32 = arith.constant 0 : i32
    %c0_i32_0 = arith.constant 0 : i32
    %c0_i32_1 = arith.constant 0 : i32
    %c0_i32_2 = arith.constant 0 : i32
    return %c0_i32, %c0_i32_0, %c0_i32_1 : i32, i32, i32
  }
  func.func @transform_11(%arg0: i32) -> (i32, i32) {
    %c0_i32 = arith.constant 0 : i32
    %c0_i32_0 = arith.constant 0 : i32
    %c0_i32_1 = arith.constant 0 : i32
    return %c0_i32, %c0_i32_0 : i32, i32
  }
  func.func @transform_12(%arg0: i32) -> (i32, i32) {
    %c0_i32 = arith.constant 0 : i32
    %c0_i32_0 = arith.constant 0 : i32
    %c0_i32_1 = arith.constant 0 : i32
    return %c0_i32, %c0_i32_0 : i32, i32
  }
  func.func @transform_13(%arg0: i32) -> (i32, i32, i32, i32) {
    %c0_i32 = arith.constant 0 : i32
    %c0_i32_0 = arith.constant 0 : i32
    %c0_i32_1 = arith.constant 0 : i32
    %c0_i32_2 = arith.constant 0 : i32
    return %arg0, %c0_i32, %c0_i32_0, %c0_i32_1 : i32, i32, i32, i32
  }
}

</mosaic_0001>

<llo_original>
// kernel: gridded_convcnp_encoder.1
$region0: #{gridded_convcnp_encoder.1}
  #allocation0 [shape = 'u32[]', space=smem, size = 0x4, offset = 0x4, fixed_abs, tag = 'smem constant byte address 0x4 - core index']
  #allocation1 [shape = 'u32[144,128]{1,0:T(1,128)}', space=vmem, size = 0x12000, scoped, tag = 'internal scratch']
  %s0 = inlined_call_operand.vmem [shape: f32[1,2,16,64], index: 0, kind: input, shape index: {}]
  %s1 = inlined_call_operand.vmem [shape: f32[1,2,16,16], index: 1, kind: input, shape index: {}]
  %s2 = inlined_call_operand.vmem [shape: s32[1,32,1], index: 2, kind: input, shape index: {}]
  %s3 = inlined_call_operand.vmem [shape: s32[1,32,1], index: 3, kind: input, shape index: {}]
  %s4 = inlined_call_operand.vmem [shape: bf16[16,64], index: 4, kind: input, shape index: {}]
  %s5 = inlined_call_operand.vmem [shape: bf16[64,512], index: 5, kind: input, shape index: {}]
  %s6 = inlined_call_operand.vmem [shape: bf16[16,512], index: 6, kind: input, shape index: {}]
  %s7 = inlined_call_operand.vmem [shape: f32[1,512], index: 7, kind: input, shape index: {}]
  %s8 = inlined_call_operand.vmem [shape: bf16[3,512,512], index: 8, kind: input, shape index: {}]
  %s9 = inlined_call_operand.vmem [shape: f32[1,512], index: 9, kind: input, shape index: {}]
  %s10 = inlined_call_operand.vmem [shape: bf16[3,512,512], index: 10, kind: input, shape index: {}]
  %s11 = inlined_call_operand.vmem [shape: f32[1,512], index: 11, kind: input, shape index: {}]
  %s12 = inlined_call_operand.vmem [shape: f32[512,32], index: 12, kind: input, shape index: {}]
  %s13 = inlined_call_operand.hbm [shape: f32[1,2,16,32], index: 13, kind: output, shape index: {}]
  %s14 = sld [smem:[#allocation0]]
  $region62: #{gridded_convcnp_encoder.1} parent=0
    _
  %s16 = ssub.s32 1, %s14
  %s17 = scalar_select 0, %s16, %s14
  $region1: #{gridded_convcnp_encoder.1} parent=0
    #allocation2 [shape = 'u8[16384]{0}', space=vmem, size = 0x4000, scoped, tag = 'output window, operand 0, single buffered']
    #allocation3 [shape = 's32[1]{0}', space=sflag, size = 0x4, scoped, tag = 'scoped memory for gridded_convcnp_encoder.1']
    %18 = vsyncpa [#allocation3], 0
    // Predicated region
    $region2: #{gridded_convcnp_encoder.1} parent=1 // pred_check
      _
    $region3: #{gridded_convcnp_encoder.1} parent=1 // pred_check_branch
      %20 = sbr.rel (0) target = $region5
    $region4: #{gridded_convcnp_encoder.1} parent=1 // pred_region
      _
    $region5: #{gridded_convcnp_encoder.1} parent=1 // pred_fallthru
      _
    // Predicated region
    $region6: #{gridded_convcnp_encoder.1} parent=1 // pred_check
      _
    $region7: #{gridded_convcnp_encoder.1} parent=1 // pred_check_branch
      %22 = sbr.rel (0) target = $region9
    $region8: #{gridded_convcnp_encoder.1} parent=1 // pred_region
      _
    $region9: #{gridded_convcnp_encoder.1} parent=1 // pred_fallthru
      _
    // Predicated region
    $region10: #{gridded_convcnp_encoder.1} parent=1 // pred_check
      _
    $region11: #{gridded_convcnp_encoder.1} parent=1 // pred_check_branch
      %24 = sbr.rel (0) target = $region13
    $region12: #{gridded_convcnp_encoder.1} parent=1 // pred_region
      _
    $region13: #{gridded_convcnp_encoder.1} parent=1 // pred_fallthru
      _
    // Predicated region
    $region14: #{gridded_convcnp_encoder.1} parent=1 // pred_check
      _
    $region15: #{gridded_convcnp_encoder.1} parent=1 // pred_check_branch
      %26 = sbr.rel (0) target = $region17
    $region16: #{gridded_convcnp_encoder.1} parent=1 // pred_region
      _
    $region17: #{gridded_convcnp_encoder.1} parent=1 // pred_fallthru
      _
    // Predicated region
    $region18: #{gridded_convcnp_encoder.1} parent=1 // pred_check
      _
    $region19: #{gridded_convcnp_encoder.1} parent=1 // pred_check_branch
      %28 = sbr.rel (0) target = $region21
    $region20: #{gridded_convcnp_encoder.1} parent=1 // pred_region
      _
    $region21: #{gridded_convcnp_encoder.1} parent=1 // pred_fallthru
      _
    // Predicated region
    $region22: #{gridded_convcnp_encoder.1} parent=1 // pred_check
      _
    $region23: #{gridded_convcnp_encoder.1} parent=1 // pred_check_branch
      %30 = sbr.rel (0) target = $region25
    $region24: #{gridded_convcnp_encoder.1} parent=1 // pred_region
      _
    $region25: #{gridded_convcnp_encoder.1} parent=1 // pred_fallthru
      _
    // Predicated region
    $region26: #{gridded_convcnp_encoder.1} parent=1 // pred_check
      _
    $region27: #{gridded_convcnp_encoder.1} parent=1 // pred_check_branch
      %32 = sbr.rel (0) target = $region29
    $region28: #{gridded_convcnp_encoder.1} parent=1 // pred_region
      _
    $region29: #{gridded_convcnp_encoder.1} parent=1 // pred_fallthru
      _
    // Predicated region
    $region30: #{gridded_convcnp_encoder.1} parent=1 // pred_check
      _
    $region31: #{gridded_convcnp_encoder.1} parent=1 // pred_check_branch
      %34 = sbr.rel (0) target = $region33
    $region32: #{gridded_convcnp_encoder.1} parent=1 // pred_region
      _
    $region33: #{gridded_convcnp_encoder.1} parent=1 // pred_fallthru
      _
    // Predicated region
    $region34: #{gridded_convcnp_encoder.1} parent=1 // pred_check
      _
    $region35: #{gridded_convcnp_encoder.1} parent=1 // pred_check_branch
      %36 = sbr.rel (0) target = $region37
    $region36: #{gridded_convcnp_encoder.1} parent=1 // pred_region
      _
    $region37: #{gridded_convcnp_encoder.1} parent=1 // pred_fallthru
      _
    // Predicated region
    $region38: #{gridded_convcnp_encoder.1} parent=1 // pred_check
      _
    $region39: #{gridded_convcnp_encoder.1} parent=1 // pred_check_branch
      %38 = sbr.rel (0) target = $region41
    $region40: #{gridded_convcnp_encoder.1} parent=1 // pred_region
      _
    $region41: #{gridded_convcnp_encoder.1} parent=1 // pred_fallthru
      _
    // Predicated region
    $region42: #{gridded_convcnp_encoder.1} parent=1 // pred_check
      _
    $region43: #{gridded_convcnp_encoder.1} parent=1 // pred_check_branch
      %40 = sbr.rel (0) target = $region45
    $region44: #{gridded_convcnp_encoder.1} parent=1 // pred_region
      _
    $region45: #{gridded_convcnp_encoder.1} parent=1 // pred_fallthru
      _
    // Predicated region
    $region46: #{gridded_convcnp_encoder.1} parent=1 // pred_check
      _
    $region47: #{gridded_convcnp_encoder.1} parent=1 // pred_check_branch
      %42 = sbr.rel (0) target = $region49
    $region48: #{gridded_convcnp_encoder.1} parent=1 // pred_region
      _
    $region49: #{gridded_convcnp_encoder.1} parent=1 // pred_fallthru
      _
    // Predicated region
    $region50: #{gridded_convcnp_encoder.1} parent=1 // pred_check
      _
    $region51: #{gridded_convcnp_encoder.1} parent=1 // pred_check_branch
      %44 = sbr.rel (0) target = $region53
    $region52: #{gridded_convcnp_encoder.1} parent=1 // pred_region
      _
    $region53: #{gridded_convcnp_encoder.1} parent=1 // pred_fallthru
      _
    %v46 = vld [vmem:[%s1] sm:$0xff]
    %v47 = vld [vmem:[%s1 + $0x8] sm:$0xff]
    %v48 = vld [vmem:[%s1 + $0x10] sm:$0xff]
    %v49 = vld [vmem:[%s1 + $0x18] sm:$0xff]
    %v50 = vpack.c.bf16 %v47, %v46
    %v51 = vpack.c.bf16 %v49, %v48
    %v52 = vld [vmem:[%s4] sm:$0xf]
    %v53 = vld [vmem:[%s4 + $0x4] sm:$0xf]
    %v56 = vunpack.c.l.b16 %v52
    %v57 = vunpack.c.l.b16 %v53
    %v58 = vpack.c.b16 %v57, %v56
    %vm60 = vcmask 130048
    %v62 = vsel %vm60, %v50, 0
    %v65 = vsel %vm60, %v51, 0
    %67 = vmatprep.subr.bf16.mxu0 0
    %68 = vmatpush1.bf16.msra.mxu0 %v58
    %69 = vmatprep.subr.bf16.mxu0 0
    %70 = vmatpush1.bf16.msra.mxu0 0
    %71 = vmatprep.subr.bf16.mxu0 0
    %72 = vmatpush1.bf16.msra.mxu0 0
    %73 = vmatprep.subr.bf16.mxu0 0
    %74 = vmatpush1.bf16.msra.mxu0 0
    %75 = vmatprep.subr.bf16.mxu0 0
    %76 = vmatpush1.bf16.msra.mxu0 0
    %77 = vmatprep.subr.bf16.mxu0 0
    %78 = vmatpush1.bf16.msra.mxu0 0
    %79 = vmatprep.subr.bf16.mxu0 0
    %80 = vmatpush1.bf16.msra.mxu0 0
    %81 = vmatprep.subr.bf16.mxu0 0
    %82 = vmatpush1.bf16.msra.mxu0 0
    %83 = vmatprep.subr.bf16.mxu0 0
    %84 = vmatpush1.bf16.msra.mxu0 0
    %85 = vmatprep.subr.bf16.mxu0 0
    %86 = vmatpush1.bf16.msra.mxu0 0
    %87 = vmatprep.subr.bf16.mxu0 0
    %88 = vmatpush1.bf16.msra.mxu0 0
    %89 = vmatprep.subr.bf16.mxu0 0
    %90 = vmatpush1.bf16.msra.mxu0 0
    %91 = vmatprep.subr.bf16.mxu0 0
    %92 = vmatpush1.bf16.msra.mxu0 0
    %93 = vmatprep.subr.bf16.mxu0 0
    %94 = vmatpush1.bf16.msra.mxu0 0
    %95 = vmatprep.subr.bf16.mxu0 0
    %96 = vmatpush1.bf16.msra.mxu0 0
    %97 = vmatprep.subr.bf16.mxu0 0
    %98 = vmatpush1.bf16.msra.mxu0 0
    %99 = vmatprep.mubr.bf16.mxu0 0
    %100 = vmatmul.mubr.bf16.gmra.mrb[0].mxu0 %v62
    %v101 = vpop.f32.mrb[0].mxu0
    %v102 = vadd.f32 0.0, %v101
    %v103 = vpop.f32.mrb[0].mxu0
    %v104 = vpop.f32.mrb[0].mxu0
    %v105 = vadd.f32 0.0, %v104
    %v106 = vpop.f32.mrb[0].mxu0
    %107 = vmatprep.mubr.bf16.mxu0 0
    %108 = vmatmul.mubr.bf16.gmra.mrb[0].mxu0 %v65
    %v109 = vpop.f32.mrb[0].mxu0
    %v110 = vadd.f32 0.0, %v109
    %v111 = vpop.f32.mrb[0].mxu0
    %v112 = vpop.f32.mrb[0].mxu0
    %v113 = vadd.f32 0.0, %v112
    %v114 = vpop.f32.mrb[0].mxu0
    %115 = vdwg.mxu0
    %v116 = vld [vmem:[%s0] sm:$0xff]
    %v117 = vld [vmem:[%s0 + $0x8] sm:$0xff]
    %v118 = vld [vmem:[%s0 + $0x10] sm:$0xff]
    %v119 = vld [vmem:[%s0 + $0x18] sm:$0xff]
    %v120 = vmul.f32 %v116, %v102
    %v121 = vmul.f32 %v117, %v105
    %v122 = vmul.f32 %v118, %v110
    %v123 = vmul.f32 %v119, %v113
    %v124 = vpack.c.bf16 %v121, %v120
    %v125 = vpack.c.bf16 %v123, %v122
    %v126 = vld [vmem:[%s5] sm:$0xff]
    %v127 = vld [vmem:[%s5 + $0x8] sm:$0xff]
    %v128 = vld [vmem:[%s5 + $0x10] sm:$0xff]
    %v129 = vld [vmem:[%s5 + $0x18] sm:$0xff]
    %v130 = vld [vmem:[%s5 + $0x20] sm:$0xff]
    %v131 = vld [vmem:[%s5 + $0x28] sm:$0xff]
    %v132 = vld [vmem:[%s5 + $0x30] sm:$0xff]
    %v133 = vld [vmem:[%s5 + $0x38] sm:$0xff]
    %v134 = vld [vmem:[%s5 + $0x40] sm:$0xff]
    %v135 = vld [vmem:[%s5 + $0x48] sm:$0xff]
    %v136 = vld [vmem:[%s5 + $0x50] sm:$0xff]
    %v137 = vld [vmem:[%s5 + $0x58] sm:$0xff]
    %v138 = vld [vmem:[%s5 + $0x60] sm:$0xff]
    %v139 = vld [vmem:[%s5 + $0x68] sm:$0xff]
    %v140 = vld [vmem:[%s5 + $0x70] sm:$0xff]
    %v141 = vld [vmem:[%s5 + $0x78] sm:$0xff]
    %v142 = vld [vmem:[%s6] sm:$0xff]
    %v143 = vld [vmem:[%s6 + $0x8] sm:$0xff]
    %v144 = vld [vmem:[%s6 + $0x10] sm:$0xff]
    %v145 = vld [vmem:[%s6 + $0x18] sm:$0xff]
    %v150 = vunpack.c.l.b16 %v142
    %v151 = vunpack.c.h.b16 %v142
    %v152 = vunpack.c.l.b16 %v143
    %v153 = vunpack.c.h.b16 %v143
    %v154 = vunpack.c.l.b16 %v144
    %v155 = vunpack.c.h.b16 %v144
    %v156 = vunpack.c.l.b16 %v145
    %v157 = vunpack.c.h.b16 %v145
    %v158 = vpack.c.b16 %v154, %v150
    %v159 = vpack.c.b16 %v155, %v151
    %v160 = vpack.c.b16 %v156, %v152
    %v161 = vpack.c.b16 %v157, %v153
    %166 = vmatprep.subr.bf16.mxu0 %v159
    %167 = vmatpush1.bf16.msra.mxu0 %v158
    %168 = vmatprep.subr.bf16.mxu0 0
    %169 = vmatpush1.bf16.msra.mxu0 0
    %170 = vmatprep.subr.bf16.mxu0 0
    %171 = vmatpush1.bf16.msra.mxu0 0
    %172 = vmatprep.subr.bf16.mxu0 0
    %173 = vmatpush1.bf16.msra.mxu0 0
    %174 = vmatprep.subr.bf16.mxu0 0
    %175 = vmatpush1.bf16.msra.mxu0 0
    %176 = vmatprep.subr.bf16.mxu0 0
    %177 = vmatpush1.bf16.msra.mxu0 0
    %178 = vmatprep.subr.bf16.mxu0 0
    %179 = vmatpush1.bf16.msra.mxu0 0
    %180 = vmatprep.subr.bf16.mxu0 0
    %181 = vmatpush1.bf16.msra.mxu0 0
    %182 = vmatprep.subr.bf16.mxu0 0
    %183 = vmatpush1.bf16.msra.mxu0 0
    %184 = vmatprep.subr.bf16.mxu0 0
    %185 = vmatpush1.bf16.msra.mxu0 0
    %186 = vmatprep.subr.bf16.mxu0 0
    %187 = vmatpush1.bf16.msra.mxu0 0
    %188 = vmatprep.subr.bf16.mxu0 0
    %189 = vmatpush1.bf16.msra.mxu0 0
    %190 = vmatprep.subr.bf16.mxu0 0
    %191 = vmatpush1.bf16.msra.mxu0 0
    %192 = vmatprep.subr.bf16.mxu0 0
    %193 = vmatpush1.bf16.msra.mxu0 0
    %194 = vmatprep.subr.bf16.mxu0 0
    %195 = vmatpush1.bf16.msra.mxu0 0
    %196 = vmatprep.subr.bf16.mxu0 0
    %197 = vmatpush1.bf16.msra.mxu0 0
    %198 = vmatprep.mubr.bf16.mxu0 0
    %199 = vmatmul.mubr.bf16.gmra.mrb[0].mxu0 %v62
    %v200 = vpop.f32.mrb[0].mxu0
    %v201 = vadd.f32 0.0, %v200
    %v202 = vpop.f32.mrb[0].mxu0
    %v203 = vadd.f32 0.0, %v202
    %v204 = vpop.f32.mrb[0].mxu0
    %v205 = vadd.f32 0.0, %v204
    %v206 = vpop.f32.mrb[0].mxu0
    %v207 = vadd.f32 0.0, %v206
    %208 = vmatprep.mubr.bf16.mxu0 0
    %209 = vmatmul.mubr.bf16.gmra.mrb[0].mxu0 %v65
    %v210 = vpop.f32.mrb[0].mxu0
    %v211 = vadd.f32 0.0, %v210
    %v212 = vpop.f32.mrb[0].mxu0
    %v213 = vadd.f32 0.0, %v212
    %v214 = vpop.f32.mrb[0].mxu0
    %v215 = vadd.f32 0.0, %v214
    %v216 = vpop.f32.mrb[0].mxu0
    %v217 = vadd.f32 0.0, %v216
    %218 = vdwg.mxu0
    %219 = vmatprep.subr.bf16.mxu0 %v161
    %220 = vmatpush1.bf16.msra.mxu0 %v160
    %221 = vmatprep.subr.bf16.mxu0 0
    %222 = vmatpush1.bf16.msra.mxu0 0
    %223 = vmatprep.subr.bf16.mxu0 0
    %224 = vmatpush1.bf16.msra.mxu0 0
    %225 = vmatprep.subr.bf16.mxu0 0
    %226 = vmatpush1.bf16.msra.mxu0 0
    %227 = vmatprep.subr.bf16.mxu0 0
    %228 = vmatpush1.bf16.msra.mxu0 0
    %229 = vmatprep.subr.bf16.mxu0 0
    %230 = vmatpush1.bf16.msra.mxu0 0
    %231 = vmatprep.subr.bf16.mxu0 0
    %232 = vmatpush1.bf16.msra.mxu0 0
    %233 = vmatprep.subr.bf16.mxu0 0
    %234 = vmatpush1.bf16.msra.mxu0 0
    %235 = vmatprep.subr.bf16.mxu0 0
    %236 = vmatpush1.bf16.msra.mxu0 0
    %237 = vmatprep.subr.bf16.mxu0 0
    %238 = vmatpush1.bf16.msra.mxu0 0
    %239 = vmatprep.subr.bf16.mxu0 0
    %240 = vmatpush1.bf16.msra.mxu0 0
    %241 = vmatprep.subr.bf16.mxu0 0
    %242 = vmatpush1.bf16.msra.mxu0 0
    %243 = vmatprep.subr.bf16.mxu0 0
    %244 = vmatpush1.bf16.msra.mxu0 0
    %245 = vmatprep.subr.bf16.mxu0 0
    %246 = vmatpush1.bf16.msra.mxu0 0
    %247 = vmatprep.subr.bf16.mxu0 0
    %248 = vmatpush1.bf16.msra.mxu0 0
    %249 = vmatprep.subr.bf16.mxu0 0
    %250 = vmatpush1.bf16.msra.mxu0 0
    %251 = vmatprep.mubr.bf16.mxu0 0
    %252 = vmatmul.mubr.bf16.gmra.mrb[0].mxu0 %v62
    %v253 = vpop.f32.mrb[0].mxu0
    %v254 = vadd.f32 0.0, %v253
    %v255 = vpop.f32.mrb[0].mxu0
    %v256 = vadd.f32 0.0, %v255
    %v257 = vpop.f32.mrb[0].mxu0
    %v258 = vadd.f32 0.0, %v257
    %v259 = vpop.f32.mrb[0].mxu0
    %v260 = vadd.f32 0.0, %v259
    %261 = vmatprep.mubr.bf16.mxu0 0
    %262 = vmatmul.mubr.bf16.gmra.mrb[0].mxu0 %v65
    %v263 = vpop.f32.mrb[0].mxu0
    %v264 = vadd.f32 0.0, %v263
    %v265 = vpop.f32.mrb[0].mxu0
    %v266 = vadd.f32 0.0, %v265
    %v267 = vpop.f32.mrb[0].mxu0
    %v268 = vadd.f32 0.0, %v267
    %v269 = vpop.f32.mrb[0].mxu0
    %v270 = vadd.f32 0.0, %v269
    %271 = vdwg.mxu0
    %v288 = vunpack.c.l.b16 %v126
    %v289 = vunpack.c.h.b16 %v126
    %v290 = vunpack.c.l.b16 %v127
    %v291 = vunpack.c.h.b16 %v127
    %v292 = vunpack.c.l.b16 %v128
    %v293 = vunpack.c.h.b16 %v128
    %v294 = vunpack.c.l.b16 %v129
    %v295 = vunpack.c.h.b16 %v129
    %v296 = vunpack.c.l.b16 %v130
    %v297 = vunpack.c.h.b16 %v130
    %v298 = vunpack.c.l.b16 %v131
    %v299 = vunpack.c.h.b16 %v131
    %v300 = vunpack.c.l.b16 %v132
    %v301 = vunpack.c.h.b16 %v132
    %v302 = vunpack.c.l.b16 %v133
    %v303 = vunpack.c.h.b16 %v133
    %v304 = vunpack.c.l.b16 %v134
    %v305 = vunpack.c.h.b16 %v134
    %v306 = vunpack.c.l.b16 %v135
    %v307 = vunpack.c.h.b16 %v135
    %v308 = vunpack.c.l.b16 %v136
    %v309 = vunpack.c.h.b16 %v136
    %v310 = vunpack.c.l.b16 %v137
    %v311 = vunpack.c.h.b16 %v137
    %v312 = vunpack.c.l.b16 %v138
    %v313 = vunpack.c.h.b16 %v138
    %v314 = vunpack.c.l.b16 %v139
    %v315 = vunpack.c.h.b16 %v139
    %v316 = vunpack.c.l.b16 %v140
    %v317 = vunpack.c.h.b16 %v140
    %v318 = vunpack.c.l.b16 %v141
    %v319 = vunpack.c.h.b16 %v141
    %v320 = vpack.c.b16 %v292, %v288
    %v321 = vpack.c.b16 %v293, %v289
    %v322 = vpack.c.b16 %v294, %v290
    %v323 = vpack.c.b16 %v295, %v291
    %v324 = vpack.c.b16 %v300, %v296
    %v325 = vpack.c.b16 %v301, %v297
    %v326 = vpack.c.b16 %v302, %v298
    %v327 = vpack.c.b16 %v303, %v299
    %v328 = vpack.c.b16 %v308, %v304
    %v329 = vpack.c.b16 %v309, %v305
    %v330 = vpack.c.b16 %v310, %v306
    %v331 = vpack.c.b16 %v311, %v307
    %v332 = vpack.c.b16 %v316, %v312
    %v333 = vpack.c.b16 %v317, %v313
    %v334 = vpack.c.b16 %v318, %v314
    %v335 = vpack.c.b16 %v319, %v315
    %vm352 = vcmask 523264
    %v354 = vsel %vm352, %v124, 0
    %v357 = vsel %vm352, %v125, 0
    %359 = vmatprep.subr.bf16.mxu0 %v321
    %360 = vmatpush1.bf16.msra.mxu0 %v320
    %361 = vmatprep.subr.bf16.mxu0 %v325
    %362 = vmatpush1.bf16.msra.mxu0 %v324
    %363 = vmatprep.subr.bf16.mxu0 %v329
    %364 = vmatpush1.bf16.msra.mxu0 %v328
    %365 = vmatprep.subr.bf16.mxu0 %v333
    %366 = vmatpush1.bf16.msra.mxu0 %v332
    %367 = vmatprep.subr.bf16.mxu0 0
    %368 = vmatpush1.bf16.msra.mxu0 0
    %369 = vmatprep.subr.bf16.mxu0 0
    %370 = vmatpush1.bf16.msra.mxu0 0
    %371 = vmatprep.subr.bf16.mxu0 0
    %372 = vmatpush1.bf16.msra.mxu0 0
    %373 = vmatprep.subr.bf16.mxu0 0
    %374 = vmatpush1.bf16.msra.mxu0 0
    %375 = vmatprep.subr.bf16.mxu0 0
    %376 = vmatpush1.bf16.msra.mxu0 0
    %377 = vmatprep.subr.bf16.mxu0 0
    %378 = vmatpush1.bf16.msra.mxu0 0
    %379 = vmatprep.subr.bf16.mxu0 0
    %380 = vmatpush1.bf16.msra.mxu0 0
    %381 = vmatprep.subr.bf16.mxu0 0
    %382 = vmatpush1.bf16.msra.mxu0 0
    %383 = vmatprep.subr.bf16.mxu0 0
    %384 = vmatpush1.bf16.msra.mxu0 0
    %385 = vmatprep.subr.bf16.mxu0 0
    %386 = vmatpush1.bf16.msra.mxu0 0
    %387 = vmatprep.subr.bf16.mxu0 0
    %388 = vmatpush1.bf16.msra.mxu0 0
    %389 = vmatprep.subr.bf16.mxu0 0
    %390 = vmatpush1.bf16.msra.mxu0 0
    %391 = vmatprep.mubr.bf16.mxu0 0
    %392 = vmatmul.mubr.bf16.gmra.mrb[0].mxu0 %v354
    %v393 = vpop.f32.mrb[0].mxu0
    %v394 = vadd.f32 %v201, %v393
    %v395 = vpop.f32.mrb[0].mxu0
    %v396 = vadd.f32 %v203, %v395
    %v397 = vpop.f32.mrb[0].mxu0
    %v398 = vadd.f32 %v205, %v397
    %v399 = vpop.f32.mrb[0].mxu0
    %v400 = vadd.f32 %v207, %v399
    %401 = vmatprep.mubr.bf16.mxu0 0
    %402 = vmatmul.mubr.bf16.gmra.mrb[0].mxu0 %v357
    %v403 = vpop.f32.mrb[0].mxu0
    %v404 = vadd.f32 %v211, %v403
    %v405 = vpop.f32.mrb[0].mxu0
    %v406 = vadd.f32 %v213, %v405
    %v407 = vpop.f32.mrb[0].mxu0
    %v408 = vadd.f32 %v215, %v407
    %v409 = vpop.f32.mrb[0].mxu0
    %v410 = vadd.f32 %v217, %v409
    %411 = vdwg.mxu0
    %412 = vmatprep.subr.bf16.mxu0 %v323
    %413 = vmatpush1.bf16.msra.mxu0 %v322
    %414 = vmatprep.subr.bf16.mxu0 %v327
    %415 = vmatpush1.bf16.msra.mxu0 %v326
    %416 = vmatprep.subr.bf16.mxu0 %v331
    %417 = vmatpush1.bf16.msra.mxu0 %v330
    %418 = vmatprep.subr.bf16.mxu0 %v335
    %419 = vmatpush1.bf16.msra.mxu0 %v334
    %420 = vmatprep.subr.bf16.mxu0 0
    %421 = vmatpush1.bf16.msra.mxu0 0
    %422 = vmatprep.subr.bf16.mxu0 0
    %423 = vmatpush1.bf16.msra.mxu0 0
    %424 = vmatprep.subr.bf16.mxu0 0
    %425 = vmatpush1.bf16.msra.mxu0 0
    %426 = vmatprep.subr.bf16.mxu0 0
    %427 = vmatpush1.bf16.msra.mxu0 0
    %428 = vmatprep.subr.bf16.mxu0 0
    %429 = vmatpush1.bf16.msra.mxu0 0
    %430 = vmatprep.subr.bf16.mxu0 0
    %431 = vmatpush1.bf16.msra.mxu0 0
    %432 = vmatprep.subr.bf16.mxu0 0
    %433 = vmatpush1.bf16.msra.mxu0 0
    %434 = vmatprep.subr.bf16.mxu0 0
    %435 = vmatpush1.bf16.msra.mxu0 0
    %436 = vmatprep.subr.bf16.mxu0 0
    %437 = vmatpush1.bf16.msra.mxu0 0
    %438 = vmatprep.subr.bf16.mxu0 0
    %439 = vmatpush1.bf16.msra.mxu0 0
    %440 = vmatprep.subr.bf16.mxu0 0
    %441 = vmatpush1.bf16.msra.mxu0 0
    %442 = vmatprep.subr.bf16.mxu0 0
    %443 = vmatpush1.bf16.msra.mxu0 0
    %444 = vmatprep.mubr.bf16.mxu0 0
    %445 = vmatmul.mubr.bf16.gmra.mrb[0].mxu0 %v354
    %v446 = vpop.f32.mrb[0].mxu0
    %v447 = vadd.f32 %v254, %v446
    %v448 = vpop.f32.mrb[0].mxu0
    %v449 = vadd.f32 %v256, %v448
    %v450 = vpop.f32.mrb[0].mxu0
    %v451 = vadd.f32 %v258, %v450
    %v452 = vpop.f32.mrb[0].mxu0
    %v453 = vadd.f32 %v260, %v452
    %454 = vmatprep.mubr.bf16.mxu0 0
    %455 = vmatmul.mubr.bf16.gmra.mrb[0].mxu0 %v357
    %v456 = vpop.f32.mrb[0].mxu0
    %v457 = vadd.f32 %v264, %v456
    %v458 = vpop.f32.mrb[0].mxu0
    %v459 = vadd.f32 %v266, %v458
    %v460 = vpop.f32.mrb[0].mxu0
    %v461 = vadd.f32 %v268, %v460
    %v462 = vpop.f32.mrb[0].mxu0
    %v463 = vadd.f32 %v270, %v462
    %464 = vdwg.mxu0
    %v465 = vld [vmem:[%s7] sm:$0xf]
    %v467 = vlaneseq
    %v468 = vshrl.u32 %v467, 7
    %v469 = vsub.s32 0, %v468
    %v470 = vrot.slane %v465, %v469
    %v471 = vlaneseq
    %v472 = vshrl.u32 %v471, 7
    %v473 = vsub.s32 1, %v472
    %v474 = vrot.slane %v465, %v473
    %v475 = vlaneseq
    %v476 = vshrl.u32 %v475, 7
    %v477 = vsub.s32 2, %v476
    %v478 = vrot.slane %v465, %v477
    %v479 = vlaneseq
    %v480 = vshrl.u32 %v479, 7
    %v481 = vsub.s32 3, %v480
    %v482 = vrot.slane %v465, %v481
    %v487 = vadd.f32 %v394, %v470
    %v488 = vadd.f32 %v396, %v474
    %v489 = vadd.f32 %v447, %v478
    %v490 = vadd.f32 %v449, %v482
    %v491 = vadd.f32 %v398, %v470
    %v492 = vadd.f32 %v400, %v474
    %v493 = vadd.f32 %v451, %v478
    %v494 = vadd.f32 %v453, %v482
    %v495 = vadd.f32 %v404, %v470
    %v496 = vadd.f32 %v406, %v474
    %v497 = vadd.f32 %v457, %v478
    %v498 = vadd.f32 %v459, %v482
    %v499 = vadd.f32 %v408, %v470
    %v500 = vadd.f32 %v410, %v474
    %v501 = vadd.f32 %v461, %v478
    %v502 = vadd.f32 %v463, %v482
    %v503 = vlaneseq
    %v504 = vshrl.u32 %v503, 7
    %v505 = vadd.s32 %v504, 8
    %vm506 = vcmp.gt.s32.totalorder %v504, 0
    %vm507 = vcmp.gt.s32.totalorder %v505, 0
    %v508 = vsel %vm506, 1, 0
    %v509 = vsel %vm507, 1, 0
    %v510 = vcvt.s32.f32 %v508
    %v511 = vcvt.s32.f32 %v509
    %vm512 = vcmp.lt.s32.totalorder %v504, 15
    %vm513 = vcmp.lt.s32.totalorder %v505, 15
    %v514 = vsel %vm512, 1, 0
    %v515 = vsel %vm513, 1, 0
    %v516 = vcvt.s32.f32 %v514
    %v517 = vcvt.s32.f32 %v515
    %v518 = vrot.slane %v487, 7
    %v519 = vrot.slane %v488, 7
    %v520 = vrot.slane %v489, 7
    %v521 = vrot.slane %v490, 7
    %v522 = vrot.slane %v495, 7
    %v523 = vrot.slane %v496, 7
    %v524 = vrot.slane %v497, 7
    %v525 = vrot.slane %v498, 7
    %v526 = vrot.slane %v491, 7
    %v527 = vrot.slane %v492, 7
    %v528 = vrot.slane %v493, 7
    %v529 = vrot.slane %v494, 7
    %v530 = vrot.slane %v499, 7
    %v531 = vrot.slane %v500, 7
    %v532 = vrot.slane %v501, 7
    %v533 = vrot.slane %v502, 7
    %vm534 = vcmp.lt.s32.totalorder %v504, 1
    %v535 = vsel %vm534, %v518, %v526
    %v536 = vsel %vm534, %v519, %v527
    %v537 = vsel %vm534, %v520, %v528
    %v538 = vsel %vm534, %v521, %v529
    %v539 = vsel %vm534, %v522, %v530
    %v540 = vsel %vm534, %v523, %v531
    %v541 = vsel %vm534, %v524, %v532
    %v542 = vsel %vm534, %v525, %v533
    %v543 = vsel %vm534, %v526, %v518
    %v544 = vsel %vm534, %v527, %v519
    %v545 = vsel %vm534, %v528, %v520
    %v546 = vsel %vm534, %v529, %v521
    %v547 = vsel %vm534, %v530, %v522
    %v548 = vsel %vm534, %v531, %v523
    %v549 = vsel %vm534, %v532, %v524
    %v550 = vsel %vm534, %v533, %v525
    %v551 = vmul.f32 %v543, %v510
    %v552 = vmul.f32 %v544, %v510
    %v553 = vmul.f32 %v545, %v510
    %v554 = vmul.f32 %v546, %v510
    %v555 = vmul.f32 %v535, %v511
    %v556 = vmul.f32 %v536, %v511
    %v557 = vmul.f32 %v537, %v511
    %v558 = vmul.f32 %v538, %v511
    %v559 = vmul.f32 %v547, %v510
    %v560 = vmul.f32 %v548, %v510
    %v561 = vmul.f32 %v549, %v510
    %v562 = vmul.f32 %v550, %v510
    %v563 = vmul.f32 %v539, %v511
    %v564 = vmul.f32 %v540, %v511
    %v565 = vmul.f32 %v541, %v511
    %v566 = vmul.f32 %v542, %v511
    %v567 = vrot.slane %v487, 1
    %v568 = vrot.slane %v488, 1
    %v569 = vrot.slane %v489, 1
    %v570 = vrot.slane %v490, 1
    %v571 = vrot.slane %v495, 1
    %v572 = vrot.slane %v496, 1
    %v573 = vrot.slane %v497, 1
    %v574 = vrot.slane %v498, 1
    %v575 = vrot.slane %v491, 1
    %v576 = vrot.slane %v492, 1
    %v577 = vrot.slane %v493, 1
    %v578 = vrot.slane %v494, 1
    %v579 = vrot.slane %v499, 1
    %v580 = vrot.slane %v500, 1
    %v581 = vrot.slane %v501, 1
    %v582 = vrot.slane %v502, 1
    %vm583 = vcmp.lt.s32.totalorder %v504, 7
    %v584 = vsel %vm583, %v567, %v575
    %v585 = vsel %vm583, %v568, %v576
    %v586 = vsel %vm583, %v569, %v577
    %v587 = vsel %vm583, %v570, %v578
    %v588 = vsel %vm583, %v571, %v579
    %v589 = vsel %vm583, %v572, %v580
    %v590 = vsel %vm583, %v573, %v581
    %v591 = vsel %vm583, %v574, %v582
    %v592 = vsel %vm583, %v575, %v567
    %v593 = vsel %vm583, %v576, %v568
    %v594 = vsel %vm583, %v577, %v569
    %v595 = vsel %vm583, %v578, %v570
    %v596 = vsel %vm583, %v579, %v571
    %v597 = vsel %vm583, %v580, %v572
    %v598 = vsel %vm583, %v581, %v573
    %v599 = vsel %vm583, %v582, %v574
    %v600 = vmul.f32 %v584, %v516
    %v601 = vmul.f32 %v585, %v516
    %v602 = vmul.f32 %v586, %v516
    %v603 = vmul.f32 %v587, %v516
    %v604 = vmul.f32 %v592, %v517
    %v605 = vmul.f32 %v593, %v517
    %v606 = vmul.f32 %v594, %v517
    %v607 = vmul.f32 %v595, %v517
    %v608 = vmul.f32 %v588, %v516
    %v609 = vmul.f32 %v589, %v516
    %v610 = vmul.f32 %v590, %v516
    %v611 = vmul.f32 %v591, %v516
    %v612 = vmul.f32 %v596, %v517
    %v613 = vmul.f32 %v597, %v517
    %v614 = vmul.f32 %v598, %v517
    %v615 = vmul.f32 %v599, %v517
    %v616 = vpack.c.bf16 %v555, %v551
    %v617 = vpack.c.bf16 %v556, %v552
    %v618 = vpack.c.bf16 %v557, %v553
    %v619 = vpack.c.bf16 %v558, %v554
    %v620 = vpack.c.bf16 %v563, %v559
    %v621 = vpack.c.bf16 %v564, %v560
    %v622 = vpack.c.bf16 %v565, %v561
    %v623 = vpack.c.bf16 %v566, %v562
    %v624 = vld [vmem:[%s8] sm:$0xff]
    %v625 = vld [vmem:[%s8 + $0x8] sm:$0xff]
    %v626 = vld [vmem:[%s8 + $0x10] sm:$0xff]
    %v627 = vld [vmem:[%s8 + $0x18] sm:$0xff]
    %v628 = vld [vmem:[%s8 + $0x20] sm:$0xff]
    %v629 = vld [vmem:[%s8 + $0x28] sm:$0xff]
    %v630 = vld [vmem:[%s8 + $0x30] sm:$0xff]
    %v631 = vld [vmem:[%s8 + $0x38] sm:$0xff]
    %v632 = vld [vmem:[%s8 + $0x40] sm:$0xff]
    %v633 = vld [vmem:[%s8 + $0x48] sm:$0xff]
    %v634 = vld [vmem:[%s8 + $0x50] sm:$0xff]
    %v635 = vld [vmem:[%s8 + $0x58] sm:$0xff]
    %v636 = vld [vmem:[%s8 + $0x60] sm:$0xff]
    %v637 = vld [vmem:[%s8 + $0x68] sm:$0xff]
    %v638 = vld [vmem:[%s8 + $0x70] sm:$0xff]
    %v639 = vld [vmem:[%s8 + $0x78] sm:$0xff]
    %v640 = vld [vmem:[%s8 + $0x80] sm:$0xff]
    %v641 = vld [vmem:[%s8 + $0x88] sm:$0xff]
    %v642 = vld [vmem:[%s8 + $0x90] sm:$0xff]
    %v643 = vld [vmem:[%s8 + $0x98] sm:$0xff]
    %v644 = vld [vmem:[%s8 + $0xa0] sm:$0xff]
    %v645 = vld [vmem:[%s8 + $0xa8] sm:$0xff]
    %v646 = vld [vmem:[%s8 + $0xb0] sm:$0xff]
    %v647 = vld [vmem:[%s8 + $0xb8] sm:$0xff]
    %v648 = vld [vmem:[%s8 + $0xc0] sm:$0xff]
    %v649 = vld [vmem:[%s8 + $0xc8] sm:$0xff]
    %v650 = vld [vmem:[%s8 + $0xd0] sm:$0xff]
    %v651 = vld [vmem:[%s8 + $0xd8] sm:$0xff]
    %v652 = vld [vmem:[%s8 + $0xe0] sm:$0xff]
    %v653 = vld [vmem:[%s8 + $0xe8] sm:$0xff]
    %v654 = vld [vmem:[%s8 + $0xf0] sm:$0xff]
    %v655 = vld [vmem:[%s8 + $0xf8] sm:$0xff]
    %v656 = vld [vmem:[%s8 + $0x100] sm:$0xff]
    %v657 = vld [vmem:[%s8 + $0x108] sm:$0xff]
    %v658 = vld [vmem:[%s8 + $0x110] sm:$0xff]
    %v659 = vld [vmem:[%s8 + $0x118] sm:$0xff]
    %v660 = vld [vmem:[%s8 + $0x120] sm:$0xff]
    %v661 = vld [vmem:[%s8 + $0x128] sm:$0xff]
    %v662 = vld [vmem:[%s8 + $0x130] sm:$0xff]
    %v663 = vld [vmem:[%s8 + $0x138] sm:$0xff]
    %v664 = vld [vmem:[%s8 + $0x140] sm:$0xff]
    %v665 = vld [vmem:[%s8 + $0x148] sm:$0xff]
    %v666 = vld [vmem:[%s8 + $0x150] sm:$0xff]
    %v667 = vld [vmem:[%s8 + $0x158] sm:$0xff]
    %v668 = vld [vmem:[%s8 + $0x160] sm:$0xff]
    %v669 = vld [vmem:[%s8 + $0x168] sm:$0xff]
    %v670 = vld [vmem:[%s8 + $0x170] sm:$0xff]
    %v671 = vld [vmem:[%s8 + $0x178] sm:$0xff]
    %v672 = vld [vmem:[%s8 + $0x180] sm:$0xff]
    %v673 = vld [vmem:[%s8 + $0x188] sm:$0xff]
    %v674 = vld [vmem:[%s8 + $0x190] sm:$0xff]
    %v675 = vld [vmem:[%s8 + $0x198] sm:$0xff]
    %v676 = vld [vmem:[%s8 + $0x1a0] sm:$0xff]
    %v677 = vld [vmem:[%s8 + $0x1a8] sm:$0xff]
    %v678 = vld [vmem:[%s8 + $0x1b0] sm:$0xff]
    %v679 = vld [vmem:[%s8 + $0x1b8] sm:$0xff]
    %v680 = vld [vmem:[%s8 + $0x1c0] sm:$0xff]
    %v681 = vld [vmem:[%s8 + $0x1c8] sm:$0xff]
    %v682 = vld [vmem:[%s8 + $0x1d0] sm:$0xff]
    %v683 = vld [vmem:[%s8 + $0x1d8] sm:$0xff]
    %v684 = vld [vmem:[%s8 + $0x1e0] sm:$0xff]
    %v685 = vld [vmem:[%s8 + $0x1e8] sm:$0xff]
    %v686 = vld [vmem:[%s8 + $0x1f0] sm:$0xff]
    %v687 = vld [vmem:[%s8 + $0x1f8] sm:$0xff]
    %v688 = vld [vmem:[%s8 + $0x200] sm:$0xff]
    %v689 = vld [vmem:[%s8 + $0x208] sm:$0xff]
    %v690 = vld [vmem:[%s8 + $0x210] sm:$0xff]
    %v691 = vld [vmem:[%s8 + $0x218] sm:$0xff]
    %v692 = vld [vmem:[%s8 + $0x220] sm:$0xff]
    %v693 = vld [vmem:[%s8 + $0x228] sm:$0xff]
    %v694 = vld [vmem:[%s8 + $0x230] sm:$0xff]
    %v695 = vld [vmem:[%s8 + $0x238] sm:$0xff]
    %v696 = vld [vmem:[%s8 + $0x240] sm:$0xff]
    %v697 = vld [vmem:[%s8 + $0x248] sm:$0xff]
    %v698 = vld [vmem:[%s8 + $0x250] sm:$0xff]
    %v699 = vld [vmem:[%s8 + $0x258] sm:$0xff]
    %v700 = vld [vmem:[%s8 + $0x260] sm:$0xff]
    %v701 = vld [vmem:[%s8 + $0x268] sm:$0xff]
    %v702 = vld [vmem:[%s8 + $0x270] sm:$0xff]
    %v703 = vld [vmem:[%s8 + $0x278] sm:$0xff]
    %v704 = vld [vmem:[%s8 + $0x280] sm:$0xff]
    %v705 = vld [vmem:[%s8 + $0x288] sm:$0xff]
    %v706 = vld [vmem:[%s8 + $0x290] sm:$0xff]
    %v707 = vld [vmem:[%s8 + $0x298] sm:$0xff]
    %v708 = vld [vmem:[%s8 + $0x2a0] sm:$0xff]
    %v709 = vld [vmem:[%s8 + $0x2a8] sm:$0xff]
    %v710 = vld [vmem:[%s8 + $0x2b0] sm:$0xff]
    %v711 = vld [vmem:[%s8 + $0x2b8] sm:$0xff]
    %v712 = vld [vmem:[%s8 + $0x2c0] sm:$0xff]
    %v713 = vld [vmem:[%s8 + $0x2c8] sm:$0xff]
    %v714 = vld [vmem:[%s8 + $0x2d0] sm:$0xff]
    %v715 = vld [vmem:[%s8 + $0x2d8] sm:$0xff]
    %v716 = vld [vmem:[%s8 + $0x2e0] sm:$0xff]
    %v717 = vld [vmem:[%s8 + $0x2e8] sm:$0xff]
    %v718 = vld [vmem:[%s8 + $0x2f0] sm:$0xff]
    %v719 = vld [vmem:[%s8 + $0x2f8] sm:$0xff]
    %v720 = vld [vmem:[%s8 + $0x300] sm:$0xff]
    %v721 = vld [vmem:[%s8 + $0x308] sm:$0xff]
    %v722 = vld [vmem:[%s8 + $0x310] sm:$0xff]
    %v723 = vld [vmem:[%s8 + $0x318] sm:$0xff]
    %v724 = vld [vmem:[%s8 + $0x320] sm:$0xff]
    %v725 = vld [vmem:[%s8 + $0x328] sm:$0xff]
    %v726 = vld [vmem:[%s8 + $0x330] sm:$0xff]
    %v727 = vld [vmem:[%s8 + $0x338] sm:$0xff]
    %v728 = vld [vmem:[%s8 + $0x340] sm:$0xff]
    %v729 = vld [vmem:[%s8 + $0x348] sm:$0xff]
    %v730 = vld [vmem:[%s8 + $0x350] sm:$0xff]
    %v731 = vld [vmem:[%s8 + $0x358] sm:$0xff]
    %v732 = vld [vmem:[%s8 + $0x360] sm:$0xff]
    %v733 = vld [vmem:[%s8 + $0x368] sm:$0xff]
    %v734 = vld [vmem:[%s8 + $0x370] sm:$0xff]
    %v735 = vld [vmem:[%s8 + $0x378] sm:$0xff]
    %v736 = vld [vmem:[%s8 + $0x380] sm:$0xff]
    %v737 = vld [vmem:[%s8 + $0x388] sm:$0xff]
    %v738 = vld [vmem:[%s8 + $0x390] sm:$0xff]
    %v739 = vld [vmem:[%s8 + $0x398] sm:$0xff]
    %v740 = vld [vmem:[%s8 + $0x3a0] sm:$0xff]
    %v741 = vld [vmem:[%s8 + $0x3a8] sm:$0xff]
    %v742 = vld [vmem:[%s8 + $0x3b0] sm:$0xff]
    %v743 = vld [vmem:[%s8 + $0x3b8] sm:$0xff]
    %v744 = vld [vmem:[%s8 + $0x3c0] sm:$0xff]
    %v745 = vld [vmem:[%s8 + $0x3c8] sm:$0xff]
    %v746 = vld [vmem:[%s8 + $0x3d0] sm:$0xff]
    %v747 = vld [vmem:[%s8 + $0x3d8] sm:$0xff]
    %v748 = vld [vmem:[%s8 + $0x3e0] sm:$0xff]
    %v749 = vld [vmem:[%s8 + $0x3e8] sm:$0xff]
    %v750 = vld [vmem:[%s8 + $0x3f0] sm:$0xff]
    %v751 = vld [vmem:[%s8 + $0x3f8] sm:$0xff]
    %v752 = vpack.c.bf16 %v491, %v487
    %v753 = vpack.c.bf16 %v492, %v488
    %v754 = vpack.c.bf16 %v493, %v489
    %v755 = vpack.c.bf16 %v494, %v490
    %v756 = vpack.c.bf16 %v499, %v495
    %v757 = vpack.c.bf16 %v500, %v496
    %v758 = vpack.c.bf16 %v501, %v497
    %v759 = vpack.c.bf16 %v502, %v498
    %s760 = scalar_lea.vmem %s8, 1024
    %v761 = vld [vmem:[%s760] sm:$0xff]
    %v762 = vld [vmem:[%s760 + $0x8] sm:$0xff]
    %v763 = vld [vmem:[%s760 + $0x10] sm:$0xff]
    %v764 = vld [vmem:[%s760 + $0x18] sm:$0xff]
    %v765 = vld [vmem:[%s760 + $0x20] sm:$0xff]
    %v766 = vld [vmem:[%s760 + $0x28] sm:$0xff]
    %v767 = vld [vmem:[%s760 + $0x30] sm:$0xff]
    %v768 = vld [vmem:[%s760 + $0x38] sm:$0xff]
    %v769 = vld [vmem:[%s760 + $0x40] sm:$0xff]
    %v770 = vld [vmem:[%s760 + $0x48] sm:$0xff]
    %v771 = vld [vmem:[%s760 + $0x50] sm:$0xff]
    %v772 = vld [vmem:[%s760 + $0x58] sm:$0xff]
    %v773 = vld [vmem:[%s760 + $0x60] sm:$0xff]
    %v774 = vld [vmem:[%s760 + $0x68] sm:$0xff]
    %v775 = vld [vmem:[%s760 + $0x70] sm:$0xff]
    %v776 = vld [vmem:[%s760 + $0x78] sm:$0xff]
    %v777 = vld [vmem:[%s760 + $0x80] sm:$0xff]
    %v778 = vld [vmem:[%s760 + $0x88] sm:$0xff]
    %v779 = vld [vmem:[%s760 + $0x90] sm:$0xff]
    %v780 = vld [vmem:[%s760 + $0x98] sm:$0xff]
    %v781 = vld [vmem:[%s760 + $0xa0] sm:$0xff]
    %v782 = vld [vmem:[%s760 + $0xa8] sm:$0xff]
    %v783 = vld [vmem:[%s760 + $0xb0] sm:$0xff]
    %v784 = vld [vmem:[%s760 + $0xb8] sm:$0xff]
    %v785 = vld [vmem:[%s760 + $0xc0] sm:$0xff]
    %v786 = vld [vmem:[%s760 + $0xc8] sm:$0xff]
    %v787 = vld [vmem:[%s760 + $0xd0] sm:$0xff]
    %v788 = vld [vmem:[%s760 + $0xd8] sm:$0xff]
    %v789 = vld [vmem:[%s760 + $0xe0] sm:$0xff]
    %v790 = vld [vmem:[%s760 + $0xe8] sm:$0xff]
    %v791 = vld [vmem:[%s760 + $0xf0] sm:$0xff]
    %v792 = vld [vmem:[%s760 + $0xf8] sm:$0xff]
    %v793 = vld [vmem:[%s760 + $0x100] sm:$0xff]
    %v794 = vld [vmem:[%s760 + $0x108] sm:$0xff]
    %v795 = vld [vmem:[%s760 + $0x110] sm:$0xff]
    %v796 = vld [vmem:[%s760 + $0x118] sm:$0xff]
    %v797 = vld [vmem:[%s760 + $0x120] sm:$0xff]
    %v798 = vld [vmem:[%s760 + $0x128] sm:$0xff]
    %v799 = vld [vmem:[%s760 + $0x130] sm:$0xff]
    %v800 = vld [vmem:[%s760 + $0x138] sm:$0xff]
    %v801 = vld [vmem:[%s760 + $0x140] sm:$0xff]
    %v802 = vld [vmem:[%s760 + $0x148] sm:$0xff]
    %v803 = vld [vmem:[%s760 + $0x150] sm:$0xff]
    %v804 = vld [vmem:[%s760 + $0x158] sm:$0xff]
    %v805 = vld [vmem:[%s760 + $0x160] sm:$0xff]
    %v806 = vld [vmem:[%s760 + $0x168] sm:$0xff]
    %v807 = vld [vmem:[%s760 + $0x170] sm:$0xff]
    %v808 = vld [vmem:[%s760 + $0x178] sm:$0xff]
    %v809 = vld [vmem:[%s760 + $0x180] sm:$0xff]
    %v810 = vld [vmem:[%s760 + $0x188] sm:$0xff]
    %v811 = vld [vmem:[%s760 + $0x190] sm:$0xff]
    %v812 = vld [vmem:[%s760 + $0x198] sm:$0xff]
    %v813 = vld [vmem:[%s760 + $0x1a0] sm:$0xff]
    %v814 = vld [vmem:[%s760 + $0x1a8] sm:$0xff]
    %v815 = vld [vmem:[%s760 + $0x1b0] sm:$0xff]
    %v816 = vld [vmem:[%s760 + $0x1b8] sm:$0xff]
    %v817 = vld [vmem:[%s760 + $0x1c0] sm:$0xff]
    %v818 = vld [vmem:[%s760 + $0x1c8] sm:$0xff]
    %v819 = vld [vmem:[%s760 + $0x1d0] sm:$0xff]
    %v820 = vld [vmem:[%s760 + $0x1d8] sm:$0xff]
    %v821 = vld [vmem:[%s760 + $0x1e0] sm:$0xff]
    %v822 = vld [vmem:[%s760 + $0x1e8] sm:$0xff]
    %v823 = vld [vmem:[%s760 + $0x1f0] sm:$0xff]
    %v824 = vld [vmem:[%s760 + $0x1f8] sm:$0xff]
    %v825 = vld [vmem:[%s760 + $0x200] sm:$0xff]
    %v826 = vld [vmem:[%s760 + $0x208] sm:$0xff]
    %v827 = vld [vmem:[%s760 + $0x210] sm:$0xff]
    %v828 = vld [vmem:[%s760 + $0x218] sm:$0xff]
    %v829 = vld [vmem:[%s760 + $0x220] sm:$0xff]
    %v830 = vld [vmem:[%s760 + $0x228] sm:$0xff]
    %v831 = vld [vmem:[%s760 + $0x230] sm:$0xff]
    %v832 = vld [vmem:[%s760 + $0x238] sm:$0xff]
    %v833 = vld [vmem:[%s760 + $0x240] sm:$0xff]
    %v834 = vld [vmem:[%s760 + $0x248] sm:$0xff]
    %v835 = vld [vmem:[%s760 + $0x250] sm:$0xff]
    %v836 = vld [vmem:[%s760 + $0x258] sm:$0xff]
    %v837 = vld [vmem:[%s760 + $0x260] sm:$0xff]
    %v838 = vld [vmem:[%s760 + $0x268] sm:$0xff]
    %v839 = vld [vmem:[%s760 + $0x270] sm:$0xff]
    %v840 = vld [vmem:[%s760 + $0x278] sm:$0xff]
    %v841 = vld [vmem:[%s760 + $0x280] sm:$0xff]
    %v842 = vld [vmem:[%s760 + $0x288] sm:$0xff]
    %v843 = vld [vmem:[%s760 + $0x290] sm:$0xff]
    %v844 = vld [vmem:[%s760 + $0x298] sm:$0xff]
    %v845 = vld [vmem:[%s760 + $0x2a0] sm:$0xff]
    %v846 = vld [vmem:[%s760 + $0x2a8] sm:$0xff]
    %v847 = vld [vmem:[%s760 + $0x2b0] sm:$0xff]
    %v848 = vld [vmem:[%s760 + $0x2b8] sm:$0xff]
    %v849 = vld [vmem:[%s760 + $0x2c0] sm:$0xff]
    %v850 = vld [vmem:[%s760 + $0x2c8] sm:$0xff]
    %v851 = vld [vmem:[%s760 + $0x2d0] sm:$0xff]
    %v852 = vld [vmem:[%s760 + $0x2d8] sm:$0xff]
    %v853 = vld [vmem:[%s760 + $0x2e0] sm:$0xff]
    %v854 = vld [vmem:[%s760 + $0x2e8] sm:$0xff]
    %v855 = vld [vmem:[%s760 + $0x2f0] sm:$0xff]
    %v856 = vld [vmem:[%s760 + $0x2f8] sm:$0xff]
    %v857 = vld [vmem:[%s760 + $0x300] sm:$0xff]
    %v858 = vld [vmem:[%s760 + $0x308] sm:$0xff]
    %v859 = vld [vmem:[%s760 + $0x310] sm:$0xff]
    %v860 = vld [vmem:[%s760 + $0x318] sm:$0xff]
    %v861 = vld [vmem:[%s760 + $0x320] sm:$0xff]
    %v862 = vld [vmem:[%s760 + $0x328] sm:$0xff]
    %v863 = vld [vmem:[%s760 + $0x330] sm:$0xff]
    %v864 = vld [vmem:[%s760 + $0x338] sm:$0xff]
    %v865 = vld [vmem:[%s760 + $0x340] sm:$0xff]
    %v866 = vld [vmem:[%s760 + $0x348] sm:$0xff]
    %v867 = vld [vmem:[%s760 + $0x350] sm:$0xff]
    %v868 = vld [vmem:[%s760 + $0x358] sm:$0xff]
    %v869 = vld [vmem:[%s760 + $0x360] sm:$0xff]
    %v870 = vld [vmem:[%s760 + $0x368] sm:$0xff]
    %v871 = vld [vmem:[%s760 + $0x370] sm:$0xff]
    %v872 = vld [vmem:[%s760 + $0x378] sm:$0xff]
    %v873 = vld [vmem:[%s760 + $0x380] sm:$0xff]
    %v874 = vld [vmem:[%s760 + $0x388] sm:$0xff]
    %v875 = vld [vmem:[%s760 + $0x390] sm:$0xff]
    %v876 = vld [vmem:[%s760 + $0x398] sm:$0xff]
    %v877 = vld [vmem:[%s760 + $0x3a0] sm:$0xff]
    %v878 = vld [vmem:[%s760 + $0x3a8] sm:$0xff]
    %v879 = vld [vmem:[%s760 + $0x3b0] sm:$0xff]
    %v880 = vld [vmem:[%s760 + $0x3b8] sm:$0xff]
    %v881 = vld [vmem:[%s760 + $0x3c0] sm:$0xff]
    %v882 = vld [vmem:[%s760 + $0x3c8] sm:$0xff]
    %v883 = vld [vmem:[%s760 + $0x3d0] sm:$0xff]
    %v884 = vld [vmem:[%s760 + $0x3d8] sm:$0xff]
    %v885 = vld [vmem:[%s760 + $0x3e0] sm:$0xff]
    %v886 = vld [vmem:[%s760 + $0x3e8] sm:$0xff]
    %v887 = vld [vmem:[%s760 + $0x3f0] sm:$0xff]
    %v888 = vld [vmem:[%s760 + $0x3f8] sm:$0xff]
    %v1017 = vunpack.c.l.b16 %v761
    %v1018 = vunpack.c.h.b16 %v761
    %v1019 = vunpack.c.l.b16 %v762
    %v1020 = vunpack.c.h.b16 %v762
    %v1021 = vunpack.c.l.b16 %v763
    %v1022 = vunpack.c.h.b16 %v763
    %v1023 = vunpack.c.l.b16 %v764
    %v1024 = vunpack.c.h.b16 %v764
    %v1025 = vunpack.c.l.b16 %v765
    %v1026 = vunpack.c.h.b16 %v765
    %v1027 = vunpack.c.l.b16 %v766
    %v1028 = vunpack.c.h.b16 %v766
    %v1029 = vunpack.c.l.b16 %v767
    %v1030 = vunpack.c.h.b16 %v767
    %v1031 = vunpack.c.l.b16 %v768
    %v1032 = vunpack.c.h.b16 %v768
    %v1033 = vunpack.c.l.b16 %v769
    %v1034 = vunpack.c.h.b16 %v769
    %v1035 = vunpack.c.l.b16 %v770
    %v1036 = vunpack.c.h.b16 %v770
    %v1037 = vunpack.c.l.b16 %v771
    %v1038 = vunpack.c.h.b16 %v771
    %v1039 = vunpack.c.l.b16 %v772
    %v1040 = vunpack.c.h.b16 %v772
    %v1041 = vunpack.c.l.b16 %v773
    %v1042 = vunpack.c.h.b16 %v773
    %v1043 = vunpack.c.l.b16 %v774
    %v1044 = vunpack.c.h.b16 %v774
    %v1045 = vunpack.c.l.b16 %v775
    %v1046 = vunpack.c.h.b16 %v775
    %v1047 = vunpack.c.l.b16 %v776
    %v1048 = vunpack.c.h.b16 %v776
    %v1049 = vunpack.c.l.b16 %v777
    %v1050 = vunpack.c.h.b16 %v777
    %v1051 = vunpack.c.l.b16 %v778
    %v1052 = vunpack.c.h.b16 %v778
    %v1053 = vunpack.c.l.b16 %v779
    %v1054 = vunpack.c.h.b16 %v779
    %v1055 = vunpack.c.l.b16 %v780
    %v1056 = vunpack.c.h.b16 %v780
    %v1057 = vunpack.c.l.b16 %v781
    %v1058 = vunpack.c.h.b16 %v781
    %v1059 = vunpack.c.l.b16 %v782
    %v1060 = vunpack.c.h.b16 %v782
    %v1061 = vunpack.c.l.b16 %v783
    %v1062 = vunpack.c.h.b16 %v783
    %v1063 = vunpack.c.l.b16 %v784
    %v1064 = vunpack.c.h.b16 %v784
    %v1065 = vunpack.c.l.b16 %v785
    %v1066 = vunpack.c.h.b16 %v785
    %v1067 = vunpack.c.l.b16 %v786
    %v1068 = vunpack.c.h.b16 %v786
    %v1069 = vunpack.c.l.b16 %v787
    %v1070 = vunpack.c.h.b16 %v787
    %v1071 = vunpack.c.l.b16 %v788
    %v1072 = vunpack.c.h.b16 %v788
    %v1073 = vunpack.c.l.b16 %v789
    %v1074 = vunpack.c.h.b16 %v789
    %v1075 = vunpack.c.l.b16 %v790
    %v1076 = vunpack.c.h.b16 %v790
    %v1077 = vunpack.c.l.b16 %v791
    %v1078 = vunpack.c.h.b16 %v791
    %v1079 = vunpack.c.l.b16 %v792
    %v1080 = vunpack.c.h.b16 %v792
    %v1081 = vunpack.c.l.b16 %v793
    %v1082 = vunpack.c.h.b16 %v793
    %v1083 = vunpack.c.l.b16 %v794
    %v1084 = vunpack.c.h.b16 %v794
    %v1085 = vunpack.c.l.b16 %v795
    %v1086 = vunpack.c.h.b16 %v795
    %v1087 = vunpack.c.l.b16 %v796
    %v1088 = vunpack.c.h.b16 %v796
    %v1089 = vunpack.c.l.b16 %v797
    %v1090 = vunpack.c.h.b16 %v797
    %v1091 = vunpack.c.l.b16 %v798
    %v1092 = vunpack.c.h.b16 %v798
    %v1093 = vunpack.c.l.b16 %v799
    %v1094 = vunpack.c.h.b16 %v799
    %v1095 = vunpack.c.l.b16 %v800
    %v1096 = vunpack.c.h.b16 %v800
    %v1097 = vunpack.c.l.b16 %v801
    %v1098 = vunpack.c.h.b16 %v801
    %v1099 = vunpack.c.l.b16 %v802
    %v1100 = vunpack.c.h.b16 %v802
    %v1101 = vunpack.c.l.b16 %v803
    %v1102 = vunpack.c.h.b16 %v803
    %v1103 = vunpack.c.l.b16 %v804
    %v1104 = vunpack.c.h.b16 %v804
    %v1105 = vunpack.c.l.b16 %v805
    %v1106 = vunpack.c.h.b16 %v805
    %v1107 = vunpack.c.l.b16 %v806
    %v1108 = vunpack.c.h.b16 %v806
    %v1109 = vunpack.c.l.b16 %v807
    %v1110 = vunpack.c.h.b16 %v807
    %v1111 = vunpack.c.l.b16 %v808
    %v1112 = vunpack.c.h.b16 %v808
    %v1113 = vunpack.c.l.b16 %v809
    %v1114 = vunpack.c.h.b16 %v809
    %v1115 = vunpack.c.l.b16 %v810
    %v1116 = vunpack.c.h.b16 %v810
    %v1117 = vunpack.c.l.b16 %v811
    %v1118 = vunpack.c.h.b16 %v811
    %v1119 = vunpack.c.l.b16 %v812
    %v1120 = vunpack.c.h.b16 %v812
    %v1121 = vunpack.c.l.b16 %v813
    %v1122 = vunpack.c.h.b16 %v813
    %v1123 = vunpack.c.l.b16 %v814
    %v1124 = vunpack.c.h.b16 %v814
    %v1125 = vunpack.c.l.b16 %v815
    %v1126 = vunpack.c.h.b16 %v815
    %v1127 = vunpack.c.l.b16 %v816
    %v1128 = vunpack.c.h.b16 %v816
    %v1129 = vunpack.c.l.b16 %v817
    %v1130 = vunpack.c.h.b16 %v817
    %v1131 = vunpack.c.l.b16 %v818
    %v1132 = vunpack.c.h.b16 %v818
    %v1133 = vunpack.c.l.b16 %v819
    %v1134 = vunpack.c.h.b16 %v819
    %v1135 = vunpack.c.l.b16 %v820
    %v1136 = vunpack.c.h.b16 %v820
    %v1137 = vunpack.c.l.b16 %v821
    %v1138 = vunpack.c.h.b16 %v821
    %v1139 = vunpack.c.l.b16 %v822
    %v1140 = vunpack.c.h.b16 %v822
    %v1141 = vunpack.c.l.b16 %v823
    %v1142 = vunpack.c.h.b16 %v823
    %v1143 = vunpack.c.l.b16 %v824
    %v1144 = vunpack.c.h.b16 %v824
    %v1145 = vunpack.c.l.b16 %v825
    %v1146 = vunpack.c.h.b16 %v825
    %v1147 = vunpack.c.l.b16 %v826
    %v1148 = vunpack.c.h.b16 %v826
    %v1149 = vunpack.c.l.b16 %v827
    %v1150 = vunpack.c.h.b16 %v827
    %v1151 = vunpack.c.l.b16 %v828
    %v1152 = vunpack.c.h.b16 %v828
    %v1153 = vunpack.c.l.b16 %v829
    %v1154 = vunpack.c.h.b16 %v829
    %v1155 = vunpack.c.l.b16 %v830
    %v1156 = vunpack.c.h.b16 %v830
    %v1157 = vunpack.c.l.b16 %v831
    %v1158 = vunpack.c.h.b16 %v831
    %v1159 = vunpack.c.l.b16 %v832
    %v1160 = vunpack.c.h.b16 %v832
    %v1161 = vunpack.c.l.b16 %v833
    %v1162 = vunpack.c.h.b16 %v833
    %v1163 = vunpack.c.l.b16 %v834
    %v1164 = vunpack.c.h.b16 %v834
    %v1165 = vunpack.c.l.b16 %v835
    %v1166 = vunpack.c.h.b16 %v835
    %v1167 = vunpack.c.l.b16 %v836
    %v1168 = vunpack.c.h.b16 %v836
    %v1169 = vunpack.c.l.b16 %v837
    %v1170 = vunpack.c.h.b16 %v837
    %v1171 = vunpack.c.l.b16 %v838
    %v1172 = vunpack.c.h.b16 %v838
    %v1173 = vunpack.c.l.b16 %v839
    %v1174 = vunpack.c.h.b16 %v839
    %v1175 = vunpack.c.l.b16 %v840
    %v1176 = vunpack.c.h.b16 %v840
    %v1177 = vunpack.c.l.b16 %v841
    %v1178 = vunpack.c.h.b16 %v841
    %v1179 = vunpack.c.l.b16 %v842
    %v1180 = vunpack.c.h.b16 %v842
    %v1181 = vunpack.c.l.b16 %v843
    %v1182 = vunpack.c.h.b16 %v843
    %v1183 = vunpack.c.l.b16 %v844
    %v1184 = vunpack.c.h.b16 %v844
    %v1185 = vunpack.c.l.b16 %v845
    %v1186 = vunpack.c.h.b16 %v845
    %v1187 = vunpack.c.l.b16 %v846
    %v1188 = vunpack.c.h.b16 %v846
    %v1189 = vunpack.c.l.b16 %v847
    %v1190 = vunpack.c.h.b16 %v847
    %v1191 = vunpack.c.l.b16 %v848
    %v1192 = vunpack.c.h.b16 %v848
    %v1193 = vunpack.c.l.b16 %v849
    %v1194 = vunpack.c.h.b16 %v849
    %v1195 = vunpack.c.l.b16 %v850
    %v1196 = vunpack.c.h.b16 %v850
    %v1197 = vunpack.c.l.b16 %v851
    %v1198 = vunpack.c.h.b16 %v851
    %v1199 = vunpack.c.l.b16 %v852
    %v1200 = vunpack.c.h.b16 %v852
    %v1201 = vunpack.c.l.b16 %v853
    %v1202 = vunpack.c.h.b16 %v853
    %v1203 = vunpack.c.l.b16 %v854
    %v1204 = vunpack.c.h.b16 %v854
    %v1205 = vunpack.c.l.b16 %v855
    %v1206 = vunpack.c.h.b16 %v855
    %v1207 = vunpack.c.l.b16 %v856
    %v1208 = vunpack.c.h.b16 %v856
    %v1209 = vunpack.c.l.b16 %v857
    %v1210 = vunpack.c.h.b16 %v857
    %v1211 = vunpack.c.l.b16 %v858
    %v1212 = vunpack.c.h.b16 %v858
    %v1213 = vunpack.c.l.b16 %v859
    %v1214 = vunpack.c.h.b16 %v859
    %v1215 = vunpack.c.l.b16 %v860
    %v1216 = vunpack.c.h.b16 %v860
    %v1217 = vunpack.c.l.b16 %v861
    %v1218 = vunpack.c.h.b16 %v861
    %v1219 = vunpack.c.l.b16 %v862
    %v1220 = vunpack.c.h.b16 %v862
    %v1221 = vunpack.c.l.b16 %v863
    %v1222 = vunpack.c.h.b16 %v863
    %v1223 = vunpack.c.l.b16 %v864
    %v1224 = vunpack.c.h.b16 %v864
    %v1225 = vunpack.c.l.b16 %v865
    %v1226 = vunpack.c.h.b16 %v865
    %v1227 = vunpack.c.l.b16 %v866
    %v1228 = vunpack.c.h.b16 %v866
    %v1229 = vunpack.c.l.b16 %v867
    %v1230 = vunpack.c.h.b16 %v867
    %v1231 = vunpack.c.l.b16 %v868
    %v1232 = vunpack.c.h.b16 %v868
    %v1233 = vunpack.c.l.b16 %v869
    %v1234 = vunpack.c.h.b16 %v869
    %v1235 = vunpack.c.l.b16 %v870
    %v1236 = vunpack.c.h.b16 %v870
    %v1237 = vunpack.c.l.b16 %v871
    %v1238 = vunpack.c.h.b16 %v871
    %v1239 = vunpack.c.l.b16 %v872
    %v1240 = vunpack.c.h.b16 %v872
    %v1241 = vunpack.c.l.b16 %v873
    %v1242 = vunpack.c.h.b16 %v873
    %v1243 = vunpack.c.l.b16 %v874
    %v1244 = vunpack.c.h.b16 %v874
    %v1245 = vunpack.c.l.b16 %v875
    %v1246 = vunpack.c.h.b16 %v875
    %v1247 = vunpack.c.l.b16 %v876
    %v1248 = vunpack.c.h.b16 %v876
    %v1249 = vunpack.c.l.b16 %v877
    %v1250 = vunpack.c.h.b16 %v877
    %v1251 = vunpack.c.l.b16 %v878
    %v1252 = vunpack.c.h.b16 %v878
    %v1253 = vunpack.c.l.b16 %v879
    %v1254 = vunpack.c.h.b16 %v879
    %v1255 = vunpack.c.l.b16 %v880
    %v1256 = vunpack.c.h.b16 %v880
    %v1257 = vunpack.c.l.b16 %v881
    %v1258 = vunpack.c.h.b16 %v881
    %v1259 = vunpack.c.l.b16 %v882
    %v1260 = vunpack.c.h.b16 %v882
    %v1261 = vunpack.c.l.b16 %v883
    %v1262 = vunpack.c.h.b16 %v883
    %v1263 = vunpack.c.l.b16 %v884
    %v1264 = vunpack.c.h.b16 %v884
    %v1265 = vunpack.c.l.b16 %v885
    %v1266 = vunpack.c.h.b16 %v885
    %v1267 = vunpack.c.l.b16 %v886
    %v1268 = vunpack.c.h.b16 %v886
    %v1269 = vunpack.c.l.b16 %v887
    %v1270 = vunpack.c.h.b16 %v887
    %v1271 = vunpack.c.l.b16 %v888
    %v1272 = vunpack.c.h.b16 %v888
    %v1273 = vpack.c.b16 %v1021, %v1017
    %v1274 = vpack.c.b16 %v1022, %v1018
    %v1275 = vpack.c.b16 %v1023, %v1019
    %v1276 = vpack.c.b16 %v1024, %v1020
    %v1277 = vpack.c.b16 %v1029, %v1025
    %v1278 = vpack.c.b16 %v1030, %v1026
    %v1279 = vpack.c.b16 %v1031, %v1027
    %v1280 = vpack.c.b16 %v1032, %v1028
    %v1281 = vpack.c.b16 %v1037, %v1033
    %v1282 = vpack.c.b16 %v1038, %v1034
    %v1283 = vpack.c.b16 %v1039, %v1035
    %v1284 = vpack.c.b16 %v1040, %v1036
    %v1285 = vpack.c.b16 %v1045, %v1041
    %v1286 = vpack.c.b16 %v1046, %v1042
    %v1287 = vpack.c.b16 %v1047, %v1043
    %v1288 = vpack.c.b16 %v1048, %v1044
    %v1289 = vpack.c.b16 %v1053, %v1049
    %v1290 = vpack.c.b16 %v1054, %v1050
    %v1291 = vpack.c.b16 %v1055, %v1051
    %v1292 = vpack.c.b16 %v1056, %v1052
    %v1293 = vpack.c.b16 %v1061, %v1057
    %v1294 = vpack.c.b16 %v1062, %v1058
    %v1295 = vpack.c.b16 %v1063, %v1059
    %v1296 = vpack.c.b16 %v1064, %v1060
    %v1297 = vpack.c.b16 %v1069, %v1065
    %v1298 = vpack.c.b16 %v1070, %v1066
    %v1299 = vpack.c.b16 %v1071, %v1067
    %v1300 = vpack.c.b16 %v1072, %v1068
    %v1301 = vpack.c.b16 %v1077, %v1073
    %v1302 = vpack.c.b16 %v1078, %v1074
    %v1303 = vpack.c.b16 %v1079, %v1075
    %v1304 = vpack.c.b16 %v1080, %v1076
    %v1305 = vpack.c.b16 %v1085, %v1081
    %v1306 = vpack.c.b16 %v1086, %v1082
    %v1307 = vpack.c.b16 %v1087, %v1083
    %v1308 = vpack.c.b16 %v1088, %v1084
    %v1309 = vpack.c.b16 %v1093, %v1089
    %v1310 = vpack.c.b16 %v1094, %v1090
    %v1311 = vpack.c.b16 %v1095, %v1091
    %v1312 = vpack.c.b16 %v1096, %v1092
    %v1313 = vpack.c.b16 %v1101, %v1097
    %v1314 = vpack.c.b16 %v1102, %v1098
    %v1315 = vpack.c.b16 %v1103, %v1099
    %v1316 = vpack.c.b16 %v1104, %v1100
    %v1317 = vpack.c.b16 %v1109, %v1105
    %v1318 = vpack.c.b16 %v1110, %v1106
    %v1319 = vpack.c.b16 %v1111, %v1107
    %v1320 = vpack.c.b16 %v1112, %v1108
    %v1321 = vpack.c.b16 %v1117, %v1113
    %v1322 = vpack.c.b16 %v1118, %v1114
    %v1323 = vpack.c.b16 %v1119, %v1115
    %v1324 = vpack.c.b16 %v1120, %v1116
    %v1325 = vpack.c.b16 %v1125, %v1121
    %v1326 = vpack.c.b16 %v1126, %v1122
    %v1327 = vpack.c.b16 %v1127, %v1123
    %v1328 = vpack.c.b16 %v1128, %v1124
    %v1329 = vpack.c.b16 %v1133, %v1129
    %v1330 = vpack.c.b16 %v1134, %v1130
    %v1331 = vpack.c.b16 %v1135, %v1131
    %v1332 = vpack.c.b16 %v1136, %v1132
    %v1333 = vpack.c.b16 %v1141, %v1137
    %v1334 = vpack.c.b16 %v1142, %v1138
    %v1335 = vpack.c.b16 %v1143, %v1139
    %v1336 = vpack.c.b16 %v1144, %v1140
    %v1337 = vpack.c.b16 %v1149, %v1145
    %v1338 = vpack.c.b16 %v1150, %v1146
    %v1339 = vpack.c.b16 %v1151, %v1147
    %v1340 = vpack.c.b16 %v1152, %v1148
    %v1341 = vpack.c.b16 %v1157, %v1153
    %v1342 = vpack.c.b16 %v1158, %v1154
    %v1343 = vpack.c.b16 %v1159, %v1155
    %v1344 = vpack.c.b16 %v1160, %v1156
    %v1345 = vpack.c.b16 %v1165, %v1161
    %v1346 = vpack.c.b16 %v1166, %v1162
    %v1347 = vpack.c.b16 %v1167, %v1163
    %v1348 = vpack.c.b16 %v1168, %v1164
    %v1349 = vpack.c.b16 %v1173, %v1169
    %v1350 = vpack.c.b16 %v1174, %v1170
    %v1351 = vpack.c.b16 %v1175, %v1171
    %v1352 = vpack.c.b16 %v1176, %v1172
    %v1353 = vpack.c.b16 %v1181, %v1177
    %v1354 = vpack.c.b16 %v1182, %v1178
    %v1355 = vpack.c.b16 %v1183, %v1179
    %v1356 = vpack.c.b16 %v1184, %v1180
    %v1357 = vpack.c.b16 %v1189, %v1185
    %v1358 = vpack.c.b16 %v1190, %v1186
    %v1359 = vpack.c.b16 %v1191, %v1187
    %v1360 = vpack.c.b16 %v1192, %v1188
    %v1361 = vpack.c.b16 %v1197, %v1193
    %v1362 = vpack.c.b16 %v1198, %v1194
    %v1363 = vpack.c.b16 %v1199, %v1195
    %v1364 = vpack.c.b16 %v1200, %v1196
    %v1365 = vpack.c.b16 %v1205, %v1201
    %v1366 = vpack.c.b16 %v1206, %v1202
    %v1367 = vpack.c.b16 %v1207, %v1203
    %v1368 = vpack.c.b16 %v1208, %v1204
    %v1369 = vpack.c.b16 %v1213, %v1209
    %v1370 = vpack.c.b16 %v1214, %v1210
    %v1371 = vpack.c.b16 %v1215, %v1211
    %v1372 = vpack.c.b16 %v1216, %v1212
    %v1373 = vpack.c.b16 %v1221, %v1217
    %v1374 = vpack.c.b16 %v1222, %v1218
    %v1375 = vpack.c.b16 %v1223, %v1219
    %v1376 = vpack.c.b16 %v1224, %v1220
    %v1377 = vpack.c.b16 %v1229, %v1225
    %v1378 = vpack.c.b16 %v1230, %v1226
    %v1379 = vpack.c.b16 %v1231, %v1227
    %v1380 = vpack.c.b16 %v1232, %v1228
    %v1381 = vpack.c.b16 %v1237, %v1233
    %v1382 = vpack.c.b16 %v1238, %v1234
    %v1383 = vpack.c.b16 %v1239, %v1235
    %v1384 = vpack.c.b16 %v1240, %v1236
    %v1385 = vpack.c.b16 %v1245, %v1241
    %v1386 = vpack.c.b16 %v1246, %v1242
    %v1387 = vpack.c.b16 %v1247, %v1243
    %v1388 = vpack.c.b16 %v1248, %v1244
    %v1389 = vpack.c.b16 %v1253, %v1249
    %v1390 = vpack.c.b16 %v1254, %v1250
    %v1391 = vpack.c.b16 %v1255, %v1251
    %v1392 = vpack.c.b16 %v1256, %v1252
    %v1393 = vpack.c.b16 %v1261, %v1257
    %v1394 = vpack.c.b16 %v1262, %v1258
    %v1395 = vpack.c.b16 %v1263, %v1259
    %v1396 = vpack.c.b16 %v1264, %v1260
    %v1397 = vpack.c.b16 %v1269, %v1265
    %v1398 = vpack.c.b16 %v1270, %v1266
    %v1399 = vpack.c.b16 %v1271, %v1267
    %v1400 = vpack.c.b16 %v1272, %v1268
    %1529 = vmatprep.subr.bf16.mxu0 %v1274
    %1530 = vmatpush1.bf16.msra.mxu0 %v1273
    %1531 = vmatprep.subr.bf16.mxu0 %v1278
    %1532 = vmatpush1.bf16.msra.mxu0 %v1277
    %1533 = vmatprep.subr.bf16.mxu0 %v1282
    %1534 = vmatpush1.bf16.msra.mxu0 %v1281
    %1535 = vmatprep.subr.bf16.mxu0 %v1286
    %1536 = vmatpush1.bf16.msra.mxu0 %v1285
    %1537 = vmatprep.subr.bf16.mxu0 %v1290
    %1538 = vmatpush1.bf16.msra.mxu0 %v1289
    %1539 = vmatprep.subr.bf16.mxu0 %v1294
    %1540 = vmatpush1.bf16.msra.mxu0 %v1293
    %1541 = vmatprep.subr.bf16.mxu0 %v1298
    %1542 = vmatpush1.bf16.msra.mxu0 %v1297
    %1543 = vmatprep.subr.bf16.mxu0 %v1302
    %1544 = vmatpush1.bf16.msra.mxu0 %v1301
    %1545 = vmatprep.subr.bf16.mxu0 %v1306
    %1546 = vmatpush1.bf16.msra.mxu0 %v1305
    %1547 = vmatprep.subr.bf16.mxu0 %v1310
    %1548 = vmatpush1.bf16.msra.mxu0 %v1309
    %1549 = vmatprep.subr.bf16.mxu0 %v1314
    %1550 = vmatpush1.bf16.msra.mxu0 %v1313
    %1551 = vmatprep.subr.bf16.mxu0 %v1318
    %1552 = vmatpush1.bf16.msra.mxu0 %v1317
    %1553 = vmatprep.subr.bf16.mxu0 %v1322
    %1554 = vmatpush1.bf16.msra.mxu0 %v1321
    %1555 = vmatprep.subr.bf16.mxu0 %v1326
    %1556 = vmatpush1.bf16.msra.mxu0 %v1325
    %1557 = vmatprep.subr.bf16.mxu0 %v1330
    %1558 = vmatpush1.bf16.msra.mxu0 %v1329
    %1559 = vmatprep.subr.bf16.mxu0 %v1334
    %1560 = vmatpush1.bf16.msra.mxu0 %v1333
    %1561 = vmatprep.mubr.bf16.mxu0 %v753
    %1562 = vmatmul.mubr.bf16.gmra.mrb[0].mxu0 %v752
    %v1563 = vpop.f32.mrb[0].mxu0
    %v1564 = vadd.f32 0.0, %v1563
    %v1565 = vpop.f32.mrb[0].mxu0
    %v1566 = vadd.f32 0.0, %v1565
    %v1567 = vpop.f32.mrb[0].mxu0
    %v1568 = vadd.f32 0.0, %v1567
    %v1569 = vpop.f32.mrb[0].mxu0
    %v1570 = vadd.f32 0.0, %v1569
    %1571 = vmatprep.mubr.bf16.mxu0 %v757
    %1572 = vmatmul.mubr.bf16.gmra.mrb[0].mxu0 %v756
    %v1573 = vpop.f32.mrb[0].mxu0
    %v1574 = vadd.f32 0.0, %v1573
    %v1575 = vpop.f32.mrb[0].mxu0
    %v1576 = vadd.f32 0.0, %v1575
    %v1577 = vpop.f32.mrb[0].mxu0
    %v1578 = vadd.f32 0.0, %v1577
    %v1579 = vpop.f32.mrb[0].mxu0
    %v1580 = vadd.f32 0.0, %v1579
    %1581 = vdwg.mxu0
    %1582 = vmatprep.subr.bf16.mxu0 %v1338
    %1583 = vmatpush1.bf16.msra.mxu0 %v1337
    %1584 = vmatprep.subr.bf16.mxu0 %v1342
    %1585 = vmatpush1.bf16.msra.mxu0 %v1341
    %1586 = vmatprep.subr.bf16.mxu0 %v1346
    %1587 = vmatpush1.bf16.msra.mxu0 %v1345
    %1588 = vmatprep.subr.bf16.mxu0 %v1350
    %1589 = vmatpush1.bf16.msra.mxu0 %v1349
    %1590 = vmatprep.subr.bf16.mxu0 %v1354
    %1591 = vmatpush1.bf16.msra.mxu0 %v1353
    %1592 = vmatprep.subr.bf16.mxu0 %v1358
    %1593 = vmatpush1.bf16.msra.mxu0 %v1357
    %1594 = vmatprep.subr.bf16.mxu0 %v1362
    %1595 = vmatpush1.bf16.msra.mxu0 %v1361
    %1596 = vmatprep.subr.bf16.mxu0 %v1366
    %1597 = vmatpush1.bf16.msra.mxu0 %v1365
    %1598 = vmatprep.subr.bf16.mxu0 %v1370
    %1599 = vmatpush1.bf16.msra.mxu0 %v1369
    %1600 = vmatprep.subr.bf16.mxu0 %v1374
    %1601 = vmatpush1.bf16.msra.mxu0 %v1373
    %1602 = vmatprep.subr.bf16.mxu0 %v1378
    %1603 = vmatpush1.bf16.msra.mxu0 %v1377
    %1604 = vmatprep.subr.bf16.mxu0 %v1382
    %1605 = vmatpush1.bf16.msra.mxu0 %v1381
    %1606 = vmatprep.subr.bf16.mxu0 %v1386
    %1607 = vmatpush1.bf16.msra.mxu0 %v1385
    %1608 = vmatprep.subr.bf16.mxu0 %v1390
    %1609 = vmatpush1.bf16.msra.mxu0 %v1389
    %1610 = vmatprep.subr.bf16.mxu0 %v1394
    %1611 = vmatpush1.bf16.msra.mxu0 %v1393
    %1612 = vmatprep.subr.bf16.mxu0 %v1398
    %1613 = vmatpush1.bf16.msra.mxu0 %v1397
    %1614 = vmatprep.mubr.bf16.mxu0 %v755
    %1615 = vmatmul.mubr.bf16.gmra.mrb[0].mxu0 %v754
    %v1616 = vpop.f32.mrb[0].mxu0
    %v1617 = vadd.f32 %v1564, %v1616
    %v1618 = vpop.f32.mrb[0].mxu0
    %v1619 = vadd.f32 %v1566, %v1618
    %v1620 = vpop.f32.mrb[0].mxu0
    %v1621 = vadd.f32 %v1568, %v1620
    %v1622 = vpop.f32.mrb[0].mxu0
    %v1623 = vadd.f32 %v1570, %v1622
    %1624 = vmatprep.mubr.bf16.mxu0 %v759
    %1625 = vmatmul.mubr.bf16.gmra.mrb[0].mxu0 %v758
    %v1626 = vpop.f32.mrb[0].mxu0
    %v1627 = vadd.f32 %v1574, %v1626
    %v1628 = vpop.f32.mrb[0].mxu0
    %v1629 = vadd.f32 %v1576, %v1628
    %v1630 = vpop.f32.mrb[0].mxu0
    %v1631 = vadd.f32 %v1578, %v1630
    %v1632 = vpop.f32.mrb[0].mxu0
    %v1633 = vadd.f32 %v1580, %v1632
    %1634 = vdwg.mxu0
    %1635 = vmatprep.subr.bf16.mxu0 %v1276
    %1636 = vmatpush1.bf16.msra.mxu0 %v1275
    %1637 = vmatprep.subr.bf16.mxu0 %v1280
    %1638 = vmatpush1.bf16.msra.mxu0 %v1279
    %1639 = vmatprep.subr.bf16.mxu0 %v1284
    %1640 = vmatpush1.bf16.msra.mxu0 %v1283
    %1641 = vmatprep.subr.bf16.mxu0 %v1288
    %1642 = vmatpush1.bf16.msra.mxu0 %v1287
    %1643 = vmatprep.subr.bf16.mxu0 %v1292
    %1644 = vmatpush1.bf16.msra.mxu0 %v1291
    %1645 = vmatprep.subr.bf16.mxu0 %v1296
    %1646 = vmatpush1.bf16.msra.mxu0 %v1295
    %1647 = vmatprep.subr.bf16.mxu0 %v1300
    %1648 = vmatpush1.bf16.msra.mxu0 %v1299
    %1649 = vmatprep.subr.bf16.mxu0 %v1304
    %1650 = vmatpush1.bf16.msra.mxu0 %v1303
    %1651 = vmatprep.subr.bf16.mxu0 %v1308
    %1652 = vmatpush1.bf16.msra.mxu0 %v1307
    %1653 = vmatprep.subr.bf16.mxu0 %v1312
    %1654 = vmatpush1.bf16.msra.mxu0 %v1311
    %1655 = vmatprep.subr.bf16.mxu0 %v1316
    %1656 = vmatpush1.bf16.msra.mxu0 %v1315
    %1657 = vmatprep.subr.bf16.mxu0 %v1320
    %1658 = vmatpush1.bf16.msra.mxu0 %v1319
    %1659 = vmatprep.subr.bf16.mxu0 %v1324
    %1660 = vmatpush1.bf16.msra.mxu0 %v1323
    %1661 = vmatprep.subr.bf16.mxu0 %v1328
    %1662 = vmatpush1.bf16.msra.mxu0 %v1327
    %1663 = vmatprep.subr.bf16.mxu0 %v1332
    %1664 = vmatpush1.bf16.msra.mxu0 %v1331
    %1665 = vmatprep.subr.bf16.mxu0 %v1336
    %1666 = vmatpush1.bf16.msra.mxu0 %v1335
    %1667 = vmatprep.mubr.bf16.mxu0 %v753
    %1668 = vmatmul.mubr.bf16.gmra.mrb[0].mxu0 %v752
    %v1669 = vpop.f32.mrb[0].mxu0
    %v1670 = vadd.f32 0.0, %v1669
    %v1671 = vpop.f32.mrb[0].mxu0
    %v1672 = vadd.f32 0.0, %v1671
    %v1673 = vpop.f32.mrb[0].mxu0
    %v1674 = vadd.f32 0.0, %v1673
    %v1675 = vpop.f32.mrb[0].mxu0
    %v1676 = vadd.f32 0.0, %v1675
    %1677 = vmatprep.mubr.bf16.mxu0 %v757
    %1678 = vmatmul.mubr.bf16.gmra.mrb[0].mxu0 %v756
    %v1679 = vpop.f32.mrb[0].mxu0
    %v1680 = vadd.f32 0.0, %v1679
    %v1681 = vpop.f32.mrb[0].mxu0
    %v1682 = vadd.f32 0.0, %v1681
    %v1683 = vpop.f32.mrb[0].mxu0
    %v1684 = vadd.f32 0.0, %v1683
    %v1685 = vpop.f32.mrb[0].mxu0
    %v1686 = vadd.f32 0.0, %v1685
    %1687 = vdwg.mxu0
    %1688 = vmatprep.subr.bf16.mxu0 %v1340
    %1689 = vmatpush1.bf16.msra.mxu0 %v1339
    %1690 = vmatprep.subr.bf16.mxu0 %v1344
    %1691 = vmatpush1.bf16.msra.mxu0 %v1343
    %1692 = vmatprep.subr.bf16.mxu0 %v1348
    %1693 = vmatpush1.bf16.msra.mxu0 %v1347
    %1694 = vmatprep.subr.bf16.mxu0 %v1352
    %1695 = vmatpush1.bf16.msra.mxu0 %v1351
    %1696 = vmatprep.subr.bf16.mxu0 %v1356
    %1697 = vmatpush1.bf16.msra.mxu0 %v1355
    %1698 = vmatprep.subr.bf16.mxu0 %v1360
    %1699 = vmatpush1.bf16.msra.mxu0 %v1359
    %1700 = vmatprep.subr.bf16.mxu0 %v1364
    %1701 = vmatpush1.bf16.msra.mxu0 %v1363
    %1702 = vmatprep.subr.bf16.mxu0 %v1368
    %1703 = vmatpush1.bf16.msra.mxu0 %v1367
    %1704 = vmatprep.subr.bf16.mxu0 %v1372
    %1705 = vmatpush1.bf16.msra.mxu0 %v1371
    %1706 = vmatprep.subr.bf16.mxu0 %v1376
    %1707 = vmatpush1.bf16.msra.mxu0 %v1375
    %1708 = vmatprep.subr.bf16.mxu0 %v1380
    %1709 = vmatpush1.bf16.msra.mxu0 %v1379
    %1710 = vmatprep.subr.bf16.mxu0 %v1384
    %1711 = vmatpush1.bf16.msra.mxu0 %v1383
    %1712 = vmatprep.subr.bf16.mxu0 %v1388
    %1713 = vmatpush1.bf16.msra.mxu0 %v1387
    %1714 = vmatprep.subr.bf16.mxu0 %v1392
    %1715 = vmatpush1.bf16.msra.mxu0 %v1391
    %1716 = vmatprep.subr.bf16.mxu0 %v1396
    %1717 = vmatpush1.bf16.msra.mxu0 %v1395
    %1718 = vmatprep.subr.bf16.mxu0 %v1400
    %1719 = vmatpush1.bf16.msra.mxu0 %v1399
    %1720 = vmatprep.mubr.bf16.mxu0 %v755
    %1721 = vmatmul.mubr.bf16.gmra.mrb[0].mxu0 %v754
    %v1722 = vpop.f32.mrb[0].mxu0
    %v1723 = vadd.f32 %v1670, %v1722
    %v1724 = vpop.f32.mrb[0].mxu0
    %v1725 = vadd.f32 %v1672, %v1724
    %v1726 = vpop.f32.mrb[0].mxu0
    %v1727 = vadd.f32 %v1674, %v1726
    %v1728 = vpop.f32.mrb[0].mxu0
    %v1729 = vadd.f32 %v1676, %v1728
    %1730 = vmatprep.mubr.bf16.mxu0 %v759
    %1731 = vmatmul.mubr.bf16.gmra.mrb[0].mxu0 %v758
    %v1732 = vpop.f32.mrb[0].mxu0
    %v1733 = vadd.f32 %v1680, %v1732
    %v1734 = vpop.f32.mrb[0].mxu0
    %v1735 = vadd.f32 %v1682, %v1734
    %v1736 = vpop.f32.mrb[0].mxu0
    %v1737 = vadd.f32 %v1684, %v1736
    %v1738 = vpop.f32.mrb[0].mxu0
    %v1739 = vadd.f32 %v1686, %v1738
    %1740 = vdwg.mxu0
    %v1869 = vunpack.c.l.b16 %v624
    %v1870 = vunpack.c.h.b16 %v624
    %v1871 = vunpack.c.l.b16 %v625
    %v1872 = vunpack.c.h.b16 %v625
    %v1873 = vunpack.c.l.b16 %v626
    %v1874 = vunpack.c.h.b16 %v626
    %v1875 = vunpack.c.l.b16 %v627
    %v1876 = vunpack.c.h.b16 %v627
    %v1877 = vunpack.c.l.b16 %v628
    %v1878 = vunpack.c.h.b16 %v628
    %v1879 = vunpack.c.l.b16 %v629
    %v1880 = vunpack.c.h.b16 %v629
    %v1881 = vunpack.c.l.b16 %v630
    %v1882 = vunpack.c.h.b16 %v630
    %v1883 = vunpack.c.l.b16 %v631
    %v1884 = vunpack.c.h.b16 %v631
    %v1885 = vunpack.c.l.b16 %v632
    %v1886 = vunpack.c.h.b16 %v632
    %v1887 = vunpack.c.l.b16 %v633
    %v1888 = vunpack.c.h.b16 %v633
    %v1889 = vunpack.c.l.b16 %v634
    %v1890 = vunpack.c.h.b16 %v634
    %v1891 = vunpack.c.l.b16 %v635
    %v1892 = vunpack.c.h.b16 %v635
    %v1893 = vunpack.c.l.b16 %v636
    %v1894 = vunpack.c.h.b16 %v636
    %v1895 = vunpack.c.l.b16 %v637
    %v1896 = vunpack.c.h.b16 %v637
    %v1897 = vunpack.c.l.b16 %v638
    %v1898 = vunpack.c.h.b16 %v638
    %v1899 = vunpack.c.l.b16 %v639
    %v1900 = vunpack.c.h.b16 %v639
    %v1901 = vunpack.c.l.b16 %v640
    %v1902 = vunpack.c.h.b16 %v640
    %v1903 = vunpack.c.l.b16 %v641
    %v1904 = vunpack.c.h.b16 %v641
    %v1905 = vunpack.c.l.b16 %v642
    %v1906 = vunpack.c.h.b16 %v642
    %v1907 = vunpack.c.l.b16 %v643
    %v1908 = vunpack.c.h.b16 %v643
    %v1909 = vunpack.c.l.b16 %v644
    %v1910 = vunpack.c.h.b16 %v644
    %v1911 = vunpack.c.l.b16 %v645
    %v1912 = vunpack.c.h.b16 %v645
    %v1913 = vunpack.c.l.b16 %v646
    %v1914 = vunpack.c.h.b16 %v646
    %v1915 = vunpack.c.l.b16 %v647
    %v1916 = vunpack.c.h.b16 %v647
    %v1917 = vunpack.c.l.b16 %v648
    %v1918 = vunpack.c.h.b16 %v648
    %v1919 = vunpack.c.l.b16 %v649
    %v1920 = vunpack.c.h.b16 %v649
    %v1921 = vunpack.c.l.b16 %v650
    %v1922 = vunpack.c.h.b16 %v650
    %v1923 = vunpack.c.l.b16 %v651
    %v1924 = vunpack.c.h.b16 %v651
    %v1925 = vunpack.c.l.b16 %v652
    %v1926 = vunpack.c.h.b16 %v652
    %v1927 = vunpack.c.l.b16 %v653
    %v1928 = vunpack.c.h.b16 %v653
    %v1929 = vunpack.c.l.b16 %v654
    %v1930 = vunpack.c.h.b16 %v654
    %v1931 = vunpack.c.l.b16 %v655
    %v1932 = vunpack.c.h.b16 %v655
    %v1933 = vunpack.c.l.b16 %v656
    %v1934 = vunpack.c.h.b16 %v656
    %v1935 = vunpack.c.l.b16 %v657
    %v1936 = vunpack.c.h.b16 %v657
    %v1937 = vunpack.c.l.b16 %v658
    %v1938 = vunpack.c.h.b16 %v658
    %v1939 = vunpack.c.l.b16 %v659
    %v1940 = vunpack.c.h.b16 %v659
    %v1941 = vunpack.c.l.b16 %v660
    %v1942 = vunpack.c.h.b16 %v660
    %v1943 = vunpack.c.l.b16 %v661
    %v1944 = vunpack.c.h.b16 %v661
    %v1945 = vunpack.c.l.b16 %v662
    %v1946 = vunpack.c.h.b16 %v662
    %v1947 = vunpack.c.l.b16 %v663
    %v1948 = vunpack.c.h.b16 %v663
    %v1949 = vunpack.c.l.b16 %v664
    %v1950 = vunpack.c.h.b16 %v664
    %v1951 = vunpack.c.l.b16 %v665
    %v1952 = vunpack.c.h.b16 %v665
    %v1953 = vunpack.c.l.b16 %v666
    %v1954 = vunpack.c.h.b16 %v666
    %v1955 = vunpack.c.l.b16 %v667
    %v1956 = vunpack.c.h.b16 %v667
    %v1957 = vunpack.c.l.b16 %v668
    %v1958 = vunpack.c.h.b16 %v668
    %v1959 = vunpack.c.l.b16 %v669
    %v1960 = vunpack.c.h.b16 %v669
    %v1961 = vunpack.c.l.b16 %v670
    %v1962 = vunpack.c.h.b16 %v670
    %v1963 = vunpack.c.l.b16 %v671
    %v1964 = vunpack.c.h.b16 %v671
    %v1965 = vunpack.c.l.b16 %v672
    %v1966 = vunpack.c.h.b16 %v672
    %v1967 = vunpack.c.l.b16 %v673
    %v1968 = vunpack.c.h.b16 %v673
    %v1969 = vunpack.c.l.b16 %v674
    %v1970 = vunpack.c.h.b16 %v674
    %v1971 = vunpack.c.l.b16 %v675
    %v1972 = vunpack.c.h.b16 %v675
    %v1973 = vunpack.c.l.b16 %v676
    %v1974 = vunpack.c.h.b16 %v676
    %v1975 = vunpack.c.l.b16 %v677
    %v1976 = vunpack.c.h.b16 %v677
    %v1977 = vunpack.c.l.b16 %v678
    %v1978 = vunpack.c.h.b16 %v678
    %v1979 = vunpack.c.l.b16 %v679
    %v1980 = vunpack.c.h.b16 %v679
    %v1981 = vunpack.c.l.b16 %v680
    %v1982 = vunpack.c.h.b16 %v680
    %v1983 = vunpack.c.l.b16 %v681
    %v1984 = vunpack.c.h.b16 %v681
    %v1985 = vunpack.c.l.b16 %v682
    %v1986 = vunpack.c.h.b16 %v682
    %v1987 = vunpack.c.l.b16 %v683
    %v1988 = vunpack.c.h.b16 %v683
    %v1989 = vunpack.c.l.b16 %v684
    %v1990 = vunpack.c.h.b16 %v684
    %v1991 = vunpack.c.l.b16 %v685
    %v1992 = vunpack.c.h.b16 %v685
    %v1993 = vunpack.c.l.b16 %v686
    %v1994 = vunpack.c.h.b16 %v686
    %v1995 = vunpack.c.l.b16 %v687
    %v1996 = vunpack.c.h.b16 %v687
    %v1997 = vunpack.c.l.b16 %v688
    %v1998 = vunpack.c.h.b16 %v688
    %v1999 = vunpack.c.l.b16 %v689
    %v2000 = vunpack.c.h.b16 %v689
    %v2001 = vunpack.c.l.b16 %v690
    %v2002 = vunpack.c.h.b16 %v690
    %v2003 = vunpack.c.l.b16 %v691
    %v2004 = vunpack.c.h.b16 %v691
    %v2005 = vunpack.c.l.b16 %v692
    %v2006 = vunpack.c.h.b16 %v692
    %v2007 = vunpack.c.l.b16 %v693
    %v2008 = vunpack.c.h.b16 %v693
    %v2009 = vunpack.c.l.b16 %v694
    %v2010 = vunpack.c.h.b16 %v694
    %v2011 = vunpack.c.l.b16 %v695
    %v2012 = vunpack.c.h.b16 %v695
    %v2013 = vunpack.c.l.b16 %v696
    %v2014 = vunpack.c.h.b16 %v696
    %v2015 = vunpack.c.l.b16 %v697
    %v2016 = vunpack.c.h.b16 %v697
    %v2017 = vunpack.c.l.b16 %v698
    %v2018 = vunpack.c.h.b16 %v698
    %v2019 = vunpack.c.l.b16 %v699
    %v2020 = vunpack.c.h.b16 %v699
    %v2021 = vunpack.c.l.b16 %v700
    %v2022 = vunpack.c.h.b16 %v700
    %v2023 = vunpack.c.l.b16 %v701
    %v2024 = vunpack.c.h.b16 %v701
    %v2025 = vunpack.c.l.b16 %v702
    %v2026 = vunpack.c.h.b16 %v702
    %v2027 = vunpack.c.l.b16 %v703
    %v2028 = vunpack.c.h.b16 %v703
    %v2029 = vunpack.c.l.b16 %v704
    %v2030 = vunpack.c.h.b16 %v704
    %v2031 = vunpack.c.l.b16 %v705
    %v2032 = vunpack.c.h.b16 %v705
    %v2033 = vunpack.c.l.b16 %v706
    %v2034 = vunpack.c.h.b16 %v706
    %v2035 = vunpack.c.l.b16 %v707
    %v2036 = vunpack.c.h.b16 %v707
    %v2037 = vunpack.c.l.b16 %v708
    %v2038 = vunpack.c.h.b16 %v708
    %v2039 = vunpack.c.l.b16 %v709
    %v2040 = vunpack.c.h.b16 %v709
    %v2041 = vunpack.c.l.b16 %v710
    %v2042 = vunpack.c.h.b16 %v710
    %v2043 = vunpack.c.l.b16 %v711
    %v2044 = vunpack.c.h.b16 %v711
    %v2045 = vunpack.c.l.b16 %v712
    %v2046 = vunpack.c.h.b16 %v712
    %v2047 = vunpack.c.l.b16 %v713
    %v2048 = vunpack.c.h.b16 %v713
    %v2049 = vunpack.c.l.b16 %v714
    %v2050 = vunpack.c.h.b16 %v714
    %v2051 = vunpack.c.l.b16 %v715
    %v2052 = vunpack.c.h.b16 %v715
    %v2053 = vunpack.c.l.b16 %v716
    %v2054 = vunpack.c.h.b16 %v716
    %v2055 = vunpack.c.l.b16 %v717
    %v2056 = vunpack.c.h.b16 %v717
    %v2057 = vunpack.c.l.b16 %v718
    %v2058 = vunpack.c.h.b16 %v718
    %v2059 = vunpack.c.l.b16 %v719
    %v2060 = vunpack.c.h.b16 %v719
    %v2061 = vunpack.c.l.b16 %v720
    %v2062 = vunpack.c.h.b16 %v720
    %v2063 = vunpack.c.l.b16 %v721
    %v2064 = vunpack.c.h.b16 %v721
    %v2065 = vunpack.c.l.b16 %v722
    %v2066 = vunpack.c.h.b16 %v722
    %v2067 = vunpack.c.l.b16 %v723
    %v2068 = vunpack.c.h.b16 %v723
    %v2069 = vunpack.c.l.b16 %v724
    %v2070 = vunpack.c.h.b16 %v724
    %v2071 = vunpack.c.l.b16 %v725
    %v2072 = vunpack.c.h.b16 %v725
    %v2073 = vunpack.c.l.b16 %v726
    %v2074 = vunpack.c.h.b16 %v726
    %v2075 = vunpack.c.l.b16 %v727
    %v2076 = vunpack.c.h.b16 %v727
    %v2077 = vunpack.c.l.b16 %v728
    %v2078 = vunpack.c.h.b16 %v728
    %v2079 = vunpack.c.l.b16 %v729
    %v2080 = vunpack.c.h.b16 %v729
    %v2081 = vunpack.c.l.b16 %v730
    %v2082 = vunpack.c.h.b16 %v730
    %v2083 = vunpack.c.l.b16 %v731
    %v2084 = vunpack.c.h.b16 %v731
    %v2085 = vunpack.c.l.b16 %v732
    %v2086 = vunpack.c.h.b16 %v732
    %v2087 = vunpack.c.l.b16 %v733
    %v2088 = vunpack.c.h.b16 %v733
    %v2089 = vunpack.c.l.b16 %v734
    %v2090 = vunpack.c.h.b16 %v734
    %v2091 = vunpack.c.l.b16 %v735
    %v2092 = vunpack.c.h.b16 %v735
    %v2093 = vunpack.c.l.b16 %v736
    %v2094 = vunpack.c.h.b16 %v736
    %v2095 = vunpack.c.l.b16 %v737
    %v2096 = vunpack.c.h.b16 %v737
    %v2097 = vunpack.c.l.b16 %v738
    %v2098 = vunpack.c.h.b16 %v738
    %v2099 = vunpack.c.l.b16 %v739
    %v2100 = vunpack.c.h.b16 %v739
    %v2101 = vunpack.c.l.b16 %v740
    %v2102 = vunpack.c.h.b16 %v740
    %v2103 = vunpack.c.l.b16 %v741
    %v2104 = vunpack.c.h.b16 %v741
    %v2105 = vunpack.c.l.b16 %v742
    %v2106 = vunpack.c.h.b16 %v742
    %v2107 = vunpack.c.l.b16 %v743
    %v2108 = vunpack.c.h.b16 %v743
    %v2109 = vunpack.c.l.b16 %v744
    %v2110 = vunpack.c.h.b16 %v744
    %v2111 = vunpack.c.l.b16 %v745
    %v2112 = vunpack.c.h.b16 %v745
    %v2113 = vunpack.c.l.b16 %v746
    %v2114 = vunpack.c.h.b16 %v746
    %v2115 = vunpack.c.l.b16 %v747
    %v2116 = vunpack.c.h.b16 %v747
    %v2117 = vunpack.c.l.b16 %v748
    %v2118 = vunpack.c.h.b16 %v748
    %v2119 = vunpack.c.l.b16 %v749
    %v2120 = vunpack.c.h.b16 %v749
    %v2121 = vunpack.c.l.b16 %v750
    %v2122 = vunpack.c.h.b16 %v750
    %v2123 = vunpack.c.l.b16 %v751
    %v2124 = vunpack.c.h.b16 %v751
    %v2125 = vpack.c.b16 %v1873, %v1869
    %v2126 = vpack.c.b16 %v1874, %v1870
    %v2127 = vpack.c.b16 %v1875, %v1871
    %v2128 = vpack.c.b16 %v1876, %v1872
    %v2129 = vpack.c.b16 %v1881, %v1877
    %v2130 = vpack.c.b16 %v1882, %v1878
    %v2131 = vpack.c.b16 %v1883, %v1879
    %v2132 = vpack.c.b16 %v1884, %v1880
    %v2133 = vpack.c.b16 %v1889, %v1885
    %v2134 = vpack.c.b16 %v1890, %v1886
    %v2135 = vpack.c.b16 %v1891, %v1887
    %v2136 = vpack.c.b16 %v1892, %v1888
    %v2137 = vpack.c.b16 %v1897, %v1893
    %v2138 = vpack.c.b16 %v1898, %v1894
    %v2139 = vpack.c.b16 %v1899, %v1895
    %v2140 = vpack.c.b16 %v1900, %v1896
    %v2141 = vpack.c.b16 %v1905, %v1901
    %v2142 = vpack.c.b16 %v1906, %v1902
    %v2143 = vpack.c.b16 %v1907, %v1903
    %v2144 = vpack.c.b16 %v1908, %v1904
    %v2145 = vpack.c.b16 %v1913, %v1909
    %v2146 = vpack.c.b16 %v1914, %v1910
    %v2147 = vpack.c.b16 %v1915, %v1911
    %v2148 = vpack.c.b16 %v1916, %v1912
    %v2149 = vpack.c.b16 %v1921, %v1917
    %v2150 = vpack.c.b16 %v1922, %v1918
    %v2151 = vpack.c.b16 %v1923, %v1919
    %v2152 = vpack.c.b16 %v1924, %v1920
    %v2153 = vpack.c.b16 %v1929, %v1925
    %v2154 = vpack.c.b16 %v1930, %v1926
    %v2155 = vpack.c.b16 %v1931, %v1927
    %v2156 = vpack.c.b16 %v1932, %v1928
    %v2157 = vpack.c.b16 %v1937, %v1933
    %v2158 = vpack.c.b16 %v1938, %v1934
    %v2159 = vpack.c.b16 %v1939, %v1935
    %v2160 = vpack.c.b16 %v1940, %v1936
    %v2161 = vpack.c.b16 %v1945, %v1941
    %v2162 = vpack.c.b16 %v1946, %v1942
    %v2163 = vpack.c.b16 %v1947, %v1943
    %v2164 = vpack.c.b16 %v1948, %v1944
    %v2165 = vpack.c.b16 %v1953, %v1949
    %v2166 = vpack.c.b16 %v1954, %v1950
    %v2167 = vpack.c.b16 %v1955, %v1951
    %v2168 = vpack.c.b16 %v1956, %v1952
    %v2169 = vpack.c.b16 %v1961, %v1957
    %v2170 = vpack.c.b16 %v1962, %v1958
    %v2171 = vpack.c.b16 %v1963, %v1959
    %v2172 = vpack.c.b16 %v1964, %v1960
    %v2173 = vpack.c.b16 %v1969, %v1965
    %v2174 = vpack.c.b16 %v1970, %v1966
    %v2175 = vpack.c.b16 %v1971, %v1967
    %v2176 = vpack.c.b16 %v1972, %v1968
    %v2177 = vpack.c.b16 %v1977, %v1973
    %v2178 = vpack.c.b16 %v1978, %v1974
    %v2179 = vpack.c.b16 %v1979, %v1975
    %v2180 = vpack.c.b16 %v1980, %v1976
    %v2181 = vpack.c.b16 %v1985, %v1981
    %v2182 = vpack.c.b16 %v1986, %v1982
    %v2183 = vpack.c.b16 %v1987, %v1983
    %v2184 = vpack.c.b16 %v1988, %v1984
    %v2185 = vpack.c.b16 %v1993, %v1989
    %v2186 = vpack.c.b16 %v1994, %v1990
    %v2187 = vpack.c.b16 %v1995, %v1991
    %v2188 = vpack.c.b16 %v1996, %v1992
    %v2189 = vpack.c.b16 %v2001, %v1997
    %v2190 = vpack.c.b16 %v2002, %v1998
    %v2191 = vpack.c.b16 %v2003, %v1999
    %v2192 = vpack.c.b16 %v2004, %v2000
    %v2193 = vpack.c.b16 %v2009, %v2005
    %v2194 = vpack.c.b16 %v2010, %v2006
    %v2195 = vpack.c.b16 %v2011, %v2007
    %v2196 = vpack.c.b16 %v2012, %v2008
    %v2197 = vpack.c.b16 %v2017, %v2013
    %v2198 = vpack.c.b16 %v2018, %v2014
    %v2199 = vpack.c.b16 %v2019, %v2015
    %v2200 = vpack.c.b16 %v2020, %v2016
    %v2201 = vpack.c.b16 %v2025, %v2021
    %v2202 = vpack.c.b16 %v2026, %v2022
    %v2203 = vpack.c.b16 %v2027, %v2023
    %v2204 = vpack.c.b16 %v2028, %v2024
    %v2205 = vpack.c.b16 %v2033, %v2029
    %v2206 = vpack.c.b16 %v2034, %v2030
    %v2207 = vpack.c.b16 %v2035, %v2031
    %v2208 = vpack.c.b16 %v2036, %v2032
    %v2209 = vpack.c.b16 %v2041, %v2037
    %v2210 = vpack.c.b16 %v2042, %v2038
    %v2211 = vpack.c.b16 %v2043, %v2039
    %v2212 = vpack.c.b16 %v2044, %v2040
    %v2213 = vpack.c.b16 %v2049, %v2045
    %v2214 = vpack.c.b16 %v2050, %v2046
    %v2215 = vpack.c.b16 %v2051, %v2047
    %v2216 = vpack.c.b16 %v2052, %v2048
    %v2217 = vpack.c.b16 %v2057, %v2053
    %v2218 = vpack.c.b16 %v2058, %v2054
    %v2219 = vpack.c.b16 %v2059, %v2055
    %v2220 = vpack.c.b16 %v2060, %v2056
    %v2221 = vpack.c.b16 %v2065, %v2061
    %v2222 = vpack.c.b16 %v2066, %v2062
    %v2223 = vpack.c.b16 %v2067, %v2063
    %v2224 = vpack.c.b16 %v2068, %v2064
    %v2225 = vpack.c.b16 %v2073, %v2069
    %v2226 = vpack.c.b16 %v2074, %v2070
    %v2227 = vpack.c.b16 %v2075, %v2071
    %v2228 = vpack.c.b16 %v2076, %v2072
    %v2229 = vpack.c.b16 %v2081, %v2077
    %v2230 = vpack.c.b16 %v2082, %v2078
    %v2231 = vpack.c.b16 %v2083, %v2079
    %v2232 = vpack.c.b16 %v2084, %v2080
    %v2233 = vpack.c.b16 %v2089, %v2085
    %v2234 = vpack.c.b16 %v2090, %v2086
    %v2235 = vpack.c.b16 %v2091, %v2087
    %v2236 = vpack.c.b16 %v2092, %v2088
    %v2237 = vpack.c.b16 %v2097, %v2093
    %v2238 = vpack.c.b16 %v2098, %v2094
    %v2239 = vpack.c.b16 %v2099, %v2095
    %v2240 = vpack.c.b16 %v2100, %v2096
    %v2241 = vpack.c.b16 %v2105, %v2101
    %v2242 = vpack.c.b16 %v2106, %v2102
    %v2243 = vpack.c.b16 %v2107, %v2103
    %v2244 = vpack.c.b16 %v2108, %v2104
    %v2245 = vpack.c.b16 %v2113, %v2109
    %v2246 = vpack.c.b16 %v2114, %v2110
    %v2247 = vpack.c.b16 %v2115, %v2111
    %v2248 = vpack.c.b16 %v2116, %v2112
    %v2249 = vpack.c.b16 %v2121, %v2117
    %v2250 = vpack.c.b16 %v2122, %v2118
    %v2251 = vpack.c.b16 %v2123, %v2119
    %v2252 = vpack.c.b16 %v2124, %v2120
    %2381 = vmatprep.subr.bf16.mxu0 %v2126
    %2382 = vmatpush1.bf16.msra.mxu0 %v2125
    %2383 = vmatprep.subr.bf16.mxu0 %v2130
    %2384 = vmatpush1.bf16.msra.mxu0 %v2129
    %2385 = vmatprep.subr.bf16.mxu0 %v2134
    %2386 = vmatpush1.bf16.msra.mxu0 %v2133
    %2387 = vmatprep.subr.bf16.mxu0 %v2138
    %2388 = vmatpush1.bf16.msra.mxu0 %v2137
    %2389 = vmatprep.subr.bf16.mxu0 %v2142
    %2390 = vmatpush1.bf16.msra.mxu0 %v2141
    %2391 = vmatprep.subr.bf16.mxu0 %v2146
    %2392 = vmatpush1.bf16.msra.mxu0 %v2145
    %2393 = vmatprep.subr.bf16.mxu0 %v2150
    %2394 = vmatpush1.bf16.msra.mxu0 %v2149
    %2395 = vmatprep.subr.bf16.mxu0 %v2154
    %2396 = vmatpush1.bf16.msra.mxu0 %v2153
    %2397 = vmatprep.subr.bf16.mxu0 %v2158
    %2398 = vmatpush1.bf16.msra.mxu0 %v2157
    %2399 = vmatprep.subr.bf16.mxu0 %v2162
    %2400 = vmatpush1.bf16.msra.mxu0 %v2161
    %2401 = vmatprep.subr.bf16.mxu0 %v2166
    %2402 = vmatpush1.bf16.msra.mxu0 %v2165
    %2403 = vmatprep.subr.bf16.mxu0 %v2170
    %2404 = vmatpush1.bf16.msra.mxu0 %v2169
    %2405 = vmatprep.subr.bf16.mxu0 %v2174
    %2406 = vmatpush1.bf16.msra.mxu0 %v2173
    %2407 = vmatprep.subr.bf16.mxu0 %v2178
    %2408 = vmatpush1.bf16.msra.mxu0 %v2177
    %2409 = vmatprep.subr.bf16.mxu0 %v2182
    %2410 = vmatpush1.bf16.msra.mxu0 %v2181
    %2411 = vmatprep.subr.bf16.mxu0 %v2186
    %2412 = vmatpush1.bf16.msra.mxu0 %v2185
    %2413 = vmatprep.mubr.bf16.mxu0 %v617
    %2414 = vmatmul.mubr.bf16.gmra.mrb[0].mxu0 %v616
    %v2415 = vpop.f32.mrb[0].mxu0
    %v2416 = vadd.f32 %v1617, %v2415
    %v2417 = vpop.f32.mrb[0].mxu0
    %v2418 = vadd.f32 %v1619, %v2417
    %v2419 = vpop.f32.mrb[0].mxu0
    %v2420 = vadd.f32 %v1621, %v2419
    %v2421 = vpop.f32.mrb[0].mxu0
    %v2422 = vadd.f32 %v1623, %v2421
    %2423 = vmatprep.mubr.bf16.mxu0 %v621
    %2424 = vmatmul.mubr.bf16.gmra.mrb[0].mxu0 %v620
    %v2425 = vpop.f32.mrb[0].mxu0
    %v2426 = vadd.f32 %v1627, %v2425
    %v2427 = vpop.f32.mrb[0].mxu0
    %v2428 = vadd.f32 %v1629, %v2427
    %v2429 = vpop.f32.mrb[0].mxu0
    %v2430 = vadd.f32 %v1631, %v2429
    %v2431 = vpop.f32.mrb[0].mxu0
    %v2432 = vadd.f32 %v1633, %v2431
    %2433 = vdwg.mxu0
    %2434 = vmatprep.subr.bf16.mxu0 %v2190
    %2435 = vmatpush1.bf16.msra.mxu0 %v2189
    %2436 = vmatprep.subr.bf16.mxu0 %v2194
    %2437 = vmatpush1.bf16.msra.mxu0 %v2193
    %2438 = vmatprep.subr.bf16.mxu0 %v2198
    %2439 = vmatpush1.bf16.msra.mxu0 %v2197
    %2440 = vmatprep.subr.bf16.mxu0 %v2202
    %2441 = vmatpush1.bf16.msra.mxu0 %v2201
    %2442 = vmatprep.subr.bf16.mxu0 %v2206
    %2443 = vmatpush1.bf16.msra.mxu0 %v2205
    %2444 = vmatprep.subr.bf16.mxu0 %v2210
    %2445 = vmatpush1.bf16.msra.mxu0 %v2209
    %2446 = vmatprep.subr.bf16.mxu0 %v2214
    %2447 = vmatpush1.bf16.msra.mxu0 %v2213
    %2448 = vmatprep.subr.bf16.mxu0 %v2218
    %2449 = vmatpush1.bf16.msra.mxu0 %v2217
    %2450 = vmatprep.subr.bf16.mxu0 %v2222
    %2451 = vmatpush1.bf16.msra.mxu0 %v2221
    %2452 = vmatprep.subr.bf16.mxu0 %v2226
    %2453 = vmatpush1.bf16.msra.mxu0 %v2225
    %2454 = vmatprep.subr.bf16.mxu0 %v2230
    %2455 = vmatpush1.bf16.msra.mxu0 %v2229
    %2456 = vmatprep.subr.bf16.mxu0 %v2234
    %2457 = vmatpush1.bf16.msra.mxu0 %v2233
    %2458 = vmatprep.subr.bf16.mxu0 %v2238
    %2459 = vmatpush1.bf16.msra.mxu0 %v2237
    %2460 = vmatprep.subr.bf16.mxu0 %v2242
    %2461 = vmatpush1.bf16.msra.mxu0 %v2241
    %2462 = vmatprep.subr.bf16.mxu0 %v2246
    %2463 = vmatpush1.bf16.msra.mxu0 %v2245
    %2464 = vmatprep.subr.bf16.mxu0 %v2250
    %2465 = vmatpush1.bf16.msra.mxu0 %v2249
    %2466 = vmatprep.mubr.bf16.mxu0 %v619
    %2467 = vmatmul.mubr.bf16.gmra.mrb[0].mxu0 %v618
    %v2468 = vpop.f32.mrb[0].mxu0
    %v2469 = vadd.f32 %v2416, %v2468
    %v2470 = vpop.f32.mrb[0].mxu0
    %v2471 = vadd.f32 %v2418, %v2470
    %v2472 = vpop.f32.mrb[0].mxu0
    %v2473 = vadd.f32 %v2420, %v2472
    %v2474 = vpop.f32.mrb[0].mxu0
    %v2475 = vadd.f32 %v2422, %v2474
    %2476 = vmatprep.mubr.bf16.mxu0 %v623
    %2477 = vmatmul.mubr.bf16.gmra.mrb[0].mxu0 %v622
    %v2478 = vpop.f32.mrb[0].mxu0
    %v2479 = vadd.f32 %v2426, %v2478
    %v2480 = vpop.f32.mrb[0].mxu0
    %v2481 = vadd.f32 %v2428, %v2480
    %v2482 = vpop.f32.mrb[0].mxu0
    %v2483 = vadd.f32 %v2430, %v2482
    %v2484 = vpop.f32.mrb[0].mxu0
    %v2485 = vadd.f32 %v2432, %v2484
    %2486 = vdwg.mxu0
    %2487 = vmatprep.subr.bf16.mxu0 %v2128
    %2488 = vmatpush1.bf16.msra.mxu0 %v2127
    %2489 = vmatprep.subr.bf16.mxu0 %v2132
    %2490 = vmatpush1.bf16.msra.mxu0 %v2131
    %2491 = vmatprep.subr.bf16.mxu0 %v2136
    %2492 = vmatpush1.bf16.msra.mxu0 %v2135
    %2493 = vmatprep.subr.bf16.mxu0 %v2140
    %2494 = vmatpush1.bf16.msra.mxu0 %v2139
    %2495 = vmatprep.subr.bf16.mxu0 %v2144
    %2496 = vmatpush1.bf16.msra.mxu0 %v2143
    %2497 = vmatprep.subr.bf16.mxu0 %v2148
    %2498 = vmatpush1.bf16.msra.mxu0 %v2147
    %2499 = vmatprep.subr.bf16.mxu0 %v2152
    %2500 = vmatpush1.bf16.msra.mxu0 %v2151
    %2501 = vmatprep.subr.bf16.mxu0 %v2156
    %2502 = vmatpush1.bf16.msra.mxu0 %v2155
    %2503 = vmatprep.subr.bf16.mxu0 %v2160
    %2504 = vmatpush1.bf16.msra.mxu0 %v2159
    %2505 = vmatprep.subr.bf16.mxu0 %v2164
    %2506 = vmatpush1.bf16.msra.mxu0 %v2163
    %2507 = vmatprep.subr.bf16.mxu0 %v2168
    %2508 = vmatpush1.bf16.msra.mxu0 %v2167
    %2509 = vmatprep.subr.bf16.mxu0 %v2172
    %2510 = vmatpush1.bf16.msra.mxu0 %v2171
    %2511 = vmatprep.subr.bf16.mxu0 %v2176
    %2512 = vmatpush1.bf16.msra.mxu0 %v2175
    %2513 = vmatprep.subr.bf16.mxu0 %v2180
    %2514 = vmatpush1.bf16.msra.mxu0 %v2179
    %2515 = vmatprep.subr.bf16.mxu0 %v2184
    %2516 = vmatpush1.bf16.msra.mxu0 %v2183
    %2517 = vmatprep.subr.bf16.mxu0 %v2188
    %2518 = vmatpush1.bf16.msra.mxu0 %v2187
    %2519 = vmatprep.mubr.bf16.mxu0 %v617
    %2520 = vmatmul.mubr.bf16.gmra.mrb[0].mxu0 %v616
    %v2521 = vpop.f32.mrb[0].mxu0
    %v2522 = vadd.f32 %v1723, %v2521
    %v2523 = vpop.f32.mrb[0].mxu0
    %v2524 = vadd.f32 %v1725, %v2523
    %v2525 = vpop.f32.mrb[0].mxu0
    %v2526 = vadd.f32 %v1727, %v2525
    %v2527 = vpop.f32.mrb[0].mxu0
    %v2528 = vadd.f32 %v1729, %v2527
    %2529 = vmatprep.mubr.bf16.mxu0 %v621
    %2530 = vmatmul.mubr.bf16.gmra.mrb[0].mxu0 %v620
    %v2531 = vpop.f32.mrb[0].mxu0
    %v2532 = vadd.f32 %v1733, %v2531
    %v2533 = vpop.f32.mrb[0].mxu0
    %v2534 = vadd.f32 %v1735, %v2533
    %v2535 = vpop.f32.mrb[0].mxu0
    %v2536 = vadd.f32 %v1737, %v2535
    %v2537 = vpop.f32.mrb[0].mxu0
    %v2538 = vadd.f32 %v1739, %v2537
    %2539 = vdwg.mxu0
    %2540 = vmatprep.subr.bf16.mxu0 %v2192
    %2541 = vmatpush1.bf16.msra.mxu0 %v2191
    %2542 = vmatprep.subr.bf16.mxu0 %v2196
    %2543 = vmatpush1.bf16.msra.mxu0 %v2195
    %2544 = vmatprep.subr.bf16.mxu0 %v2200
    %2545 = vmatpush1.bf16.msra.mxu0 %v2199
    %2546 = vmatprep.subr.bf16.mxu0 %v2204
    %2547 = vmatpush1.bf16.msra.mxu0 %v2203
    %2548 = vmatprep.subr.bf16.mxu0 %v2208
    %2549 = vmatpush1.bf16.msra.mxu0 %v2207
    %2550 = vmatprep.subr.bf16.mxu0 %v2212
    %2551 = vmatpush1.bf16.msra.mxu0 %v2211
    %2552 = vmatprep.subr.bf16.mxu0 %v2216
    %2553 = vmatpush1.bf16.msra.mxu0 %v2215
    %2554 = vmatprep.subr.bf16.mxu0 %v2220
    %2555 = vmatpush1.bf16.msra.mxu0 %v2219
    %2556 = vmatprep.subr.bf16.mxu0 %v2224
    %2557 = vmatpush1.bf16.msra.mxu0 %v2223
    %2558 = vmatprep.subr.bf16.mxu0 %v2228
    %2559 = vmatpush1.bf16.msra.mxu0 %v2227
    %2560 = vmatprep.subr.bf16.mxu0 %v2232
    %2561 = vmatpush1.bf16.msra.mxu0 %v2231
    %2562 = vmatprep.subr.bf16.mxu0 %v2236
    %2563 = vmatpush1.bf16.msra.mxu0 %v2235
    %2564 = vmatprep.subr.bf16.mxu0 %v2240
    %2565 = vmatpush1.bf16.msra.mxu0 %v2239
    %2566 = vmatprep.subr.bf16.mxu0 %v2244
    %2567 = vmatpush1.bf16.msra.mxu0 %v2243
    %2568 = vmatprep.subr.bf16.mxu0 %v2248
    %2569 = vmatpush1.bf16.msra.mxu0 %v2247
    %2570 = vmatprep.subr.bf16.mxu0 %v2252
    %2571 = vmatpush1.bf16.msra.mxu0 %v2251
    %2572 = vmatprep.mubr.bf16.mxu0 %v619
    %2573 = vmatmul.mubr.bf16.gmra.mrb[0].mxu0 %v618
    %v2574 = vpop.f32.mrb[0].mxu0
    %v2575 = vadd.f32 %v2522, %v2574
    %v2576 = vpop.f32.mrb[0].mxu0
    %v2577 = vadd.f32 %v2524, %v2576
    %v2578 = vpop.f32.mrb[0].mxu0
    %v2579 = vadd.f32 %v2526, %v2578
    %v2580 = vpop.f32.mrb[0].mxu0
    %v2581 = vadd.f32 %v2528, %v2580
    %2582 = vmatprep.mubr.bf16.mxu0 %v623
    %2583 = vmatmul.mubr.bf16.gmra.mrb[0].mxu0 %v622
    %v2584 = vpop.f32.mrb[0].mxu0
    %v2585 = vadd.f32 %v2532, %v2584
    %v2586 = vpop.f32.mrb[0].mxu0
    %v2587 = vadd.f32 %v2534, %v2586
    %v2588 = vpop.f32.mrb[0].mxu0
    %v2589 = vadd.f32 %v2536, %v2588
    %v2590 = vpop.f32.mrb[0].mxu0
    %v2591 = vadd.f32 %v2538, %v2590
    %2592 = vdwg.mxu0
    %v2593 = vpack.c.bf16 %v604, %v600
    %v2594 = vpack.c.bf16 %v605, %v601
    %v2595 = vpack.c.bf16 %v606, %v602
    %v2596 = vpack.c.bf16 %v607, %v603
    %v2597 = vpack.c.bf16 %v612, %v608
    %v2598 = vpack.c.bf16 %v613, %v609
    %v2599 = vpack.c.bf16 %v614, %v610
    %v2600 = vpack.c.bf16 %v615, %v611
    %s2601 = scalar_lea.vmem %s8, 2048
    %v2602 = vld [vmem:[%s2601] sm:$0xff]
    %v2603 = vld [vmem:[%s2601 + $0x8] sm:$0xff]
    %v2604 = vld [vmem:[%s2601 + $0x10] sm:$0xff]
    %v2605 = vld [vmem:[%s2601 + $0x18] sm:$0xff]
    %v2606 = vld [vmem:[%s2601 + $0x20] sm:$0xff]
    %v2607 = vld [vmem:[%s2601 + $0x28] sm:$0xff]
    %v2608 = vld [vmem:[%s2601 + $0x30] sm:$0xff]
    %v2609 = vld [vmem:[%s2601 + $0x38] sm:$0xff]
    %v2610 = vld [vmem:[%s2601 + $0x40] sm:$0xff]
    %v2611 = vld [vmem:[%s2601 + $0x48] sm:$0xff]
    %v2612 = vld [vmem:[%s2601 + $0x50] sm:$0xff]
    %v2613 = vld [vmem:[%s2601 + $0x58] sm:$0xff]
    %v2614 = vld [vmem:[%s2601 + $0x60] sm:$0xff]
    %v2615 = vld [vmem:[%s2601 + $0x68] sm:$0xff]
    %v2616 = vld [vmem:[%s2601 + $0x70] sm:$0xff]
    %v2617 = vld [vmem:[%s2601 + $0x78] sm:$0xff]
    %v2618 = vld [vmem:[%s2601 + $0x80] sm:$0xff]
    %v2619 = vld [vmem:[%s2601 + $0x88] sm:$0xff]
    %v2620 = vld [vmem:[%s2601 + $0x90] sm:$0xff]
    %v2621 = vld [vmem:[%s2601 + $0x98] sm:$0xff]
    %v2622 = vld [vmem:[%s2601 + $0xa0] sm:$0xff]
    %v2623 = vld [vmem:[%s2601 + $0xa8] sm:$0xff]
    %v2624 = vld [vmem:[%s2601 + $0xb0] sm:$0xff]
    %v2625 = vld [vmem:[%s2601 + $0xb8] sm:$0xff]
    %v2626 = vld [vmem:[%s2601 + $0xc0] sm:$0xff]
    %v2627 = vld [vmem:[%s2601 + $0xc8] sm:$0xff]
    %v2628 = vld [vmem:[%s2601 + $0xd0] sm:$0xff]
    %v2629 = vld [vmem:[%s2601 + $0xd8] sm:$0xff]
    %v2630 = vld [vmem:[%s2601 + $0xe0] sm:$0xff]
    %v2631 = vld [vmem:[%s2601 + $0xe8] sm:$0xff]
    %v2632 = vld [vmem:[%s2601 + $0xf0] sm:$0xff]
    %v2633 = vld [vmem:[%s2601 + $0xf8] sm:$0xff]
    %v2634 = vld [vmem:[%s2601 + $0x100] sm:$0xff]
    %v2635 = vld [vmem:[%s2601 + $0x108] sm:$0xff]
    %v2636 = vld [vmem:[%s2601 + $0x110] sm:$0xff]
    %v2637 = vld [vmem:[%s2601 + $0x118] sm:$0xff]
    %v2638 = vld [vmem:[%s2601 + $0x120] sm:$0xff]
    %v2639 = vld [vmem:[%s2601 + $0x128] sm:$0xff]
    %v2640 = vld [vmem:[%s2601 + $0x130] sm:$0xff]
    %v2641 = vld [vmem:[%s2601 + $0x138] sm:$0xff]
    %v2642 = vld [vmem:[%s2601 + $0x140] sm:$0xff]
    %v2643 = vld [vmem:[%s2601 + $0x148] sm:$0xff]
    %v2644 = vld [vmem:[%s2601 + $0x150] sm:$0xff]
    %v2645 = vld [vmem:[%s2601 + $0x158] sm:$0xff]
    %v2646 = vld [vmem:[%s2601 + $0x160] sm:$0xff]
    %v2647 = vld [vmem:[%s2601 + $0x168] sm:$0xff]
    %v2648 = vld [vmem:[%s2601 + $0x170] sm:$0xff]
    %v2649 = vld [vmem:[%s2601 + $0x178] sm:$0xff]
    %v2650 = vld [vmem:[%s2601 + $0x180] sm:$0xff]
    %v2651 = vld [vmem:[%s2601 + $0x188] sm:$0xff]
    %v2652 = vld [vmem:[%s2601 + $0x190] sm:$0xff]
    %v2653 = vld [vmem:[%s2601 + $0x198] sm:$0xff]
    %v2654 = vld [vmem:[%s2601 + $0x1a0] sm:$0xff]
    %v2655 = vld [vmem:[%s2601 + $0x1a8] sm:$0xff]
    %v2656 = vld [vmem:[%s2601 + $0x1b0] sm:$0xff]
    %v2657 = vld [vmem:[%s2601 + $0x1b8] sm:$0xff]
    %v2658 = vld [vmem:[%s2601 + $0x1c0] sm:$0xff]
    %v2659 = vld [vmem:[%s2601 + $0x1c8] sm:$0xff]
    %v2660 = vld [vmem:[%s2601 + $0x1d0] sm:$0xff]
    %v2661 = vld [vmem:[%s2601 + $0x1d8] sm:$0xff]
    %v2662 = vld [vmem:[%s2601 + $0x1e0] sm:$0xff]
    %v2663 = vld [vmem:[%s2601 + $0x1e8] sm:$0xff]
    %v2664 = vld [vmem:[%s2601 + $0x1f0] sm:$0xff]
    %v2665 = vld [vmem:[%s2601 + $0x1f8] sm:$0xff]
    %v2666 = vld [vmem:[%s2601 + $0x200] sm:$0xff]
    %v2667 = vld [vmem:[%s2601 + $0x208] sm:$0xff]
    %v2668 = vld [vmem:[%s2601 + $0x210] sm:$0xff]
    %v2669 = vld [vmem:[%s2601 + $0x218] sm:$0xff]
    %v2670 = vld [vmem:[%s2601 + $0x220] sm:$0xff]
    %v2671 = vld [vmem:[%s2601 + $0x228] sm:$0xff]
    %v2672 = vld [vmem:[%s2601 + $0x230] sm:$0xff]
    %v2673 = vld [vmem:[%s2601 + $0x238] sm:$0xff]
    %v2674 = vld [vmem:[%s2601 + $0x240] sm:$0xff]
    %v2675 = vld [vmem:[%s2601 + $0x248] sm:$0xff]
    %v2676 = vld [vmem:[%s2601 + $0x250] sm:$0xff]
    %v2677 = vld [vmem:[%s2601 + $0x258] sm:$0xff]
    %v2678 = vld [vmem:[%s2601 + $0x260] sm:$0xff]
    %v2679 = vld [vmem:[%s2601 + $0x268] sm:$0xff]
    %v2680 = vld [vmem:[%s2601 + $0x270] sm:$0xff]
    %v2681 = vld [vmem:[%s2601 + $0x278] sm:$0xff]
    %v2682 = vld [vmem:[%s2601 + $0x280] sm:$0xff]
    %v2683 = vld [vmem:[%s2601 + $0x288] sm:$0xff]
    %v2684 = vld [vmem:[%s2601 + $0x290] sm:$0xff]
    %v2685 = vld [vmem:[%s2601 + $0x298] sm:$0xff]
    %v2686 = vld [vmem:[%s2601 + $0x2a0] sm:$0xff]
    %v2687 = vld [vmem:[%s2601 + $0x2a8] sm:$0xff]
    %v2688 = vld [vmem:[%s2601 + $0x2b0] sm:$0xff]
    %v2689 = vld [vmem:[%s2601 + $0x2b8] sm:$0xff]
    %v2690 = vld [vmem:[%s2601 + $0x2c0] sm:$0xff]
    %v2691 = vld [vmem:[%s2601 + $0x2c8] sm:$0xff]
    %v2692 = vld [vmem:[%s2601 + $0x2d0] sm:$0xff]
    %v2693 = vld [vmem:[%s2601 + $0x2d8] sm:$0xff]
    %v2694 = vld [vmem:[%s2601 + $0x2e0] sm:$0xff]
    %v2695 = vld [vmem:[%s2601 + $0x2e8] sm:$0xff]
    %v2696 = vld [vmem:[%s2601 + $0x2f0] sm:$0xff]
    %v2697 = vld [vmem:[%s2601 + $0x2f8] sm:$0xff]
    %v2698 = vld [vmem:[%s2601 + $0x300] sm:$0xff]
    %v2699 = vld [vmem:[%s2601 + $0x308] sm:$0xff]
    %v2700 = vld [vmem:[%s2601 + $0x310] sm:$0xff]
    %v2701 = vld [vmem:[%s2601 + $0x318] sm:$0xff]
    %v2702 = vld [vmem:[%s2601 + $0x320] sm:$0xff]
    %v2703 = vld [vmem:[%s2601 + $0x328] sm:$0xff]
    %v2704 = vld [vmem:[%s2601 + $0x330] sm:$0xff]
    %v2705 = vld [vmem:[%s2601 + $0x338] sm:$0xff]
    %v2706 = vld [vmem:[%s2601 + $0x340] sm:$0xff]
    %v2707 = vld [vmem:[%s2601 + $0x348] sm:$0xff]
    %v2708 = vld [vmem:[%s2601 + $0x350] sm:$0xff]
    %v2709 = vld [vmem:[%s2601 + $0x358] sm:$0xff]
    %v2710 = vld [vmem:[%s2601 + $0x360] sm:$0xff]
    %v2711 = vld [vmem:[%s2601 + $0x368] sm:$0xff]
    %v2712 = vld [vmem:[%s2601 + $0x370] sm:$0xff]
    %v2713 = vld [vmem:[%s2601 + $0x378] sm:$0xff]
    %v2714 = vld [vmem:[%s2601 + $0x380] sm:$0xff]
    %v2715 = vld [vmem:[%s2601 + $0x388] sm:$0xff]
    %v2716 = vld [vmem:[%s2601 + $0x390] sm:$0xff]
    %v2717 = vld [vmem:[%s2601 + $0x398] sm:$0xff]
    %v2718 = vld [vmem:[%s2601 + $0x3a0] sm:$0xff]
    %v2719 = vld [vmem:[%s2601 + $0x3a8] sm:$0xff]
    %v2720 = vld [vmem:[%s2601 + $0x3b0] sm:$0xff]
    %v2721 = vld [vmem:[%s2601 + $0x3b8] sm:$0xff]
    %v2722 = vld [vmem:[%s2601 + $0x3c0] sm:$0xff]
    %v2723 = vld [vmem:[%s2601 + $0x3c8] sm:$0xff]
    %v2724 = vld [vmem:[%s2601 + $0x3d0] sm:$0xff]
    %v2725 = vld [vmem:[%s2601 + $0x3d8] sm:$0xff]
    %v2726 = vld [vmem:[%s2601 + $0x3e0] sm:$0xff]
    %v2727 = vld [vmem:[%s2601 + $0x3e8] sm:$0xff]
    %v2728 = vld [vmem:[%s2601 + $0x3f0] sm:$0xff]
    %v2729 = vld [vmem:[%s2601 + $0x3f8] sm:$0xff]
    %v2858 = vunpack.c.l.b16 %v2602
    %v2859 = vunpack.c.h.b16 %v2602
    %v2860 = vunpack.c.l.b16 %v2603
    %v2861 = vunpack.c.h.b16 %v2603
    %v2862 = vunpack.c.l.b16 %v2604
    %v2863 = vunpack.c.h.b16 %v2604
    %v2864 = vunpack.c.l.b16 %v2605
    %v2865 = vunpack.c.h.b16 %v2605
    %v2866 = vunpack.c.l.b16 %v2606
    %v2867 = vunpack.c.h.b16 %v2606
    %v2868 = vunpack.c.l.b16 %v2607
    %v2869 = vunpack.c.h.b16 %v2607
    %v2870 = vunpack.c.l.b16 %v2608
    %v2871 = vunpack.c.h.b16 %v2608
    %v2872 = vunpack.c.l.b16 %v2609
    %v2873 = vunpack.c.h.b16 %v2609
    %v2874 = vunpack.c.l.b16 %v2610
    %v2875 = vunpack.c.h.b16 %v2610
    %v2876 = vunpack.c.l.b16 %v2611
    %v2877 = vunpack.c.h.b16 %v2611
    %v2878 = vunpack.c.l.b16 %v2612
    %v2879 = vunpack.c.h.b16 %v2612
    %v2880 = vunpack.c.l.b16 %v2613
    %v2881 = vunpack.c.h.b16 %v2613
    %v2882 = vunpack.c.l.b16 %v2614
    %v2883 = vunpack.c.h.b16 %v2614
    %v2884 = vunpack.c.l.b16 %v2615
    %v2885 = vunpack.c.h.b16 %v2615
    %v2886 = vunpack.c.l.b16 %v2616
    %v2887 = vunpack.c.h.b16 %v2616
    %v2888 = vunpack.c.l.b16 %v2617
    %v2889 = vunpack.c.h.b16 %v2617
    %v2890 = vunpack.c.l.b16 %v2618
    %v2891 = vunpack.c.h.b16 %v2618
    %v2892 = vunpack.c.l.b16 %v2619
    %v2893 = vunpack.c.h.b16 %v2619
    %v2894 = vunpack.c.l.b16 %v2620
    %v2895 = vunpack.c.h.b16 %v2620
    %v2896 = vunpack.c.l.b16 %v2621
    %v2897 = vunpack.c.h.b16 %v2621
    %v2898 = vunpack.c.l.b16 %v2622
    %v2899 = vunpack.c.h.b16 %v2622
    %v2900 = vunpack.c.l.b16 %v2623
    %v2901 = vunpack.c.h.b16 %v2623
    %v2902 = vunpack.c.l.b16 %v2624
    %v2903 = vunpack.c.h.b16 %v2624
    %v2904 = vunpack.c.l.b16 %v2625
    %v2905 = vunpack.c.h.b16 %v2625
    %v2906 = vunpack.c.l.b16 %v2626
    %v2907 = vunpack.c.h.b16 %v2626
    %v2908 = vunpack.c.l.b16 %v2627
    %v2909 = vunpack.c.h.b16 %v2627
    %v2910 = vunpack.c.l.b16 %v2628
    %v2911 = vunpack.c.h.b16 %v2628
    %v2912 = vunpack.c.l.b16 %v2629
    %v2913 = vunpack.c.h.b16 %v2629
    %v2914 = vunpack.c.l.b16 %v2630
    %v2915 = vunpack.c.h.b16 %v2630
    %v2916 = vunpack.c.l.b16 %v2631
    %v2917 = vunpack.c.h.b16 %v2631
    %v2918 = vunpack.c.l.b16 %v2632
    %v2919 = vunpack.c.h.b16 %v2632
    %v2920 = vunpack.c.l.b16 %v2633
    %v2921 = vunpack.c.h.b16 %v2633
    %v2922 = vunpack.c.l.b16 %v2634
    %v2923 = vunpack.c.h.b16 %v2634
    %v2924 = vunpack.c.l.b16 %v2635
    %v2925 = vunpack.c.h.b16 %v2635
    %v2926 = vunpack.c.l.b16 %v2636
    %v2927 = vunpack.c.h.b16 %v2636
    %v2928 = vunpack.c.l.b16 %v2637
    %v2929 = vunpack.c.h.b16 %v2637
    %v2930 = vunpack.c.l.b16 %v2638
    %v2931 = vunpack.c.h.b16 %v2638
    %v2932 = vunpack.c.l.b16 %v2639
    %v2933 = vunpack.c.h.b16 %v2639
    %v2934 = vunpack.c.l.b16 %v2640
    %v2935 = vunpack.c.h.b16 %v2640
    %v2936 = vunpack.c.l.b16 %v2641
    %v2937 = vunpack.c.h.b16 %v2641
    %v2938 = vunpack.c.l.b16 %v2642
    %v2939 = vunpack.c.h.b16 %v2642
    %v2940 = vunpack.c.l.b16 %v2643
    %v2941 = vunpack.c.h.b16 %v2643
    %v2942 = vunpack.c.l.b16 %v2644
    %v2943 = vunpack.c.h.b16 %v2644
    %v2944 = vunpack.c.l.b16 %v2645
    %v2945 = vunpack.c.h.b16 %v2645
    %v2946 = vunpack.c.l.b16 %v2646
    %v2947 = vunpack.c.h.b16 %v2646
    %v2948 = vunpack.c.l.b16 %v2647
    %v2949 = vunpack.c.h.b16 %v2647
    %v2950 = vunpack.c.l.b16 %v2648
    %v2951 = vunpack.c.h.b16 %v2648
    %v2952 = vunpack.c.l.b16 %v2649
    %v2953 = vunpack.c.h.b16 %v2649
    %v2954 = vunpack.c.l.b16 %v2650
    %v2955 = vunpack.c.h.b16 %v2650
    %v2956 = vunpack.c.l.b16 %v2651
    %v2957 = vunpack.c.h.b16 %v2651
    %v2958 = vunpack.c.l.b16 %v2652
    %v2959 = vunpack.c.h.b16 %v2652
    %v2960 = vunpack.c.l.b16 %v2653
    %v2961 = vunpack.c.h.b16 %v2653
    %v2962 = vunpack.c.l.b16 %v2654
    %v2963 = vunpack.c.h.b16 %v2654
    %v2964 = vunpack.c.l.b16 %v2655
    %v2965 = vunpack.c.h.b16 %v2655
    %v2966 = vunpack.c.l.b16 %v2656
    %v2967 = vunpack.c.h.b16 %v2656
    %v2968 = vunpack.c.l.b16 %v2657
    %v2969 = vunpack.c.h.b16 %v2657
    %v2970 = vunpack.c.l.b16 %v2658
    %v2971 = vunpack.c.h.b16 %v2658
    %v2972 = vunpack.c.l.b16 %v2659
    %v2973 = vunpack.c.h.b16 %v2659
    %v2974 = vunpack.c.l.b16 %v2660
    %v2975 = vunpack.c.h.b16 %v2660
    %v2976 = vunpack.c.l.b16 %v2661
    %v2977 = vunpack.c.h.b16 %v2661
    %v2978 = vunpack.c.l.b16 %v2662
    %v2979 = vunpack.c.h.b16 %v2662
    %v2980 = vunpack.c.l.b16 %v2663
    %v2981 = vunpack.c.h.b16 %v2663
    %v2982 = vunpack.c.l.b16 %v2664
    %v2983 = vunpack.c.h.b16 %v2664
    %v2984 = vunpack.c.l.b16 %v2665
    %v2985 = vunpack.c.h.b16 %v2665
    %v2986 = vunpack.c.l.b16 %v2666
    %v2987 = vunpack.c.h.b16 %v2666
    %v2988 = vunpack.c.l.b16 %v2667
    %v2989 = vunpack.c.h.b16 %v2667
    %v2990 = vunpack.c.l.b16 %v2668
    %v2991 = vunpack.c.h.b16 %v2668
    %v2992 = vunpack.c.l.b16 %v2669
    %v2993 = vunpack.c.h.b16 %v2669
    %v2994 = vunpack.c.l.b16 %v2670
    %v2995 = vunpack.c.h.b16 %v2670
    %v2996 = vunpack.c.l.b16 %v2671
    %v2997 = vunpack.c.h.b16 %v2671
    %v2998 = vunpack.c.l.b16 %v2672
    %v2999 = vunpack.c.h.b16 %v2672
    %v3000 = vunpack.c.l.b16 %v2673
    %v3001 = vunpack.c.h.b16 %v2673
    %v3002 = vunpack.c.l.b16 %v2674
    %v3003 = vunpack.c.h.b16 %v2674
    %v3004 = vunpack.c.l.b16 %v2675
    %v3005 = vunpack.c.h.b16 %v2675
    %v3006 = vunpack.c.l.b16 %v2676
    %v3007 = vunpack.c.h.b16 %v2676
    %v3008 = vunpack.c.l.b16 %v2677
    %v3009 = vunpack.c.h.b16 %v2677
    %v3010 = vunpack.c.l.b16 %v2678
    %v3011 = vunpack.c.h.b16 %v2678
    %v3012 = vunpack.c.l.b16 %v2679
    %v3013 = vunpack.c.h.b16 %v2679
    %v3014 = vunpack.c.l.b16 %v2680
    %v3015 = vunpack.c.h.b16 %v2680
    %v3016 = vunpack.c.l.b16 %v2681
    %v3017 = vunpack.c.h.b16 %v2681
    %v3018 = vunpack.c.l.b16 %v2682
    %v3019 = vunpack.c.h.b16 %v2682
    %v3020 = vunpack.c.l.b16 %v2683
    %v3021 = vunpack.c.h.b16 %v2683
    %v3022 = vunpack.c.l.b16 %v2684
    %v3023 = vunpack.c.h.b16 %v2684
    %v3024 = vunpack.c.l.b16 %v2685
    %v3025 = vunpack.c.h.b16 %v2685
    %v3026 = vunpack.c.l.b16 %v2686
    %v3027 = vunpack.c.h.b16 %v2686
    %v3028 = vunpack.c.l.b16 %v2687
    %v3029 = vunpack.c.h.b16 %v2687
    %v3030 = vunpack.c.l.b16 %v2688
    %v3031 = vunpack.c.h.b16 %v2688
    %v3032 = vunpack.c.l.b16 %v2689
    %v3033 = vunpack.c.h.b16 %v2689
    %v3034 = vunpack.c.l.b16 %v2690
    %v3035 = vunpack.c.h.b16 %v2690
    %v3036 = vunpack.c.l.b16 %v2691
    %v3037 = vunpack.c.h.b16 %v2691
    %v3038 = vunpack.c.l.b16 %v2692
    %v3039 = vunpack.c.h.b16 %v2692
    %v3040 = vunpack.c.l.b16 %v2693
    %v3041 = vunpack.c.h.b16 %v2693
    %v3042 = vunpack.c.l.b16 %v2694
    %v3043 = vunpack.c.h.b16 %v2694
    %v3044 = vunpack.c.l.b16 %v2695
    %v3045 = vunpack.c.h.b16 %v2695
    %v3046 = vunpack.c.l.b16 %v2696
    %v3047 = vunpack.c.h.b16 %v2696
    %v3048 = vunpack.c.l.b16 %v2697
    %v3049 = vunpack.c.h.b16 %v2697
    %v3050 = vunpack.c.l.b16 %v2698
    %v3051 = vunpack.c.h.b16 %v2698
    %v3052 = vunpack.c.l.b16 %v2699
    %v3053 = vunpack.c.h.b16 %v2699
    %v3054 = vunpack.c.l.b16 %v2700
    %v3055 = vunpack.c.h.b16 %v2700
    %v3056 = vunpack.c.l.b16 %v2701
    %v3057 = vunpack.c.h.b16 %v2701
    %v3058 = vunpack.c.l.b16 %v2702
    %v3059 = vunpack.c.h.b16 %v2702
    %v3060 = vunpack.c.l.b16 %v2703
    %v3061 = vunpack.c.h.b16 %v2703
    %v3062 = vunpack.c.l.b16 %v2704
    %v3063 = vunpack.c.h.b16 %v2704
    %v3064 = vunpack.c.l.b16 %v2705
    %v3065 = vunpack.c.h.b16 %v2705
    %v3066 = vunpack.c.l.b16 %v2706
    %v3067 = vunpack.c.h.b16 %v2706
    %v3068 = vunpack.c.l.b16 %v2707
    %v3069 = vunpack.c.h.b16 %v2707
    %v3070 = vunpack.c.l.b16 %v2708
    %v3071 = vunpack.c.h.b16 %v2708
    %v3072 = vunpack.c.l.b16 %v2709
    %v3073 = vunpack.c.h.b16 %v2709
    %v3074 = vunpack.c.l.b16 %v2710
    %v3075 = vunpack.c.h.b16 %v2710
    %v3076 = vunpack.c.l.b16 %v2711
    %v3077 = vunpack.c.h.b16 %v2711
    %v3078 = vunpack.c.l.b16 %v2712
    %v3079 = vunpack.c.h.b16 %v2712
    %v3080 = vunpack.c.l.b16 %v2713
    %v3081 = vunpack.c.h.b16 %v2713
    %v3082 = vunpack.c.l.b16 %v2714
    %v3083 = vunpack.c.h.b16 %v2714
    %v3084 = vunpack.c.l.b16 %v2715
    %v3085 = vunpack.c.h.b16 %v2715
    %v3086 = vunpack.c.l.b16 %v2716
    %v3087 = vunpack.c.h.b16 %v2716
    %v3088 = vunpack.c.l.b16 %v2717
    %v3089 = vunpack.c.h.b16 %v2717
    %v3090 = vunpack.c.l.b16 %v2718
    %v3091 = vunpack.c.h.b16 %v2718
    %v3092 = vunpack.c.l.b16 %v2719
    %v3093 = vunpack.c.h.b16 %v2719
    %v3094 = vunpack.c.l.b16 %v2720
    %v3095 = vunpack.c.h.b16 %v2720
    %v3096 = vunpack.c.l.b16 %v2721
    %v3097 = vunpack.c.h.b16 %v2721
    %v3098 = vunpack.c.l.b16 %v2722
    %v3099 = vunpack.c.h.b16 %v2722
    %v3100 = vunpack.c.l.b16 %v2723
    %v3101 = vunpack.c.h.b16 %v2723
    %v3102 = vunpack.c.l.b16 %v2724
    %v3103 = vunpack.c.h.b16 %v2724
    %v3104 = vunpack.c.l.b16 %v2725
    %v3105 = vunpack.c.h.b16 %v2725
    %v3106 = vunpack.c.l.b16 %v2726
    %v3107 = vunpack.c.h.b16 %v2726
    %v3108 = vunpack.c.l.b16 %v2727
    %v3109 = vunpack.c.h.b16 %v2727
    %v3110 = vunpack.c.l.b16 %v2728
    %v3111 = vunpack.c.h.b16 %v2728
    %v3112 = vunpack.c.l.b16 %v2729
    %v3113 = vunpack.c.h.b16 %v2729
    %v3114 = vpack.c.b16 %v2862, %v2858
    %v3115 = vpack.c.b16 %v2863, %v2859
    %v3116 = vpack.c.b16 %v2864, %v2860
    %v3117 = vpack.c.b16 %v2865, %v2861
    %v3118 = vpack.c.b16 %v2870, %v2866
    %v3119 = vpack.c.b16 %v2871, %v2867
    %v3120 = vpack.c.b16 %v2872, %v2868
    %v3121 = vpack.c.b16 %v2873, %v2869
    %v3122 = vpack.c.b16 %v2878, %v2874
    %v3123 = vpack.c.b16 %v2879, %v2875
    %v3124 = vpack.c.b16 %v2880, %v2876
    %v3125 = vpack.c.b16 %v2881, %v2877
    %v3126 = vpack.c.b16 %v2886, %v2882
    %v3127 = vpack.c.b16 %v2887, %v2883
    %v3128 = vpack.c.b16 %v2888, %v2884
    %v3129 = vpack.c.b16 %v2889, %v2885
    %v3130 = vpack.c.b16 %v2894, %v2890
    %v3131 = vpack.c.b16 %v2895, %v2891
    %v3132 = vpack.c.b16 %v2896, %v2892
    %v3133 = vpack.c.b16 %v2897, %v2893
    %v3134 = vpack.c.b16 %v2902, %v2898
    %v3135 = vpack.c.b16 %v2903, %v2899
    %v3136 = vpack.c.b16 %v2904, %v2900
    %v3137 = vpack.c.b16 %v2905, %v2901
    %v3138 = vpack.c.b16 %v2910, %v2906
    %v3139 = vpack.c.b16 %v2911, %v2907
    %v3140 = vpack.c.b16 %v2912, %v2908
    %v3141 = vpack.c.b16 %v2913, %v2909
    %v3142 = vpack.c.b16 %v2918, %v2914
    %v3143 = vpack.c.b16 %v2919, %v2915
    %v3144 = vpack.c.b16 %v2920, %v2916
    %v3145 = vpack.c.b16 %v2921, %v2917
    %v3146 = vpack.c.b16 %v2926, %v2922
    %v3147 = vpack.c.b16 %v2927, %v2923
    %v3148 = vpack.c.b16 %v2928, %v2924
    %v3149 = vpack.c.b16 %v2929, %v2925
    %v3150 = vpack.c.b16 %v2934, %v2930
    %v3151 = vpack.c.b16 %v2935, %v2931
    %v3152 = vpack.c.b16 %v2936, %v2932
    %v3153 = vpack.c.b16 %v2937, %v2933
    %v3154 = vpack.c.b16 %v2942, %v2938
    %v3155 = vpack.c.b16 %v2943, %v2939
    %v3156 = vpack.c.b16 %v2944, %v2940
    %v3157 = vpack.c.b16 %v2945, %v2941
    %v3158 = vpack.c.b16 %v2950, %v2946
    %v3159 = vpack.c.b16 %v2951, %v2947
    %v3160 = vpack.c.b16 %v2952, %v2948
    %v3161 = vpack.c.b16 %v2953, %v2949
    %v3162 = vpack.c.b16 %v2958, %v2954
    %v3163 = vpack.c.b16 %v2959, %v2955
    %v3164 = vpack.c.b16 %v2960, %v2956
    %v3165 = vpack.c.b16 %v2961, %v2957
    %v3166 = vpack.c.b16 %v2966, %v2962
    %v3167 = vpack.c.b16 %v2967, %v2963
    %v3168 = vpack.c.b16 %v2968, %v2964
    %v3169 = vpack.c.b16 %v2969, %v2965
    %v3170 = vpack.c.b16 %v2974, %v2970
    %v3171 = vpack.c.b16 %v2975, %v2971
    %v3172 = vpack.c.b16 %v2976, %v2972
    %v3173 = vpack.c.b16 %v2977, %v2973
    %v3174 = vpack.c.b16 %v2982, %v2978
    %v3175 = vpack.c.b16 %v2983, %v2979
    %v3176 = vpack.c.b16 %v2984, %v2980
    %v3177 = vpack.c.b16 %v2985, %v2981
    %v3178 = vpack.c.b16 %v2990, %v2986
    %v3179 = vpack.c.b16 %v2991, %v2987
    %v3180 = vpack.c.b16 %v2992, %v2988
    %v3181 = vpack.c.b16 %v2993, %v2989
    %v3182 = vpack.c.b16 %v2998, %v2994
    %v3183 = vpack.c.b16 %v2999, %v2995
    %v3184 = vpack.c.b16 %v3000, %v2996
    %v3185 = vpack.c.b16 %v3001, %v2997
    %v3186 = vpack.c.b16 %v3006, %v3002
    %v3187 = vpack.c.b16 %v3007, %v3003
    %v3188 = vpack.c.b16 %v3008, %v3004
    %v3189 = vpack.c.b16 %v3009, %v3005
    %v3190 = vpack.c.b16 %v3014, %v3010
    %v3191 = vpack.c.b16 %v3015, %v3011
    %v3192 = vpack.c.b16 %v3016, %v3012
    %v3193 = vpack.c.b16 %v3017, %v3013
    %v3194 = vpack.c.b16 %v3022, %v3018
    %v3195 = vpack.c.b16 %v3023, %v3019
    %v3196 = vpack.c.b16 %v3024, %v3020
    %v3197 = vpack.c.b16 %v3025, %v3021
    %v3198 = vpack.c.b16 %v3030, %v3026
    %v3199 = vpack.c.b16 %v3031, %v3027
    %v3200 = vpack.c.b16 %v3032, %v3028
    %v3201 = vpack.c.b16 %v3033, %v3029
    %v3202 = vpack.c.b16 %v3038, %v3034
    %v3203 = vpack.c.b16 %v3039, %v3035
    %v3204 = vpack.c.b16 %v3040, %v3036
    %v3205 = vpack.c.b16 %v3041, %v3037
    %v3206 = vpack.c.b16 %v3046, %v3042
    %v3207 = vpack.c.b16 %v3047, %v3043
    %v3208 = vpack.c.b16 %v3048, %v3044
    %v3209 = vpack.c.b16 %v3049, %v3045
    %v3210 = vpack.c.b16 %v3054, %v3050
    %v3211 = vpack.c.b16 %v3055, %v3051
    %v3212 = vpack.c.b16 %v3056, %v3052
    %v3213 = vpack.c.b16 %v3057, %v3053
    %v3214 = vpack.c.b16 %v3062, %v3058
    %v3215 = vpack.c.b16 %v3063, %v3059
    %v3216 = vpack.c.b16 %v3064, %v3060
    %v3217 = vpack.c.b16 %v3065, %v3061
    %v3218 = vpack.c.b16 %v3070, %v3066
    %v3219 = vpack.c.b16 %v3071, %v3067
    %v3220 = vpack.c.b16 %v3072, %v3068
    %v3221 = vpack.c.b16 %v3073, %v3069
    %v3222 = vpack.c.b16 %v3078, %v3074
    %v3223 = vpack.c.b16 %v3079, %v3075
    %v3224 = vpack.c.b16 %v3080, %v3076
    %v3225 = vpack.c.b16 %v3081, %v3077
    %v3226 = vpack.c.b16 %v3086, %v3082
    %v3227 = vpack.c.b16 %v3087, %v3083
    %v3228 = vpack.c.b16 %v3088, %v3084
    %v3229 = vpack.c.b16 %v3089, %v3085
    %v3230 = vpack.c.b16 %v3094, %v3090
    %v3231 = vpack.c.b16 %v3095, %v3091
    %v3232 = vpack.c.b16 %v3096, %v3092
    %v3233 = vpack.c.b16 %v3097, %v3093
    %v3234 = vpack.c.b16 %v3102, %v3098
    %v3235 = vpack.c.b16 %v3103, %v3099
    %v3236 = vpack.c.b16 %v3104, %v3100
    %v3237 = vpack.c.b16 %v3105, %v3101
    %v3238 = vpack.c.b16 %v3110, %v3106
    %v3239 = vpack.c.b16 %v3111, %v3107
    %v3240 = vpack.c.b16 %v3112, %v3108
    %v3241 = vpack.c.b16 %v3113, %v3109
    %3370 = vmatprep.subr.bf16.mxu0 %v3115
    %3371 = vmatpush1.bf16.msra.mxu0 %v3114
    %3372 = vmatprep.subr.bf16.mxu0 %v3119
    %3373 = vmatpush1.bf16.msra.mxu0 %v3118
    %3374 = vmatprep.subr.bf16.mxu0 %v3123
    %3375 = vmatpush1.bf16.msra.mxu0 %v3122
    %3376 = vmatprep.subr.bf16.mxu0 %v3127
    %3377 = vmatpush1.bf16.msra.mxu0 %v3126
    %3378 = vmatprep.subr.bf16.mxu0 %v3131
    %3379 = vmatpush1.bf16.msra.mxu0 %v3130
    %3380 = vmatprep.subr.bf16.mxu0 %v3135
    %3381 = vmatpush1.bf16.msra.mxu0 %v3134
    %3382 = vmatprep.subr.bf16.mxu0 %v3139
    %3383 = vmatpush1.bf16.msra.mxu0 %v3138
    %3384 = vmatprep.subr.bf16.mxu0 %v3143
    %3385 = vmatpush1.bf16.msra.mxu0 %v3142
    %3386 = vmatprep.subr.bf16.mxu0 %v3147
    %3387 = vmatpush1.bf16.msra.mxu0 %v3146
    %3388 = vmatprep.subr.bf16.mxu0 %v3151
    %3389 = vmatpush1.bf16.msra.mxu0 %v3150
    %3390 = vmatprep.subr.bf16.mxu0 %v3155
    %3391 = vmatpush1.bf16.msra.mxu0 %v3154
    %3392 = vmatprep.subr.bf16.mxu0 %v3159
    %3393 = vmatpush1.bf16.msra.mxu0 %v3158
    %3394 = vmatprep.subr.bf16.mxu0 %v3163
    %3395 = vmatpush1.bf16.msra.mxu0 %v3162
    %3396 = vmatprep.subr.bf16.mxu0 %v3167
    %3397 = vmatpush1.bf16.msra.mxu0 %v3166
    %3398 = vmatprep.subr.bf16.mxu0 %v3171
    %3399 = vmatpush1.bf16.msra.mxu0 %v3170
    %3400 = vmatprep.subr.bf16.mxu0 %v3175
    %3401 = vmatpush1.bf16.msra.mxu0 %v3174
    %3402 = vmatprep.mubr.bf16.mxu0 %v2594
    %3403 = vmatmul.mubr.bf16.gmra.mrb[0].mxu0 %v2593
    %v3404 = vpop.f32.mrb[0].mxu0
    %v3405 = vadd.f32 0.0, %v3404
    %v3406 = vpop.f32.mrb[0].mxu0
    %v3407 = vadd.f32 0.0, %v3406
    %v3408 = vpop.f32.mrb[0].mxu0
    %v3409 = vadd.f32 0.0, %v3408
    %v3410 = vpop.f32.mrb[0].mxu0
    %v3411 = vadd.f32 0.0, %v3410
    %3412 = vmatprep.mubr.bf16.mxu0 %v2598
    %3413 = vmatmul.mubr.bf16.gmra.mrb[0].mxu0 %v2597
    %v3414 = vpop.f32.mrb[0].mxu0
    %v3415 = vadd.f32 0.0, %v3414
    %v3416 = vpop.f32.mrb[0].mxu0
    %v3417 = vadd.f32 0.0, %v3416
    %v3418 = vpop.f32.mrb[0].mxu0
    %v3419 = vadd.f32 0.0, %v3418
    %v3420 = vpop.f32.mrb[0].mxu0
    %v3421 = vadd.f32 0.0, %v3420
    %3422 = vdwg.mxu0
    %3423 = vmatprep.subr.bf16.mxu0 %v3179
    %3424 = vmatpush1.bf16.msra.mxu0 %v3178
    %3425 = vmatprep.subr.bf16.mxu0 %v3183
    %3426 = vmatpush1.bf16.msra.mxu0 %v3182
    %3427 = vmatprep.subr.bf16.mxu0 %v3187
    %3428 = vmatpush1.bf16.msra.mxu0 %v3186
    %3429 = vmatprep.subr.bf16.mxu0 %v3191
    %3430 = vmatpush1.bf16.msra.mxu0 %v3190
    %3431 = vmatprep.subr.bf16.mxu0 %v3195
    %3432 = vmatpush1.bf16.msra.mxu0 %v3194
    %3433 = vmatprep.subr.bf16.mxu0 %v3199
    %3434 = vmatpush1.bf16.msra.mxu0 %v3198
    %3435 = vmatprep.subr.bf16.mxu0 %v3203
    %3436 = vmatpush1.bf16.msra.mxu0 %v3202
    %3437 = vmatprep.subr.bf16.mxu0 %v3207
    %3438 = vmatpush1.bf16.msra.mxu0 %v3206
    %3439 = vmatprep.subr.bf16.mxu0 %v3211
    %3440 = vmatpush1.bf16.msra.mxu0 %v3210
    %3441 = vmatprep.subr.bf16.mxu0 %v3215
    %3442 = vmatpush1.bf16.msra.mxu0 %v3214
    %3443 = vmatprep.subr.bf16.mxu0 %v3219
    %3444 = vmatpush1.bf16.msra.mxu0 %v3218
    %3445 = vmatprep.subr.bf16.mxu0 %v3223
    %3446 = vmatpush1.bf16.msra.mxu0 %v3222
    %3447 = vmatprep.subr.bf16.mxu0 %v3227
    %3448 = vmatpush1.bf16.msra.mxu0 %v3226
    %3449 = vmatprep.subr.bf16.mxu0 %v3231
    %3450 = vmatpush1.bf16.msra.mxu0 %v3230
    %3451 = vmatprep.subr.bf16.mxu0 %v3235
    %3452 = vmatpush1.bf16.msra.mxu0 %v3234
    %3453 = vmatprep.subr.bf16.mxu0 %v3239
    %3454 = vmatpush1.bf16.msra.mxu0 %v3238
    %3455 = vmatprep.mubr.bf16.mxu0 %v2596
    %3456 = vmatmul.mubr.bf16.gmra.mrb[0].mxu0 %v2595
    %v3457 = vpop.f32.mrb[0].mxu0
    %v3458 = vadd.f32 %v3405, %v3457
    %v3459 = vpop.f32.mrb[0].mxu0
    %v3460 = vadd.f32 %v3407, %v3459
    %v3461 = vpop.f32.mrb[0].mxu0
    %v3462 = vadd.f32 %v3409, %v3461
    %v3463 = vpop.f32.mrb[0].mxu0
    %v3464 = vadd.f32 %v3411, %v3463
    %3465 = vmatprep.mubr.bf16.mxu0 %v2600
    %3466 = vmatmul.mubr.bf16.gmra.mrb[0].mxu0 %v2599
    %v3467 = vpop.f32.mrb[0].mxu0
    %v3468 = vadd.f32 %v3415, %v3467
    %v3469 = vpop.f32.mrb[0].mxu0
    %v3470 = vadd.f32 %v3417, %v3469
    %v3471 = vpop.f32.mrb[0].mxu0
    %v3472 = vadd.f32 %v3419, %v3471
    %v3473 = vpop.f32.mrb[0].mxu0
    %v3474 = vadd.f32 %v3421, %v3473
    %3475 = vdwg.mxu0
    %3476 = vmatprep.subr.bf16.mxu0 %v3117
    %3477 = vmatpush1.bf16.msra.mxu0 %v3116
    %3478 = vmatprep.subr.bf16.mxu0 %v3121
    %3479 = vmatpush1.bf16.msra.mxu0 %v3120
    %3480 = vmatprep.subr.bf16.mxu0 %v3125
    %3481 = vmatpush1.bf16.msra.mxu0 %v3124
    %3482 = vmatprep.subr.bf16.mxu0 %v3129
    %3483 = vmatpush1.bf16.msra.mxu0 %v3128
    %3484 = vmatprep.subr.bf16.mxu0 %v3133
    %3485 = vmatpush1.bf16.msra.mxu0 %v3132
    %3486 = vmatprep.subr.bf16.mxu0 %v3137
    %3487 = vmatpush1.bf16.msra.mxu0 %v3136
    %3488 = vmatprep.subr.bf16.mxu0 %v3141
    %3489 = vmatpush1.bf16.msra.mxu0 %v3140
    %3490 = vmatprep.subr.bf16.mxu0 %v3145
    %3491 = vmatpush1.bf16.msra.mxu0 %v3144
    %3492 = vmatprep.subr.bf16.mxu0 %v3149
    %3493 = vmatpush1.bf16.msra.mxu0 %v3148
    %3494 = vmatprep.subr.bf16.mxu0 %v3153
    %3495 = vmatpush1.bf16.msra.mxu0 %v3152
    %3496 = vmatprep.subr.bf16.mxu0 %v3157
    %3497 = vmatpush1.bf16.msra.mxu0 %v3156
    %3498 = vmatprep.subr.bf16.mxu0 %v3161
    %3499 = vmatpush1.bf16.msra.mxu0 %v3160
    %3500 = vmatprep.subr.bf16.mxu0 %v3165
    %3501 = vmatpush1.bf16.msra.mxu0 %v3164
    %3502 = vmatprep.subr.bf16.mxu0 %v3169
    %3503 = vmatpush1.bf16.msra.mxu0 %v3168
    %3504 = vmatprep.subr.bf16.mxu0 %v3173
    %3505 = vmatpush1.bf16.msra.mxu0 %v3172
    %3506 = vmatprep.subr.bf16.mxu0 %v3177
    %3507 = vmatpush1.bf16.msra.mxu0 %v3176
    %3508 = vmatprep.mubr.bf16.mxu0 %v2594
    %3509 = vmatmul.mubr.bf16.gmra.mrb[0].mxu0 %v2593
    %v3510 = vpop.f32.mrb[0].mxu0
    %v3511 = vadd.f32 0.0, %v3510
    %v3512 = vpop.f32.mrb[0].mxu0
    %v3513 = vadd.f32 0.0, %v3512
    %v3514 = vpop.f32.mrb[0].mxu0
    %v3515 = vadd.f32 0.0, %v3514
    %v3516 = vpop.f32.mrb[0].mxu0
    %v3517 = vadd.f32 0.0, %v3516
    %3518 = vmatprep.mubr.bf16.mxu0 %v2598
    %3519 = vmatmul.mubr.bf16.gmra.mrb[0].mxu0 %v2597
    %v3520 = vpop.f32.mrb[0].mxu0
    %v3521 = vadd.f32 0.0, %v3520
    %v3522 = vpop.f32.mrb[0].mxu0
    %v3523 = vadd.f32 0.0, %v3522
    %v3524 = vpop.f32.mrb[0].mxu0
    %v3525 = vadd.f32 0.0, %v3524
    %v3526 = vpop.f32.mrb[0].mxu0
    %v3527 = vadd.f32 0.0, %v3526
    %3528 = vdwg.mxu0
    %3529 = vmatprep.subr.bf16.mxu0 %v3181
    %3530 = vmatpush1.bf16.msra.mxu0 %v3180
    %3531 = vmatprep.subr.bf16.mxu0 %v3185
    %3532 = vmatpush1.bf16.msra.mxu0 %v3184
    %3533 = vmatprep.subr.bf16.mxu0 %v3189
    %3534 = vmatpush1.bf16.msra.mxu0 %v3188
    %3535 = vmatprep.subr.bf16.mxu0 %v3193
    %3536 = vmatpush1.bf16.msra.mxu0 %v3192
    %3537 = vmatprep.subr.bf16.mxu0 %v3197
    %3538 = vmatpush1.bf16.msra.mxu0 %v3196
    %3539 = vmatprep.subr.bf16.mxu0 %v3201
    %3540 = vmatpush1.bf16.msra.mxu0 %v3200
    %3541 = vmatprep.subr.bf16.mxu0 %v3205
    %3542 = vmatpush1.bf16.msra.mxu0 %v3204
    %3543 = vmatprep.subr.bf16.mxu0 %v3209
    %3544 = vmatpush1.bf16.msra.mxu0 %v3208
    %3545 = vmatprep.subr.bf16.mxu0 %v3213
    %3546 = vmatpush1.bf16.msra.mxu0 %v3212
    %3547 = vmatprep.subr.bf16.mxu0 %v3217
    %3548 = vmatpush1.bf16.msra.mxu0 %v3216
    %3549 = vmatprep.subr.bf16.mxu0 %v3221
    %3550 = vmatpush1.bf16.msra.mxu0 %v3220
    %3551 = vmatprep.subr.bf16.mxu0 %v3225
    %3552 = vmatpush1.bf16.msra.mxu0 %v3224
    %3553 = vmatprep.subr.bf16.mxu0 %v3229
    %3554 = vmatpush1.bf16.msra.mxu0 %v3228
    %3555 = vmatprep.subr.bf16.mxu0 %v3233
    %3556 = vmatpush1.bf16.msra.mxu0 %v3232
    %3557 = vmatprep.subr.bf16.mxu0 %v3237
    %3558 = vmatpush1.bf16.msra.mxu0 %v3236
    %3559 = vmatprep.subr.bf16.mxu0 %v3241
    %3560 = vmatpush1.bf16.msra.mxu0 %v3240
    %3561 = vmatprep.mubr.bf16.mxu0 %v2596
    %3562 = vmatmul.mubr.bf16.gmra.mrb[0].mxu0 %v2595
    %v3563 = vpop.f32.mrb[0].mxu0
    %v3564 = vadd.f32 %v3511, %v3563
    %v3565 = vpop.f32.mrb[0].mxu0
    %v3566 = vadd.f32 %v3513, %v3565
    %v3567 = vpop.f32.mrb[0].mxu0
    %v3568 = vadd.f32 %v3515, %v3567
    %v3569 = vpop.f32.mrb[0].mxu0
    %v3570 = vadd.f32 %v3517, %v3569
    %3571 = vmatprep.mubr.bf16.mxu0 %v2600
    %3572 = vmatmul.mubr.bf16.gmra.mrb[0].mxu0 %v2599
    %v3573 = vpop.f32.mrb[0].mxu0
    %v3574 = vadd.f32 %v3521, %v3573
    %v3575 = vpop.f32.mrb[0].mxu0
    %v3576 = vadd.f32 %v3523, %v3575
    %v3577 = vpop.f32.mrb[0].mxu0
    %v3578 = vadd.f32 %v3525, %v3577
    %v3579 = vpop.f32.mrb[0].mxu0
    %v3580 = vadd.f32 %v3527, %v3579
    %3581 = vdwg.mxu0
    %v3582 = vadd.f32 %v2469, %v3458
    %v3583 = vadd.f32 %v2471, %v3460
    %v3584 = vadd.f32 %v2575, %v3564
    %v3585 = vadd.f32 %v2577, %v3566
    %v3586 = vadd.f32 %v2473, %v3462
    %v3587 = vadd.f32 %v2475, %v3464
    %v3588 = vadd.f32 %v2579, %v3568
    %v3589 = vadd.f32 %v2581, %v3570
    %v3590 = vadd.f32 %v2479, %v3468
    %v3591 = vadd.f32 %v2481, %v3470
    %v3592 = vadd.f32 %v2585, %v3574
    %v3593 = vadd.f32 %v2587, %v3576
    %v3594 = vadd.f32 %v2483, %v3472
    %v3595 = vadd.f32 %v2485, %v3474
    %v3596 = vadd.f32 %v2589, %v3578
    %v3597 = vadd.f32 %v2591, %v3580
    %v3598 = vld [vmem:[%s9] sm:$0xf]
    %v3600 = vlaneseq
    %v3601 = vshrl.u32 %v3600, 7
    %v3602 = vsub.s32 0, %v3601
    %v3603 = vrot.slane %v3598, %v3602
    %v3604 = vlaneseq
    %v3605 = vshrl.u32 %v3604, 7
    %v3606 = vsub.s32 1, %v3605
    %v3607 = vrot.slane %v3598, %v3606
    %v3608 = vlaneseq
    %v3609 = vshrl.u32 %v3608, 7
    %v3610 = vsub.s32 2, %v3609
    %v3611 = vrot.slane %v3598, %v3610
    %v3612 = vlaneseq
    %v3613 = vshrl.u32 %v3612, 7
    %v3614 = vsub.s32 3, %v3613
    %v3615 = vrot.slane %v3598, %v3614
    %v3620 = vadd.f32 %v3582, %v3603
    %v3621 = vadd.f32 %v3583, %v3607
    %v3622 = vadd.f32 %v3584, %v3611
    %v3623 = vadd.f32 %v3585, %v3615
    %v3624 = vadd.f32 %v3586, %v3603
    %v3625 = vadd.f32 %v3587, %v3607
    %v3626 = vadd.f32 %v3588, %v3611
    %v3627 = vadd.f32 %v3589, %v3615
    %v3628 = vadd.f32 %v3590, %v3603
    %v3629 = vadd.f32 %v3591, %v3607
    %v3630 = vadd.f32 %v3592, %v3611
    %v3631 = vadd.f32 %v3593, %v3615
    %v3632 = vadd.f32 %v3594, %v3603
    %v3633 = vadd.f32 %v3595, %v3607
    %v3634 = vadd.f32 %v3596, %v3611
    %v3635 = vadd.f32 %v3597, %v3615
    %v3636 = vmax.f32 %v3620, 0.0
    %v3637 = vmax.f32 %v3621, 0.0
    %v3638 = vmax.f32 %v3622, 0.0
    %v3639 = vmax.f32 %v3623, 0.0
    %v3640 = vmax.f32 %v3624, 0.0
    %v3641 = vmax.f32 %v3625, 0.0
    %v3642 = vmax.f32 %v3626, 0.0
    %v3643 = vmax.f32 %v3627, 0.0
    %v3644 = vmax.f32 %v3628, 0.0
    %v3645 = vmax.f32 %v3629, 0.0
    %v3646 = vmax.f32 %v3630, 0.0
    %v3647 = vmax.f32 %v3631, 0.0
    %v3648 = vmax.f32 %v3632, 0.0
    %v3649 = vmax.f32 %v3633, 0.0
    %v3650 = vmax.f32 %v3634, 0.0
    %v3651 = vmax.f32 %v3635, 0.0
    %v3652 = vrot.slane %v3636, 7
    %v3653 = vrot.slane %v3637, 7
    %v3654 = vrot.slane %v3638, 7
    %v3655 = vrot.slane %v3639, 7
    %v3656 = vrot.slane %v3644, 7
    %v3657 = vrot.slane %v3645, 7
    %v3658 = vrot.slane %v3646, 7
    %v3659 = vrot.slane %v3647, 7
    %v3660 = vrot.slane %v3640, 7
    %v3661 = vrot.slane %v3641, 7
    %v3662 = vrot.slane %v3642, 7
    %v3663 = vrot.slane %v3643, 7
    %v3664 = vrot.slane %v3648, 7
    %v3665 = vrot.slane %v3649, 7
    %v3666 = vrot.slane %v3650, 7
    %v3667 = vrot.slane %v3651, 7
    %v3668 = vsel %vm534, %v3652, %v3660
    %v3669 = vsel %vm534, %v3653, %v3661
    %v3670 = vsel %vm534, %v3654, %v3662
    %v3671 = vsel %vm534, %v3655, %v3663
    %v3672 = vsel %vm534, %v3656, %v3664
    %v3673 = vsel %vm534, %v3657, %v3665
    %v3674 = vsel %vm534, %v3658, %v3666
    %v3675 = vsel %vm534, %v3659, %v3667
    %v3676 = vsel %vm534, %v3660, %v3652
    %v3677 = vsel %vm534, %v3661, %v3653
    %v3678 = vsel %vm534, %v3662, %v3654
    %v3679 = vsel %vm534, %v3663, %v3655
    %v3680 = vsel %vm534, %v3664, %v3656
    %v3681 = vsel %vm534, %v3665, %v3657
    %v3682 = vsel %vm534, %v3666, %v3658
    %v3683 = vsel %vm534, %v3667, %v3659
    %v3684 = vmul.f32 %v3676, %v510
    %v3685 = vmul.f32 %v3677, %v510
    %v3686 = vmul.f32 %v3678, %v510
    %v3687 = vmul.f32 %v3679, %v510
    %v3688 = vmul.f32 %v3668, %v511
    %v3689 = vmul.f32 %v3669, %v511
    %v3690 = vmul.f32 %v3670, %v511
    %v3691 = vmul.f32 %v3671, %v511
    %v3692 = vmul.f32 %v3680, %v510
    %v3693 = vmul.f32 %v3681, %v510
    %v3694 = vmul.f32 %v3682, %v510
    %v3695 = vmul.f32 %v3683, %v510
    %v3696 = vmul.f32 %v3672, %v511
    %v3697 = vmul.f32 %v3673, %v511
    %v3698 = vmul.f32 %v3674, %v511
    %v3699 = vmul.f32 %v3675, %v511
    %v3700 = vrot.slane %v3636, 1
    %v3701 = vrot.slane %v3637, 1
    %v3702 = vrot.slane %v3638, 1
    %v3703 = vrot.slane %v3639, 1
    %v3704 = vrot.slane %v3644, 1
    %v3705 = vrot.slane %v3645, 1
    %v3706 = vrot.slane %v3646, 1
    %v3707 = vrot.slane %v3647, 1
    %v3708 = vrot.slane %v3640, 1
    %v3709 = vrot.slane %v3641, 1
    %v3710 = vrot.slane %v3642, 1
    %v3711 = vrot.slane %v3643, 1
    %v3712 = vrot.slane %v3648, 1
    %v3713 = vrot.slane %v3649, 1
    %v3714 = vrot.slane %v3650, 1
    %v3715 = vrot.slane %v3651, 1
    %v3716 = vsel %vm583, %v3700, %v3708
    %v3717 = vsel %vm583, %v3701, %v3709
    %v3718 = vsel %vm583, %v3702, %v3710
    %v3719 = vsel %vm583, %v3703, %v3711
    %v3720 = vsel %vm583, %v3704, %v3712
    %v3721 = vsel %vm583, %v3705, %v3713
    %v3722 = vsel %vm583, %v3706, %v3714
    %v3723 = vsel %vm583, %v3707, %v3715
    %v3724 = vsel %vm583, %v3708, %v3700
    %v3725 = vsel %vm583, %v3709, %v3701
    %v3726 = vsel %vm583, %v3710, %v3702
    %v3727 = vsel %vm583, %v3711, %v3703
    %v3728 = vsel %vm583, %v3712, %v3704
    %v3729 = vsel %vm583, %v3713, %v3705
    %v3730 = vsel %vm583, %v3714, %v3706
    %v3731 = vsel %vm583, %v3715, %v3707
    %v3732 = vmul.f32 %v3716, %v516
    %v3733 = vmul.f32 %v3717, %v516
    %v3734 = vmul.f32 %v3718, %v516
    %v3735 = vmul.f32 %v3719, %v516
    %v3736 = vmul.f32 %v3724, %v517
    %v3737 = vmul.f32 %v3725, %v517
    %v3738 = vmul.f32 %v3726, %v517
    %v3739 = vmul.f32 %v3727, %v517
    %v3740 = vmul.f32 %v3720, %v516
    %v3741 = vmul.f32 %v3721, %v516
    %v3742 = vmul.f32 %v3722, %v516
    %v3743 = vmul.f32 %v3723, %v516
    %v3744 = vmul.f32 %v3728, %v517
    %v3745 = vmul.f32 %v3729, %v517
    %v3746 = vmul.f32 %v3730, %v517
    %v3747 = vmul.f32 %v3731, %v517
    %v3748 = vpack.c.bf16 %v3688, %v3684
    %v3749 = vpack.c.bf16 %v3689, %v3685
    %v3750 = vpack.c.bf16 %v3690, %v3686
    %v3751 = vpack.c.bf16 %v3691, %v3687
    %v3752 = vpack.c.bf16 %v3696, %v3692
    %v3753 = vpack.c.bf16 %v3697, %v3693
    %v3754 = vpack.c.bf16 %v3698, %v3694
    %v3755 = vpack.c.bf16 %v3699, %v3695
    %v3756 = vld [vmem:[%s10] sm:$0xff]
    %v3757 = vld [vmem:[%s10 + $0x8] sm:$0xff]
    %v3758 = vld [vmem:[%s10 + $0x10] sm:$0xff]
    %v3759 = vld [vmem:[%s10 + $0x18] sm:$0xff]
    %v3760 = vld [vmem:[%s10 + $0x20] sm:$0xff]
    %v3761 = vld [vmem:[%s10 + $0x28] sm:$0xff]
    %v3762 = vld [vmem:[%s10 + $0x30] sm:$0xff]
    %v3763 = vld [vmem:[%s10 + $0x38] sm:$0xff]
    %v3764 = vld [vmem:[%s10 + $0x40] sm:$0xff]
    %v3765 = vld [vmem:[%s10 + $0x48] sm:$0xff]
    %v3766 = vld [vmem:[%s10 + $0x50] sm:$0xff]
    %v3767 = vld [vmem:[%s10 + $0x58] sm:$0xff]
    %v3768 = vld [vmem:[%s10 + $0x60] sm:$0xff]
    %v3769 = vld [vmem:[%s10 + $0x68] sm:$0xff]
    %v3770 = vld [vmem:[%s10 + $0x70] sm:$0xff]
    %v3771 = vld [vmem:[%s10 + $0x78] sm:$0xff]
    %v3772 = vld [vmem:[%s10 + $0x80] sm:$0xff]
    %v3773 = vld [vmem:[%s10 + $0x88] sm:$0xff]
    %v3774 = vld [vmem:[%s10 + $0x90] sm:$0xff]
    %v3775 = vld [vmem:[%s10 + $0x98] sm:$0xff]
    %v3776 = vld [vmem:[%s10 + $0xa0] sm:$0xff]
    %v3777 = vld [vmem:[%s10 + $0xa8] sm:$0xff]
    %v3778 = vld [vmem:[%s10 + $0xb0] sm:$0xff]
    %v3779 = vld [vmem:[%s10 + $0xb8] sm:$0xff]
    %v3780 = vld [vmem:[%s10 + $0xc0] sm:$0xff]
    %v3781 = vld [vmem:[%s10 + $0xc8] sm:$0xff]
    %v3782 = vld [vmem:[%s10 + $0xd0] sm:$0xff]
    %v3783 = vld [vmem:[%s10 + $0xd8] sm:$0xff]
    %v3784 = vld [vmem:[%s10 + $0xe0] sm:$0xff]
    %v3785 = vld [vmem:[%s10 + $0xe8] sm:$0xff]
    %v3786 = vld [vmem:[%s10 + $0xf0] sm:$0xff]
    %v3787 = vld [vmem:[%s10 + $0xf8] sm:$0xff]
    %v3788 = vld [vmem:[%s10 + $0x100] sm:$0xff]
    %v3789 = vld [vmem:[%s10 + $0x108] sm:$0xff]
    %v3790 = vld [vmem:[%s10 + $0x110] sm:$0xff]
    %v3791 = vld [vmem:[%s10 + $0x118] sm:$0xff]
    %v3792 = vld [vmem:[%s10 + $0x120] sm:$0xff]
    %v3793 = vld [vmem:[%s10 + $0x128] sm:$0xff]
    %v3794 = vld [vmem:[%s10 + $0x130] sm:$0xff]
    %v3795 = vld [vmem:[%s10 + $0x138] sm:$0xff]
    %v3796 = vld [vmem:[%s10 + $0x140] sm:$0xff]
    %v3797 = vld [vmem:[%s10 + $0x148] sm:$0xff]
    %v3798 = vld [vmem:[%s10 + $0x150] sm:$0xff]
    %v3799 = vld [vmem:[%s10 + $0x158] sm:$0xff]
    %v3800 = vld [vmem:[%s10 + $0x160] sm:$0xff]
    %v3801 = vld [vmem:[%s10 + $0x168] sm:$0xff]
    %v3802 = vld [vmem:[%s10 + $0x170] sm:$0xff]
    %v3803 = vld [vmem:[%s10 + $0x178] sm:$0xff]
    %v3804 = vld [vmem:[%s10 + $0x180] sm:$0xff]
    %v3805 = vld [vmem:[%s10 + $0x188] sm:$0xff]
    %v3806 = vld [vmem:[%s10 + $0x190] sm:$0xff]
    %v3807 = vld [vmem:[%s10 + $0x198] sm:$0xff]
    %v3808 = vld [vmem:[%s10 + $0x1a0] sm:$0xff]
    %v3809 = vld [vmem:[%s10 + $0x1a8] sm:$0xff]
    %v3810 = vld [vmem:[%s10 + $0x1b0] sm:$0xff]
    %v3811 = vld [vmem:[%s10 + $0x1b8] sm:$0xff]
    %v3812 = vld [vmem:[%s10 + $0x1c0] sm:$0xff]
    %v3813 = vld [vmem:[%s10 + $0x1c8] sm:$0xff]
    %v3814 = vld [vmem:[%s10 + $0x1d0] sm:$0xff]
    %v3815 = vld [vmem:[%s10 + $0x1d8] sm:$0xff]
    %v3816 = vld [vmem:[%s10 + $0x1e0] sm:$0xff]
    %v3817 = vld [vmem:[%s10 + $0x1e8] sm:$0xff]
    %v3818 = vld [vmem:[%s10 + $0x1f0] sm:$0xff]
    %v3819 = vld [vmem:[%s10 + $0x1f8] sm:$0xff]
    %v3820 = vld [vmem:[%s10 + $0x200] sm:$0xff]
    %v3821 = vld [vmem:[%s10 + $0x208] sm:$0xff]
    %v3822 = vld [vmem:[%s10 + $0x210] sm:$0xff]
    %v3823 = vld [vmem:[%s10 + $0x218] sm:$0xff]
    %v3824 = vld [vmem:[%s10 + $0x220] sm:$0xff]
    %v3825 = vld [vmem:[%s10 + $0x228] sm:$0xff]
    %v3826 = vld [vmem:[%s10 + $0x230] sm:$0xff]
    %v3827 = vld [vmem:[%s10 + $0x238] sm:$0xff]
    %v3828 = vld [vmem:[%s10 + $0x240] sm:$0xff]
    %v3829 = vld [vmem:[%s10 + $0x248] sm:$0xff]
    %v3830 = vld [vmem:[%s10 + $0x250] sm:$0xff]
    %v3831 = vld [vmem:[%s10 + $0x258] sm:$0xff]
    %v3832 = vld [vmem:[%s10 + $0x260] sm:$0xff]
    %v3833 = vld [vmem:[%s10 + $0x268] sm:$0xff]
    %v3834 = vld [vmem:[%s10 + $0x270] sm:$0xff]
    %v3835 = vld [vmem:[%s10 + $0x278] sm:$0xff]
    %v3836 = vld [vmem:[%s10 + $0x280] sm:$0xff]
    %v3837 = vld [vmem:[%s10 + $0x288] sm:$0xff]
    %v3838 = vld [vmem:[%s10 + $0x290] sm:$0xff]
    %v3839 = vld [vmem:[%s10 + $0x298] sm:$0xff]
    %v3840 = vld [vmem:[%s10 + $0x2a0] sm:$0xff]
    %v3841 = vld [vmem:[%s10 + $0x2a8] sm:$0xff]
    %v3842 = vld [vmem:[%s10 + $0x2b0] sm:$0xff]
    %v3843 = vld [vmem:[%s10 + $0x2b8] sm:$0xff]
    %v3844 = vld [vmem:[%s10 + $0x2c0] sm:$0xff]
    %v3845 = vld [vmem:[%s10 + $0x2c8] sm:$0xff]
    %v3846 = vld [vmem:[%s10 + $0x2d0] sm:$0xff]
    %v3847 = vld [vmem:[%s10 + $0x2d8] sm:$0xff]
    %v3848 = vld [vmem:[%s10 + $0x2e0] sm:$0xff]
    %v3849 = vld [vmem:[%s10 + $0x2e8] sm:$0xff]
    %v3850 = vld [vmem:[%s10 + $0x2f0] sm:$0xff]
    %v3851 = vld [vmem:[%s10 + $0x2f8] sm:$0xff]
    %v3852 = vld [vmem:[%s10 + $0x300] sm:$0xff]
    %v3853 = vld [vmem:[%s10 + $0x308] sm:$0xff]
    %v3854 = vld [vmem:[%s10 + $0x310] sm:$0xff]
    %v3855 = vld [vmem:[%s10 + $0x318] sm:$0xff]
    %v3856 = vld [vmem:[%s10 + $0x320] sm:$0xff]
    %v3857 = vld [vmem:[%s10 + $0x328] sm:$0xff]
    %v3858 = vld [vmem:[%s10 + $0x330] sm:$0xff]
    %v3859 = vld [vmem:[%s10 + $0x338] sm:$0xff]
    %v3860 = vld [vmem:[%s10 + $0x340] sm:$0xff]
    %v3861 = vld [vmem:[%s10 + $0x348] sm:$0xff]
    %v3862 = vld [vmem:[%s10 + $0x350] sm:$0xff]
    %v3863 = vld [vmem:[%s10 + $0x358] sm:$0xff]
    %v3864 = vld [vmem:[%s10 + $0x360] sm:$0xff]
    %v3865 = vld [vmem:[%s10 + $0x368] sm:$0xff]
    %v3866 = vld [vmem:[%s10 + $0x370] sm:$0xff]
    %v3867 = vld [vmem:[%s10 + $0x378] sm:$0xff]
    %v3868 = vld [vmem:[%s10 + $0x380] sm:$0xff]
    %v3869 = vld [vmem:[%s10 + $0x388] sm:$0xff]
    %v3870 = vld [vmem:[%s10 + $0x390] sm:$0xff]
    %v3871 = vld [vmem:[%s10 + $0x398] sm:$0xff]
    %v3872 = vld [vmem:[%s10 + $0x3a0] sm:$0xff]
    %v3873 = vld [vmem:[%s10 + $0x3a8] sm:$0xff]
    %v3874 = vld [vmem:[%s10 + $0x3b0] sm:$0xff]
    %v3875 = vld [vmem:[%s10 + $0x3b8] sm:$0xff]
    %v3876 = vld [vmem:[%s10 + $0x3c0] sm:$0xff]
    %v3877 = vld [vmem:[%s10 + $0x3c8] sm:$0xff]
    %v3878 = vld [vmem:[%s10 + $0x3d0] sm:$0xff]
    %v3879 = vld [vmem:[%s10 + $0x3d8] sm:$0xff]
    %v3880 = vld [vmem:[%s10 + $0x3e0] sm:$0xff]
    %v3881 = vld [vmem:[%s10 + $0x3e8] sm:$0xff]
    %v3882 = vld [vmem:[%s10 + $0x3f0] sm:$0xff]
    %v3883 = vld [vmem:[%s10 + $0x3f8] sm:$0xff]
    %v3884 = vpack.c.bf16 %v3640, %v3636
    %v3885 = vpack.c.bf16 %v3641, %v3637
    %v3886 = vpack.c.bf16 %v3642, %v3638
    %v3887 = vpack.c.bf16 %v3643, %v3639
    %v3888 = vpack.c.bf16 %v3648, %v3644
    %v3889 = vpack.c.bf16 %v3649, %v3645
    %v3890 = vpack.c.bf16 %v3650, %v3646
    %v3891 = vpack.c.bf16 %v3651, %v3647
    %s3892 = scalar_lea.vmem %s10, 1024
    %v3893 = vld [vmem:[%s3892] sm:$0xff]
    %v3894 = vld [vmem:[%s3892 + $0x8] sm:$0xff]
    %v3895 = vld [vmem:[%s3892 + $0x10] sm:$0xff]
    %v3896 = vld [vmem:[%s3892 + $0x18] sm:$0xff]
    %v3897 = vld [vmem:[%s3892 + $0x20] sm:$0xff]
    %v3898 = vld [vmem:[%s3892 + $0x28] sm:$0xff]
    %v3899 = vld [vmem:[%s3892 + $0x30] sm:$0xff]
    %v3900 = vld [vmem:[%s3892 + $0x38] sm:$0xff]
    %v3901 = vld [vmem:[%s3892 + $0x40] sm:$0xff]
    %v3902 = vld [vmem:[%s3892 + $0x48] sm:$0xff]
    %v3903 = vld [vmem:[%s3892 + $0x50] sm:$0xff]
    %v3904 = vld [vmem:[%s3892 + $0x58] sm:$0xff]
    %v3905 = vld [vmem:[%s3892 + $0x60] sm:$0xff]
    %v3906 = vld [vmem:[%s3892 + $0x68] sm:$0xff]
    %v3907 = vld [vmem:[%s3892 + $0x70] sm:$0xff]
    %v3908 = vld [vmem:[%s3892 + $0x78] sm:$0xff]
    %v3909 = vld [vmem:[%s3892 + $0x80] sm:$0xff]
    %v3910 = vld [vmem:[%s3892 + $0x88] sm:$0xff]
    %v3911 = vld [vmem:[%s3892 + $0x90] sm:$0xff]
    %v3912 = vld [vmem:[%s3892 + $0x98] sm:$0xff]
    %v3913 = vld [vmem:[%s3892 + $0xa0] sm:$0xff]
    %v3914 = vld [vmem:[%s3892 + $0xa8] sm:$0xff]
    %v3915 = vld [vmem:[%s3892 + $0xb0] sm:$0xff]
    %v3916 = vld [vmem:[%s3892 + $0xb8] sm:$0xff]
    %v3917 = vld [vmem:[%s3892 + $0xc0] sm:$0xff]
    %v3918 = vld [vmem:[%s3892 + $0xc8] sm:$0xff]
    %v3919 = vld [vmem:[%s3892 + $0xd0] sm:$0xff]
    %v3920 = vld [vmem:[%s3892 + $0xd8] sm:$0xff]
    %v3921 = vld [vmem:[%s3892 + $0xe0] sm:$0xff]
    %v3922 = vld [vmem:[%s3892 + $0xe8] sm:$0xff]
    %v3923 = vld [vmem:[%s3892 + $0xf0] sm:$0xff]
    %v3924 = vld [vmem:[%s3892 + $0xf8] sm:$0xff]
    %v3925 = vld [vmem:[%s3892 + $0x100] sm:$0xff]
    %v3926 = vld [vmem:[%s3892 + $0x108] sm:$0xff]
    %v3927 = vld [vmem:[%s3892 + $0x110] sm:$0xff]
    %v3928 = vld [vmem:[%s3892 + $0x118] sm:$0xff]
    %v3929 = vld [vmem:[%s3892 + $0x120] sm:$0xff]
    %v3930 = vld [vmem:[%s3892 + $0x128] sm:$0xff]
    %v3931 = vld [vmem:[%s3892 + $0x130] sm:$0xff]
    %v3932 = vld [vmem:[%s3892 + $0x138] sm:$0xff]
    %v3933 = vld [vmem:[%s3892 + $0x140] sm:$0xff]
    %v3934 = vld [vmem:[%s3892 + $0x148] sm:$0xff]
    %v3935 = vld [vmem:[%s3892 + $0x150] sm:$0xff]
    %v3936 = vld [vmem:[%s3892 + $0x158] sm:$0xff]
    %v3937 = vld [vmem:[%s3892 + $0x160] sm:$0xff]
    %v3938 = vld [vmem:[%s3892 + $0x168] sm:$0xff]
    %v3939 = vld [vmem:[%s3892 + $0x170] sm:$0xff]
    %v3940 = vld [vmem:[%s3892 + $0x178] sm:$0xff]
    %v3941 = vld [vmem:[%s3892 + $0x180] sm:$0xff]
    %v3942 = vld [vmem:[%s3892 + $0x188] sm:$0xff]
    %v3943 = vld [vmem:[%s3892 + $0x190] sm:$0xff]
    %v3944 = vld [vmem:[%s3892 + $0x198] sm:$0xff]
    %v3945 = vld [vmem:[%s3892 + $0x1a0] sm:$0xff]
    %v3946 = vld [vmem:[%s3892 + $0x1a8] sm:$0xff]
    %v3947 = vld [vmem:[%s3892 + $0x1b0] sm:$0xff]
    %v3948 = vld [vmem:[%s3892 + $0x1b8] sm:$0xff]
    %v3949 = vld [vmem:[%s3892 + $0x1c0] sm:$0xff]
    %v3950 = vld [vmem:[%s3892 + $0x1c8] sm:$0xff]
    %v3951 = vld [vmem:[%s3892 + $0x1d0] sm:$0xff]
    %v3952 = vld [vmem:[%s3892 + $0x1d8] sm:$0xff]
    %v3953 = vld [vmem:[%s3892 + $0x1e0] sm:$0xff]
    %v3954 = vld [vmem:[%s3892 + $0x1e8] sm:$0xff]
    %v3955 = vld [vmem:[%s3892 + $0x1f0] sm:$0xff]
    %v3956 = vld [vmem:[%s3892 + $0x1f8] sm:$0xff]
    %v3957 = vld [vmem:[%s3892 + $0x200] sm:$0xff]
    %v3958 = vld [vmem:[%s3892 + $0x208] sm:$0xff]
    %v3959 = vld [vmem:[%s3892 + $0x210] sm:$0xff]
    %v3960 = vld [vmem:[%s3892 + $0x218] sm:$0xff]
    %v3961 = vld [vmem:[%s3892 + $0x220] sm:$0xff]
    %v3962 = vld [vmem:[%s3892 + $0x228] sm:$0xff]
    %v3963 = vld [vmem:[%s3892 + $0x230] sm:$0xff]
    %v3964 = vld [vmem:[%s3892 + $0x238] sm:$0xff]
    %v3965 = vld [vmem:[%s3892 + $0x240] sm:$0xff]
    %v3966 = vld [vmem:[%s3892 + $0x248] sm:$0xff]
    %v3967 = vld [vmem:[%s3892 + $0x250] sm:$0xff]
    %v3968 = vld [vmem:[%s3892 + $0x258] sm:$0xff]
    %v3969 = vld [vmem:[%s3892 + $0x260] sm:$0xff]
    %v3970 = vld [vmem:[%s3892 + $0x268] sm:$0xff]
    %v3971 = vld [vmem:[%s3892 + $0x270] sm:$0xff]
    %v3972 = vld [vmem:[%s3892 + $0x278] sm:$0xff]
    %v3973 = vld [vmem:[%s3892 + $0x280] sm:$0xff]
    %v3974 = vld [vmem:[%s3892 + $0x288] sm:$0xff]
    %v3975 = vld [vmem:[%s3892 + $0x290] sm:$0xff]
    %v3976 = vld [vmem:[%s3892 + $0x298] sm:$0xff]
    %v3977 = vld [vmem:[%s3892 + $0x2a0] sm:$0xff]
    %v3978 = vld [vmem:[%s3892 + $0x2a8] sm:$0xff]
    %v3979 = vld [vmem:[%s3892 + $0x2b0] sm:$0xff]
    %v3980 = vld [vmem:[%s3892 + $0x2b8] sm:$0xff]
    %v3981 = vld [vmem:[%s3892 + $0x2c0] sm:$0xff]
    %v3982 = vld [vmem:[%s3892 + $0x2c8] sm:$0xff]
    %v3983 = vld [vmem:[%s3892 + $0x2d0] sm:$0xff]
    %v3984 = vld [vmem:[%s3892 + $0x2d8] sm:$0xff]
    %v3985 = vld [vmem:[%s3892 + $0x2e0] sm:$0xff]
    %v3986 = vld [vmem:[%s3892 + $0x2e8] sm:$0xff]
    %v3987 = vld [vmem:[%s3892 + $0x2f0] sm:$0xff]
    %v3988 = vld [vmem:[%s3892 + $0x2f8] sm:$0xff]
    %v3989 = vld [vmem:[%s3892 + $0x300] sm:$0xff]
    %v3990 = vld [vmem:[%s3892 + $0x308] sm:$0xff]
    %v3991 = vld [vmem:[%s3892 + $0x310] sm:$0xff]
    %v3992 = vld [vmem:[%s3892 + $0x318] sm:$0xff]
    %v3993 = vld [vmem:[%s3892 + $0x320] sm:$0xff]
    %v3994 = vld [vmem:[%s3892 + $0x328] sm:$0xff]
    %v3995 = vld [vmem:[%s3892 + $0x330] sm:$0xff]
    %v3996 = vld [vmem:[%s3892 + $0x338] sm:$0xff]
    %v3997 = vld [vmem:[%s3892 + $0x340] sm:$0xff]
    %v3998 = vld [vmem:[%s3892 + $0x348] sm:$0xff]
    %v3999 = vld [vmem:[%s3892 + $0x350] sm:$0xff]
    %v4000 = vld [vmem:[%s3892 + $0x358] sm:$0xff]
    %v4001 = vld [vmem:[%s3892 + $0x360] sm:$0xff]
    %v4002 = vld [vmem:[%s3892 + $0x368] sm:$0xff]
    %v4003 = vld [vmem:[%s3892 + $0x370] sm:$0xff]
    %v4004 = vld [vmem:[%s3892 + $0x378] sm:$0xff]
    %v4005 = vld [vmem:[%s3892 + $0x380] sm:$0xff]
    %v4006 = vld [vmem:[%s3892 + $0x388] sm:$0xff]
    %v4007 = vld [vmem:[%s3892 + $0x390] sm:$0xff]
    %v4008 = vld [vmem:[%s3892 + $0x398] sm:$0xff]
    %v4009 = vld [vmem:[%s3892 + $0x3a0] sm:$0xff]
    %v4010 = vld [vmem:[%s3892 + $0x3a8] sm:$0xff]
    %v4011 = vld [vmem:[%s3892 + $0x3b0] sm:$0xff]
    %v4012 = vld [vmem:[%s3892 + $0x3b8] sm:$0xff]
    %v4013 = vld [vmem:[%s3892 + $0x3c0] sm:$0xff]
    %v4014 = vld [vmem:[%s3892 + $0x3c8] sm:$0xff]
    %v4015 = vld [vmem:[%s3892 + $0x3d0] sm:$0xff]
    %v4016 = vld [vmem:[%s3892 + $0x3d8] sm:$0xff]
    %v4017 = vld [vmem:[%s3892 + $0x3e0] sm:$0xff]
    %v4018 = vld [vmem:[%s3892 + $0x3e8] sm:$0xff]
    %v4019 = vld [vmem:[%s3892 + $0x3f0] sm:$0xff]
    %v4020 = vld [vmem:[%s3892 + $0x3f8] sm:$0xff]
    %v4149 = vunpack.c.l.b16 %v3893
    %v4150 = vunpack.c.h.b16 %v3893
    %v4151 = vunpack.c.l.b16 %v3894
    %v4152 = vunpack.c.h.b16 %v3894
    %v4153 = vunpack.c.l.b16 %v3895
    %v4154 = vunpack.c.h.b16 %v3895
    %v4155 = vunpack.c.l.b16 %v3896
    %v4156 = vunpack.c.h.b16 %v3896
    %v4157 = vunpack.c.l.b16 %v3897
    %v4158 = vunpack.c.h.b16 %v3897
    %v4159 = vunpack.c.l.b16 %v3898
    %v4160 = vunpack.c.h.b16 %v3898
    %v4161 = vunpack.c.l.b16 %v3899
    %v4162 = vunpack.c.h.b16 %v3899
    %v4163 = vunpack.c.l.b16 %v3900
    %v4164 = vunpack.c.h.b16 %v3900
    %v4165 = vunpack.c.l.b16 %v3901
    %v4166 = vunpack.c.h.b16 %v3901
    %v4167 = vunpack.c.l.b16 %v3902
    %v4168 = vunpack.c.h.b16 %v3902
    %v4169 = vunpack.c.l.b16 %v3903
    %v4170 = vunpack.c.h.b16 %v3903
    %v4171 = vunpack.c.l.b16 %v3904
    %v4172 = vunpack.c.h.b16 %v3904
    %v4173 = vunpack.c.l.b16 %v3905
    %v4174 = vunpack.c.h.b16 %v3905
    %v4175 = vunpack.c.l.b16 %v3906
    %v4176 = vunpack.c.h.b16 %v3906
    %v4177 = vunpack.c.l.b16 %v3907
    %v4178 = vunpack.c.h.b16 %v3907
    %v4179 = vunpack.c.l.b16 %v3908
    %v4180 = vunpack.c.h.b16 %v3908
    %v4181 = vunpack.c.l.b16 %v3909
    %v4182 = vunpack.c.h.b16 %v3909
    %v4183 = vunpack.c.l.b16 %v3910
    %v4184 = vunpack.c.h.b16 %v3910
    %v4185 = vunpack.c.l.b16 %v3911
    %v4186 = vunpack.c.h.b16 %v3911
    %v4187 = vunpack.c.l.b16 %v3912
    %v4188 = vunpack.c.h.b16 %v3912
    %v4189 = vunpack.c.l.b16 %v3913
    %v4190 = vunpack.c.h.b16 %v3913
    %v4191 = vunpack.c.l.b16 %v3914
    %v4192 = vunpack.c.h.b16 %v3914
    %v4193 = vunpack.c.l.b16 %v3915
    %v4194 = vunpack.c.h.b16 %v3915
    %v4195 = vunpack.c.l.b16 %v3916
    %v4196 = vunpack.c.h.b16 %v3916
    %v4197 = vunpack.c.l.b16 %v3917
    %v4198 = vunpack.c.h.b16 %v3917
    %v4199 = vunpack.c.l.b16 %v3918
    %v4200 = vunpack.c.h.b16 %v3918
    %v4201 = vunpack.c.l.b16 %v3919
    %v4202 = vunpack.c.h.b16 %v3919
    %v4203 = vunpack.c.l.b16 %v3920
    %v4204 = vunpack.c.h.b16 %v3920
    %v4205 = vunpack.c.l.b16 %v3921
    %v4206 = vunpack.c.h.b16 %v3921
    %v4207 = vunpack.c.l.b16 %v3922
    %v4208 = vunpack.c.h.b16 %v3922
    %v4209 = vunpack.c.l.b16 %v3923
    %v4210 = vunpack.c.h.b16 %v3923
    %v4211 = vunpack.c.l.b16 %v3924
    %v4212 = vunpack.c.h.b16 %v3924
    %v4213 = vunpack.c.l.b16 %v3925
    %v4214 = vunpack.c.h.b16 %v3925
    %v4215 = vunpack.c.l.b16 %v3926
    %v4216 = vunpack.c.h.b16 %v3926
    %v4217 = vunpack.c.l.b16 %v3927
    %v4218 = vunpack.c.h.b16 %v3927
    %v4219 = vunpack.c.l.b16 %v3928
    %v4220 = vunpack.c.h.b16 %v3928
    %v4221 = vunpack.c.l.b16 %v3929
    %v4222 = vunpack.c.h.b16 %v3929
    %v4223 = vunpack.c.l.b16 %v3930
    %v4224 = vunpack.c.h.b16 %v3930
    %v4225 = vunpack.c.l.b16 %v3931
    %v4226 = vunpack.c.h.b16 %v3931
    %v4227 = vunpack.c.l.b16 %v3932
    %v4228 = vunpack.c.h.b16 %v3932
    %v4229 = vunpack.c.l.b16 %v3933
    %v4230 = vunpack.c.h.b16 %v3933
    %v4231 = vunpack.c.l.b16 %v3934
    %v4232 = vunpack.c.h.b16 %v3934
    %v4233 = vunpack.c.l.b16 %v3935
    %v4234 = vunpack.c.h.b16 %v3935
    %v4235 = vunpack.c.l.b16 %v3936
    %v4236 = vunpack.c.h.b16 %v3936
    %v4237 = vunpack.c.l.b16 %v3937
    %v4238 = vunpack.c.h.b16 %v3937
    %v4239 = vunpack.c.l.b16 %v3938
    %v4240 = vunpack.c.h.b16 %v3938
    %v4241 = vunpack.c.l.b16 %v3939
    %v4242 = vunpack.c.h.b16 %v3939
    %v4243 = vunpack.c.l.b16 %v3940
    %v4244 = vunpack.c.h.b16 %v3940
    %v4245 = vunpack.c.l.b16 %v3941
    %v4246 = vunpack.c.h.b16 %v3941
    %v4247 = vunpack.c.l.b16 %v3942
    %v4248 = vunpack.c.h.b16 %v3942
    %v4249 = vunpack.c.l.b16 %v3943
    %v4250 = vunpack.c.h.b16 %v3943
    %v4251 = vunpack.c.l.b16 %v3944
    %v4252 = vunpack.c.h.b16 %v3944
    %v4253 = vunpack.c.l.b16 %v3945
    %v4254 = vunpack.c.h.b16 %v3945
    %v4255 = vunpack.c.l.b16 %v3946
    %v4256 = vunpack.c.h.b16 %v3946
    %v4257 = vunpack.c.l.b16 %v3947
    %v4258 = vunpack.c.h.b16 %v3947
    %v4259 = vunpack.c.l.b16 %v3948
    %v4260 = vunpack.c.h.b16 %v3948
    %v4261 = vunpack.c.l.b16 %v3949
    %v4262 = vunpack.c.h.b16 %v3949
    %v4263 = vunpack.c.l.b16 %v3950
    %v4264 = vunpack.c.h.b16 %v3950
    %v4265 = vunpack.c.l.b16 %v3951
    %v4266 = vunpack.c.h.b16 %v3951
    %v4267 = vunpack.c.l.b16 %v3952
    %v4268 = vunpack.c.h.b16 %v3952
    %v4269 = vunpack.c.l.b16 %v3953
    %v4270 = vunpack.c.h.b16 %v3953
    %v4271 = vunpack.c.l.b16 %v3954
    %v4272 = vunpack.c.h.b16 %v3954
    %v4273 = vunpack.c.l.b16 %v3955
    %v4274 = vunpack.c.h.b16 %v3955
    %v4275 = vunpack.c.l.b16 %v3956
    %v4276 = vunpack.c.h.b16 %v3956
    %v4277 = vunpack.c.l.b16 %v3957
    %v4278 = vunpack.c.h.b16 %v3957
    %v4279 = vunpack.c.l.b16 %v3958
    %v4280 = vunpack.c.h.b16 %v3958
    %v4281 = vunpack.c.l.b16 %v3959
    %v4282 = vunpack.c.h.b16 %v3959
    %v4283 = vunpack.c.l.b16 %v3960
    %v4284 = vunpack.c.h.b16 %v3960
    %v4285 = vunpack.c.l.b16 %v3961
    %v4286 = vunpack.c.h.b16 %v3961
    %v4287 = vunpack.c.l.b16 %v3962
    %v4288 = vunpack.c.h.b16 %v3962
    %v4289 = vunpack.c.l.b16 %v3963
    %v4290 = vunpack.c.h.b16 %v3963
    %v4291 = vunpack.c.l.b16 %v3964
    %v4292 = vunpack.c.h.b16 %v3964
    %v4293 = vunpack.c.l.b16 %v3965
    %v4294 = vunpack.c.h.b16 %v3965
    %v4295 = vunpack.c.l.b16 %v3966
    %v4296 = vunpack.c.h.b16 %v3966
    %v4297 = vunpack.c.l.b16 %v3967
    %v4298 = vunpack.c.h.b16 %v3967
    %v4299 = vunpack.c.l.b16 %v3968
    %v4300 = vunpack.c.h.b16 %v3968
    %v4301 = vunpack.c.l.b16 %v3969
    %v4302 = vunpack.c.h.b16 %v3969
    %v4303 = vunpack.c.l.b16 %v3970
    %v4304 = vunpack.c.h.b16 %v3970
    %v4305 = vunpack.c.l.b16 %v3971
    %v4306 = vunpack.c.h.b16 %v3971
    %v4307 = vunpack.c.l.b16 %v3972
    %v4308 = vunpack.c.h.b16 %v3972
    %v4309 = vunpack.c.l.b16 %v3973
    %v4310 = vunpack.c.h.b16 %v3973
    %v4311 = vunpack.c.l.b16 %v3974
    %v4312 = vunpack.c.h.b16 %v3974
    %v4313 = vunpack.c.l.b16 %v3975
    %v4314 = vunpack.c.h.b16 %v3975
    %v4315 = vunpack.c.l.b16 %v3976
    %v4316 = vunpack.c.h.b16 %v3976
    %v4317 = vunpack.c.l.b16 %v3977
    %v4318 = vunpack.c.h.b16 %v3977
    %v4319 = vunpack.c.l.b16 %v3978
    %v4320 = vunpack.c.h.b16 %v3978
    %v4321 = vunpack.c.l.b16 %v3979
    %v4322 = vunpack.c.h.b16 %v3979
    %v4323 = vunpack.c.l.b16 %v3980
    %v4324 = vunpack.c.h.b16 %v3980
    %v4325 = vunpack.c.l.b16 %v3981
    %v4326 = vunpack.c.h.b16 %v3981
    %v4327 = vunpack.c.l.b16 %v3982
    %v4328 = vunpack.c.h.b16 %v3982
    %v4329 = vunpack.c.l.b16 %v3983
    %v4330 = vunpack.c.h.b16 %v3983
    %v4331 = vunpack.c.l.b16 %v3984
    %v4332 = vunpack.c.h.b16 %v3984
    %v4333 = vunpack.c.l.b16 %v3985
    %v4334 = vunpack.c.h.b16 %v3985
    %v4335 = vunpack.c.l.b16 %v3986
    %v4336 = vunpack.c.h.b16 %v3986
    %v4337 = vunpack.c.l.b16 %v3987
    %v4338 = vunpack.c.h.b16 %v3987
    %v4339 = vunpack.c.l.b16 %v3988
    %v4340 = vunpack.c.h.b16 %v3988
    %v4341 = vunpack.c.l.b16 %v3989
    %v4342 = vunpack.c.h.b16 %v3989
    %v4343 = vunpack.c.l.b16 %v3990
    %v4344 = vunpack.c.h.b16 %v3990
    %v4345 = vunpack.c.l.b16 %v3991
    %v4346 = vunpack.c.h.b16 %v3991
    %v4347 = vunpack.c.l.b16 %v3992
    %v4348 = vunpack.c.h.b16 %v3992
    %v4349 = vunpack.c.l.b16 %v3993
    %v4350 = vunpack.c.h.b16 %v3993
    %v4351 = vunpack.c.l.b16 %v3994
    %v4352 = vunpack.c.h.b16 %v3994
    %v4353 = vunpack.c.l.b16 %v3995
    %v4354 = vunpack.c.h.b16 %v3995
    %v4355 = vunpack.c.l.b16 %v3996
    %v4356 = vunpack.c.h.b16 %v3996
    %v4357 = vunpack.c.l.b16 %v3997
    %v4358 = vunpack.c.h.b16 %v3997
    %v4359 = vunpack.c.l.b16 %v3998
    %v4360 = vunpack.c.h.b16 %v3998
    %v4361 = vunpack.c.l.b16 %v3999
    %v4362 = vunpack.c.h.b16 %v3999
    %v4363 = vunpack.c.l.b16 %v4000
    %v4364 = vunpack.c.h.b16 %v4000
    %v4365 = vunpack.c.l.b16 %v4001
    %v4366 = vunpack.c.h.b16 %v4001
    %v4367 = vunpack.c.l.b16 %v4002
    %v4368 = vunpack.c.h.b16 %v4002
    %v4369 = vunpack.c.l.b16 %v4003
    %v4370 = vunpack.c.h.b16 %v4003
    %v4371 = vunpack.c.l.b16 %v4004
    %v4372 = vunpack.c.h.b16 %v4004
    %v4373 = vunpack.c.l.b16 %v4005
    %v4374 = vunpack.c.h.b16 %v4005
    %v4375 = vunpack.c.l.b16 %v4006
    %v4376 = vunpack.c.h.b16 %v4006
    %v4377 = vunpack.c.l.b16 %v4007
    %v4378 = vunpack.c.h.b16 %v4007
    %v4379 = vunpack.c.l.b16 %v4008
    %v4380 = vunpack.c.h.b16 %v4008
    %v4381 = vunpack.c.l.b16 %v4009
    %v4382 = vunpack.c.h.b16 %v4009
    %v4383 = vunpack.c.l.b16 %v4010
    %v4384 = vunpack.c.h.b16 %v4010
    %v4385 = vunpack.c.l.b16 %v4011
    %v4386 = vunpack.c.h.b16 %v4011
    %v4387 = vunpack.c.l.b16 %v4012
    %v4388 = vunpack.c.h.b16 %v4012
    %v4389 = vunpack.c.l.b16 %v4013
    %v4390 = vunpack.c.h.b16 %v4013
    %v4391 = vunpack.c.l.b16 %v4014
    %v4392 = vunpack.c.h.b16 %v4014
    %v4393 = vunpack.c.l.b16 %v4015
    %v4394 = vunpack.c.h.b16 %v4015
    %v4395 = vunpack.c.l.b16 %v4016
    %v4396 = vunpack.c.h.b16 %v4016
    %v4397 = vunpack.c.l.b16 %v4017
    %v4398 = vunpack.c.h.b16 %v4017
    %v4399 = vunpack.c.l.b16 %v4018
    %v4400 = vunpack.c.h.b16 %v4018
    %v4401 = vunpack.c.l.b16 %v4019
    %v4402 = vunpack.c.h.b16 %v4019
    %v4403 = vunpack.c.l.b16 %v4020
    %v4404 = vunpack.c.h.b16 %v4020
    %v4405 = vpack.c.b16 %v4153, %v4149
    %v4406 = vpack.c.b16 %v4154, %v4150
    %v4407 = vpack.c.b16 %v4155, %v4151
    %v4408 = vpack.c.b16 %v4156, %v4152
    %v4409 = vpack.c.b16 %v4161, %v4157
    %v4410 = vpack.c.b16 %v4162, %v4158
    %v4411 = vpack.c.b16 %v4163, %v4159
    %v4412 = vpack.c.b16 %v4164, %v4160
    %v4413 = vpack.c.b16 %v4169, %v4165
    %v4414 = vpack.c.b16 %v4170, %v4166
    %v4415 = vpack.c.b16 %v4171, %v4167
    %v4416 = vpack.c.b16 %v4172, %v4168
    %v4417 = vpack.c.b16 %v4177, %v4173
    %v4418 = vpack.c.b16 %v4178, %v4174
    %v4419 = vpack.c.b16 %v4179, %v4175
    %v4420 = vpack.c.b16 %v4180, %v4176
    %v4421 = vpack.c.b16 %v4185, %v4181
    %v4422 = vpack.c.b16 %v4186, %v4182
    %v4423 = vpack.c.b16 %v4187, %v4183
    %v4424 = vpack.c.b16 %v4188, %v4184
    %v4425 = vpack.c.b16 %v4193, %v4189
    %v4426 = vpack.c.b16 %v4194, %v4190
    %v4427 = vpack.c.b16 %v4195, %v4191
    %v4428 = vpack.c.b16 %v4196, %v4192
    %v4429 = vpack.c.b16 %v4201, %v4197
    %v4430 = vpack.c.b16 %v4202, %v4198
    %v4431 = vpack.c.b16 %v4203, %v4199
    %v4432 = vpack.c.b16 %v4204, %v4200
    %v4433 = vpack.c.b16 %v4209, %v4205
    %v4434 = vpack.c.b16 %v4210, %v4206
    %v4435 = vpack.c.b16 %v4211, %v4207
    %v4436 = vpack.c.b16 %v4212, %v4208
    %v4437 = vpack.c.b16 %v4217, %v4213
    %v4438 = vpack.c.b16 %v4218, %v4214
    %v4439 = vpack.c.b16 %v4219, %v4215
    %v4440 = vpack.c.b16 %v4220, %v4216
    %v4441 = vpack.c.b16 %v4225, %v4221
    %v4442 = vpack.c.b16 %v4226, %v4222
    %v4443 = vpack.c.b16 %v4227, %v4223
    %v4444 = vpack.c.b16 %v4228, %v4224
    %v4445 = vpack.c.b16 %v4233, %v4229
    %v4446 = vpack.c.b16 %v4234, %v4230
    %v4447 = vpack.c.b16 %v4235, %v4231
    %v4448 = vpack.c.b16 %v4236, %v4232
    %v4449 = vpack.c.b16 %v4241, %v4237
    %v4450 = vpack.c.b16 %v4242, %v4238
    %v4451 = vpack.c.b16 %v4243, %v4239
    %v4452 = vpack.c.b16 %v4244, %v4240
    %v4453 = vpack.c.b16 %v4249, %v4245
    %v4454 = vpack.c.b16 %v4250, %v4246
    %v4455 = vpack.c.b16 %v4251, %v4247
    %v4456 = vpack.c.b16 %v4252, %v4248
    %v4457 = vpack.c.b16 %v4257, %v4253
    %v4458 = vpack.c.b16 %v4258, %v4254
    %v4459 = vpack.c.b16 %v4259, %v4255
    %v4460 = vpack.c.b16 %v4260, %v4256
    %v4461 = vpack.c.b16 %v4265, %v4261
    %v4462 = vpack.c.b16 %v4266, %v4262
    %v4463 = vpack.c.b16 %v4267, %v4263
    %v4464 = vpack.c.b16 %v4268, %v4264
    %v4465 = vpack.c.b16 %v4273, %v4269
    %v4466 = vpack.c.b16 %v4274, %v4270
    %v4467 = vpack.c.b16 %v4275, %v4271
    %v4468 = vpack.c.b16 %v4276, %v4272
    %v4469 = vpack.c.b16 %v4281, %v4277
    %v4470 = vpack.c.b16 %v4282, %v4278
    %v4471 = vpack.c.b16 %v4283, %v4279
    %v4472 = vpack.c.b16 %v4284, %v4280
    %v4473 = vpack.c.b16 %v4289, %v4285
    %v4474 = vpack.c.b16 %v4290, %v4286
    %v4475 = vpack.c.b16 %v4291, %v4287
    %v4476 = vpack.c.b16 %v4292, %v4288
    %v4477 = vpack.c.b16 %v4297, %v4293
    %v4478 = vpack.c.b16 %v4298, %v4294
    %v4479 = vpack.c.b16 %v4299, %v4295
    %v4480 = vpack.c.b16 %v4300, %v4296
    %v4481 = vpack.c.b16 %v4305, %v4301
    %v4482 = vpack.c.b16 %v4306, %v4302
    %v4483 = vpack.c.b16 %v4307, %v4303
    %v4484 = vpack.c.b16 %v4308, %v4304
    %v4485 = vpack.c.b16 %v4313, %v4309
    %v4486 = vpack.c.b16 %v4314, %v4310
    %v4487 = vpack.c.b16 %v4315, %v4311
    %v4488 = vpack.c.b16 %v4316, %v4312
    %v4489 = vpack.c.b16 %v4321, %v4317
    %v4490 = vpack.c.b16 %v4322, %v4318
    %v4491 = vpack.c.b16 %v4323, %v4319
    %v4492 = vpack.c.b16 %v4324, %v4320
    %v4493 = vpack.c.b16 %v4329, %v4325
    %v4494 = vpack.c.b16 %v4330, %v4326
    %v4495 = vpack.c.b16 %v4331, %v4327
    %v4496 = vpack.c.b16 %v4332, %v4328
    %v4497 = vpack.c.b16 %v4337, %v4333
    %v4498 = vpack.c.b16 %v4338, %v4334
    %v4499 = vpack.c.b16 %v4339, %v4335
    %v4500 = vpack.c.b16 %v4340, %v4336
    %v4501 = vpack.c.b16 %v4345, %v4341
    %v4502 = vpack.c.b16 %v4346, %v4342
    %v4503 = vpack.c.b16 %v4347, %v4343
    %v4504 = vpack.c.b16 %v4348, %v4344
    %v4505 = vpack.c.b16 %v4353, %v4349
    %v4506 = vpack.c.b16 %v4354, %v4350
    %v4507 = vpack.c.b16 %v4355, %v4351
    %v4508 = vpack.c.b16 %v4356, %v4352
    %v4509 = vpack.c.b16 %v4361, %v4357
    %v4510 = vpack.c.b16 %v4362, %v4358
    %v4511 = vpack.c.b16 %v4363, %v4359
    %v4512 = vpack.c.b16 %v4364, %v4360
    %v4513 = vpack.c.b16 %v4369, %v4365
    %v4514 = vpack.c.b16 %v4370, %v4366
    %v4515 = vpack.c.b16 %v4371, %v4367
    %v4516 = vpack.c.b16 %v4372, %v4368
    %v4517 = vpack.c.b16 %v4377, %v4373
    %v4518 = vpack.c.b16 %v4378, %v4374
    %v4519 = vpack.c.b16 %v4379, %v4375
    %v4520 = vpack.c.b16 %v4380, %v4376
    %v4521 = vpack.c.b16 %v4385, %v4381
    %v4522 = vpack.c.b16 %v4386, %v4382
    %v4523 = vpack.c.b16 %v4387, %v4383
    %v4524 = vpack.c.b16 %v4388, %v4384
    %v4525 = vpack.c.b16 %v4393, %v4389
    %v4526 = vpack.c.b16 %v4394, %v4390
    %v4527 = vpack.c.b16 %v4395, %v4391
    %v4528 = vpack.c.b16 %v4396, %v4392
    %v4529 = vpack.c.b16 %v4401, %v4397
    %v4530 = vpack.c.b16 %v4402, %v4398
    %v4531 = vpack.c.b16 %v4403, %v4399
    %v4532 = vpack.c.b16 %v4404, %v4400
    %4661 = vmatprep.subr.bf16.mxu0 %v4406
    %4662 = vmatpush1.bf16.msra.mxu0 %v4405
    %4663 = vmatprep.subr.bf16.mxu0 %v4410
    %4664 = vmatpush1.bf16.msra.mxu0 %v4409
    %4665 = vmatprep.subr.bf16.mxu0 %v4414
    %4666 = vmatpush1.bf16.msra.mxu0 %v4413
    %4667 = vmatprep.subr.bf16.mxu0 %v4418
    %4668 = vmatpush1.bf16.msra.mxu0 %v4417
    %4669 = vmatprep.subr.bf16.mxu0 %v4422
    %4670 = vmatpush1.bf16.msra.mxu0 %v4421
    %4671 = vmatprep.subr.bf16.mxu0 %v4426
    %4672 = vmatpush1.bf16.msra.mxu0 %v4425
    %4673 = vmatprep.subr.bf16.mxu0 %v4430
    %4674 = vmatpush1.bf16.msra.mxu0 %v4429
    %4675 = vmatprep.subr.bf16.mxu0 %v4434
    %4676 = vmatpush1.bf16.msra.mxu0 %v4433
    %4677 = vmatprep.subr.bf16.mxu0 %v4438
    %4678 = vmatpush1.bf16.msra.mxu0 %v4437
    %4679 = vmatprep.subr.bf16.mxu0 %v4442
    %4680 = vmatpush1.bf16.msra.mxu0 %v4441
    %4681 = vmatprep.subr.bf16.mxu0 %v4446
    %4682 = vmatpush1.bf16.msra.mxu0 %v4445
    %4683 = vmatprep.subr.bf16.mxu0 %v4450
    %4684 = vmatpush1.bf16.msra.mxu0 %v4449
    %4685 = vmatprep.subr.bf16.mxu0 %v4454
    %4686 = vmatpush1.bf16.msra.mxu0 %v4453
    %4687 = vmatprep.subr.bf16.mxu0 %v4458
    %4688 = vmatpush1.bf16.msra.mxu0 %v4457
    %4689 = vmatprep.subr.bf16.mxu0 %v4462
    %4690 = vmatpush1.bf16.msra.mxu0 %v4461
    %4691 = vmatprep.subr.bf16.mxu0 %v4466
    %4692 = vmatpush1.bf16.msra.mxu0 %v4465
    %4693 = vmatprep.mubr.bf16.mxu0 %v3885
    %4694 = vmatmul.mubr.bf16.gmra.mrb[0].mxu0 %v3884
    %v4695 = vpop.f32.mrb[0].mxu0
    %v4696 = vadd.f32 0.0, %v4695
    %v4697 = vpop.f32.mrb[0].mxu0
    %v4698 = vadd.f32 0.0, %v4697
    %v4699 = vpop.f32.mrb[0].mxu0
    %v4700 = vadd.f32 0.0, %v4699
    %v4701 = vpop.f32.mrb[0].mxu0
    %v4702 = vadd.f32 0.0, %v4701
    %4703 = vmatprep.mubr.bf16.mxu0 %v3889
    %4704 = vmatmul.mubr.bf16.gmra.mrb[0].mxu0 %v3888
    %v4705 = vpop.f32.mrb[0].mxu0
    %v4706 = vadd.f32 0.0, %v4705
    %v4707 = vpop.f32.mrb[0].mxu0
    %v4708 = vadd.f32 0.0, %v4707
    %v4709 = vpop.f32.mrb[0].mxu0
    %v4710 = vadd.f32 0.0, %v4709
    %v4711 = vpop.f32.mrb[0].mxu0
    %v4712 = vadd.f32 0.0, %v4711
    %4713 = vdwg.mxu0
    %4714 = vmatprep.subr.bf16.mxu0 %v4470
    %4715 = vmatpush1.bf16.msra.mxu0 %v4469
    %4716 = vmatprep.subr.bf16.mxu0 %v4474
    %4717 = vmatpush1.bf16.msra.mxu0 %v4473
    %4718 = vmatprep.subr.bf16.mxu0 %v4478
    %4719 = vmatpush1.bf16.msra.mxu0 %v4477
    %4720 = vmatprep.subr.bf16.mxu0 %v4482
    %4721 = vmatpush1.bf16.msra.mxu0 %v4481
    %4722 = vmatprep.subr.bf16.mxu0 %v4486
    %4723 = vmatpush1.bf16.msra.mxu0 %v4485
    %4724 = vmatprep.subr.bf16.mxu0 %v4490
    %4725 = vmatpush1.bf16.msra.mxu0 %v4489
    %4726 = vmatprep.subr.bf16.mxu0 %v4494
    %4727 = vmatpush1.bf16.msra.mxu0 %v4493
    %4728 = vmatprep.subr.bf16.mxu0 %v4498
    %4729 = vmatpush1.bf16.msra.mxu0 %v4497
    %4730 = vmatprep.subr.bf16.mxu0 %v4502
    %4731 = vmatpush1.bf16.msra.mxu0 %v4501
    %4732 = vmatprep.subr.bf16.mxu0 %v4506
    %4733 = vmatpush1.bf16.msra.mxu0 %v4505
    %4734 = vmatprep.subr.bf16.mxu0 %v4510
    %4735 = vmatpush1.bf16.msra.mxu0 %v4509
    %4736 = vmatprep.subr.bf16.mxu0 %v4514
    %4737 = vmatpush1.bf16.msra.mxu0 %v4513
    %4738 = vmatprep.subr.bf16.mxu0 %v4518
    %4739 = vmatpush1.bf16.msra.mxu0 %v4517
    %4740 = vmatprep.subr.bf16.mxu0 %v4522
    %4741 = vmatpush1.bf16.msra.mxu0 %v4521
    %4742 = vmatprep.subr.bf16.mxu0 %v4526
    %4743 = vmatpush1.bf16.msra.mxu0 %v4525
    %4744 = vmatprep.subr.bf16.mxu0 %v4530
    %4745 = vmatpush1.bf16.msra.mxu0 %v4529
    %4746 = vmatprep.mubr.bf16.mxu0 %v3887
    %4747 = vmatmul.mubr.bf16.gmra.mrb[0].mxu0 %v3886
    %v4748 = vpop.f32.mrb[0].mxu0
    %v4749 = vadd.f32 %v4696, %v4748
    %v4750 = vpop.f32.mrb[0].mxu0
    %v4751 = vadd.f32 %v4698, %v4750
    %v4752 = vpop.f32.mrb[0].mxu0
    %v4753 = vadd.f32 %v4700, %v4752
    %v4754 = vpop.f32.mrb[0].mxu0
    %v4755 = vadd.f32 %v4702, %v4754
    %4756 = vmatprep.mubr.bf16.mxu0 %v3891
    %4757 = vmatmul.mubr.bf16.gmra.mrb[0].mxu0 %v3890
    %v4758 = vpop.f32.mrb[0].mxu0
    %v4759 = vadd.f32 %v4706, %v4758
    %v4760 = vpop.f32.mrb[0].mxu0
    %v4761 = vadd.f32 %v4708, %v4760
    %v4762 = vpop.f32.mrb[0].mxu0
    %v4763 = vadd.f32 %v4710, %v4762
    %v4764 = vpop.f32.mrb[0].mxu0
    %v4765 = vadd.f32 %v4712, %v4764
    %4766 = vdwg.mxu0
    %4767 = vmatprep.subr.bf16.mxu0 %v4408
    %4768 = vmatpush1.bf16.msra.mxu0 %v4407
    %4769 = vmatprep.subr.bf16.mxu0 %v4412
    %4770 = vmatpush1.bf16.msra.mxu0 %v4411
    %4771 = vmatprep.subr.bf16.mxu0 %v4416
    %4772 = vmatpush1.bf16.msra.mxu0 %v4415
    %4773 = vmatprep.subr.bf16.mxu0 %v4420
    %4774 = vmatpush1.bf16.msra.mxu0 %v4419
    %4775 = vmatprep.subr.bf16.mxu0 %v4424
    %4776 = vmatpush1.bf16.msra.mxu0 %v4423
    %4777 = vmatprep.subr.bf16.mxu0 %v4428
    %4778 = vmatpush1.bf16.msra.mxu0 %v4427
    %4779 = vmatprep.subr.bf16.mxu0 %v4432
    %4780 = vmatpush1.bf16.msra.mxu0 %v4431
    %4781 = vmatprep.subr.bf16.mxu0 %v4436
    %4782 = vmatpush1.bf16.msra.mxu0 %v4435
    %4783 = vmatprep.subr.bf16.mxu0 %v4440
    %4784 = vmatpush1.bf16.msra.mxu0 %v4439
    %4785 = vmatprep.subr.bf16.mxu0 %v4444
    %4786 = vmatpush1.bf16.msra.mxu0 %v4443
    %4787 = vmatprep.subr.bf16.mxu0 %v4448
    %4788 = vmatpush1.bf16.msra.mxu0 %v4447
    %4789 = vmatprep.subr.bf16.mxu0 %v4452
    %4790 = vmatpush1.bf16.msra.mxu0 %v4451
    %4791 = vmatprep.subr.bf16.mxu0 %v4456
    %4792 = vmatpush1.bf16.msra.mxu0 %v4455
    %4793 = vmatprep.subr.bf16.mxu0 %v4460
    %4794 = vmatpush1.bf16.msra.mxu0 %v4459
    %4795 = vmatprep.subr.bf16.mxu0 %v4464
    %4796 = vmatpush1.bf16.msra.mxu0 %v4463
    %4797 = vmatprep.subr.bf16.mxu0 %v4468
    %4798 = vmatpush1.bf16.msra.mxu0 %v4467
    %4799 = vmatprep.mubr.bf16.mxu0 %v3885
    %4800 = vmatmul.mubr.bf16.gmra.mrb[0].mxu0 %v3884
    %v4801 = vpop.f32.mrb[0].mxu0
    %v4802 = vadd.f32 0.0, %v4801
    %v4803 = vpop.f32.mrb[0].mxu0
    %v4804 = vadd.f32 0.0, %v4803
    %v4805 = vpop.f32.mrb[0].mxu0
    %v4806 = vadd.f32 0.0, %v4805
    %v4807 = vpop.f32.mrb[0].mxu0
    %v4808 = vadd.f32 0.0, %v4807
    %4809 = vmatprep.mubr.bf16.mxu0 %v3889
    %4810 = vmatmul.mubr.bf16.gmra.mrb[0].mxu0 %v3888
    %v4811 = vpop.f32.mrb[0].mxu0
    %v4812 = vadd.f32 0.0, %v4811
    %v4813 = vpop.f32.mrb[0].mxu0
    %v4814 = vadd.f32 0.0, %v4813
    %v4815 = vpop.f32.mrb[0].mxu0
    %v4816 = vadd.f32 0.0, %v4815
    %v4817 = vpop.f32.mrb[0].mxu0
    %v4818 = vadd.f32 0.0, %v4817
    %4819 = vdwg.mxu0
    %4820 = vmatprep.subr.bf16.mxu0 %v4472
    %4821 = vmatpush1.bf16.msra.mxu0 %v4471
    %4822 = vmatprep.subr.bf16.mxu0 %v4476
    %4823 = vmatpush1.bf16.msra.mxu0 %v4475
    %4824 = vmatprep.subr.bf16.mxu0 %v4480
    %4825 = vmatpush1.bf16.msra.mxu0 %v4479
    %4826 = vmatprep.subr.bf16.mxu0 %v4484
    %4827 = vmatpush1.bf16.msra.mxu0 %v4483
    %4828 = vmatprep.subr.bf16.mxu0 %v4488
    %4829 = vmatpush1.bf16.msra.mxu0 %v4487
    %4830 = vmatprep.subr.bf16.mxu0 %v4492
    %4831 = vmatpush1.bf16.msra.mxu0 %v4491
    %4832 = vmatprep.subr.bf16.mxu0 %v4496
    %4833 = vmatpush1.bf16.msra.mxu0 %v4495
    %4834 = vmatprep.subr.bf16.mxu0 %v4500
    %4835 = vmatpush1.bf16.msra.mxu0 %v4499
    %4836 = vmatprep.subr.bf16.mxu0 %v4504
    %4837 = vmatpush1.bf16.msra.mxu0 %v4503
    %4838 = vmatprep.subr.bf16.mxu0 %v4508
    %4839 = vmatpush1.bf16.msra.mxu0 %v4507
    %4840 = vmatprep.subr.bf16.mxu0 %v4512
    %4841 = vmatpush1.bf16.msra.mxu0 %v4511
    %4842 = vmatprep.subr.bf16.mxu0 %v4516
    %4843 = vmatpush1.bf16.msra.mxu0 %v4515
    %4844 = vmatprep.subr.bf16.mxu0 %v4520
    %4845 = vmatpush1.bf16.msra.mxu0 %v4519
    %4846 = vmatprep.subr.bf16.mxu0 %v4524
    %4847 = vmatpush1.bf16.msra.mxu0 %v4523
    %4848 = vmatprep.subr.bf16.mxu0 %v4528
    %4849 = vmatpush1.bf16.msra.mxu0 %v4527
    %4850 = vmatprep.subr.bf16.mxu0 %v4532
    %4851 = vmatpush1.bf16.msra.mxu0 %v4531
    %4852 = vmatprep.mubr.bf16.mxu0 %v3887
    %4853 = vmatmul.mubr.bf16.gmra.mrb[0].mxu0 %v3886
    %v4854 = vpop.f32.mrb[0].mxu0
    %v4855 = vadd.f32 %v4802, %v4854
    %v4856 = vpop.f32.mrb[0].mxu0
    %v4857 = vadd.f32 %v4804, %v4856
    %v4858 = vpop.f32.mrb[0].mxu0
    %v4859 = vadd.f32 %v4806, %v4858
    %v4860 = vpop.f32.mrb[0].mxu0
    %v4861 = vadd.f32 %v4808, %v4860
    %4862 = vmatprep.mubr.bf16.mxu0 %v3891
    %4863 = vmatmul.mubr.bf16.gmra.mrb[0].mxu0 %v3890
    %v4864 = vpop.f32.mrb[0].mxu0
    %v4865 = vadd.f32 %v4812, %v4864
    %v4866 = vpop.f32.mrb[0].mxu0
    %v4867 = vadd.f32 %v4814, %v4866
    %v4868 = vpop.f32.mrb[0].mxu0
    %v4869 = vadd.f32 %v4816, %v4868
    %v4870 = vpop.f32.mrb[0].mxu0
    %v4871 = vadd.f32 %v4818, %v4870
    %4872 = vdwg.mxu0
    %v5001 = vunpack.c.l.b16 %v3756
    %v5002 = vunpack.c.h.b16 %v3756
    %v5003 = vunpack.c.l.b16 %v3757
    %v5004 = vunpack.c.h.b16 %v3757
    %v5005 = vunpack.c.l.b16 %v3758
    %v5006 = vunpack.c.h.b16 %v3758
    %v5007 = vunpack.c.l.b16 %v3759
    %v5008 = vunpack.c.h.b16 %v3759
    %v5009 = vunpack.c.l.b16 %v3760
    %v5010 = vunpack.c.h.b16 %v3760
    %v5011 = vunpack.c.l.b16 %v3761
    %v5012 = vunpack.c.h.b16 %v3761
    %v5013 = vunpack.c.l.b16 %v3762
    %v5014 = vunpack.c.h.b16 %v3762
    %v5015 = vunpack.c.l.b16 %v3763
    %v5016 = vunpack.c.h.b16 %v3763
    %v5017 = vunpack.c.l.b16 %v3764
    %v5018 = vunpack.c.h.b16 %v3764
    %v5019 = vunpack.c.l.b16 %v3765
    %v5020 = vunpack.c.h.b16 %v3765
    %v5021 = vunpack.c.l.b16 %v3766
    %v5022 = vunpack.c.h.b16 %v3766
    %v5023 = vunpack.c.l.b16 %v3767
    %v5024 = vunpack.c.h.b16 %v3767
    %v5025 = vunpack.c.l.b16 %v3768
    %v5026 = vunpack.c.h.b16 %v3768
    %v5027 = vunpack.c.l.b16 %v3769
    %v5028 = vunpack.c.h.b16 %v3769
    %v5029 = vunpack.c.l.b16 %v3770
    %v5030 = vunpack.c.h.b16 %v3770
    %v5031 = vunpack.c.l.b16 %v3771
    %v5032 = vunpack.c.h.b16 %v3771
    %v5033 = vunpack.c.l.b16 %v3772
    %v5034 = vunpack.c.h.b16 %v3772
    %v5035 = vunpack.c.l.b16 %v3773
    %v5036 = vunpack.c.h.b16 %v3773
    %v5037 = vunpack.c.l.b16 %v3774
    %v5038 = vunpack.c.h.b16 %v3774
    %v5039 = vunpack.c.l.b16 %v3775
    %v5040 = vunpack.c.h.b16 %v3775
    %v5041 = vunpack.c.l.b16 %v3776
    %v5042 = vunpack.c.h.b16 %v3776
    %v5043 = vunpack.c.l.b16 %v3777
    %v5044 = vunpack.c.h.b16 %v3777
    %v5045 = vunpack.c.l.b16 %v3778
    %v5046 = vunpack.c.h.b16 %v3778
    %v5047 = vunpack.c.l.b16 %v3779
    %v5048 = vunpack.c.h.b16 %v3779
    %v5049 = vunpack.c.l.b16 %v3780
    %v5050 = vunpack.c.h.b16 %v3780
    %v5051 = vunpack.c.l.b16 %v3781
    %v5052 = vunpack.c.h.b16 %v3781
    %v5053 = vunpack.c.l.b16 %v3782
    %v5054 = vunpack.c.h.b16 %v3782
    %v5055 = vunpack.c.l.b16 %v3783
    %v5056 = vunpack.c.h.b16 %v3783
    %v5057 = vunpack.c.l.b16 %v3784
    %v5058 = vunpack.c.h.b16 %v3784
    %v5059 = vunpack.c.l.b16 %v3785
    %v5060 = vunpack.c.h.b16 %v3785
    %v5061 = vunpack.c.l.b16 %v3786
    %v5062 = vunpack.c.h.b16 %v3786
    %v5063 = vunpack.c.l.b16 %v3787
    %v5064 = vunpack.c.h.b16 %v3787
    %v5065 = vunpack.c.l.b16 %v3788
    %v5066 = vunpack.c.h.b16 %v3788
    %v5067 = vunpack.c.l.b16 %v3789
    %v5068 = vunpack.c.h.b16 %v3789
    %v5069 = vunpack.c.l.b16 %v3790
    %v5070 = vunpack.c.h.b16 %v3790
    %v5071 = vunpack.c.l.b16 %v3791
    %v5072 = vunpack.c.h.b16 %v3791
    %v5073 = vunpack.c.l.b16 %v3792
    %v5074 = vunpack.c.h.b16 %v3792
    %v5075 = vunpack.c.l.b16 %v3793
    %v5076 = vunpack.c.h.b16 %v3793
    %v5077 = vunpack.c.l.b16 %v3794
    %v5078 = vunpack.c.h.b16 %v3794
    %v5079 = vunpack.c.l.b16 %v3795
    %v5080 = vunpack.c.h.b16 %v3795
    %v5081 = vunpack.c.l.b16 %v3796
    %v5082 = vunpack.c.h.b16 %v3796
    %v5083 = vunpack.c.l.b16 %v3797
    %v5084 = vunpack.c.h.b16 %v3797
    %v5085 = vunpack.c.l.b16 %v3798
    %v5086 = vunpack.c.h.b16 %v3798
    %v5087 = vunpack.c.l.b16 %v3799
    %v5088 = vunpack.c.h.b16 %v3799
    %v5089 = vunpack.c.l.b16 %v3800
    %v5090 = vunpack.c.h.b16 %v3800
    %v5091 = vunpack.c.l.b16 %v3801
    %v5092 = vunpack.c.h.b16 %v3801
    %v5093 = vunpack.c.l.b16 %v3802
    %v5094 = vunpack.c.h.b16 %v3802
    %v5095 = vunpack.c.l.b16 %v3803
    %v5096 = vunpack.c.h.b16 %v3803
    %v5097 = vunpack.c.l.b16 %v3804
    %v5098 = vunpack.c.h.b16 %v3804
    %v5099 = vunpack.c.l.b16 %v3805
    %v5100 = vunpack.c.h.b16 %v3805
    %v5101 = vunpack.c.l.b16 %v3806
    %v5102 = vunpack.c.h.b16 %v3806
    %v5103 = vunpack.c.l.b16 %v3807
    %v5104 = vunpack.c.h.b16 %v3807
    %v5105 = vunpack.c.l.b16 %v3808
    %v5106 = vunpack.c.h.b16 %v3808
    %v5107 = vunpack.c.l.b16 %v3809
    %v5108 = vunpack.c.h.b16 %v3809
    %v5109 = vunpack.c.l.b16 %v3810
    %v5110 = vunpack.c.h.b16 %v3810
    %v5111 = vunpack.c.l.b16 %v3811
    %v5112 = vunpack.c.h.b16 %v3811
    %v5113 = vunpack.c.l.b16 %v3812
    %v5114 = vunpack.c.h.b16 %v3812
    %v5115 = vunpack.c.l.b16 %v3813
    %v5116 = vunpack.c.h.b16 %v3813
    %v5117 = vunpack.c.l.b16 %v3814
    %v5118 = vunpack.c.h.b16 %v3814
    %v5119 = vunpack.c.l.b16 %v3815
    %v5120 = vunpack.c.h.b16 %v3815
    %v5121 = vunpack.c.l.b16 %v3816
    %v5122 = vunpack.c.h.b16 %v3816
    %v5123 = vunpack.c.l.b16 %v3817
    %v5124 = vunpack.c.h.b16 %v3817
    %v5125 = vunpack.c.l.b16 %v3818
    %v5126 = vunpack.c.h.b16 %v3818
    %v5127 = vunpack.c.l.b16 %v3819
    %v5128 = vunpack.c.h.b16 %v3819
    %v5129 = vunpack.c.l.b16 %v3820
    %v5130 = vunpack.c.h.b16 %v3820
    %v5131 = vunpack.c.l.b16 %v3821
    %v5132 = vunpack.c.h.b16 %v3821
    %v5133 = vunpack.c.l.b16 %v3822
    %v5134 = vunpack.c.h.b16 %v3822
    %v5135 = vunpack.c.l.b16 %v3823
    %v5136 = vunpack.c.h.b16 %v3823
    %v5137 = vunpack.c.l.b16 %v3824
    %v5138 = vunpack.c.h.b16 %v3824
    %v5139 = vunpack.c.l.b16 %v3825
    %v5140 = vunpack.c.h.b16 %v3825
    %v5141 = vunpack.c.l.b16 %v3826
    %v5142 = vunpack.c.h.b16 %v3826
    %v5143 = vunpack.c.l.b16 %v3827
    %v5144 = vunpack.c.h.b16 %v3827
    %v5145 = vunpack.c.l.b16 %v3828
    %v5146 = vunpack.c.h.b16 %v3828
    %v5147 = vunpack.c.l.b16 %v3829
    %v5148 = vunpack.c.h.b16 %v3829
    %v5149 = vunpack.c.l.b16 %v3830
    %v5150 = vunpack.c.h.b16 %v3830
    %v5151 = vunpack.c.l.b16 %v3831
    %v5152 = vunpack.c.h.b16 %v3831
    %v5153 = vunpack.c.l.b16 %v3832
    %v5154 = vunpack.c.h.b16 %v3832
    %v5155 = vunpack.c.l.b16 %v3833
    %v5156 = vunpack.c.h.b16 %v3833
    %v5157 = vunpack.c.l.b16 %v3834
    %v5158 = vunpack.c.h.b16 %v3834
    %v5159 = vunpack.c.l.b16 %v3835
    %v5160 = vunpack.c.h.b16 %v3835
    %v5161 = vunpack.c.l.b16 %v3836
    %v5162 = vunpack.c.h.b16 %v3836
    %v5163 = vunpack.c.l.b16 %v3837
    %v5164 = vunpack.c.h.b16 %v3837
    %v5165 = vunpack.c.l.b16 %v3838
    %v5166 = vunpack.c.h.b16 %v3838
    %v5167 = vunpack.c.l.b16 %v3839
    %v5168 = vunpack.c.h.b16 %v3839
    %v5169 = vunpack.c.l.b16 %v3840
    %v5170 = vunpack.c.h.b16 %v3840
    %v5171 = vunpack.c.l.b16 %v3841
    %v5172 = vunpack.c.h.b16 %v3841
    %v5173 = vunpack.c.l.b16 %v3842
    %v5174 = vunpack.c.h.b16 %v3842
    %v5175 = vunpack.c.l.b16 %v3843
    %v5176 = vunpack.c.h.b16 %v3843
    %v5177 = vunpack.c.l.b16 %v3844
    %v5178 = vunpack.c.h.b16 %v3844
    %v5179 = vunpack.c.l.b16 %v3845
    %v5180 = vunpack.c.h.b16 %v3845
    %v5181 = vunpack.c.l.b16 %v3846
    %v5182 = vunpack.c.h.b16 %v3846
    %v5183 = vunpack.c.l.b16 %v3847
    %v5184 = vunpack.c.h.b16 %v3847
    %v5185 = vunpack.c.l.b16 %v3848
    %v5186 = vunpack.c.h.b16 %v3848
    %v5187 = vunpack.c.l.b16 %v3849
    %v5188 = vunpack.c.h.b16 %v3849
    %v5189 = vunpack.c.l.b16 %v3850
    %v5190 = vunpack.c.h.b16 %v3850
    %v5191 = vunpack.c.l.b16 %v3851
    %v5192 = vunpack.c.h.b16 %v3851
    %v5193 = vunpack.c.l.b16 %v3852
    %v5194 = vunpack.c.h.b16 %v3852
    %v5195 = vunpack.c.l.b16 %v3853
    %v5196 = vunpack.c.h.b16 %v3853
    %v5197 = vunpack.c.l.b16 %v3854
    %v5198 = vunpack.c.h.b16 %v3854
    %v5199 = vunpack.c.l.b16 %v3855
    %v5200 = vunpack.c.h.b16 %v3855
    %v5201 = vunpack.c.l.b16 %v3856
    %v5202 = vunpack.c.h.b16 %v3856
    %v5203 = vunpack.c.l.b16 %v3857
    %v5204 = vunpack.c.h.b16 %v3857
    %v5205 = vunpack.c.l.b16 %v3858
    %v5206 = vunpack.c.h.b16 %v3858
    %v5207 = vunpack.c.l.b16 %v3859
    %v5208 = vunpack.c.h.b16 %v3859
    %v5209 = vunpack.c.l.b16 %v3860
    %v5210 = vunpack.c.h.b16 %v3860
    %v5211 = vunpack.c.l.b16 %v3861
    %v5212 = vunpack.c.h.b16 %v3861
    %v5213 = vunpack.c.l.b16 %v3862
    %v5214 = vunpack.c.h.b16 %v3862
    %v5215 = vunpack.c.l.b16 %v3863
    %v5216 = vunpack.c.h.b16 %v3863
    %v5217 = vunpack.c.l.b16 %v3864
    %v5218 = vunpack.c.h.b16 %v3864
    %v5219 = vunpack.c.l.b16 %v3865
    %v5220 = vunpack.c.h.b16 %v3865
    %v5221 = vunpack.c.l.b16 %v3866
    %v5222 = vunpack.c.h.b16 %v3866
    %v5223 = vunpack.c.l.b16 %v3867
    %v5224 = vunpack.c.h.b16 %v3867
    %v5225 = vunpack.c.l.b16 %v3868
    %v5226 = vunpack.c.h.b16 %v3868
    %v5227 = vunpack.c.l.b16 %v3869
    %v5228 = vunpack.c.h.b16 %v3869
    %v5229 = vunpack.c.l.b16 %v3870
    %v5230 = vunpack.c.h.b16 %v3870
    %v5231 = vunpack.c.l.b16 %v3871
    %v5232 = vunpack.c.h.b16 %v3871
    %v5233 = vunpack.c.l.b16 %v3872
    %v5234 = vunpack.c.h.b16 %v3872
    %v5235 = vunpack.c.l.b16 %v3873
    %v5236 = vunpack.c.h.b16 %v3873
    %v5237 = vunpack.c.l.b16 %v3874
    %v5238 = vunpack.c.h.b16 %v3874
    %v5239 = vunpack.c.l.b16 %v3875
    %v5240 = vunpack.c.h.b16 %v3875
    %v5241 = vunpack.c.l.b16 %v3876
    %v5242 = vunpack.c.h.b16 %v3876
    %v5243 = vunpack.c.l.b16 %v3877
    %v5244 = vunpack.c.h.b16 %v3877
    %v5245 = vunpack.c.l.b16 %v3878
    %v5246 = vunpack.c.h.b16 %v3878
    %v5247 = vunpack.c.l.b16 %v3879
    %v5248 = vunpack.c.h.b16 %v3879
    %v5249 = vunpack.c.l.b16 %v3880
    %v5250 = vunpack.c.h.b16 %v3880
    %v5251 = vunpack.c.l.b16 %v3881
    %v5252 = vunpack.c.h.b16 %v3881
    %v5253 = vunpack.c.l.b16 %v3882
    %v5254 = vunpack.c.h.b16 %v3882
    %v5255 = vunpack.c.l.b16 %v3883
    %v5256 = vunpack.c.h.b16 %v3883
    %v5257 = vpack.c.b16 %v5005, %v5001
    %v5258 = vpack.c.b16 %v5006, %v5002
    %v5259 = vpack.c.b16 %v5007, %v5003
    %v5260 = vpack.c.b16 %v5008, %v5004
    %v5261 = vpack.c.b16 %v5013, %v5009
    %v5262 = vpack.c.b16 %v5014, %v5010
    %v5263 = vpack.c.b16 %v5015, %v5011
    %v5264 = vpack.c.b16 %v5016, %v5012
    %v5265 = vpack.c.b16 %v5021, %v5017
    %v5266 = vpack.c.b16 %v5022, %v5018
    %v5267 = vpack.c.b16 %v5023, %v5019
    %v5268 = vpack.c.b16 %v5024, %v5020
    %v5269 = vpack.c.b16 %v5029, %v5025
    %v5270 = vpack.c.b16 %v5030, %v5026
    %v5271 = vpack.c.b16 %v5031, %v5027
    %v5272 = vpack.c.b16 %v5032, %v5028
    %v5273 = vpack.c.b16 %v5037, %v5033
    %v5274 = vpack.c.b16 %v5038, %v5034
    %v5275 = vpack.c.b16 %v5039, %v5035
    %v5276 = vpack.c.b16 %v5040, %v5036
    %v5277 = vpack.c.b16 %v5045, %v5041
    %v5278 = vpack.c.b16 %v5046, %v5042
    %v5279 = vpack.c.b16 %v5047, %v5043
    %v5280 = vpack.c.b16 %v5048, %v5044
    %v5281 = vpack.c.b16 %v5053, %v5049
    %v5282 = vpack.c.b16 %v5054, %v5050
    %v5283 = vpack.c.b16 %v5055, %v5051
    %v5284 = vpack.c.b16 %v5056, %v5052
    %v5285 = vpack.c.b16 %v5061, %v5057
    %v5286 = vpack.c.b16 %v5062, %v5058
    %v5287 = vpack.c.b16 %v5063, %v5059
    %v5288 = vpack.c.b16 %v5064, %v5060
    %v5289 = vpack.c.b16 %v5069, %v5065
    %v5290 = vpack.c.b16 %v5070, %v5066
    %v5291 = vpack.c.b16 %v5071, %v5067
    %v5292 = vpack.c.b16 %v5072, %v5068
    %v5293 = vpack.c.b16 %v5077, %v5073
    %v5294 = vpack.c.b16 %v5078, %v5074
    %v5295 = vpack.c.b16 %v5079, %v5075
    %v5296 = vpack.c.b16 %v5080, %v5076
    %v5297 = vpack.c.b16 %v5085, %v5081
    %v5298 = vpack.c.b16 %v5086, %v5082
    %v5299 = vpack.c.b16 %v5087, %v5083
    %v5300 = vpack.c.b16 %v5088, %v5084
    %v5301 = vpack.c.b16 %v5093, %v5089
    %v5302 = vpack.c.b16 %v5094, %v5090
    %v5303 = vpack.c.b16 %v5095, %v5091
    %v5304 = vpack.c.b16 %v5096, %v5092
    %v5305 = vpack.c.b16 %v5101, %v5097
    %v5306 = vpack.c.b16 %v5102, %v5098
    %v5307 = vpack.c.b16 %v5103, %v5099
    %v5308 = vpack.c.b16 %v5104, %v5100
    %v5309 = vpack.c.b16 %v5109, %v5105
    %v5310 = vpack.c.b16 %v5110, %v5106
    %v5311 = vpack.c.b16 %v5111, %v5107
    %v5312 = vpack.c.b16 %v5112, %v5108
    %v5313 = vpack.c.b16 %v5117, %v5113
    %v5314 = vpack.c.b16 %v5118, %v5114
    %v5315 = vpack.c.b16 %v5119, %v5115
    %v5316 = vpack.c.b16 %v5120, %v5116
    %v5317 = vpack.c.b16 %v5125, %v5121
    %v5318 = vpack.c.b16 %v5126, %v5122
    %v5319 = vpack.c.b16 %v5127, %v5123
    %v5320 = vpack.c.b16 %v5128, %v5124
    %v5321 = vpack.c.b16 %v5133, %v5129
    %v5322 = vpack.c.b16 %v5134, %v5130
    %v5323 = vpack.c.b16 %v5135, %v5131
    %v5324 = vpack.c.b16 %v5136, %v5132
    %v5325 = vpack.c.b16 %v5141, %v5137
    %v5326 = vpack.c.b16 %v5142, %v5138
    %v5327 = vpack.c.b16 %v5143, %v5139
    %v5328 = vpack.c.b16 %v5144, %v5140
    %v5329 = vpack.c.b16 %v5149, %v5145
    %v5330 = vpack.c.b16 %v5150, %v5146
    %v5331 = vpack.c.b16 %v5151, %v5147
    %v5332 = vpack.c.b16 %v5152, %v5148
    %v5333 = vpack.c.b16 %v5157, %v5153
    %v5334 = vpack.c.b16 %v5158, %v5154
    %v5335 = vpack.c.b16 %v5159, %v5155
    %v5336 = vpack.c.b16 %v5160, %v5156
    %v5337 = vpack.c.b16 %v5165, %v5161
    %v5338 = vpack.c.b16 %v5166, %v5162
    %v5339 = vpack.c.b16 %v5167, %v5163
    %v5340 = vpack.c.b16 %v5168, %v5164
    %v5341 = vpack.c.b16 %v5173, %v5169
    %v5342 = vpack.c.b16 %v5174, %v5170
    %v5343 = vpack.c.b16 %v5175, %v5171
    %v5344 = vpack.c.b16 %v5176, %v5172
    %v5345 = vpack.c.b16 %v5181, %v5177
    %v5346 = vpack.c.b16 %v5182, %v5178
    %v5347 = vpack.c.b16 %v5183, %v5179
    %v5348 = vpack.c.b16 %v5184, %v5180
    %v5349 = vpack.c.b16 %v5189, %v5185
    %v5350 = vpack.c.b16 %v5190, %v5186
    %v5351 = vpack.c.b16 %v5191, %v5187
    %v5352 = vpack.c.b16 %v5192, %v5188
    %v5353 = vpack.c.b16 %v5197, %v5193
    %v5354 = vpack.c.b16 %v5198, %v5194
    %v5355 = vpack.c.b16 %v5199, %v5195
    %v5356 = vpack.c.b16 %v5200, %v5196
    %v5357 = vpack.c.b16 %v5205, %v5201
    %v5358 = vpack.c.b16 %v5206, %v5202
    %v5359 = vpack.c.b16 %v5207, %v5203
    %v5360 = vpack.c.b16 %v5208, %v5204
    %v5361 = vpack.c.b16 %v5213, %v5209
    %v5362 = vpack.c.b16 %v5214, %v5210
    %v5363 = vpack.c.b16 %v5215, %v5211
    %v5364 = vpack.c.b16 %v5216, %v5212
    %v5365 = vpack.c.b16 %v5221, %v5217
    %v5366 = vpack.c.b16 %v5222, %v5218
    %v5367 = vpack.c.b16 %v5223, %v5219
    %v5368 = vpack.c.b16 %v5224, %v5220
    %v5369 = vpack.c.b16 %v5229, %v5225
    %v5370 = vpack.c.b16 %v5230, %v5226
    %v5371 = vpack.c.b16 %v5231, %v5227
    %v5372 = vpack.c.b16 %v5232, %v5228
    %v5373 = vpack.c.b16 %v5237, %v5233
    %v5374 = vpack.c.b16 %v5238, %v5234
    %v5375 = vpack.c.b16 %v5239, %v5235
    %v5376 = vpack.c.b16 %v5240, %v5236
    %v5377 = vpack.c.b16 %v5245, %v5241
    %v5378 = vpack.c.b16 %v5246, %v5242
    %v5379 = vpack.c.b16 %v5247, %v5243
    %v5380 = vpack.c.b16 %v5248, %v5244
    %v5381 = vpack.c.b16 %v5253, %v5249
    %v5382 = vpack.c.b16 %v5254, %v5250
    %v5383 = vpack.c.b16 %v5255, %v5251
    %v5384 = vpack.c.b16 %v5256, %v5252
    %5513 = vmatprep.subr.bf16.mxu0 %v5258
    %5514 = vmatpush1.bf16.msra.mxu0 %v5257
    %5515 = vmatprep.subr.bf16.mxu0 %v5262
    %5516 = vmatpush1.bf16.msra.mxu0 %v5261
    %5517 = vmatprep.subr.bf16.mxu0 %v5266
    %5518 = vmatpush1.bf16.msra.mxu0 %v5265
    %5519 = vmatprep.subr.bf16.mxu0 %v5270
    %5520 = vmatpush1.bf16.msra.mxu0 %v5269
    %5521 = vmatprep.subr.bf16.mxu0 %v5274
    %5522 = vmatpush1.bf16.msra.mxu0 %v5273
    %5523 = vmatprep.subr.bf16.mxu0 %v5278
    %5524 = vmatpush1.bf16.msra.mxu0 %v5277
    %5525 = vmatprep.subr.bf16.mxu0 %v5282
    %5526 = vmatpush1.bf16.msra.mxu0 %v5281
    %5527 = vmatprep.subr.bf16.mxu0 %v5286
    %5528 = vmatpush1.bf16.msra.mxu0 %v5285
    %5529 = vmatprep.subr.bf16.mxu0 %v5290
    %5530 = vmatpush1.bf16.msra.mxu0 %v5289
    %5531 = vmatprep.subr.bf16.mxu0 %v5294
    %5532 = vmatpush1.bf16.msra.mxu0 %v5293
    %5533 = vmatprep.subr.bf16.mxu0 %v5298
    %5534 = vmatpush1.bf16.msra.mxu0 %v5297
    %5535 = vmatprep.subr.bf16.mxu0 %v5302
    %5536 = vmatpush1.bf16.msra.mxu0 %v5301
    %5537 = vmatprep.subr.bf16.mxu0 %v5306
    %5538 = vmatpush1.bf16.msra.mxu0 %v5305
    %5539 = vmatprep.subr.bf16.mxu0 %v5310
    %5540 = vmatpush1.bf16.msra.mxu0 %v5309
    %5541 = vmatprep.subr.bf16.mxu0 %v5314
    %5542 = vmatpush1.bf16.msra.mxu0 %v5313
    %5543 = vmatprep.subr.bf16.mxu0 %v5318
    %5544 = vmatpush1.bf16.msra.mxu0 %v5317
    %5545 = vmatprep.mubr.bf16.mxu0 %v3749
    %5546 = vmatmul.mubr.bf16.gmra.mrb[0].mxu0 %v3748
    %v5547 = vpop.f32.mrb[0].mxu0
    %v5548 = vadd.f32 %v4749, %v5547
    %v5549 = vpop.f32.mrb[0].mxu0
    %v5550 = vadd.f32 %v4751, %v5549
    %v5551 = vpop.f32.mrb[0].mxu0
    %v5552 = vadd.f32 %v4753, %v5551
    %v5553 = vpop.f32.mrb[0].mxu0
    %v5554 = vadd.f32 %v4755, %v5553
    %5555 = vmatprep.mubr.bf16.mxu0 %v3753
    %5556 = vmatmul.mubr.bf16.gmra.mrb[0].mxu0 %v3752
    %v5557 = vpop.f32.mrb[0].mxu0
    %v5558 = vadd.f32 %v4759, %v5557
    %v5559 = vpop.f32.mrb[0].mxu0
    %v5560 = vadd.f32 %v4761, %v5559
    %v5561 = vpop.f32.mrb[0].mxu0
    %v5562 = vadd.f32 %v4763, %v5561
    %v5563 = vpop.f32.mrb[0].mxu0
    %v5564 = vadd.f32 %v4765, %v5563
    %5565 = vdwg.mxu0
    %5566 = vmatprep.subr.bf16.mxu0 %v5322
    %5567 = vmatpush1.bf16.msra.mxu0 %v5321
    %5568 = vmatprep.subr.bf16.mxu0 %v5326
    %5569 = vmatpush1.bf16.msra.mxu0 %v5325
    %5570 = vmatprep.subr.bf16.mxu0 %v5330
    %5571 = vmatpush1.bf16.msra.mxu0 %v5329
    %5572 = vmatprep.subr.bf16.mxu0 %v5334
    %5573 = vmatpush1.bf16.msra.mxu0 %v5333
    %5574 = vmatprep.subr.bf16.mxu0 %v5338
    %5575 = vmatpush1.bf16.msra.mxu0 %v5337
    %5576 = vmatprep.subr.bf16.mxu0 %v5342
    %5577 = vmatpush1.bf16.msra.mxu0 %v5341
    %5578 = vmatprep.subr.bf16.mxu0 %v5346
    %5579 = vmatpush1.bf16.msra.mxu0 %v5345
    %5580 = vmatprep.subr.bf16.mxu0 %v5350
    %5581 = vmatpush1.bf16.msra.mxu0 %v5349
    %5582 = vmatprep.subr.bf16.mxu0 %v5354
    %5583 = vmatpush1.bf16.msra.mxu0 %v5353
    %5584 = vmatprep.subr.bf16.mxu0 %v5358
    %5585 = vmatpush1.bf16.msra.mxu0 %v5357
    %5586 = vmatprep.subr.bf16.mxu0 %v5362
    %5587 = vmatpush1.bf16.msra.mxu0 %v5361
    %5588 = vmatprep.subr.bf16.mxu0 %v5366
    %5589 = vmatpush1.bf16.msra.mxu0 %v5365
    %5590 = vmatprep.subr.bf16.mxu0 %v5370
    %5591 = vmatpush1.bf16.msra.mxu0 %v5369
    %5592 = vmatprep.subr.bf16.mxu0 %v5374
    %5593 = vmatpush1.bf16.msra.mxu0 %v5373
    %5594 = vmatprep.subr.bf16.mxu0 %v5378
    %5595 = vmatpush1.bf16.msra.mxu0 %v5377
    %5596 = vmatprep.subr.bf16.mxu0 %v5382
    %5597 = vmatpush1.bf16.msra.mxu0 %v5381
    %5598 = vmatprep.mubr.bf16.mxu0 %v3751
    %5599 = vmatmul.mubr.bf16.gmra.mrb[0].mxu0 %v3750
    %v5600 = vpop.f32.mrb[0].mxu0
    %v5601 = vadd.f32 %v5548, %v5600
    %v5602 = vpop.f32.mrb[0].mxu0
    %v5603 = vadd.f32 %v5550, %v5602
    %v5604 = vpop.f32.mrb[0].mxu0
    %v5605 = vadd.f32 %v5552, %v5604
    %v5606 = vpop.f32.mrb[0].mxu0
    %v5607 = vadd.f32 %v5554, %v5606
    %5608 = vmatprep.mubr.bf16.mxu0 %v3755
    %5609 = vmatmul.mubr.bf16.gmra.mrb[0].mxu0 %v3754
    %v5610 = vpop.f32.mrb[0].mxu0
    %v5611 = vadd.f32 %v5558, %v5610
    %v5612 = vpop.f32.mrb[0].mxu0
    %v5613 = vadd.f32 %v5560, %v5612
    %v5614 = vpop.f32.mrb[0].mxu0
    %v5615 = vadd.f32 %v5562, %v5614
    %v5616 = vpop.f32.mrb[0].mxu0
    %v5617 = vadd.f32 %v5564, %v5616
    %5618 = vdwg.mxu0
    %5619 = vmatprep.subr.bf16.mxu0 %v5260
    %5620 = vmatpush1.bf16.msra.mxu0 %v5259
    %5621 = vmatprep.subr.bf16.mxu0 %v5264
    %5622 = vmatpush1.bf16.msra.mxu0 %v5263
    %5623 = vmatprep.subr.bf16.mxu0 %v5268
    %5624 = vmatpush1.bf16.msra.mxu0 %v5267
    %5625 = vmatprep.subr.bf16.mxu0 %v5272
    %5626 = vmatpush1.bf16.msra.mxu0 %v5271
    %5627 = vmatprep.subr.bf16.mxu0 %v5276
    %5628 = vmatpush1.bf16.msra.mxu0 %v5275
    %5629 = vmatprep.subr.bf16.mxu0 %v5280
    %5630 = vmatpush1.bf16.msra.mxu0 %v5279
    %5631 = vmatprep.subr.bf16.mxu0 %v5284
    %5632 = vmatpush1.bf16.msra.mxu0 %v5283
    %5633 = vmatprep.subr.bf16.mxu0 %v5288
    %5634 = vmatpush1.bf16.msra.mxu0 %v5287
    %5635 = vmatprep.subr.bf16.mxu0 %v5292
    %5636 = vmatpush1.bf16.msra.mxu0 %v5291
    %5637 = vmatprep.subr.bf16.mxu0 %v5296
    %5638 = vmatpush1.bf16.msra.mxu0 %v5295
    %5639 = vmatprep.subr.bf16.mxu0 %v5300
    %5640 = vmatpush1.bf16.msra.mxu0 %v5299
    %5641 = vmatprep.subr.bf16.mxu0 %v5304
    %5642 = vmatpush1.bf16.msra.mxu0 %v5303
    %5643 = vmatprep.subr.bf16.mxu0 %v5308
    %5644 = vmatpush1.bf16.msra.mxu0 %v5307
    %5645 = vmatprep.subr.bf16.mxu0 %v5312
    %5646 = vmatpush1.bf16.msra.mxu0 %v5311
    %5647 = vmatprep.subr.bf16.mxu0 %v5316
    %5648 = vmatpush1.bf16.msra.mxu0 %v5315
    %5649 = vmatprep.subr.bf16.mxu0 %v5320
    %5650 = vmatpush1.bf16.msra.mxu0 %v5319
    %5651 = vmatprep.mubr.bf16.mxu0 %v3749
    %5652 = vmatmul.mubr.bf16.gmra.mrb[0].mxu0 %v3748
    %v5653 = vpop.f32.mrb[0].mxu0
    %v5654 = vadd.f32 %v4855, %v5653
    %v5655 = vpop.f32.mrb[0].mxu0
    %v5656 = vadd.f32 %v4857, %v5655
    %v5657 = vpop.f32.mrb[0].mxu0
    %v5658 = vadd.f32 %v4859, %v5657
    %v5659 = vpop.f32.mrb[0].mxu0
    %v5660 = vadd.f32 %v4861, %v5659
    %5661 = vmatprep.mubr.bf16.mxu0 %v3753
    %5662 = vmatmul.mubr.bf16.gmra.mrb[0].mxu0 %v3752
    %v5663 = vpop.f32.mrb[0].mxu0
    %v5664 = vadd.f32 %v4865, %v5663
    %v5665 = vpop.f32.mrb[0].mxu0
    %v5666 = vadd.f32 %v4867, %v5665
    %v5667 = vpop.f32.mrb[0].mxu0
    %v5668 = vadd.f32 %v4869, %v5667
    %v5669 = vpop.f32.mrb[0].mxu0
    %v5670 = vadd.f32 %v4871, %v5669
    %5671 = vdwg.mxu0
    %5672 = vmatprep.subr.bf16.mxu0 %v5324
    %5673 = vmatpush1.bf16.msra.mxu0 %v5323
    %5674 = vmatprep.subr.bf16.mxu0 %v5328
    %5675 = vmatpush1.bf16.msra.mxu0 %v5327
    %5676 = vmatprep.subr.bf16.mxu0 %v5332
    %5677 = vmatpush1.bf16.msra.mxu0 %v5331
    %5678 = vmatprep.subr.bf16.mxu0 %v5336
    %5679 = vmatpush1.bf16.msra.mxu0 %v5335
    %5680 = vmatprep.subr.bf16.mxu0 %v5340
    %5681 = vmatpush1.bf16.msra.mxu0 %v5339
    %5682 = vmatprep.subr.bf16.mxu0 %v5344
    %5683 = vmatpush1.bf16.msra.mxu0 %v5343
    %5684 = vmatprep.subr.bf16.mxu0 %v5348
    %5685 = vmatpush1.bf16.msra.mxu0 %v5347
    %5686 = vmatprep.subr.bf16.mxu0 %v5352
    %5687 = vmatpush1.bf16.msra.mxu0 %v5351
    %5688 = vmatprep.subr.bf16.mxu0 %v5356
    %5689 = vmatpush1.bf16.msra.mxu0 %v5355
    %5690 = vmatprep.subr.bf16.mxu0 %v5360
    %5691 = vmatpush1.bf16.msra.mxu0 %v5359
    %5692 = vmatprep.subr.bf16.mxu0 %v5364
    %5693 = vmatpush1.bf16.msra.mxu0 %v5363
    %5694 = vmatprep.subr.bf16.mxu0 %v5368
    %5695 = vmatpush1.bf16.msra.mxu0 %v5367
    %5696 = vmatprep.subr.bf16.mxu0 %v5372
    %5697 = vmatpush1.bf16.msra.mxu0 %v5371
    %5698 = vmatprep.subr.bf16.mxu0 %v5376
    %5699 = vmatpush1.bf16.msra.mxu0 %v5375
    %5700 = vmatprep.subr.bf16.mxu0 %v5380
    %5701 = vmatpush1.bf16.msra.mxu0 %v5379
    %5702 = vmatprep.subr.bf16.mxu0 %v5384
    %5703 = vmatpush1.bf16.msra.mxu0 %v5383
    %5704 = vmatprep.mubr.bf16.mxu0 %v3751
    %5705 = vmatmul.mubr.bf16.gmra.mrb[0].mxu0 %v3750
    %v5706 = vpop.f32.mrb[0].mxu0
    %v5707 = vadd.f32 %v5654, %v5706
    %v5708 = vpop.f32.mrb[0].mxu0
    %v5709 = vadd.f32 %v5656, %v5708
    %v5710 = vpop.f32.mrb[0].mxu0
    %v5711 = vadd.f32 %v5658, %v5710
    %v5712 = vpop.f32.mrb[0].mxu0
    %v5713 = vadd.f32 %v5660, %v5712
    %5714 = vmatprep.mubr.bf16.mxu0 %v3755
    %5715 = vmatmul.mubr.bf16.gmra.mrb[0].mxu0 %v3754
    %v5716 = vpop.f32.mrb[0].mxu0
    %v5717 = vadd.f32 %v5664, %v5716
    %v5718 = vpop.f32.mrb[0].mxu0
    %v5719 = vadd.f32 %v5666, %v5718
    %v5720 = vpop.f32.mrb[0].mxu0
    %v5721 = vadd.f32 %v5668, %v5720
    %v5722 = vpop.f32.mrb[0].mxu0
    %v5723 = vadd.f32 %v5670, %v5722
    %5724 = vdwg.mxu0
    %v5725 = vpack.c.bf16 %v3736, %v3732
    %v5726 = vpack.c.bf16 %v3737, %v3733
    %v5727 = vpack.c.bf16 %v3738, %v3734
    %v5728 = vpack.c.bf16 %v3739, %v3735
    %v5729 = vpack.c.bf16 %v3744, %v3740
    %v5730 = vpack.c.bf16 %v3745, %v3741
    %v5731 = vpack.c.bf16 %v3746, %v3742
    %v5732 = vpack.c.bf16 %v3747, %v3743
    %s5733 = scalar_lea.vmem %s10, 2048
    %v5734 = vld [vmem:[%s5733] sm:$0xff]
    %v5735 = vld [vmem:[%s5733 + $0x8] sm:$0xff]
    %v5736 = vld [vmem:[%s5733 + $0x10] sm:$0xff]
    %v5737 = vld [vmem:[%s5733 + $0x18] sm:$0xff]
    %v5738 = vld [vmem:[%s5733 + $0x20] sm:$0xff]
    %v5739 = vld [vmem:[%s5733 + $0x28] sm:$0xff]
    %v5740 = vld [vmem:[%s5733 + $0x30] sm:$0xff]
    %v5741 = vld [vmem:[%s5733 + $0x38] sm:$0xff]
    %v5742 = vld [vmem:[%s5733 + $0x40] sm:$0xff]
    %v5743 = vld [vmem:[%s5733 + $0x48] sm:$0xff]
    %v5744 = vld [vmem:[%s5733 + $0x50] sm:$0xff]
    %v5745 = vld [vmem:[%s5733 + $0x58] sm:$0xff]
    %v5746 = vld [vmem:[%s5733 + $0x60] sm:$0xff]
    %v5747 = vld [vmem:[%s5733 + $0x68] sm:$0xff]
    %v5748 = vld [vmem:[%s5733 + $0x70] sm:$0xff]
    %v5749 = vld [vmem:[%s5733 + $0x78] sm:$0xff]
    %v5750 = vld [vmem:[%s5733 + $0x80] sm:$0xff]
    %v5751 = vld [vmem:[%s5733 + $0x88] sm:$0xff]
    %v5752 = vld [vmem:[%s5733 + $0x90] sm:$0xff]
    %v5753 = vld [vmem:[%s5733 + $0x98] sm:$0xff]
    %v5754 = vld [vmem:[%s5733 + $0xa0] sm:$0xff]
    %v5755 = vld [vmem:[%s5733 + $0xa8] sm:$0xff]
    %v5756 = vld [vmem:[%s5733 + $0xb0] sm:$0xff]
    %v5757 = vld [vmem:[%s5733 + $0xb8] sm:$0xff]
    %v5758 = vld [vmem:[%s5733 + $0xc0] sm:$0xff]
    %v5759 = vld [vmem:[%s5733 + $0xc8] sm:$0xff]
    %v5760 = vld [vmem:[%s5733 + $0xd0] sm:$0xff]
    %v5761 = vld [vmem:[%s5733 + $0xd8] sm:$0xff]
    %v5762 = vld [vmem:[%s5733 + $0xe0] sm:$0xff]
    %v5763 = vld [vmem:[%s5733 + $0xe8] sm:$0xff]
    %v5764 = vld [vmem:[%s5733 + $0xf0] sm:$0xff]
    %v5765 = vld [vmem:[%s5733 + $0xf8] sm:$0xff]
    %v5766 = vld [vmem:[%s5733 + $0x100] sm:$0xff]
    %v5767 = vld [vmem:[%s5733 + $0x108] sm:$0xff]
    %v5768 = vld [vmem:[%s5733 + $0x110] sm:$0xff]
    %v5769 = vld [vmem:[%s5733 + $0x118] sm:$0xff]
    %v5770 = vld [vmem:[%s5733 + $0x120] sm:$0xff]
    %v5771 = vld [vmem:[%s5733 + $0x128] sm:$0xff]
    %v5772 = vld [vmem:[%s5733 + $0x130] sm:$0xff]
    %v5773 = vld [vmem:[%s5733 + $0x138] sm:$0xff]
    %v5774 = vld [vmem:[%s5733 + $0x140] sm:$0xff]
    %v5775 = vld [vmem:[%s5733 + $0x148] sm:$0xff]
    %v5776 = vld [vmem:[%s5733 + $0x150] sm:$0xff]
    %v5777 = vld [vmem:[%s5733 + $0x158] sm:$0xff]
    %v5778 = vld [vmem:[%s5733 + $0x160] sm:$0xff]
    %v5779 = vld [vmem:[%s5733 + $0x168] sm:$0xff]
    %v5780 = vld [vmem:[%s5733 + $0x170] sm:$0xff]
    %v5781 = vld [vmem:[%s5733 + $0x178] sm:$0xff]
    %v5782 = vld [vmem:[%s5733 + $0x180] sm:$0xff]
    %v5783 = vld [vmem:[%s5733 + $0x188] sm:$0xff]
    %v5784 = vld [vmem:[%s5733 + $0x190] sm:$0xff]
    %v5785 = vld [vmem:[%s5733 + $0x198] sm:$0xff]
    %v5786 = vld [vmem:[%s5733 + $0x1a0] sm:$0xff]
    %v5787 = vld [vmem:[%s5733 + $0x1a8] sm:$0xff]
    %v5788 = vld [vmem:[%s5733 + $0x1b0] sm:$0xff]
    %v5789 = vld [vmem:[%s5733 + $0x1b8] sm:$0xff]
    %v5790 = vld [vmem:[%s5733 + $0x1c0] sm:$0xff]
    %v5791 = vld [vmem:[%s5733 + $0x1c8] sm:$0xff]
    %v5792 = vld [vmem:[%s5733 + $0x1d0] sm:$0xff]
    %v5793 = vld [vmem:[%s5733 + $0x1d8] sm:$0xff]
    %v5794 = vld [vmem:[%s5733 + $0x1e0] sm:$0xff]
    %v5795 = vld [vmem:[%s5733 + $0x1e8] sm:$0xff]
    %v5796 = vld [vmem:[%s5733 + $0x1f0] sm:$0xff]
    %v5797 = vld [vmem:[%s5733 + $0x1f8] sm:$0xff]
    %v5798 = vld [vmem:[%s5733 + $0x200] sm:$0xff]
    %v5799 = vld [vmem:[%s5733 + $0x208] sm:$0xff]
    %v5800 = vld [vmem:[%s5733 + $0x210] sm:$0xff]
    %v5801 = vld [vmem:[%s5733 + $0x218] sm:$0xff]
    %v5802 = vld [vmem:[%s5733 + $0x220] sm:$0xff]
    %v5803 = vld [vmem:[%s5733 + $0x228] sm:$0xff]
    %v5804 = vld [vmem:[%s5733 + $0x230] sm:$0xff]
    %v5805 = vld [vmem:[%s5733 + $0x238] sm:$0xff]
    %v5806 = vld [vmem:[%s5733 + $0x240] sm:$0xff]
    %v5807 = vld [vmem:[%s5733 + $0x248] sm:$0xff]
    %v5808 = vld [vmem:[%s5733 + $0x250] sm:$0xff]
    %v5809 = vld [vmem:[%s5733 + $0x258] sm:$0xff]
    %v5810 = vld [vmem:[%s5733 + $0x260] sm:$0xff]
    %v5811 = vld [vmem:[%s5733 + $0x268] sm:$0xff]
    %v5812 = vld [vmem:[%s5733 + $0x270] sm:$0xff]
    %v5813 = vld [vmem:[%s5733 + $0x278] sm:$0xff]
    %v5814 = vld [vmem:[%s5733 + $0x280] sm:$0xff]
    %v5815 = vld [vmem:[%s5733 + $0x288] sm:$0xff]
    %v5816 = vld [vmem:[%s5733 + $0x290] sm:$0xff]
    %v5817 = vld [vmem:[%s5733 + $0x298] sm:$0xff]
    %v5818 = vld [vmem:[%s5733 + $0x2a0] sm:$0xff]
    %v5819 = vld [vmem:[%s5733 + $0x2a8] sm:$0xff]
    %v5820 = vld [vmem:[%s5733 + $0x2b0] sm:$0xff]
    %v5821 = vld [vmem:[%s5733 + $0x2b8] sm:$0xff]
    %v5822 = vld [vmem:[%s5733 + $0x2c0] sm:$0xff]
    %v5823 = vld [vmem:[%s5733 + $0x2c8] sm:$0xff]
    %v5824 = vld [vmem:[%s5733 + $0x2d0] sm:$0xff]
    %v5825 = vld [vmem:[%s5733 + $0x2d8] sm:$0xff]
    %v5826 = vld [vmem:[%s5733 + $0x2e0] sm:$0xff]
    %v5827 = vld [vmem:[%s5733 + $0x2e8] sm:$0xff]
    %v5828 = vld [vmem:[%s5733 + $0x2f0] sm:$0xff]
    %v5829 = vld [vmem:[%s5733 + $0x2f8] sm:$0xff]
    %v5830 = vld [vmem:[%s5733 + $0x300] sm:$0xff]
    %v5831 = vld [vmem:[%s5733 + $0x308] sm:$0xff]
    %v5832 = vld [vmem:[%s5733 + $0x310] sm:$0xff]
    %v5833 = vld [vmem:[%s5733 + $0x318] sm:$0xff]
    %v5834 = vld [vmem:[%s5733 + $0x320] sm:$0xff]
    %v5835 = vld [vmem:[%s5733 + $0x328] sm:$0xff]
    %v5836 = vld [vmem:[%s5733 + $0x330] sm:$0xff]
    %v5837 = vld [vmem:[%s5733 + $0x338] sm:$0xff]
    %v5838 = vld [vmem:[%s5733 + $0x340] sm:$0xff]
    %v5839 = vld [vmem:[%s5733 + $0x348] sm:$0xff]
    %v5840 = vld [vmem:[%s5733 + $0x350] sm:$0xff]
    %v5841 = vld [vmem:[%s5733 + $0x358] sm:$0xff]
    %v5842 = vld [vmem:[%s5733 + $0x360] sm:$0xff]
    %v5843 = vld [vmem:[%s5733 + $0x368] sm:$0xff]
    %v5844 = vld [vmem:[%s5733 + $0x370] sm:$0xff]
    %v5845 = vld [vmem:[%s5733 + $0x378] sm:$0xff]
    %v5846 = vld [vmem:[%s5733 + $0x380] sm:$0xff]
    %v5847 = vld [vmem:[%s5733 + $0x388] sm:$0xff]
    %v5848 = vld [vmem:[%s5733 + $0x390] sm:$0xff]
    %v5849 = vld [vmem:[%s5733 + $0x398] sm:$0xff]
    %v5850 = vld [vmem:[%s5733 + $0x3a0] sm:$0xff]
    %v5851 = vld [vmem:[%s5733 + $0x3a8] sm:$0xff]
    %v5852 = vld [vmem:[%s5733 + $0x3b0] sm:$0xff]
    %v5853 = vld [vmem:[%s5733 + $0x3b8] sm:$0xff]
    %v5854 = vld [vmem:[%s5733 + $0x3c0] sm:$0xff]
    %v5855 = vld [vmem:[%s5733 + $0x3c8] sm:$0xff]
    %v5856 = vld [vmem:[%s5733 + $0x3d0] sm:$0xff]
    %v5857 = vld [vmem:[%s5733 + $0x3d8] sm:$0xff]
    %v5858 = vld [vmem:[%s5733 + $0x3e0] sm:$0xff]
    %v5859 = vld [vmem:[%s5733 + $0x3e8] sm:$0xff]
    %v5860 = vld [vmem:[%s5733 + $0x3f0] sm:$0xff]
    %v5861 = vld [vmem:[%s5733 + $0x3f8] sm:$0xff]
    %v5990 = vunpack.c.l.b16 %v5734
    %v5991 = vunpack.c.h.b16 %v5734
    %v5992 = vunpack.c.l.b16 %v5735
    %v5993 = vunpack.c.h.b16 %v5735
    %v5994 = vunpack.c.l.b16 %v5736
    %v5995 = vunpack.c.h.b16 %v5736
    %v5996 = vunpack.c.l.b16 %v5737
    %v5997 = vunpack.c.h.b16 %v5737
    %v5998 = vunpack.c.l.b16 %v5738
    %v5999 = vunpack.c.h.b16 %v5738
    %v6000 = vunpack.c.l.b16 %v5739
    %v6001 = vunpack.c.h.b16 %v5739
    %v6002 = vunpack.c.l.b16 %v5740
    %v6003 = vunpack.c.h.b16 %v5740
    %v6004 = vunpack.c.l.b16 %v5741
    %v6005 = vunpack.c.h.b16 %v5741
    %v6006 = vunpack.c.l.b16 %v5742
    %v6007 = vunpack.c.h.b16 %v5742
    %v6008 = vunpack.c.l.b16 %v5743
    %v6009 = vunpack.c.h.b16 %v5743
    %v6010 = vunpack.c.l.b16 %v5744
    %v6011 = vunpack.c.h.b16 %v5744
    %v6012 = vunpack.c.l.b16 %v5745
    %v6013 = vunpack.c.h.b16 %v5745
    %v6014 = vunpack.c.l.b16 %v5746
    %v6015 = vunpack.c.h.b16 %v5746
    %v6016 = vunpack.c.l.b16 %v5747
    %v6017 = vunpack.c.h.b16 %v5747
    %v6018 = vunpack.c.l.b16 %v5748
    %v6019 = vunpack.c.h.b16 %v5748
    %v6020 = vunpack.c.l.b16 %v5749
    %v6021 = vunpack.c.h.b16 %v5749
    %v6022 = vunpack.c.l.b16 %v5750
    %v6023 = vunpack.c.h.b16 %v5750
    %v6024 = vunpack.c.l.b16 %v5751
    %v6025 = vunpack.c.h.b16 %v5751
    %v6026 = vunpack.c.l.b16 %v5752
    %v6027 = vunpack.c.h.b16 %v5752
    %v6028 = vunpack.c.l.b16 %v5753
    %v6029 = vunpack.c.h.b16 %v5753
    %v6030 = vunpack.c.l.b16 %v5754
    %v6031 = vunpack.c.h.b16 %v5754
    %v6032 = vunpack.c.l.b16 %v5755
    %v6033 = vunpack.c.h.b16 %v5755
    %v6034 = vunpack.c.l.b16 %v5756
    %v6035 = vunpack.c.h.b16 %v5756
    %v6036 = vunpack.c.l.b16 %v5757
    %v6037 = vunpack.c.h.b16 %v5757
    %v6038 = vunpack.c.l.b16 %v5758
    %v6039 = vunpack.c.h.b16 %v5758
    %v6040 = vunpack.c.l.b16 %v5759
    %v6041 = vunpack.c.h.b16 %v5759
    %v6042 = vunpack.c.l.b16 %v5760
    %v6043 = vunpack.c.h.b16 %v5760
    %v6044 = vunpack.c.l.b16 %v5761
    %v6045 = vunpack.c.h.b16 %v5761
    %v6046 = vunpack.c.l.b16 %v5762
    %v6047 = vunpack.c.h.b16 %v5762
    %v6048 = vunpack.c.l.b16 %v5763
    %v6049 = vunpack.c.h.b16 %v5763
    %v6050 = vunpack.c.l.b16 %v5764
    %v6051 = vunpack.c.h.b16 %v5764
    %v6052 = vunpack.c.l.b16 %v5765
    %v6053 = vunpack.c.h.b16 %v5765
    %v6054 = vunpack.c.l.b16 %v5766
    %v6055 = vunpack.c.h.b16 %v5766
    %v6056 = vunpack.c.l.b16 %v5767
    %v6057 = vunpack.c.h.b16 %v5767
    %v6058 = vunpack.c.l.b16 %v5768
    %v6059 = vunpack.c.h.b16 %v5768
    %v6060 = vunpack.c.l.b16 %v5769
    %v6061 = vunpack.c.h.b16 %v5769
    %v6062 = vunpack.c.l.b16 %v5770
    %v6063 = vunpack.c.h.b16 %v5770
    %v6064 = vunpack.c.l.b16 %v5771
    %v6065 = vunpack.c.h.b16 %v5771
    %v6066 = vunpack.c.l.b16 %v5772
    %v6067 = vunpack.c.h.b16 %v5772
    %v6068 = vunpack.c.l.b16 %v5773
    %v6069 = vunpack.c.h.b16 %v5773
    %v6070 = vunpack.c.l.b16 %v5774
    %v6071 = vunpack.c.h.b16 %v5774
    %v6072 = vunpack.c.l.b16 %v5775
    %v6073 = vunpack.c.h.b16 %v5775
    %v6074 = vunpack.c.l.b16 %v5776
    %v6075 = vunpack.c.h.b16 %v5776
    %v6076 = vunpack.c.l.b16 %v5777
    %v6077 = vunpack.c.h.b16 %v5777
    %v6078 = vunpack.c.l.b16 %v5778
    %v6079 = vunpack.c.h.b16 %v5778
    %v6080 = vunpack.c.l.b16 %v5779
    %v6081 = vunpack.c.h.b16 %v5779
    %v6082 = vunpack.c.l.b16 %v5780
    %v6083 = vunpack.c.h.b16 %v5780
    %v6084 = vunpack.c.l.b16 %v5781
    %v6085 = vunpack.c.h.b16 %v5781
    %v6086 = vunpack.c.l.b16 %v5782
    %v6087 = vunpack.c.h.b16 %v5782
    %v6088 = vunpack.c.l.b16 %v5783
    %v6089 = vunpack.c.h.b16 %v5783
    %v6090 = vunpack.c.l.b16 %v5784
    %v6091 = vunpack.c.h.b16 %v5784
    %v6092 = vunpack.c.l.b16 %v5785
    %v6093 = vunpack.c.h.b16 %v5785
    %v6094 = vunpack.c.l.b16 %v5786
    %v6095 = vunpack.c.h.b16 %v5786
    %v6096 = vunpack.c.l.b16 %v5787
    %v6097 = vunpack.c.h.b16 %v5787
    %v6098 = vunpack.c.l.b16 %v5788
    %v6099 = vunpack.c.h.b16 %v5788
    %v6100 = vunpack.c.l.b16 %v5789
    %v6101 = vunpack.c.h.b16 %v5789
    %v6102 = vunpack.c.l.b16 %v5790
    %v6103 = vunpack.c.h.b16 %v5790
    %v6104 = vunpack.c.l.b16 %v5791
    %v6105 = vunpack.c.h.b16 %v5791
    %v6106 = vunpack.c.l.b16 %v5792
    %v6107 = vunpack.c.h.b16 %v5792
    %v6108 = vunpack.c.l.b16 %v5793
    %v6109 = vunpack.c.h.b16 %v5793
    %v6110 = vunpack.c.l.b16 %v5794
    %v6111 = vunpack.c.h.b16 %v5794
    %v6112 = vunpack.c.l.b16 %v5795
    %v6113 = vunpack.c.h.b16 %v5795
    %v6114 = vunpack.c.l.b16 %v5796
    %v6115 = vunpack.c.h.b16 %v5796
    %v6116 = vunpack.c.l.b16 %v5797
    %v6117 = vunpack.c.h.b16 %v5797
    %v6118 = vunpack.c.l.b16 %v5798
    %v6119 = vunpack.c.h.b16 %v5798
    %v6120 = vunpack.c.l.b16 %v5799
    %v6121 = vunpack.c.h.b16 %v5799
    %v6122 = vunpack.c.l.b16 %v5800
    %v6123 = vunpack.c.h.b16 %v5800
    %v6124 = vunpack.c.l.b16 %v5801
    %v6125 = vunpack.c.h.b16 %v5801
    %v6126 = vunpack.c.l.b16 %v5802
    %v6127 = vunpack.c.h.b16 %v5802
    %v6128 = vunpack.c.l.b16 %v5803
    %v6129 = vunpack.c.h.b16 %v5803
    %v6130 = vunpack.c.l.b16 %v5804
    %v6131 = vunpack.c.h.b16 %v5804
    %v6132 = vunpack.c.l.b16 %v5805
    %v6133 = vunpack.c.h.b16 %v5805
    %v6134 = vunpack.c.l.b16 %v5806
    %v6135 = vunpack.c.h.b16 %v5806
    %v6136 = vunpack.c.l.b16 %v5807
    %v6137 = vunpack.c.h.b16 %v5807
    %v6138 = vunpack.c.l.b16 %v5808
    %v6139 = vunpack.c.h.b16 %v5808
    %v6140 = vunpack.c.l.b16 %v5809
    %v6141 = vunpack.c.h.b16 %v5809
    %v6142 = vunpack.c.l.b16 %v5810
    %v6143 = vunpack.c.h.b16 %v5810
    %v6144 = vunpack.c.l.b16 %v5811
    %v6145 = vunpack.c.h.b16 %v5811
    %v6146 = vunpack.c.l.b16 %v5812
    %v6147 = vunpack.c.h.b16 %v5812
    %v6148 = vunpack.c.l.b16 %v5813
    %v6149 = vunpack.c.h.b16 %v5813
    %v6150 = vunpack.c.l.b16 %v5814
    %v6151 = vunpack.c.h.b16 %v5814
    %v6152 = vunpack.c.l.b16 %v5815
    %v6153 = vunpack.c.h.b16 %v5815
    %v6154 = vunpack.c.l.b16 %v5816
    %v6155 = vunpack.c.h.b16 %v5816
    %v6156 = vunpack.c.l.b16 %v5817
    %v6157 = vunpack.c.h.b16 %v5817
    %v6158 = vunpack.c.l.b16 %v5818
    %v6159 = vunpack.c.h.b16 %v5818
    %v6160 = vunpack.c.l.b16 %v5819
    %v6161 = vunpack.c.h.b16 %v5819
    %v6162 = vunpack.c.l.b16 %v5820
    %v6163 = vunpack.c.h.b16 %v5820
    %v6164 = vunpack.c.l.b16 %v5821
    %v6165 = vunpack.c.h.b16 %v5821
    %v6166 = vunpack.c.l.b16 %v5822
    %v6167 = vunpack.c.h.b16 %v5822
    %v6168 = vunpack.c.l.b16 %v5823
    %v6169 = vunpack.c.h.b16 %v5823
    %v6170 = vunpack.c.l.b16 %v5824
    %v6171 = vunpack.c.h.b16 %v5824
    %v6172 = vunpack.c.l.b16 %v5825
    %v6173 = vunpack.c.h.b16 %v5825
    %v6174 = vunpack.c.l.b16 %v5826
    %v6175 = vunpack.c.h.b16 %v5826
    %v6176 = vunpack.c.l.b16 %v5827
    %v6177 = vunpack.c.h.b16 %v5827
    %v6178 = vunpack.c.l.b16 %v5828
    %v6179 = vunpack.c.h.b16 %v5828
    %v6180 = vunpack.c.l.b16 %v5829
    %v6181 = vunpack.c.h.b16 %v5829
    %v6182 = vunpack.c.l.b16 %v5830
    %v6183 = vunpack.c.h.b16 %v5830
    %v6184 = vunpack.c.l.b16 %v5831
    %v6185 = vunpack.c.h.b16 %v5831
    %v6186 = vunpack.c.l.b16 %v5832
    %v6187 = vunpack.c.h.b16 %v5832
    %v6188 = vunpack.c.l.b16 %v5833
    %v6189 = vunpack.c.h.b16 %v5833
    %v6190 = vunpack.c.l.b16 %v5834
    %v6191 = vunpack.c.h.b16 %v5834
    %v6192 = vunpack.c.l.b16 %v5835
    %v6193 = vunpack.c.h.b16 %v5835
    %v6194 = vunpack.c.l.b16 %v5836
    %v6195 = vunpack.c.h.b16 %v5836
    %v6196 = vunpack.c.l.b16 %v5837
    %v6197 = vunpack.c.h.b16 %v5837
    %v6198 = vunpack.c.l.b16 %v5838
    %v6199 = vunpack.c.h.b16 %v5838
    %v6200 = vunpack.c.l.b16 %v5839
    %v6201 = vunpack.c.h.b16 %v5839
    %v6202 = vunpack.c.l.b16 %v5840
    %v6203 = vunpack.c.h.b16 %v5840
    %v6204 = vunpack.c.l.b16 %v5841
    %v6205 = vunpack.c.h.b16 %v5841
    %v6206 = vunpack.c.l.b16 %v5842
    %v6207 = vunpack.c.h.b16 %v5842
    %v6208 = vunpack.c.l.b16 %v5843
    %v6209 = vunpack.c.h.b16 %v5843
    %v6210 = vunpack.c.l.b16 %v5844
    %v6211 = vunpack.c.h.b16 %v5844
    %v6212 = vunpack.c.l.b16 %v5845
    %v6213 = vunpack.c.h.b16 %v5845
    %v6214 = vunpack.c.l.b16 %v5846
    %v6215 = vunpack.c.h.b16 %v5846
    %v6216 = vunpack.c.l.b16 %v5847
    %v6217 = vunpack.c.h.b16 %v5847
    %v6218 = vunpack.c.l.b16 %v5848
    %v6219 = vunpack.c.h.b16 %v5848
    %v6220 = vunpack.c.l.b16 %v5849
    %v6221 = vunpack.c.h.b16 %v5849
    %v6222 = vunpack.c.l.b16 %v5850
    %v6223 = vunpack.c.h.b16 %v5850
    %v6224 = vunpack.c.l.b16 %v5851
    %v6225 = vunpack.c.h.b16 %v5851
    %v6226 = vunpack.c.l.b16 %v5852
    %v6227 = vunpack.c.h.b16 %v5852
    %v6228 = vunpack.c.l.b16 %v5853
    %v6229 = vunpack.c.h.b16 %v5853
    %v6230 = vunpack.c.l.b16 %v5854
    %v6231 = vunpack.c.h.b16 %v5854
    %v6232 = vunpack.c.l.b16 %v5855
    %v6233 = vunpack.c.h.b16 %v5855
    %v6234 = vunpack.c.l.b16 %v5856
    %v6235 = vunpack.c.h.b16 %v5856
    %v6236 = vunpack.c.l.b16 %v5857
    %v6237 = vunpack.c.h.b16 %v5857
    %v6238 = vunpack.c.l.b16 %v5858
    %v6239 = vunpack.c.h.b16 %v5858
    %v6240 = vunpack.c.l.b16 %v5859
    %v6241 = vunpack.c.h.b16 %v5859
    %v6242 = vunpack.c.l.b16 %v5860
    %v6243 = vunpack.c.h.b16 %v5860
    %v6244 = vunpack.c.l.b16 %v5861
    %v6245 = vunpack.c.h.b16 %v5861
    %v6246 = vpack.c.b16 %v5994, %v5990
    %v6247 = vpack.c.b16 %v5995, %v5991
    %v6248 = vpack.c.b16 %v5996, %v5992
    %v6249 = vpack.c.b16 %v5997, %v5993
    %v6250 = vpack.c.b16 %v6002, %v5998
    %v6251 = vpack.c.b16 %v6003, %v5999
    %v6252 = vpack.c.b16 %v6004, %v6000
    %v6253 = vpack.c.b16 %v6005, %v6001
    %v6254 = vpack.c.b16 %v6010, %v6006
    %v6255 = vpack.c.b16 %v6011, %v6007
    %v6256 = vpack.c.b16 %v6012, %v6008
    %v6257 = vpack.c.b16 %v6013, %v6009
    %v6258 = vpack.c.b16 %v6018, %v6014
    %v6259 = vpack.c.b16 %v6019, %v6015
    %v6260 = vpack.c.b16 %v6020, %v6016
    %v6261 = vpack.c.b16 %v6021, %v6017
    %v6262 = vpack.c.b16 %v6026, %v6022
    %v6263 = vpack.c.b16 %v6027, %v6023
    %v6264 = vpack.c.b16 %v6028, %v6024
    %v6265 = vpack.c.b16 %v6029, %v6025
    %v6266 = vpack.c.b16 %v6034, %v6030
    %v6267 = vpack.c.b16 %v6035, %v6031
    %v6268 = vpack.c.b16 %v6036, %v6032
    %v6269 = vpack.c.b16 %v6037, %v6033
    %v6270 = vpack.c.b16 %v6042, %v6038
    %v6271 = vpack.c.b16 %v6043, %v6039
    %v6272 = vpack.c.b16 %v6044, %v6040
    %v6273 = vpack.c.b16 %v6045, %v6041
    %v6274 = vpack.c.b16 %v6050, %v6046
    %v6275 = vpack.c.b16 %v6051, %v6047
    %v6276 = vpack.c.b16 %v6052, %v6048
    %v6277 = vpack.c.b16 %v6053, %v6049
    %v6278 = vpack.c.b16 %v6058, %v6054
    %v6279 = vpack.c.b16 %v6059, %v6055
    %v6280 = vpack.c.b16 %v6060, %v6056
    %v6281 = vpack.c.b16 %v6061, %v6057
    %v6282 = vpack.c.b16 %v6066, %v6062
    %v6283 = vpack.c.b16 %v6067, %v6063
    %v6284 = vpack.c.b16 %v6068, %v6064
    %v6285 = vpack.c.b16 %v6069, %v6065
    %v6286 = vpack.c.b16 %v6074, %v6070
    %v6287 = vpack.c.b16 %v6075, %v6071
    %v6288 = vpack.c.b16 %v6076, %v6072
    %v6289 = vpack.c.b16 %v6077, %v6073
    %v6290 = vpack.c.b16 %v6082, %v6078
    %v6291 = vpack.c.b16 %v6083, %v6079
    %v6292 = vpack.c.b16 %v6084, %v6080
    %v6293 = vpack.c.b16 %v6085, %v6081
    %v6294 = vpack.c.b16 %v6090, %v6086
    %v6295 = vpack.c.b16 %v6091, %v6087
    %v6296 = vpack.c.b16 %v6092, %v6088
    %v6297 = vpack.c.b16 %v6093, %v6089
    %v6298 = vpack.c.b16 %v6098, %v6094
    %v6299 = vpack.c.b16 %v6099, %v6095
    %v6300 = vpack.c.b16 %v6100, %v6096
    %v6301 = vpack.c.b16 %v6101, %v6097
    %v6302 = vpack.c.b16 %v6106, %v6102
    %v6303 = vpack.c.b16 %v6107, %v6103
    %v6304 = vpack.c.b16 %v6108, %v6104
    %v6305 = vpack.c.b16 %v6109, %v6105
    %v6306 = vpack.c.b16 %v6114, %v6110
    %v6307 = vpack.c.b16 %v6115, %v6111
    %v6308 = vpack.c.b16 %v6116, %v6112
    %v6309 = vpack.c.b16 %v6117, %v6113
    %v6310 = vpack.c.b16 %v6122, %v6118
    %v6311 = vpack.c.b16 %v6123, %v6119
    %v6312 = vpack.c.b16 %v6124, %v6120
    %v6313 = vpack.c.b16 %v6125, %v6121
    %v6314 = vpack.c.b16 %v6130, %v6126
    %v6315 = vpack.c.b16 %v6131, %v6127
    %v6316 = vpack.c.b16 %v6132, %v6128
    %v6317 = vpack.c.b16 %v6133, %v6129
    %v6318 = vpack.c.b16 %v6138, %v6134
    %v6319 = vpack.c.b16 %v6139, %v6135
    %v6320 = vpack.c.b16 %v6140, %v6136
    %v6321 = vpack.c.b16 %v6141, %v6137
    %v6322 = vpack.c.b16 %v6146, %v6142
    %v6323 = vpack.c.b16 %v6147, %v6143
    %v6324 = vpack.c.b16 %v6148, %v6144
    %v6325 = vpack.c.b16 %v6149, %v6145
    %v6326 = vpack.c.b16 %v6154, %v6150
    %v6327 = vpack.c.b16 %v6155, %v6151
    %v6328 = vpack.c.b16 %v6156, %v6152
    %v6329 = vpack.c.b16 %v6157, %v6153
    %v6330 = vpack.c.b16 %v6162, %v6158
    %v6331 = vpack.c.b16 %v6163, %v6159
    %v6332 = vpack.c.b16 %v6164, %v6160
    %v6333 = vpack.c.b16 %v6165, %v6161
    %v6334 = vpack.c.b16 %v6170, %v6166
    %v6335 = vpack.c.b16 %v6171, %v6167
    %v6336 = vpack.c.b16 %v6172, %v6168
    %v6337 = vpack.c.b16 %v6173, %v6169
    %v6338 = vpack.c.b16 %v6178, %v6174
    %v6339 = vpack.c.b16 %v6179, %v6175
    %v6340 = vpack.c.b16 %v6180, %v6176
    %v6341 = vpack.c.b16 %v6181, %v6177
    %v6342 = vpack.c.b16 %v6186, %v6182
    %v6343 = vpack.c.b16 %v6187, %v6183
    %v6344 = vpack.c.b16 %v6188, %v6184
    %v6345 = vpack.c.b16 %v6189, %v6185
    %v6346 = vpack.c.b16 %v6194, %v6190
    %v6347 = vpack.c.b16 %v6195, %v6191
    %v6348 = vpack.c.b16 %v6196, %v6192
    %v6349 = vpack.c.b16 %v6197, %v6193
    %v6350 = vpack.c.b16 %v6202, %v6198
    %v6351 = vpack.c.b16 %v6203, %v6199
    %v6352 = vpack.c.b16 %v6204, %v6200
    %v6353 = vpack.c.b16 %v6205, %v6201
    %v6354 = vpack.c.b16 %v6210, %v6206
    %v6355 = vpack.c.b16 %v6211, %v6207
    %v6356 = vpack.c.b16 %v6212, %v6208
    %v6357 = vpack.c.b16 %v6213, %v6209
    %v6358 = vpack.c.b16 %v6218, %v6214
    %v6359 = vpack.c.b16 %v6219, %v6215
    %v6360 = vpack.c.b16 %v6220, %v6216
    %v6361 = vpack.c.b16 %v6221, %v6217
    %v6362 = vpack.c.b16 %v6226, %v6222
    %v6363 = vpack.c.b16 %v6227, %v6223
    %v6364 = vpack.c.b16 %v6228, %v6224
    %v6365 = vpack.c.b16 %v6229, %v6225
    %v6366 = vpack.c.b16 %v6234, %v6230
    %v6367 = vpack.c.b16 %v6235, %v6231
    %v6368 = vpack.c.b16 %v6236, %v6232
    %v6369 = vpack.c.b16 %v6237, %v6233
    %v6370 = vpack.c.b16 %v6242, %v6238
    %v6371 = vpack.c.b16 %v6243, %v6239
    %v6372 = vpack.c.b16 %v6244, %v6240
    %v6373 = vpack.c.b16 %v6245, %v6241
    %6502 = vmatprep.subr.bf16.mxu0 %v6247
    %6503 = vmatpush1.bf16.msra.mxu0 %v6246
    %6504 = vmatprep.subr.bf16.mxu0 %v6251
    %6505 = vmatpush1.bf16.msra.mxu0 %v6250
    %6506 = vmatprep.subr.bf16.mxu0 %v6255
    %6507 = vmatpush1.bf16.msra.mxu0 %v6254
    %6508 = vmatprep.subr.bf16.mxu0 %v6259
    %6509 = vmatpush1.bf16.msra.mxu0 %v6258
    %6510 = vmatprep.subr.bf16.mxu0 %v6263
    %6511 = vmatpush1.bf16.msra.mxu0 %v6262
    %6512 = vmatprep.subr.bf16.mxu0 %v6267
    %6513 = vmatpush1.bf16.msra.mxu0 %v6266
    %6514 = vmatprep.subr.bf16.mxu0 %v6271
    %6515 = vmatpush1.bf16.msra.mxu0 %v6270
    %6516 = vmatprep.subr.bf16.mxu0 %v6275
    %6517 = vmatpush1.bf16.msra.mxu0 %v6274
    %6518 = vmatprep.subr.bf16.mxu0 %v6279
    %6519 = vmatpush1.bf16.msra.mxu0 %v6278
    %6520 = vmatprep.subr.bf16.mxu0 %v6283
    %6521 = vmatpush1.bf16.msra.mxu0 %v6282
    %6522 = vmatprep.subr.bf16.mxu0 %v6287
    %6523 = vmatpush1.bf16.msra.mxu0 %v6286
    %6524 = vmatprep.subr.bf16.mxu0 %v6291
    %6525 = vmatpush1.bf16.msra.mxu0 %v6290
    %6526 = vmatprep.subr.bf16.mxu0 %v6295
    %6527 = vmatpush1.bf16.msra.mxu0 %v6294
    %6528 = vmatprep.subr.bf16.mxu0 %v6299
    %6529 = vmatpush1.bf16.msra.mxu0 %v6298
    %6530 = vmatprep.subr.bf16.mxu0 %v6303
    %6531 = vmatpush1.bf16.msra.mxu0 %v6302
    %6532 = vmatprep.subr.bf16.mxu0 %v6307
    %6533 = vmatpush1.bf16.msra.mxu0 %v6306
    %6534 = vmatprep.mubr.bf16.mxu0 %v5726
    %6535 = vmatmul.mubr.bf16.gmra.mrb[0].mxu0 %v5725
    %v6536 = vpop.f32.mrb[0].mxu0
    %v6537 = vadd.f32 0.0, %v6536
    %v6538 = vpop.f32.mrb[0].mxu0
    %v6539 = vadd.f32 0.0, %v6538
    %v6540 = vpop.f32.mrb[0].mxu0
    %v6541 = vadd.f32 0.0, %v6540
    %v6542 = vpop.f32.mrb[0].mxu0
    %v6543 = vadd.f32 0.0, %v6542
    %6544 = vmatprep.mubr.bf16.mxu0 %v5730
    %6545 = vmatmul.mubr.bf16.gmra.mrb[0].mxu0 %v5729
    %v6546 = vpop.f32.mrb[0].mxu0
    %v6547 = vadd.f32 0.0, %v6546
    %v6548 = vpop.f32.mrb[0].mxu0
    %v6549 = vadd.f32 0.0, %v6548
    %v6550 = vpop.f32.mrb[0].mxu0
    %v6551 = vadd.f32 0.0, %v6550
    %v6552 = vpop.f32.mrb[0].mxu0
    %v6553 = vadd.f32 0.0, %v6552
    %6554 = vdwg.mxu0
    %6555 = vmatprep.subr.bf16.mxu0 %v6311
    %6556 = vmatpush1.bf16.msra.mxu0 %v6310
    %6557 = vmatprep.subr.bf16.mxu0 %v6315
    %6558 = vmatpush1.bf16.msra.mxu0 %v6314
    %6559 = vmatprep.subr.bf16.mxu0 %v6319
    %6560 = vmatpush1.bf16.msra.mxu0 %v6318
    %6561 = vmatprep.subr.bf16.mxu0 %v6323
    %6562 = vmatpush1.bf16.msra.mxu0 %v6322
    %6563 = vmatprep.subr.bf16.mxu0 %v6327
    %6564 = vmatpush1.bf16.msra.mxu0 %v6326
    %6565 = vmatprep.subr.bf16.mxu0 %v6331
    %6566 = vmatpush1.bf16.msra.mxu0 %v6330
    %6567 = vmatprep.subr.bf16.mxu0 %v6335
    %6568 = vmatpush1.bf16.msra.mxu0 %v6334
    %6569 = vmatprep.subr.bf16.mxu0 %v6339
    %6570 = vmatpush1.bf16.msra.mxu0 %v6338
    %6571 = vmatprep.subr.bf16.mxu0 %v6343
    %6572 = vmatpush1.bf16.msra.mxu0 %v6342
    %6573 = vmatprep.subr.bf16.mxu0 %v6347
    %6574 = vmatpush1.bf16.msra.mxu0 %v6346
    %6575 = vmatprep.subr.bf16.mxu0 %v6351
    %6576 = vmatpush1.bf16.msra.mxu0 %v6350
    %6577 = vmatprep.subr.bf16.mxu0 %v6355
    %6578 = vmatpush1.bf16.msra.mxu0 %v6354
    %6579 = vmatprep.subr.bf16.mxu0 %v6359
    %6580 = vmatpush1.bf16.msra.mxu0 %v6358
    %6581 = vmatprep.subr.bf16.mxu0 %v6363
    %6582 = vmatpush1.bf16.msra.mxu0 %v6362
    %6583 = vmatprep.subr.bf16.mxu0 %v6367
    %6584 = vmatpush1.bf16.msra.mxu0 %v6366
    %6585 = vmatprep.subr.bf16.mxu0 %v6371
    %6586 = vmatpush1.bf16.msra.mxu0 %v6370
    %6587 = vmatprep.mubr.bf16.mxu0 %v5728
    %6588 = vmatmul.mubr.bf16.gmra.mrb[0].mxu0 %v5727
    %v6589 = vpop.f32.mrb[0].mxu0
    %v6590 = vadd.f32 %v6537, %v6589
    %v6591 = vpop.f32.mrb[0].mxu0
    %v6592 = vadd.f32 %v6539, %v6591
    %v6593 = vpop.f32.mrb[0].mxu0
    %v6594 = vadd.f32 %v6541, %v6593
    %v6595 = vpop.f32.mrb[0].mxu0
    %v6596 = vadd.f32 %v6543, %v6595
    %6597 = vmatprep.mubr.bf16.mxu0 %v5732
    %6598 = vmatmul.mubr.bf16.gmra.mrb[0].mxu0 %v5731
    %v6599 = vpop.f32.mrb[0].mxu0
    %v6600 = vadd.f32 %v6547, %v6599
    %v6601 = vpop.f32.mrb[0].mxu0
    %v6602 = vadd.f32 %v6549, %v6601
    %v6603 = vpop.f32.mrb[0].mxu0
    %v6604 = vadd.f32 %v6551, %v6603
    %v6605 = vpop.f32.mrb[0].mxu0
    %v6606 = vadd.f32 %v6553, %v6605
    %6607 = vdwg.mxu0
    %6608 = vmatprep.subr.bf16.mxu0 %v6249
    %6609 = vmatpush1.bf16.msra.mxu0 %v6248
    %6610 = vmatprep.subr.bf16.mxu0 %v6253
    %6611 = vmatpush1.bf16.msra.mxu0 %v6252
    %6612 = vmatprep.subr.bf16.mxu0 %v6257
    %6613 = vmatpush1.bf16.msra.mxu0 %v6256
    %6614 = vmatprep.subr.bf16.mxu0 %v6261
    %6615 = vmatpush1.bf16.msra.mxu0 %v6260
    %6616 = vmatprep.subr.bf16.mxu0 %v6265
    %6617 = vmatpush1.bf16.msra.mxu0 %v6264
    %6618 = vmatprep.subr.bf16.mxu0 %v6269
    %6619 = vmatpush1.bf16.msra.mxu0 %v6268
    %6620 = vmatprep.subr.bf16.mxu0 %v6273
    %6621 = vmatpush1.bf16.msra.mxu0 %v6272
    %6622 = vmatprep.subr.bf16.mxu0 %v6277
    %6623 = vmatpush1.bf16.msra.mxu0 %v6276
    %6624 = vmatprep.subr.bf16.mxu0 %v6281
    %6625 = vmatpush1.bf16.msra.mxu0 %v6280
    %6626 = vmatprep.subr.bf16.mxu0 %v6285
    %6627 = vmatpush1.bf16.msra.mxu0 %v6284
    %6628 = vmatprep.subr.bf16.mxu0 %v6289
    %6629 = vmatpush1.bf16.msra.mxu0 %v6288
    %6630 = vmatprep.subr.bf16.mxu0 %v6293
    %6631 = vmatpush1.bf16.msra.mxu0 %v6292
    %6632 = vmatprep.subr.bf16.mxu0 %v6297
    %6633 = vmatpush1.bf16.msra.mxu0 %v6296
    %6634 = vmatprep.subr.bf16.mxu0 %v6301
    %6635 = vmatpush1.bf16.msra.mxu0 %v6300
    %6636 = vmatprep.subr.bf16.mxu0 %v6305
    %6637 = vmatpush1.bf16.msra.mxu0 %v6304
    %6638 = vmatprep.subr.bf16.mxu0 %v6309
    %6639 = vmatpush1.bf16.msra.mxu0 %v6308
    %6640 = vmatprep.mubr.bf16.mxu0 %v5726
    %6641 = vmatmul.mubr.bf16.gmra.mrb[0].mxu0 %v5725
    %v6642 = vpop.f32.mrb[0].mxu0
    %v6643 = vadd.f32 0.0, %v6642
    %v6644 = vpop.f32.mrb[0].mxu0
    %v6645 = vadd.f32 0.0, %v6644
    %v6646 = vpop.f32.mrb[0].mxu0
    %v6647 = vadd.f32 0.0, %v6646
    %v6648 = vpop.f32.mrb[0].mxu0
    %v6649 = vadd.f32 0.0, %v6648
    %6650 = vmatprep.mubr.bf16.mxu0 %v5730
    %6651 = vmatmul.mubr.bf16.gmra.mrb[0].mxu0 %v5729
    %v6652 = vpop.f32.mrb[0].mxu0
    %v6653 = vadd.f32 0.0, %v6652
    %v6654 = vpop.f32.mrb[0].mxu0
    %v6655 = vadd.f32 0.0, %v6654
    %v6656 = vpop.f32.mrb[0].mxu0
    %v6657 = vadd.f32 0.0, %v6656
    %v6658 = vpop.f32.mrb[0].mxu0
    %v6659 = vadd.f32 0.0, %v6658
    %6660 = vdwg.mxu0
    %6661 = vmatprep.subr.bf16.mxu0 %v6313
    %6662 = vmatpush1.bf16.msra.mxu0 %v6312
    %6663 = vmatprep.subr.bf16.mxu0 %v6317
    %6664 = vmatpush1.bf16.msra.mxu0 %v6316
    %6665 = vmatprep.subr.bf16.mxu0 %v6321
    %6666 = vmatpush1.bf16.msra.mxu0 %v6320
    %6667 = vmatprep.subr.bf16.mxu0 %v6325
    %6668 = vmatpush1.bf16.msra.mxu0 %v6324
    %6669 = vmatprep.subr.bf16.mxu0 %v6329
    %6670 = vmatpush1.bf16.msra.mxu0 %v6328
    %6671 = vmatprep.subr.bf16.mxu0 %v6333
    %6672 = vmatpush1.bf16.msra.mxu0 %v6332
    %6673 = vmatprep.subr.bf16.mxu0 %v6337
    %6674 = vmatpush1.bf16.msra.mxu0 %v6336
    %6675 = vmatprep.subr.bf16.mxu0 %v6341
    %6676 = vmatpush1.bf16.msra.mxu0 %v6340
    %6677 = vmatprep.subr.bf16.mxu0 %v6345
    %6678 = vmatpush1.bf16.msra.mxu0 %v6344
    %6679 = vmatprep.subr.bf16.mxu0 %v6349
    %6680 = vmatpush1.bf16.msra.mxu0 %v6348
    %6681 = vmatprep.subr.bf16.mxu0 %v6353
    %6682 = vmatpush1.bf16.msra.mxu0 %v6352
    %6683 = vmatprep.subr.bf16.mxu0 %v6357
    %6684 = vmatpush1.bf16.msra.mxu0 %v6356
    %6685 = vmatprep.subr.bf16.mxu0 %v6361
    %6686 = vmatpush1.bf16.msra.mxu0 %v6360
    %6687 = vmatprep.subr.bf16.mxu0 %v6365
    %6688 = vmatpush1.bf16.msra.mxu0 %v6364
    %6689 = vmatprep.subr.bf16.mxu0 %v6369
    %6690 = vmatpush1.bf16.msra.mxu0 %v6368
    %6691 = vmatprep.subr.bf16.mxu0 %v6373
    %6692 = vmatpush1.bf16.msra.mxu0 %v6372
    %6693 = vmatprep.mubr.bf16.mxu0 %v5728
    %6694 = vmatmul.mubr.bf16.gmra.mrb[0].mxu0 %v5727
    %v6695 = vpop.f32.mrb[0].mxu0
    %v6696 = vadd.f32 %v6643, %v6695
    %v6697 = vpop.f32.mrb[0].mxu0
    %v6698 = vadd.f32 %v6645, %v6697
    %v6699 = vpop.f32.mrb[0].mxu0
    %v6700 = vadd.f32 %v6647, %v6699
    %v6701 = vpop.f32.mrb[0].mxu0
    %v6702 = vadd.f32 %v6649, %v6701
    %6703 = vmatprep.mubr.bf16.mxu0 %v5732
    %6704 = vmatmul.mubr.bf16.gmra.mrb[0].mxu0 %v5731
    %v6705 = vpop.f32.mrb[0].mxu0
    %v6706 = vadd.f32 %v6653, %v6705
    %v6707 = vpop.f32.mrb[0].mxu0
    %v6708 = vadd.f32 %v6655, %v6707
    %v6709 = vpop.f32.mrb[0].mxu0
    %v6710 = vadd.f32 %v6657, %v6709
    %v6711 = vpop.f32.mrb[0].mxu0
    %v6712 = vadd.f32 %v6659, %v6711
    %6713 = vdwg.mxu0
    %v6714 = vadd.f32 %v5601, %v6590
    %v6715 = vadd.f32 %v5603, %v6592
    %v6716 = vadd.f32 %v5707, %v6696
    %v6717 = vadd.f32 %v5709, %v6698
    %v6718 = vadd.f32 %v5605, %v6594
    %v6719 = vadd.f32 %v5607, %v6596
    %v6720 = vadd.f32 %v5711, %v6700
    %v6721 = vadd.f32 %v5713, %v6702
    %v6722 = vadd.f32 %v5611, %v6600
    %v6723 = vadd.f32 %v5613, %v6602
    %v6724 = vadd.f32 %v5717, %v6706
    %v6725 = vadd.f32 %v5719, %v6708
    %v6726 = vadd.f32 %v5615, %v6604
    %v6727 = vadd.f32 %v5617, %v6606
    %v6728 = vadd.f32 %v5721, %v6710
    %v6729 = vadd.f32 %v5723, %v6712
    %v6730 = vld [vmem:[%s11] sm:$0xf]
    %v6732 = vlaneseq
    %v6733 = vshrl.u32 %v6732, 7
    %v6734 = vsub.s32 0, %v6733
    %v6735 = vrot.slane %v6730, %v6734
    %v6736 = vlaneseq
    %v6737 = vshrl.u32 %v6736, 7
    %v6738 = vsub.s32 1, %v6737
    %v6739 = vrot.slane %v6730, %v6738
    %v6740 = vlaneseq
    %v6741 = vshrl.u32 %v6740, 7
    %v6742 = vsub.s32 2, %v6741
    %v6743 = vrot.slane %v6730, %v6742
    %v6744 = vlaneseq
    %v6745 = vshrl.u32 %v6744, 7
    %v6746 = vsub.s32 3, %v6745
    %v6747 = vrot.slane %v6730, %v6746
    %v6752 = vadd.f32 %v6714, %v6735
    %v6753 = vadd.f32 %v6715, %v6739
    %v6754 = vadd.f32 %v6716, %v6743
    %v6755 = vadd.f32 %v6717, %v6747
    %v6756 = vadd.f32 %v6718, %v6735
    %v6757 = vadd.f32 %v6719, %v6739
    %v6758 = vadd.f32 %v6720, %v6743
    %v6759 = vadd.f32 %v6721, %v6747
    %v6760 = vadd.f32 %v6722, %v6735
    %v6761 = vadd.f32 %v6723, %v6739
    %v6762 = vadd.f32 %v6724, %v6743
    %v6763 = vadd.f32 %v6725, %v6747
    %v6764 = vadd.f32 %v6726, %v6735
    %v6765 = vadd.f32 %v6727, %v6739
    %v6766 = vadd.f32 %v6728, %v6743
    %v6767 = vadd.f32 %v6729, %v6747
    %v6768 = vld [vmem:[%s2] sm:$0xff]
    %v6769 = vld [vmem:[%s2 + $0x8] sm:$0xff]
    %v6770 = vld [vmem:[%s2 + $0x10] sm:$0xff]
    %v6771 = vld [vmem:[%s2 + $0x18] sm:$0xff]
    %v6772 = vld [vmem:[%s3] sm:$0xff]
    %v6773 = vld [vmem:[%s3 + $0x8] sm:$0xff]
    %v6774 = vld [vmem:[%s3 + $0x10] sm:$0xff]
    %v6775 = vld [vmem:[%s3 + $0x18] sm:$0xff]
    %v6776 = vlaneseq
    %v6777 = vand.u32 %v6776, 127
    %6778 = vset.pattern.permute.xlu0 0
    %6779 = vperm.xlu0 %6778, %v6768
    %v6780 = vpop.permute.xlu0 %6779
    %6781 = vset.pattern.permute.xlu0 0
    %6782 = vperm.xlu0 %6781, %v6769
    %v6783 = vpop.permute.xlu0 %6782
    %6784 = vset.pattern.permute.xlu0 0
    %6785 = vperm.xlu0 %6784, %v6770
    %v6786 = vpop.permute.xlu0 %6785
    %6787 = vset.pattern.permute.xlu0 0
    %6788 = vperm.xlu0 %6787, %v6771
    %v6789 = vpop.permute.xlu0 %6788
    %vm6790 = vcmp.eq.s32.totalorder %v6777, %v6780
    %vm6791 = vcmp.eq.s32.totalorder %v6777, %v6783
    %vm6792 = vcmp.eq.s32.totalorder %v6777, %v6786
    %vm6793 = vcmp.eq.s32.totalorder %v6777, %v6789
    %v6794 = vsel %vm6790, 1, 0
    %v6795 = vsel %vm6791, 1, 0
    %v6796 = vsel %vm6792, 1, 0
    %v6797 = vsel %vm6793, 1, 0
    %v6798 = vcvt.s32.f32 %v6794
    %v6799 = vcvt.s32.f32 %v6795
    %v6800 = vcvt.s32.f32 %v6796
    %v6801 = vcvt.s32.f32 %v6797
    %vm6802 = vcmask 261120
    %v6804 = vsel %vm6802, %v6798, 0
    %v6807 = vsel %vm6802, %v6799, 0
    %v6810 = vsel %vm6802, %v6800, 0
    %v6813 = vsel %vm6802, %v6801, 0
    %6815 = vmatprep.subr.mxu0 %v6753
    %6816 = vmatpush1.msra.mxu0 %v6752
    %6817 = vmatprep.subr.mxu0 %v6757
    %6818 = vmatpush1.msra.mxu0 %v6756
    %6819 = vmatprep.subr.mxu0 %v6761
    %6820 = vmatpush1.msra.mxu0 %v6760
    %6821 = vmatprep.subr.mxu0 %v6765
    %6822 = vmatpush1.msra.mxu0 %v6764
    %6823 = vmatprep.subr.mxu0 0.0
    %6824 = vmatpush1.msra.mxu0 0.0
    %6825 = vmatprep.subr.mxu0 0.0
    %6826 = vmatpush1.msra.mxu0 0.0
    %6827 = vmatprep.subr.mxu0 0.0
    %6828 = vmatpush1.msra.mxu0 0.0
    %6829 = vmatprep.subr.mxu0 0.0
    %6830 = vmatpush1.msra.mxu0 0.0
    %6831 = vmatprep.subr.mxu0 0.0
    %6832 = vmatpush1.msra.mxu0 0.0
    %6833 = vmatprep.subr.mxu0 0.0
    %6834 = vmatpush1.msra.mxu0 0.0
    %6835 = vmatprep.subr.mxu0 0.0
    %6836 = vmatpush1.msra.mxu0 0.0
    %6837 = vmatprep.subr.mxu0 0.0
    %6838 = vmatpush1.msra.mxu0 0.0
    %6839 = vmatprep.subr.mxu0 0.0
    %6840 = vmatpush1.msra.mxu0 0.0
    %6841 = vmatprep.subr.mxu0 0.0
    %6842 = vmatpush1.msra.mxu0 0.0
    %6843 = vmatprep.subr.mxu0 0.0
    %6844 = vmatpush1.msra.mxu0 0.0
    %6845 = vmatprep.subr.mxu0 0.0
    %6846 = vmatpush1.msra.mxu0 0.0
    %6847 = vmatprep.subr.mxu0 0.0
    %6848 = vmatpush1.msra.mxu0 0.0
    %6849 = vmatprep.subr.mxu0 0.0
    %6850 = vmatpush1.msra.mxu0 0.0
    %6851 = vmatprep.subr.mxu0 0.0
    %6852 = vmatpush1.msra.mxu0 0.0
    %6853 = vmatprep.subr.mxu0 0.0
    %6854 = vmatpush1.msra.mxu0 0.0
    %6855 = vmatprep.subr.mxu0 0.0
    %6856 = vmatpush1.msra.mxu0 0.0
    %6857 = vmatprep.subr.mxu0 0.0
    %6858 = vmatpush1.msra.mxu0 0.0
    %6859 = vmatprep.subr.mxu0 0.0
    %6860 = vmatpush1.msra.mxu0 0.0
    %6861 = vmatprep.subr.mxu0 0.0
    %6862 = vmatpush1.msra.mxu0 0.0
    %6863 = vmatprep.subr.mxu0 0.0
    %6864 = vmatpush1.msra.mxu0 0.0
    %6865 = vmatprep.subr.mxu0 0.0
    %6866 = vmatpush1.msra.mxu0 0.0
    %6867 = vmatprep.subr.mxu0 0.0
    %6868 = vmatpush1.msra.mxu0 0.0
    %6869 = vmatprep.subr.mxu0 0.0
    %6870 = vmatpush1.msra.mxu0 0.0
    %6871 = vmatprep.subr.mxu0 0.0
    %6872 = vmatpush1.msra.mxu0 0.0
    %6873 = vmatprep.subr.mxu0 0.0
    %6874 = vmatpush1.msra.mxu0 0.0
    %6875 = vmatprep.subr.mxu0 0.0
    %6876 = vmatpush1.msra.mxu0 0.0
    %6877 = vmatprep.subr.mxu0 0.0
    %6878 = vmatpush1.msra.mxu0 0.0
    %6879 = vmatprep.mubr.f32.mxu0 0.0
    %6880 = vmatmul.mubr.f32.gmra.mrb[0].mxu0 %v6804
    %v6881 = vpop.f32.mrb[0].mxu0
    %v6882 = vadd.f32 0.0, %v6881
    %v6883 = vpop.f32.mrb[0].mxu0
    %v6884 = vadd.f32 0.0, %v6883
    %6885 = vmatprep.mubr.f32.mxu0 0.0
    %6886 = vmatmul.mubr.f32.gmra.mrb[0].mxu0 %v6807
    %v6887 = vpop.f32.mrb[0].mxu0
    %v6888 = vadd.f32 0.0, %v6887
    %v6889 = vpop.f32.mrb[0].mxu0
    %v6890 = vadd.f32 0.0, %v6889
    %6891 = vmatprep.mubr.f32.mxu0 0.0
    %6892 = vmatmul.mubr.f32.gmra.mrb[0].mxu0 %v6810
    %v6893 = vpop.f32.mrb[0].mxu0
    %v6894 = vadd.f32 0.0, %v6893
    %v6895 = vpop.f32.mrb[0].mxu0
    %v6896 = vadd.f32 0.0, %v6895
    %6897 = vmatprep.mubr.f32.mxu0 0.0
    %6898 = vmatmul.mubr.f32.gmra.mrb[0].mxu0 %v6813
    %v6899 = vpop.f32.mrb[0].mxu0
    %v6900 = vadd.f32 0.0, %v6899
    %v6901 = vpop.f32.mrb[0].mxu0
    %v6902 = vadd.f32 0.0, %v6901
    %6903 = vdwg.mxu0
    %6904 = vmatprep.subr.mxu0 %v6755
    %6905 = vmatpush1.msra.mxu0 %v6754
    %6906 = vmatprep.subr.mxu0 %v6759
    %6907 = vmatpush1.msra.mxu0 %v6758
    %6908 = vmatprep.subr.mxu0 %v6763
    %6909 = vmatpush1.msra.mxu0 %v6762
    %6910 = vmatprep.subr.mxu0 %v6767
    %6911 = vmatpush1.msra.mxu0 %v6766
    %6912 = vmatprep.subr.mxu0 0.0
    %6913 = vmatpush1.msra.mxu0 0.0
    %6914 = vmatprep.subr.mxu0 0.0
    %6915 = vmatpush1.msra.mxu0 0.0
    %6916 = vmatprep.subr.mxu0 0.0
    %6917 = vmatpush1.msra.mxu0 0.0
    %6918 = vmatprep.subr.mxu0 0.0
    %6919 = vmatpush1.msra.mxu0 0.0
    %6920 = vmatprep.subr.mxu0 0.0
    %6921 = vmatpush1.msra.mxu0 0.0
    %6922 = vmatprep.subr.mxu0 0.0
    %6923 = vmatpush1.msra.mxu0 0.0
    %6924 = vmatprep.subr.mxu0 0.0
    %6925 = vmatpush1.msra.mxu0 0.0
    %6926 = vmatprep.subr.mxu0 0.0
    %6927 = vmatpush1.msra.mxu0 0.0
    %6928 = vmatprep.subr.mxu0 0.0
    %6929 = vmatpush1.msra.mxu0 0.0
    %6930 = vmatprep.subr.mxu0 0.0
    %6931 = vmatpush1.msra.mxu0 0.0
    %6932 = vmatprep.subr.mxu0 0.0
    %6933 = vmatpush1.msra.mxu0 0.0
    %6934 = vmatprep.subr.mxu0 0.0
    %6935 = vmatpush1.msra.mxu0 0.0
    %6936 = vmatprep.subr.mxu0 0.0
    %6937 = vmatpush1.msra.mxu0 0.0
    %6938 = vmatprep.subr.mxu0 0.0
    %6939 = vmatpush1.msra.mxu0 0.0
    %6940 = vmatprep.subr.mxu0 0.0
    %6941 = vmatpush1.msra.mxu0 0.0
    %6942 = vmatprep.subr.mxu0 0.0
    %6943 = vmatpush1.msra.mxu0 0.0
    %6944 = vmatprep.subr.mxu0 0.0
    %6945 = vmatpush1.msra.mxu0 0.0
    %6946 = vmatprep.subr.mxu0 0.0
    %6947 = vmatpush1.msra.mxu0 0.0
    %6948 = vmatprep.subr.mxu0 0.0
    %6949 = vmatpush1.msra.mxu0 0.0
    %6950 = vmatprep.subr.mxu0 0.0
    %6951 = vmatpush1.msra.mxu0 0.0
    %6952 = vmatprep.subr.mxu0 0.0
    %6953 = vmatpush1.msra.mxu0 0.0
    %6954 = vmatprep.subr.mxu0 0.0
    %6955 = vmatpush1.msra.mxu0 0.0
    %6956 = vmatprep.subr.mxu0 0.0
    %6957 = vmatpush1.msra.mxu0 0.0
    %6958 = vmatprep.subr.mxu0 0.0
    %6959 = vmatpush1.msra.mxu0 0.0
    %6960 = vmatprep.subr.mxu0 0.0
    %6961 = vmatpush1.msra.mxu0 0.0
    %6962 = vmatprep.subr.mxu0 0.0
    %6963 = vmatpush1.msra.mxu0 0.0
    %6964 = vmatprep.subr.mxu0 0.0
    %6965 = vmatpush1.msra.mxu0 0.0
    %6966 = vmatprep.subr.mxu0 0.0
    %6967 = vmatpush1.msra.mxu0 0.0
    %6968 = vmatprep.mubr.f32.mxu0 0.0
    %6969 = vmatmul.mubr.f32.gmra.mrb[0].mxu0 %v6804
    %v6970 = vpop.f32.mrb[0].mxu0
    %v6971 = vadd.f32 0.0, %v6970
    %v6972 = vpop.f32.mrb[0].mxu0
    %v6973 = vadd.f32 0.0, %v6972
    %6974 = vmatprep.mubr.f32.mxu0 0.0
    %6975 = vmatmul.mubr.f32.gmra.mrb[0].mxu0 %v6807
    %v6976 = vpop.f32.mrb[0].mxu0
    %v6977 = vadd.f32 0.0, %v6976
    %v6978 = vpop.f32.mrb[0].mxu0
    %v6979 = vadd.f32 0.0, %v6978
    %6980 = vmatprep.mubr.f32.mxu0 0.0
    %6981 = vmatmul.mubr.f32.gmra.mrb[0].mxu0 %v6810
    %v6982 = vpop.f32.mrb[0].mxu0
    %v6983 = vadd.f32 0.0, %v6982
    %v6984 = vpop.f32.mrb[0].mxu0
    %v6985 = vadd.f32 0.0, %v6984
    %6986 = vmatprep.mubr.f32.mxu0 0.0
    %6987 = vmatmul.mubr.f32.gmra.mrb[0].mxu0 %v6813
    %v6988 = vpop.f32.mrb[0].mxu0
    %v6989 = vadd.f32 0.0, %v6988
    %v6990 = vpop.f32.mrb[0].mxu0
    %v6991 = vadd.f32 0.0, %v6990
    %6992 = vdwg.mxu0
    %v6993 = vadd.s32 %v6777, 128
    %v6994 = vadd.s32 %v6777, 256
    %v6995 = vadd.s32 %v6777, 384
    %v6996 = vmul.u32 %v6772, 32
    %v6997 = vmul.u32 %v6773, 32
    %v6998 = vmul.u32 %v6774, 32
    %v6999 = vmul.u32 %v6775, 32
    %7000 = vset.pattern.permute.xlu0 0
    %7001 = vperm.xlu0 %7000, %v6996
    %v7002 = vpop.permute.xlu0 %7001
    %7003 = vset.pattern.permute.xlu0 0
    %7004 = vperm.xlu0 %7003, %v6997
    %v7005 = vpop.permute.xlu0 %7004
    %7006 = vset.pattern.permute.xlu0 0
    %7007 = vperm.xlu0 %7006, %v6998
    %v7008 = vpop.permute.xlu0 %7007
    %7009 = vset.pattern.permute.xlu0 0
    %7010 = vperm.xlu0 %7009, %v6999
    %v7011 = vpop.permute.xlu0 %7010
    %vm7012 = vcmp.ge.s32.totalorder %v6777, %v7002
    %vm7013 = vcmp.ge.s32.totalorder %v6993, %v7002
    %vm7014 = vcmp.ge.s32.totalorder %v6994, %v7002
    %vm7015 = vcmp.ge.s32.totalorder %v6995, %v7002
    %vm7016 = vcmp.ge.s32.totalorder %v6777, %v7005
    %vm7017 = vcmp.ge.s32.totalorder %v6993, %v7005
    %vm7018 = vcmp.ge.s32.totalorder %v6994, %v7005
    %vm7019 = vcmp.ge.s32.totalorder %v6995, %v7005
    %vm7020 = vcmp.ge.s32.totalorder %v6777, %v7008
    %vm7021 = vcmp.ge.s32.totalorder %v6993, %v7008
    %vm7022 = vcmp.ge.s32.totalorder %v6994, %v7008
    %vm7023 = vcmp.ge.s32.totalorder %v6995, %v7008
    %vm7024 = vcmp.ge.s32.totalorder %v6777, %v7011
    %vm7025 = vcmp.ge.s32.totalorder %v6993, %v7011
    %vm7026 = vcmp.ge.s32.totalorder %v6994, %v7011
    %vm7027 = vcmp.ge.s32.totalorder %v6995, %v7011
    %v7028 = vadd.s32 %v6996, 32
    %v7029 = vadd.s32 %v6997, 32
    %v7030 = vadd.s32 %v6998, 32
    %v7031 = vadd.s32 %v6999, 32
    %7032 = vset.pattern.permute.xlu0 0
    %7033 = vperm.xlu0 %7032, %v7028
    %v7034 = vpop.permute.xlu0 %7033
    %7035 = vset.pattern.permute.xlu0 0
    %7036 = vperm.xlu0 %7035, %v7029
    %v7037 = vpop.permute.xlu0 %7036
    %7038 = vset.pattern.permute.xlu0 0
    %7039 = vperm.xlu0 %7038, %v7030
    %v7040 = vpop.permute.xlu0 %7039
    %7041 = vset.pattern.permute.xlu0 0
    %7042 = vperm.xlu0 %7041, %v7031
    %v7043 = vpop.permute.xlu0 %7042
    %vm7044 = vcmp.lt.s32.totalorder %v6777, %v7034
    %vm7045 = vcmp.lt.s32.totalorder %v6993, %v7034
    %vm7046 = vcmp.lt.s32.totalorder %v6994, %v7034
    %vm7047 = vcmp.lt.s32.totalorder %v6995, %v7034
    %vm7048 = vcmp.lt.s32.totalorder %v6777, %v7037
    %vm7049 = vcmp.lt.s32.totalorder %v6993, %v7037
    %vm7050 = vcmp.lt.s32.totalorder %v6994, %v7037
    %vm7051 = vcmp.lt.s32.totalorder %v6995, %v7037
    %vm7052 = vcmp.lt.s32.totalorder %v6777, %v7040
    %vm7053 = vcmp.lt.s32.totalorder %v6993, %v7040
    %vm7054 = vcmp.lt.s32.totalorder %v6994, %v7040
    %vm7055 = vcmp.lt.s32.totalorder %v6995, %v7040
    %vm7056 = vcmp.lt.s32.totalorder %v6777, %v7043
    %vm7057 = vcmp.lt.s32.totalorder %v6993, %v7043
    %vm7058 = vcmp.lt.s32.totalorder %v6994, %v7043
    %vm7059 = vcmp.lt.s32.totalorder %v6995, %v7043
    %vm7060 = vmand %vm7012, %vm7044
    %vm7061 = vmand %vm7013, %vm7045
    %vm7062 = vmand %vm7014, %vm7046
    %vm7063 = vmand %vm7015, %vm7047
    %vm7064 = vmand %vm7016, %vm7048
    %vm7065 = vmand %vm7017, %vm7049
    %vm7066 = vmand %vm7018, %vm7050
    %vm7067 = vmand %vm7019, %vm7051
    %vm7068 = vmand %vm7020, %vm7052
    %vm7069 = vmand %vm7021, %vm7053
    %vm7070 = vmand %vm7022, %vm7054
    %vm7071 = vmand %vm7023, %vm7055
    %vm7072 = vmand %vm7024, %vm7056
    %vm7073 = vmand %vm7025, %vm7057
    %vm7074 = vmand %vm7026, %vm7058
    %vm7075 = vmand %vm7027, %vm7059
    %v7076 = vsel %vm7060, %v6882, 0.0
    %v7077 = vsel %vm7061, %v6884, 0.0
    %v7078 = vsel %vm7062, %v6971, 0.0
    %v7079 = vsel %vm7063, %v6973, 0.0
    %v7080 = vsel %vm7064, %v6888, 0.0
    %v7081 = vsel %vm7065, %v6890, 0.0
    %v7082 = vsel %vm7066, %v6977, 0.0
    %v7083 = vsel %vm7067, %v6979, 0.0
    %v7084 = vsel %vm7068, %v6894, 0.0
    %v7085 = vsel %vm7069, %v6896, 0.0
    %v7086 = vsel %vm7070, %v6983, 0.0
    %v7087 = vsel %vm7071, %v6985, 0.0
    %v7088 = vsel %vm7072, %v6900, 0.0
    %v7089 = vsel %vm7073, %v6902, 0.0
    %v7090 = vsel %vm7074, %v6989, 0.0
    %v7091 = vsel %vm7075, %v6991, 0.0
    %v7092 = vld [vmem:[%s12] sm:$0xff]
    %v7093 = vld [vmem:[%s12 + $0x8] sm:$0xff]
    %v7094 = vld [vmem:[%s12 + $0x10] sm:$0xff]
    %v7095 = vld [vmem:[%s12 + $0x18] sm:$0xff]
    %v7096 = vld [vmem:[%s12 + $0x20] sm:$0xff]
    %v7097 = vld [vmem:[%s12 + $0x28] sm:$0xff]
    %v7098 = vld [vmem:[%s12 + $0x30] sm:$0xff]
    %v7099 = vld [vmem:[%s12 + $0x38] sm:$0xff]
    %v7100 = vld [vmem:[%s12 + $0x40] sm:$0xff]
    %v7101 = vld [vmem:[%s12 + $0x48] sm:$0xff]
    %v7102 = vld [vmem:[%s12 + $0x50] sm:$0xff]
    %v7103 = vld [vmem:[%s12 + $0x58] sm:$0xff]
    %v7104 = vld [vmem:[%s12 + $0x60] sm:$0xff]
    %v7105 = vld [vmem:[%s12 + $0x68] sm:$0xff]
    %v7106 = vld [vmem:[%s12 + $0x70] sm:$0xff]
    %v7107 = vld [vmem:[%s12 + $0x78] sm:$0xff]
    %v7108 = vld [vmem:[%s12 + $0x80] sm:$0xff]
    %v7109 = vld [vmem:[%s12 + $0x88] sm:$0xff]
    %v7110 = vld [vmem:[%s12 + $0x90] sm:$0xff]
    %v7111 = vld [vmem:[%s12 + $0x98] sm:$0xff]
    %v7112 = vld [vmem:[%s12 + $0xa0] sm:$0xff]
    %v7113 = vld [vmem:[%s12 + $0xa8] sm:$0xff]
    %v7114 = vld [vmem:[%s12 + $0xb0] sm:$0xff]
    %v7115 = vld [vmem:[%s12 + $0xb8] sm:$0xff]
    %v7116 = vld [vmem:[%s12 + $0xc0] sm:$0xff]
    %v7117 = vld [vmem:[%s12 + $0xc8] sm:$0xff]
    %v7118 = vld [vmem:[%s12 + $0xd0] sm:$0xff]
    %v7119 = vld [vmem:[%s12 + $0xd8] sm:$0xff]
    %v7120 = vld [vmem:[%s12 + $0xe0] sm:$0xff]
    %v7121 = vld [vmem:[%s12 + $0xe8] sm:$0xff]
    %v7122 = vld [vmem:[%s12 + $0xf0] sm:$0xff]
    %v7123 = vld [vmem:[%s12 + $0xf8] sm:$0xff]
    %v7124 = vld [vmem:[%s12 + $0x100] sm:$0xff]
    %v7125 = vld [vmem:[%s12 + $0x108] sm:$0xff]
    %v7126 = vld [vmem:[%s12 + $0x110] sm:$0xff]
    %v7127 = vld [vmem:[%s12 + $0x118] sm:$0xff]
    %v7128 = vld [vmem:[%s12 + $0x120] sm:$0xff]
    %v7129 = vld [vmem:[%s12 + $0x128] sm:$0xff]
    %v7130 = vld [vmem:[%s12 + $0x130] sm:$0xff]
    %v7131 = vld [vmem:[%s12 + $0x138] sm:$0xff]
    %v7132 = vld [vmem:[%s12 + $0x140] sm:$0xff]
    %v7133 = vld [vmem:[%s12 + $0x148] sm:$0xff]
    %v7134 = vld [vmem:[%s12 + $0x150] sm:$0xff]
    %v7135 = vld [vmem:[%s12 + $0x158] sm:$0xff]
    %v7136 = vld [vmem:[%s12 + $0x160] sm:$0xff]
    %v7137 = vld [vmem:[%s12 + $0x168] sm:$0xff]
    %v7138 = vld [vmem:[%s12 + $0x170] sm:$0xff]
    %v7139 = vld [vmem:[%s12 + $0x178] sm:$0xff]
    %v7140 = vld [vmem:[%s12 + $0x180] sm:$0xff]
    %v7141 = vld [vmem:[%s12 + $0x188] sm:$0xff]
    %v7142 = vld [vmem:[%s12 + $0x190] sm:$0xff]
    %v7143 = vld [vmem:[%s12 + $0x198] sm:$0xff]
    %v7144 = vld [vmem:[%s12 + $0x1a0] sm:$0xff]
    %v7145 = vld [vmem:[%s12 + $0x1a8] sm:$0xff]
    %v7146 = vld [vmem:[%s12 + $0x1b0] sm:$0xff]
    %v7147 = vld [vmem:[%s12 + $0x1b8] sm:$0xff]
    %v7148 = vld [vmem:[%s12 + $0x1c0] sm:$0xff]
    %v7149 = vld [vmem:[%s12 + $0x1c8] sm:$0xff]
    %v7150 = vld [vmem:[%s12 + $0x1d0] sm:$0xff]
    %v7151 = vld [vmem:[%s12 + $0x1d8] sm:$0xff]
    %v7152 = vld [vmem:[%s12 + $0x1e0] sm:$0xff]
    %v7153 = vld [vmem:[%s12 + $0x1e8] sm:$0xff]
    %v7154 = vld [vmem:[%s12 + $0x1f0] sm:$0xff]
    %v7155 = vld [vmem:[%s12 + $0x1f8] sm:$0xff]
    %7156 = vmatprep.subr.mxu0 0.0
    %7157 = vmatpush1.msra.mxu0 %v7092
    %7158 = vmatprep.subr.mxu0 0.0
    %7159 = vmatpush1.msra.mxu0 %v7093
    %7160 = vmatprep.subr.mxu0 0.0
    %7161 = vmatpush1.msra.mxu0 %v7094
    %7162 = vmatprep.subr.mxu0 0.0
    %7163 = vmatpush1.msra.mxu0 %v7095
    %7164 = vmatprep.subr.mxu0 0.0
    %7165 = vmatpush1.msra.mxu0 %v7096
    %7166 = vmatprep.subr.mxu0 0.0
    %7167 = vmatpush1.msra.mxu0 %v7097
    %7168 = vmatprep.subr.mxu0 0.0
    %7169 = vmatpush1.msra.mxu0 %v7098
    %7170 = vmatprep.subr.mxu0 0.0
    %7171 = vmatpush1.msra.mxu0 %v7099
    %7172 = vmatprep.subr.mxu0 0.0
    %7173 = vmatpush1.msra.mxu0 %v7100
    %7174 = vmatprep.subr.mxu0 0.0
    %7175 = vmatpush1.msra.mxu0 %v7101
    %7176 = vmatprep.subr.mxu0 0.0
    %7177 = vmatpush1.msra.mxu0 %v7102
    %7178 = vmatprep.subr.mxu0 0.0
    %7179 = vmatpush1.msra.mxu0 %v7103
    %7180 = vmatprep.subr.mxu0 0.0
    %7181 = vmatpush1.msra.mxu0 %v7104
    %7182 = vmatprep.subr.mxu0 0.0
    %7183 = vmatpush1.msra.mxu0 %v7105
    %7184 = vmatprep.subr.mxu0 0.0
    %7185 = vmatpush1.msra.mxu0 %v7106
    %7186 = vmatprep.subr.mxu0 0.0
    %7187 = vmatpush1.msra.mxu0 %v7107
    %7188 = vmatprep.subr.mxu0 0.0
    %7189 = vmatpush1.msra.mxu0 %v7108
    %7190 = vmatprep.subr.mxu0 0.0
    %7191 = vmatpush1.msra.mxu0 %v7109
    %7192 = vmatprep.subr.mxu0 0.0
    %7193 = vmatpush1.msra.mxu0 %v7110
    %7194 = vmatprep.subr.mxu0 0.0
    %7195 = vmatpush1.msra.mxu0 %v7111
    %7196 = vmatprep.subr.mxu0 0.0
    %7197 = vmatpush1.msra.mxu0 %v7112
    %7198 = vmatprep.subr.mxu0 0.0
    %7199 = vmatpush1.msra.mxu0 %v7113
    %7200 = vmatprep.subr.mxu0 0.0
    %7201 = vmatpush1.msra.mxu0 %v7114
    %7202 = vmatprep.subr.mxu0 0.0
    %7203 = vmatpush1.msra.mxu0 %v7115
    %7204 = vmatprep.subr.mxu0 0.0
    %7205 = vmatpush1.msra.mxu0 %v7116
    %7206 = vmatprep.subr.mxu0 0.0
    %7207 = vmatpush1.msra.mxu0 %v7117
    %7208 = vmatprep.subr.mxu0 0.0
    %7209 = vmatpush1.msra.mxu0 %v7118
    %7210 = vmatprep.subr.mxu0 0.0
    %7211 = vmatpush1.msra.mxu0 %v7119
    %7212 = vmatprep.subr.mxu0 0.0
    %7213 = vmatpush1.msra.mxu0 %v7120
    %7214 = vmatprep.subr.mxu0 0.0
    %7215 = vmatpush1.msra.mxu0 %v7121
    %7216 = vmatprep.subr.mxu0 0.0
    %7217 = vmatpush1.msra.mxu0 %v7122
    %7218 = vmatprep.subr.mxu0 0.0
    %7219 = vmatpush1.msra.mxu0 %v7123
    %7220 = vmatprep.mubr.f32.mxu0 %v7077
    %7221 = vmatmul.mubr.f32.gmra.mrb[0].mxu0 %v7076
    %v7222 = vpop.f32.mrb[0].mxu0
    %v7223 = vadd.f32 0.0, %v7222
    %v7224 = vpop.f32.mrb[0].mxu0
    %7225 = vmatprep.mubr.f32.mxu0 %v7081
    %7226 = vmatmul.mubr.f32.gmra.mrb[0].mxu0 %v7080
    %v7227 = vpop.f32.mrb[0].mxu0
    %v7228 = vadd.f32 0.0, %v7227
    %v7229 = vpop.f32.mrb[0].mxu0
    %7230 = vmatprep.mubr.f32.mxu0 %v7085
    %7231 = vmatmul.mubr.f32.gmra.mrb[0].mxu0 %v7084
    %v7232 = vpop.f32.mrb[0].mxu0
    %v7233 = vadd.f32 0.0, %v7232
    %v7234 = vpop.f32.mrb[0].mxu0
    %7235 = vmatprep.mubr.f32.mxu0 %v7089
    %7236 = vmatmul.mubr.f32.gmra.mrb[0].mxu0 %v7088
    %v7237 = vpop.f32.mrb[0].mxu0
    %v7238 = vadd.f32 0.0, %v7237
    %v7239 = vpop.f32.mrb[0].mxu0
    %7240 = vdwg.mxu0
    %7241 = vmatprep.subr.mxu0 0.0
    %7242 = vmatpush1.msra.mxu0 %v7124
    %7243 = vmatprep.subr.mxu0 0.0
    %7244 = vmatpush1.msra.mxu0 %v7125
    %7245 = vmatprep.subr.mxu0 0.0
    %7246 = vmatpush1.msra.mxu0 %v7126
    %7247 = vmatprep.subr.mxu0 0.0
    %7248 = vmatpush1.msra.mxu0 %v7127
    %7249 = vmatprep.subr.mxu0 0.0
    %7250 = vmatpush1.msra.mxu0 %v7128
    %7251 = vmatprep.subr.mxu0 0.0
    %7252 = vmatpush1.msra.mxu0 %v7129
    %7253 = vmatprep.subr.mxu0 0.0
    %7254 = vmatpush1.msra.mxu0 %v7130
    %7255 = vmatprep.subr.mxu0 0.0
    %7256 = vmatpush1.msra.mxu0 %v7131
    %7257 = vmatprep.subr.mxu0 0.0
    %7258 = vmatpush1.msra.mxu0 %v7132
    %7259 = vmatprep.subr.mxu0 0.0
    %7260 = vmatpush1.msra.mxu0 %v7133
    %7261 = vmatprep.subr.mxu0 0.0
    %7262 = vmatpush1.msra.mxu0 %v7134
    %7263 = vmatprep.subr.mxu0 0.0
    %7264 = vmatpush1.msra.mxu0 %v7135
    %7265 = vmatprep.subr.mxu0 0.0
    %7266 = vmatpush1.msra.mxu0 %v7136
    %7267 = vmatprep.subr.mxu0 0.0
    %7268 = vmatpush1.msra.mxu0 %v7137
    %7269 = vmatprep.subr.mxu0 0.0
    %7270 = vmatpush1.msra.mxu0 %v7138
    %7271 = vmatprep.subr.mxu0 0.0
    %7272 = vmatpush1.msra.mxu0 %v7139
    %7273 = vmatprep.subr.mxu0 0.0
    %7274 = vmatpush1.msra.mxu0 %v7140
    %7275 = vmatprep.subr.mxu0 0.0
    %7276 = vmatpush1.msra.mxu0 %v7141
    %7277 = vmatprep.subr.mxu0 0.0
    %7278 = vmatpush1.msra.mxu0 %v7142
    %7279 = vmatprep.subr.mxu0 0.0
    %7280 = vmatpush1.msra.mxu0 %v7143
    %7281 = vmatprep.subr.mxu0 0.0
    %7282 = vmatpush1.msra.mxu0 %v7144
    %7283 = vmatprep.subr.mxu0 0.0
    %7284 = vmatpush1.msra.mxu0 %v7145
    %7285 = vmatprep.subr.mxu0 0.0
    %7286 = vmatpush1.msra.mxu0 %v7146
    %7287 = vmatprep.subr.mxu0 0.0
    %7288 = vmatpush1.msra.mxu0 %v7147
    %7289 = vmatprep.subr.mxu0 0.0
    %7290 = vmatpush1.msra.mxu0 %v7148
    %7291 = vmatprep.subr.mxu0 0.0
    %7292 = vmatpush1.msra.mxu0 %v7149
    %7293 = vmatprep.subr.mxu0 0.0
    %7294 = vmatpush1.msra.mxu0 %v7150
    %7295 = vmatprep.subr.mxu0 0.0
    %7296 = vmatpush1.msra.mxu0 %v7151
    %7297 = vmatprep.subr.mxu0 0.0
    %7298 = vmatpush1.msra.mxu0 %v7152
    %7299 = vmatprep.subr.mxu0 0.0
    %7300 = vmatpush1.msra.mxu0 %v7153
    %7301 = vmatprep.subr.mxu0 0.0
    %7302 = vmatpush1.msra.mxu0 %v7154
    %7303 = vmatprep.subr.mxu0 0.0
    %7304 = vmatpush1.msra.mxu0 %v7155
    %7305 = vmatprep.mubr.f32.mxu0 %v7079
    %7306 = vmatmul.mubr.f32.gmra.mrb[0].mxu0 %v7078
    %v7307 = vpop.f32.mrb[0].mxu0
    %v7308 = vadd.f32 %v7223, %v7307
    %v7309 = vpop.f32.mrb[0].mxu0
    %7310 = vmatprep.mubr.f32.mxu0 %v7083
    %7311 = vmatmul.mubr.f32.gmra.mrb[0].mxu0 %v7082
    %v7312 = vpop.f32.mrb[0].mxu0
    %v7313 = vadd.f32 %v7228, %v7312
    %v7314 = vpop.f32.mrb[0].mxu0
    %7315 = vmatprep.mubr.f32.mxu0 %v7087
    %7316 = vmatmul.mubr.f32.gmra.mrb[0].mxu0 %v7086
    %v7317 = vpop.f32.mrb[0].mxu0
    %v7318 = vadd.f32 %v7233, %v7317
    %v7319 = vpop.f32.mrb[0].mxu0
    %7320 = vmatprep.mubr.f32.mxu0 %v7091
    %7321 = vmatmul.mubr.f32.gmra.mrb[0].mxu0 %v7090
    %v7322 = vpop.f32.mrb[0].mxu0
    %v7323 = vadd.f32 %v7238, %v7322
    %v7324 = vpop.f32.mrb[0].mxu0
    %7325 = vdwg.mxu0
    %7326 = vst.msk [vmem:[#allocation2] sm:$0xff] %vm6802, %v7308
    %7327 = vst.msk [vmem:[#allocation2 + $0x8] sm:$0xff] %vm6802, %v7313
    %7328 = vst.msk [vmem:[#allocation2 + $0x10] sm:$0xff] %vm6802, %v7318
    %7329 = vst.msk [vmem:[#allocation2 + $0x18] sm:$0xff] %vm6802, %v7323
    // Predicated region
    $region54: #{gridded_convcnp_encoder.1} parent=1 // pred_check
      _
    $region55: #{gridded_convcnp_encoder.1} parent=1 // pred_check_branch
      %7331 = sbr.rel (0) target = $region57
    $region56: #{gridded_convcnp_encoder.1} parent=1 // pred_region
      %s7333 = ssub.s32 512, 512
      %7334 = vsyncadd [#allocation3], %s7333
      %s7335 = sshll.u32 [#allocation2], 4
      %s7336 = int_to_ptr.vmem [resolvable:$true] %s7335
      %7341 = dma.vmem_to_hbm [thread:$0]  %s7336, 512, %s13, [#allocation3], 128, 128, 8
    $region57: #{gridded_convcnp_encoder.1} parent=1 // pred_fallthru
      _
    // Predicated region
    $region58: #{gridded_convcnp_encoder.1} parent=1 // pred_check
      _
    $region59: #{gridded_convcnp_encoder.1} parent=1 // pred_check_branch
      %7343 = sbr.rel (0) target = $region61
    $region60: #{gridded_convcnp_encoder.1} parent=1 // pred_region
      %7344 = dma.done [#allocation3], 512
    $region61: #{gridded_convcnp_encoder.1} parent=1 // pred_fallthru
      _
    %7345 = vsyncpa [#allocation3], 1

</llo_original>
